<compile_context>
chip_gen: v7x
topology: tpu7x:2x2x1
jax: 0.10.0
libtpu: 0.0.40
codegen_flags: <defaults>
</compile_context>

<pallas_src>
import functools

import jax
import jax.numpy as jnp
from jax.experimental import pallas as pl
from jax.experimental.pallas import tpu as pltpu


def _round_up(x, m):
    return (x + m - 1) // m * m


def _pick_row_tile(H, max_rows=16):
    """Largest even divisor of H that is <= max_rows (whole image if none)."""
    if H <= max_rows:
        return H
    best = None
    for t in range(2, max_rows + 1, 2):
        if H % t == 0:
            best = t
    # TODO(synk): odd H with H > max_rows falls back to a whole-image row tile;
    # supporting row tiling there needs 1-row halo operands.
    return best if best is not None else H


def _fused_head_kernel(
    x_ref,      # (1, tH, W, Cin)   current row tile
    xtop_ref,   # (1, 2,  W, Cin)   image rows r*tH-2 .. r*tH-1   (valid when r > 0)
    xbot_ref,   # (1, 2,  W, Cin)   image rows (r+1)*tH .. +1     (valid when r < nrt-1)
    w1_ref,     # (9, Cin, F)       conv1 taps (HWIO flattened), compute dtype
    b1_ref,     # (1, F)            float32
    w2_ref,     # (9, F, Cout)      conv2 taps, compute dtype
    b2_ref,     # (1, Cout)         float32
    out_ref,    # (1, tH, W, Cout)  float32
    xflat_ref,  # ((tH+4)*Wp + 8, Cin) VMEM scratch: flattened padded input slab
    hflat_ref,  # ((tH+2)*Wp + 8, F)   VMEM scratch: flattened padded hidden slab
    *, tH, W, Wp, nrt,
):
    r = pl.program_id(1)
    F = w1_ref.shape[2]
    Cout = w2_ref.shape[2]
    cdtype = x_ref.dtype

    # ---- build the zero-padded, flattened input slab ------------------------
    # slab row i (flat rows [i*Wp, (i+1)*Wp)) holds image row r*tH - 2 + i; the
    # valid pixels sit at flat rows [i*Wp + 1, i*Wp + 1 + W).  Everything else
    # (left/right conv padding, out-of-image halo rows, slack tail) stays zero.
    xflat_ref[...] = jnp.zeros(xflat_ref.shape, cdtype)
    hflat_ref[...] = jnp.zeros(hflat_ref.shape, cdtype)

    for i in range(tH):                              # interior rows
        base = (i + 2) * Wp + 1
        xflat_ref[base:base + W, :] = x_ref[0, i]

    @pl.when(r > 0)                                  # top halo rows, else zeros
    def _():
        for i in range(2):
            base = i * Wp + 1
            xflat_ref[base:base + W, :] = xtop_ref[0, i]

    @pl.when(r < nrt - 1)                            # bottom halo rows, else zeros
    def _():
        for i in range(2):
            base = (tH + 2 + i) * Wp + 1
            xflat_ref[base:base + W, :] = xbot_ref[0, i]

    # ---- conv1 + ReLU: 9 shifted contiguous-window matmuls ------------------
    L1 = (tH + 2) * Wp                               # hid slab: tH+2 spatial rows
    acc1 = jnp.zeros((L1, F), jnp.float32)
    for k in range(9):
        off = (k // 3) * Wp + (k % 3)
        acc1 = acc1 + jnp.dot(xflat_ref[off:off + L1, :], w1_ref[k],
                              preferred_element_type=jnp.float32)
    hid = jnp.maximum(acc1 + b1_ref[...], 0.0).astype(cdtype)

    # Scatter the W valid columns of every hid row into the padded hid slab.
    # Slab rows 0 / tH+1 are conv2's zero padding at the true image top/bottom:
    # skip the write there (the slab was zero-filled above).
    for j in range(tH + 2):
        def write(j=j):
            base = j * Wp
            hflat_ref[base + 1:base + 1 + W, :] = hid[base:base + W, :]
        if j == 0:
            pl.when(r > 0)(write)
        elif j == tH + 1:
            pl.when(r < nrt - 1)(write)
        else:
            write()

    # ---- conv2 + sigmoid -----------------------------------------------------
    L2 = tH * Wp
    acc2 = jnp.zeros((L2, Cout), jnp.float32)
    for k in range(9):
        off = (k // 3) * Wp + (k % 3)
        acc2 = acc2 + jnp.dot(hflat_ref[off:off + L2, :], w2_ref[k],
                              preferred_element_type=jnp.float32)
    res = jax.nn.sigmoid(acc2 + b2_ref[...])         # bias + sigmoid once per tile

    for j in range(tH):
        base = j * Wp
        out_ref[0, j] = res[base:base + W, :].astype(out_ref.dtype)


def attribute_model_forward(x_nchw, params, num_anchors, num_attr, *,
                            use_bf16=True, row_tile=None):
    """x_nchw: (B, Cin, H, W) float32 -> (B, H*W*num_anchors, num_attr) float32."""
    w1, b1, w2, b2 = params            # conv weights in HWIO layout
    B, Cin, H, W = x_nchw.shape
    F = w1.shape[-1]
    Cout = w2.shape[-1]
    assert Cout == num_anchors * num_attr
    assert H >= 2

    cdtype = jnp.bfloat16 if use_bf16 else jnp.float32
    Cin_pad = _round_up(Cin, 8)        # sublane/K friendliness (real RetinaNet: 256)
    F_pad = _round_up(F, 128)          # lane-dense hidden channels
    Cout_pad = _round_up(Cout, 128)    # 360 -> 384: unmasked stores, clean MXU N

    tH = _pick_row_tile(H) if row_tile is None else row_tile
    assert H % tH == 0, (H, tH)
    nrt = H // tH
    assert nrt == 1 or tH % 2 == 0, "row tile must be even when tiling rows"
    Wp = W + 2
    last_halo_blk = max(H // 2 - 1, 0)

    # Glue (fuses into one XLA copy each): NCHW->NHWC + channel padding + dtype
    # cast for the activation; tap flattening + lane padding for the weights.
    # NOTE: no spatial jnp.pad of activations -- padding is written in VMEM.
    x = jnp.transpose(x_nchw, (0, 2, 3, 1)).astype(cdtype)
    x = jnp.pad(x, ((0, 0), (0, 0), (0, 0), (0, Cin_pad - Cin)))
    w1p = jnp.pad(w1, ((0, 0), (0, 0), (0, Cin_pad - Cin), (0, F_pad - F)))
    w1p = w1p.reshape(9, Cin_pad, F_pad).astype(cdtype)
    b1p = jnp.pad(b1, (0, F_pad - F)).reshape(1, F_pad).astype(jnp.float32)
    w2p = jnp.pad(w2, ((0, 0), (0, 0), (0, F_pad - F), (0, Cout_pad - Cout)))
    w2p = w2p.reshape(9, F_pad, Cout_pad).astype(cdtype)
    b2p = jnp.pad(b2, (0, Cout_pad - Cout)).reshape(1, Cout_pad).astype(jnp.float32)

    kernel = functools.partial(_fused_head_kernel, tH=tH, W=W, Wp=Wp, nrt=nrt)

    x_map = lambda b, r: (b, r, 0, 0)
    top_map = lambda b, r: (b, jnp.maximum(r * (tH // 2) - 1, 0), 0, 0)
    bot_map = lambda b, r: (b, jnp.minimum((r + 1) * (tH // 2), last_halo_blk), 0, 0)

    out = pl.pallas_call(
        kernel,
        out_shape=jax.ShapeDtypeStruct((B, H, W, Cout_pad), jnp.float32),
        grid_spec=pltpu.PrefetchScalarGridSpec(
            num_scalar_prefetch=0,
            grid=(B, nrt),
            in_specs=[
                pl.BlockSpec((1, tH, W, Cin_pad), x_map),
                pl.BlockSpec((1, 2, W, Cin_pad), top_map),
                pl.BlockSpec((1, 2, W, Cin_pad), bot_map),
                pl.BlockSpec((9, Cin_pad, F_pad), lambda b, r: (0, 0, 0)),
                pl.BlockSpec((1, F_pad), lambda b, r: (0, 0)),
                pl.BlockSpec((9, F_pad, Cout_pad), lambda b, r: (0, 0, 0)),
                pl.BlockSpec((1, Cout_pad), lambda b, r: (0, 0)),
            ],
            out_specs=pl.BlockSpec((1, tH, W, Cout_pad), x_map),
            scratch_shapes=[
                pltpu.VMEM(((tH + 4) * Wp + 8, Cin_pad), cdtype),
                pltpu.VMEM(((tH + 2) * Wp + 8, F_pad), cdtype),
            ],
        ),
        compiler_params=pltpu.CompilerParams(
            dimension_semantics=("parallel", "parallel"),
            vmem_limit_bytes=64 * 1024 * 1024,
        ),
    )(x, x, x, w1p, b1p, w2p, b2p)

    out = out[..., :Cout]                     # drop lane padding BEFORE the reshape
    return out.reshape(B, H * W * num_anchors, num_attr)


def attribute_model_reference(x_nchw, params, num_anchors, num_attr):
    """Pure-JAX reference (lax conv, f32) for correctness checking."""
    w1, b1, w2, b2 = params
    x = jnp.transpose(x_nchw, (0, 2, 3, 1))
    dn = ("NHWC", "HWIO", "NHWC")
    h = jax.lax.conv_general_dilated(x, w1, (1, 1), "SAME", dimension_numbers=dn) + b1
    h = jnp.maximum(h, 0.0)
    o = jax.lax.conv_general_dilated(h, w2, (1, 1), "SAME", dimension_numbers=dn) + b2
    o = jax.nn.sigmoid(o)
    B, H, W, _ = o.shape
    return o.reshape(B, H * W * num_anchors, num_attr)


if __name__ == "__main__":
    # Small shapes consistent with the module's forward.
    B, Cin, H, W = 2, 4, 16, 16
    num_anchors, num_attr = 9, 40
    feature_size = 32                 # module default is 256; kept small for the test
    Cout = num_anchors * num_attr

    key = jax.random.PRNGKey(0)
    kx, k1, k2, k3, k4 = jax.random.split(key, 5)
    x = jax.random.normal(kx, (B, Cin, H, W), jnp.float32)
    w1 = jax.random.normal(k1, (3, 3, Cin, feature_size), jnp.float32) * 0.05
    b1 = jax.random.normal(k2, (feature_size,), jnp.float32) * 0.05
    w2 = jax.random.normal(k3, (3, 3, feature_size, Cout), jnp.float32) * 0.05
    b2 = jax.random.normal(k4, (Cout,), jnp.float32) * 0.05
    params = (w1, b1, w2, b2)

    ref = attribute_model_reference(x, params, num_anchors, num_attr)

    # f32 path, 2 row tiles -> exercises the halo machinery; tight tolerance.
    out_f32 = attribute_model_forward(x, params, num_anchors, num_attr,
                                      use_bf16=False, row_tile=8)
    out_f32 = jax.block_until_ready(out_f32)
    assert out_f32.shape == (B, H * W * num_anchors, num_attr), out_f32.shape
    assert jnp.allclose(out_f32, ref, atol=1e-5, rtol=1e-5), \
        float(jnp.max(jnp.abs(out_f32 - ref)))

    # bf16-operand path (f32 accumulation), 4 row tiles; looser tolerance.
    out_bf16 = attribute_model_forward(x, params, num_anchors, num_attr,
                                       use_bf16=True, row_tile=4)
    out_bf16 = jax.block_until_ready(out_bf16)
    assert out_bf16.shape == (B, H * W * num_anchors, num_attr), out_bf16.shape
    assert jnp.allclose(out_bf16, ref, atol=2e-2, rtol=2e-2), \
        float(jnp.max(jnp.abs(out_bf16 - ref)))

    print("KERNEL_OK")
</pallas_src>

<mosaic_0001>
module attributes {stable_mosaic.version = 11 : i64} {
  func.func @_fused_head_kernel(%arg0: i32, %arg1: i32, %arg2: memref<1x8x16x8xf32, #tpu.memory_space<vmem>>, %arg3: memref<1x2x16x8xf32, #tpu.memory_space<vmem>>, %arg4: memref<1x2x16x8xf32, #tpu.memory_space<vmem>>, %arg5: memref<9x8x128xf32, #tpu.memory_space<vmem>>, %arg6: memref<1x128xf32, #tpu.memory_space<vmem>>, %arg7: memref<9x128x384xf32, #tpu.memory_space<vmem>>, %arg8: memref<1x384xf32, #tpu.memory_space<vmem>>, %arg9: memref<1x8x16x384xf32, #tpu.memory_space<vmem>>, %arg10: memref<224x8xf32, #tpu.memory_space<vmem>>, %arg11: memref<188x128xf32, #tpu.memory_space<vmem>>) attributes {dimension_semantics = [#tpu.dimension_semantics<parallel>, #tpu.dimension_semantics<parallel>], iteration_bounds = array<i64: 2, 2>, scalar_prefetch = 0 : i64, scratch_operands = 2 : i64, tpu.core_type = #tpu.core_type<tc>, window_params = [{transform_indices = @transform_0, window_bounds = array<i64: 1, 8, 16, 8>}, {transform_indices = @transform_1, window_bounds = array<i64: 1, 2, 16, 8>}, {transform_indices = @transform_2, window_bounds = array<i64: 1, 2, 16, 8>}, {pipeline_mode = #tpu.pipeline_mode<synchronous>, transform_indices = @transform_3, window_bounds = array<i64: 9, 8, 128>}, {pipeline_mode = #tpu.pipeline_mode<synchronous>, transform_indices = @transform_4, window_bounds = array<i64: 1, 128>}, {pipeline_mode = #tpu.pipeline_mode<synchronous>, transform_indices = @transform_5, window_bounds = array<i64: 9, 128, 384>}, {pipeline_mode = #tpu.pipeline_mode<synchronous>, transform_indices = @transform_6, window_bounds = array<i64: 1, 384>}, {transform_indices = @transform_7, window_bounds = array<i64: 1, 8, 16, 384>}]} {
    %cst = arith.constant 0.000000e+00 : f32
    %0 = vector.broadcast %cst : f32 to vector<224x8xf32>
    %c0 = arith.constant 0 : index
    %c0_0 = arith.constant 0 : index
    %1 = vector.load %arg10[%c0, %c0_0] : memref<224x8xf32, #tpu.memory_space<vmem>>, vector<224x8xf32>
    tpu.vector_store %arg10[%c0, %c0_0], %0 {strides = array<i32>} : memref<224x8xf32, #tpu.memory_space<vmem>>, vector<224x8xf32>,
    %cst_1 = arith.constant 0.000000e+00 : f32
    %2 = vector.broadcast %cst_1 : f32 to vector<188x128xf32>
    %c0_2 = arith.constant 0 : index
    %c0_3 = arith.constant 0 : index
    %3 = vector.load %arg11[%c0_2, %c0_3] : memref<188x128xf32, #tpu.memory_space<vmem>>, vector<188x128xf32>
    tpu.vector_store %arg11[%c0_2, %c0_3], %2 {strides = array<i32>} : memref<188x128xf32, #tpu.memory_space<vmem>>, vector<188x128xf32>,
    %c0_4 = arith.constant 0 : index
    %c0_5 = arith.constant 0 : index
    %c0_6 = arith.constant 0 : index
    %c0_7 = arith.constant 0 : index
    %4 = vector.load %arg2[%c0_4, %c0_5, %c0_6, %c0_7] : memref<1x8x16x8xf32, #tpu.memory_space<vmem>>, vector<1x1x16x8xf32>
    %5 = vector.shape_cast %4 : vector<1x1x16x8xf32> to vector<16x8xf32>
    %c37 = arith.constant 37 : index
    %c0_8 = arith.constant 0 : index
    %6 = vector.load %arg10[%c37, %c0_8] : memref<224x8xf32, #tpu.memory_space<vmem>>, vector<16x8xf32>
    tpu.vector_store %arg10[%c37, %c0_8], %5 {strides = array<i32>} : memref<224x8xf32, #tpu.memory_space<vmem>>, vector<16x8xf32>,
    %c0_9 = arith.constant 0 : index
    %c1 = arith.constant 1 : index
    %c0_10 = arith.constant 0 : index
    %c0_11 = arith.constant 0 : index
    %7 = vector.load %arg2[%c0_9, %c1, %c0_10, %c0_11] : memref<1x8x16x8xf32, #tpu.memory_space<vmem>>, vector<1x1x16x8xf32>
    %8 = vector.shape_cast %7 : vector<1x1x16x8xf32> to vector<16x8xf32>
    %c55 = arith.constant 55 : index
    %c0_12 = arith.constant 0 : index
    %9 = vector.load %arg10[%c55, %c0_12] : memref<224x8xf32, #tpu.memory_space<vmem>>, vector<16x8xf32>
    tpu.vector_store %arg10[%c55, %c0_12], %8 {strides = array<i32>} : memref<224x8xf32, #tpu.memory_space<vmem>>, vector<16x8xf32>,
    %c0_13 = arith.constant 0 : index
    %c2 = arith.constant 2 : index
    %c0_14 = arith.constant 0 : index
    %c0_15 = arith.constant 0 : index
    %10 = vector.load %arg2[%c0_13, %c2, %c0_14, %c0_15] : memref<1x8x16x8xf32, #tpu.memory_space<vmem>>, vector<1x1x16x8xf32>
    %11 = vector.shape_cast %10 : vector<1x1x16x8xf32> to vector<16x8xf32>
    %c73 = arith.constant 73 : index
    %c0_16 = arith.constant 0 : index
    %12 = vector.load %arg10[%c73, %c0_16] : memref<224x8xf32, #tpu.memory_space<vmem>>, vector<16x8xf32>
    tpu.vector_store %arg10[%c73, %c0_16], %11 {strides = array<i32>} : memref<224x8xf32, #tpu.memory_space<vmem>>, vector<16x8xf32>,
    %c0_17 = arith.constant 0 : index
    %c3 = arith.constant 3 : index
    %c0_18 = arith.constant 0 : index
    %c0_19 = arith.constant 0 : index
    %13 = vector.load %arg2[%c0_17, %c3, %c0_18, %c0_19] : memref<1x8x16x8xf32, #tpu.memory_space<vmem>>, vector<1x1x16x8xf32>
    %14 = vector.shape_cast %13 : vector<1x1x16x8xf32> to vector<16x8xf32>
    %c91 = arith.constant 91 : index
    %c0_20 = arith.constant 0 : index
    %15 = vector.load %arg10[%c91, %c0_20] : memref<224x8xf32, #tpu.memory_space<vmem>>, vector<16x8xf32>
    tpu.vector_store %arg10[%c91, %c0_20], %14 {strides = array<i32>} : memref<224x8xf32, #tpu.memory_space<vmem>>, vector<16x8xf32>,
    %c0_21 = arith.constant 0 : index
    %c4 = arith.constant 4 : index
    %c0_22 = arith.constant 0 : index
    %c0_23 = arith.constant 0 : index
    %16 = vector.load %arg2[%c0_21, %c4, %c0_22, %c0_23] : memref<1x8x16x8xf32, #tpu.memory_space<vmem>>, vector<1x1x16x8xf32>
    %17 = vector.shape_cast %16 : vector<1x1x16x8xf32> to vector<16x8xf32>
    %c109 = arith.constant 109 : index
    %c0_24 = arith.constant 0 : index
    %18 = vector.load %arg10[%c109, %c0_24] : memref<224x8xf32, #tpu.memory_space<vmem>>, vector<16x8xf32>
    tpu.vector_store %arg10[%c109, %c0_24], %17 {strides = array<i32>} : memref<224x8xf32, #tpu.memory_space<vmem>>, vector<16x8xf32>,
    %c0_25 = arith.constant 0 : index
    %c5 = arith.constant 5 : index
    %c0_26 = arith.constant 0 : index
    %c0_27 = arith.constant 0 : index
    %19 = vector.load %arg2[%c0_25, %c5, %c0_26, %c0_27] : memref<1x8x16x8xf32, #tpu.memory_space<vmem>>, vector<1x1x16x8xf32>
    %20 = vector.shape_cast %19 : vector<1x1x16x8xf32> to vector<16x8xf32>
    %c127 = arith.constant 127 : index
    %c0_28 = arith.constant 0 : index
    %21 = vector.load %arg10[%c127, %c0_28] : memref<224x8xf32, #tpu.memory_space<vmem>>, vector<16x8xf32>
    tpu.vector_store %arg10[%c127, %c0_28], %20 {strides = array<i32>} : memref<224x8xf32, #tpu.memory_space<vmem>>, vector<16x8xf32>,
    %c0_29 = arith.constant 0 : index
    %c6 = arith.constant 6 : index
    %c0_30 = arith.constant 0 : index
    %c0_31 = arith.constant 0 : index
    %22 = vector.load %arg2[%c0_29, %c6, %c0_30, %c0_31] : memref<1x8x16x8xf32, #tpu.memory_space<vmem>>, vector<1x1x16x8xf32>
    %23 = vector.shape_cast %22 : vector<1x1x16x8xf32> to vector<16x8xf32>
    %c145 = arith.constant 145 : index
    %c0_32 = arith.constant 0 : index
    %24 = vector.load %arg10[%c145, %c0_32] : memref<224x8xf32, #tpu.memory_space<vmem>>, vector<16x8xf32>
    tpu.vector_store %arg10[%c145, %c0_32], %23 {strides = array<i32>} : memref<224x8xf32, #tpu.memory_space<vmem>>, vector<16x8xf32>,
    %c0_33 = arith.constant 0 : index
    %c7 = arith.constant 7 : index
    %c0_34 = arith.constant 0 : index
    %c0_35 = arith.constant 0 : index
    %25 = vector.load %arg2[%c0_33, %c7, %c0_34, %c0_35] : memref<1x8x16x8xf32, #tpu.memory_space<vmem>>, vector<1x1x16x8xf32>
    %26 = vector.shape_cast %25 : vector<1x1x16x8xf32> to vector<16x8xf32>
    %c163 = arith.constant 163 : index
    %c0_36 = arith.constant 0 : index
    %27 = vector.load %arg10[%c163, %c0_36] : memref<224x8xf32, #tpu.memory_space<vmem>>, vector<16x8xf32>
    tpu.vector_store %arg10[%c163, %c0_36], %26 {strides = array<i32>} : memref<224x8xf32, #tpu.memory_space<vmem>>, vector<16x8xf32>,
    %c0_i32 = arith.constant 0 : i32
    %28 = arith.cmpi sgt, %arg1, %c0_i32 : i32
    %29 = arith.extui %28 : i1 to i32
    %c0_i32_37 = arith.constant 0 : i32
    %30 = arith.cmpi ne, %29, %c0_i32_37 : i32
    scf.if %30 {
      %c0_201 = arith.constant 0 : index
      %c0_202 = arith.constant 0 : index
      %c0_203 = arith.constant 0 : index
      %c0_204 = arith.constant 0 : index
      %193 = vector.load %arg3[%c0_201, %c0_202, %c0_203, %c0_204] : memref<1x2x16x8xf32, #tpu.memory_space<vmem>>, vector<1x1x16x8xf32>
      %194 = vector.shape_cast %193 : vector<1x1x16x8xf32> to vector<16x8xf32>
      %c1_205 = arith.constant 1 : index
      %c0_206 = arith.constant 0 : index
      %195 = vector.load %arg10[%c1_205, %c0_206] : memref<224x8xf32, #tpu.memory_space<vmem>>, vector<16x8xf32>
      tpu.vector_store %arg10[%c1_205, %c0_206], %194 {strides = array<i32>} : memref<224x8xf32, #tpu.memory_space<vmem>>, vector<16x8xf32>,
      %c0_207 = arith.constant 0 : index
      %c1_208 = arith.constant 1 : index
      %c0_209 = arith.constant 0 : index
      %c0_210 = arith.constant 0 : index
      %196 = vector.load %arg3[%c0_207, %c1_208, %c0_209, %c0_210] : memref<1x2x16x8xf32, #tpu.memory_space<vmem>>, vector<1x1x16x8xf32>
      %197 = vector.shape_cast %196 : vector<1x1x16x8xf32> to vector<16x8xf32>
      %c19_211 = arith.constant 19 : index
      %c0_212 = arith.constant 0 : index
      %198 = vector.load %arg10[%c19_211, %c0_212] : memref<224x8xf32, #tpu.memory_space<vmem>>, vector<16x8xf32>
      tpu.vector_store %arg10[%c19_211, %c0_212], %197 {strides = array<i32>} : memref<224x8xf32, #tpu.memory_space<vmem>>, vector<16x8xf32>,
    } else {
    }
    %c1_i32 = arith.constant 1 : i32
    %31 = arith.cmpi slt, %arg1, %c1_i32 : i32
    %32 = arith.extui %31 : i1 to i32
    %c0_i32_38 = arith.constant 0 : i32
    %33 = arith.cmpi ne, %32, %c0_i32_38 : i32
    scf.if %33 {
      %c0_201 = arith.constant 0 : index
      %c0_202 = arith.constant 0 : index
      %c0_203 = arith.constant 0 : index
      %c0_204 = arith.constant 0 : index
      %193 = vector.load %arg4[%c0_201, %c0_202, %c0_203, %c0_204] : memref<1x2x16x8xf32, #tpu.memory_space<vmem>>, vector<1x1x16x8xf32>
      %194 = vector.shape_cast %193 : vector<1x1x16x8xf32> to vector<16x8xf32>
      %c181 = arith.constant 181 : index
      %c0_205 = arith.constant 0 : index
      %195 = vector.load %arg10[%c181, %c0_205] : memref<224x8xf32, #tpu.memory_space<vmem>>, vector<16x8xf32>
      tpu.vector_store %arg10[%c181, %c0_205], %194 {strides = array<i32>} : memref<224x8xf32, #tpu.memory_space<vmem>>, vector<16x8xf32>,
      %c0_206 = arith.constant 0 : index
      %c1_207 = arith.constant 1 : index
      %c0_208 = arith.constant 0 : index
      %c0_209 = arith.constant 0 : index
      %196 = vector.load %arg4[%c0_206, %c1_207, %c0_208, %c0_209] : memref<1x2x16x8xf32, #tpu.memory_space<vmem>>, vector<1x1x16x8xf32>
      %197 = vector.shape_cast %196 : vector<1x1x16x8xf32> to vector<16x8xf32>
      %c199 = arith.constant 199 : index
      %c0_210 = arith.constant 0 : index
      %198 = vector.load %arg10[%c199, %c0_210] : memref<224x8xf32, #tpu.memory_space<vmem>>, vector<16x8xf32>
      tpu.vector_store %arg10[%c199, %c0_210], %197 {strides = array<i32>} : memref<224x8xf32, #tpu.memory_space<vmem>>, vector<16x8xf32>,
    } else {
    }
    %cst_39 = arith.constant 0.000000e+00 : f32
    %34 = vector.broadcast %cst_39 : f32 to vector<180x128xf32>
    %c0_40 = arith.constant 0 : index
    %c0_41 = arith.constant 0 : index
    %35 = vector.load %arg10[%c0_40, %c0_41] : memref<224x8xf32, #tpu.memory_space<vmem>>, vector<180x8xf32>
    %c0_42 = arith.constant 0 : index
    %c0_43 = arith.constant 0 : index
    %c0_44 = arith.constant 0 : index
    %36 = vector.load %arg5[%c0_42, %c0_43, %c0_44] : memref<9x8x128xf32, #tpu.memory_space<vmem>>, vector<1x8x128xf32>
    %37 = vector.shape_cast %36 : vector<1x8x128xf32> to vector<8x128xf32>
    %cst_45 = arith.constant dense<0.000000e+00> : vector<180x128xf32>
    %38 = tpu.matmul %35, %37, %cst_45 {dimension_numbers = #tpu.dot_dimension_numbers<[1], [0], [0], [1], [0, 0, 1, 1], [], []>} : vector<180x8xf32>, vector<8x128xf32>, vector<180x128xf32> -> vector<180x128xf32>
    %39 = arith.addf %34, %38 : vector<180x128xf32>
    %c1_46 = arith.constant 1 : index
    %c0_47 = arith.constant 0 : index
    %40 = vector.load %arg10[%c1_46, %c0_47] : memref<224x8xf32, #tpu.memory_space<vmem>>, vector<180x8xf32>
    %c1_48 = arith.constant 1 : index
    %c0_49 = arith.constant 0 : index
    %c0_50 = arith.constant 0 : index
    %41 = vector.load %arg5[%c1_48, %c0_49, %c0_50] : memref<9x8x128xf32, #tpu.memory_space<vmem>>, vector<1x8x128xf32>
    %42 = vector.shape_cast %41 : vector<1x8x128xf32> to vector<8x128xf32>
    %cst_51 = arith.constant dense<0.000000e+00> : vector<180x128xf32>
    %43 = tpu.matmul %40, %42, %cst_51 {dimension_numbers = #tpu.dot_dimension_numbers<[1], [0], [0], [1], [0, 0, 1, 1], [], []>} : vector<180x8xf32>, vector<8x128xf32>, vector<180x128xf32> -> vector<180x128xf32>
    %44 = arith.addf %39, %43 : vector<180x128xf32>
    %c2_52 = arith.constant 2 : index
    %c0_53 = arith.constant 0 : index
    %45 = vector.load %arg10[%c2_52, %c0_53] : memref<224x8xf32, #tpu.memory_space<vmem>>, vector<180x8xf32>
    %c2_54 = arith.constant 2 : index
    %c0_55 = arith.constant 0 : index
    %c0_56 = arith.constant 0 : index
    %46 = vector.load %arg5[%c2_54, %c0_55, %c0_56] : memref<9x8x128xf32, #tpu.memory_space<vmem>>, vector<1x8x128xf32>
    %47 = vector.shape_cast %46 : vector<1x8x128xf32> to vector<8x128xf32>
    %cst_57 = arith.constant dense<0.000000e+00> : vector<180x128xf32>
    %48 = tpu.matmul %45, %47, %cst_57 {dimension_numbers = #tpu.dot_dimension_numbers<[1], [0], [0], [1], [0, 0, 1, 1], [], []>} : vector<180x8xf32>, vector<8x128xf32>, vector<180x128xf32> -> vector<180x128xf32>
    %49 = arith.addf %44, %48 : vector<180x128xf32>
    %c18 = arith.constant 18 : index
    %c0_58 = arith.constant 0 : index
    %50 = vector.load %arg10[%c18, %c0_58] : memref<224x8xf32, #tpu.memory_space<vmem>>, vector<180x8xf32>
    %c3_59 = arith.constant 3 : index
    %c0_60 = arith.constant 0 : index
    %c0_61 = arith.constant 0 : index
    %51 = vector.load %arg5[%c3_59, %c0_60, %c0_61] : memref<9x8x128xf32, #tpu.memory_space<vmem>>, vector<1x8x128xf32>
    %52 = vector.shape_cast %51 : vector<1x8x128xf32> to vector<8x128xf32>
    %cst_62 = arith.constant dense<0.000000e+00> : vector<180x128xf32>
    %53 = tpu.matmul %50, %52, %cst_62 {dimension_numbers = #tpu.dot_dimension_numbers<[1], [0], [0], [1], [0, 0, 1, 1], [], []>} : vector<180x8xf32>, vector<8x128xf32>, vector<180x128xf32> -> vector<180x128xf32>
    %54 = arith.addf %49, %53 : vector<180x128xf32>
    %c19 = arith.constant 19 : index
    %c0_63 = arith.constant 0 : index
    %55 = vector.load %arg10[%c19, %c0_63] : memref<224x8xf32, #tpu.memory_space<vmem>>, vector<180x8xf32>
    %c4_64 = arith.constant 4 : index
    %c0_65 = arith.constant 0 : index
    %c0_66 = arith.constant 0 : index
    %56 = vector.load %arg5[%c4_64, %c0_65, %c0_66] : memref<9x8x128xf32, #tpu.memory_space<vmem>>, vector<1x8x128xf32>
    %57 = vector.shape_cast %56 : vector<1x8x128xf32> to vector<8x128xf32>
    %cst_67 = arith.constant dense<0.000000e+00> : vector<180x128xf32>
    %58 = tpu.matmul %55, %57, %cst_67 {dimension_numbers = #tpu.dot_dimension_numbers<[1], [0], [0], [1], [0, 0, 1, 1], [], []>} : vector<180x8xf32>, vector<8x128xf32>, vector<180x128xf32> -> vector<180x128xf32>
    %59 = arith.addf %54, %58 : vector<180x128xf32>
    %c20 = arith.constant 20 : index
    %c0_68 = arith.constant 0 : index
    %60 = vector.load %arg10[%c20, %c0_68] : memref<224x8xf32, #tpu.memory_space<vmem>>, vector<180x8xf32>
    %c5_69 = arith.constant 5 : index
    %c0_70 = arith.constant 0 : index
    %c0_71 = arith.constant 0 : index
    %61 = vector.load %arg5[%c5_69, %c0_70, %c0_71] : memref<9x8x128xf32, #tpu.memory_space<vmem>>, vector<1x8x128xf32>
    %62 = vector.shape_cast %61 : vector<1x8x128xf32> to vector<8x128xf32>
    %cst_72 = arith.constant dense<0.000000e+00> : vector<180x128xf32>
    %63 = tpu.matmul %60, %62, %cst_72 {dimension_numbers = #tpu.dot_dimension_numbers<[1], [0], [0], [1], [0, 0, 1, 1], [], []>} : vector<180x8xf32>, vector<8x128xf32>, vector<180x128xf32> -> vector<180x128xf32>
    %64 = arith.addf %59, %63 : vector<180x128xf32>
    %c36 = arith.constant 36 : index
    %c0_73 = arith.constant 0 : index
    %65 = vector.load %arg10[%c36, %c0_73] : memref<224x8xf32, #tpu.memory_space<vmem>>, vector<180x8xf32>
    %c6_74 = arith.constant 6 : index
    %c0_75 = arith.constant 0 : index
    %c0_76 = arith.constant 0 : index
    %66 = vector.load %arg5[%c6_74, %c0_75, %c0_76] : memref<9x8x128xf32, #tpu.memory_space<vmem>>, vector<1x8x128xf32>
    %67 = vector.shape_cast %66 : vector<1x8x128xf32> to vector<8x128xf32>
    %cst_77 = arith.constant dense<0.000000e+00> : vector<180x128xf32>
    %68 = tpu.matmul %65, %67, %cst_77 {dimension_numbers = #tpu.dot_dimension_numbers<[1], [0], [0], [1], [0, 0, 1, 1], [], []>} : vector<180x8xf32>, vector<8x128xf32>, vector<180x128xf32> -> vector<180x128xf32>
    %69 = arith.addf %64, %68 : vector<180x128xf32>
    %c37_78 = arith.constant 37 : index
    %c0_79 = arith.constant 0 : index
    %70 = vector.load %arg10[%c37_78, %c0_79] : memref<224x8xf32, #tpu.memory_space<vmem>>, vector<180x8xf32>
    %c7_80 = arith.constant 7 : index
    %c0_81 = arith.constant 0 : index
    %c0_82 = arith.constant 0 : index
    %71 = vector.load %arg5[%c7_80, %c0_81, %c0_82] : memref<9x8x128xf32, #tpu.memory_space<vmem>>, vector<1x8x128xf32>
    %72 = vector.shape_cast %71 : vector<1x8x128xf32> to vector<8x128xf32>
    %cst_83 = arith.constant dense<0.000000e+00> : vector<180x128xf32>
    %73 = tpu.matmul %70, %72, %cst_83 {dimension_numbers = #tpu.dot_dimension_numbers<[1], [0], [0], [1], [0, 0, 1, 1], [], []>} : vector<180x8xf32>, vector<8x128xf32>, vector<180x128xf32> -> vector<180x128xf32>
    %74 = arith.addf %69, %73 : vector<180x128xf32>
    %c38 = arith.constant 38 : index
    %c0_84 = arith.constant 0 : index
    %75 = vector.load %arg10[%c38, %c0_84] : memref<224x8xf32, #tpu.memory_space<vmem>>, vector<180x8xf32>
    %c8 = arith.constant 8 : index
    %c0_85 = arith.constant 0 : index
    %c0_86 = arith.constant 0 : index
    %76 = vector.load %arg5[%c8, %c0_85, %c0_86] : memref<9x8x128xf32, #tpu.memory_space<vmem>>, vector<1x8x128xf32>
    %77 = vector.shape_cast %76 : vector<1x8x128xf32> to vector<8x128xf32>
    %cst_87 = arith.constant dense<0.000000e+00> : vector<180x128xf32>
    %78 = tpu.matmul %75, %77, %cst_87 {dimension_numbers = #tpu.dot_dimension_numbers<[1], [0], [0], [1], [0, 0, 1, 1], [], []>} : vector<180x8xf32>, vector<8x128xf32>, vector<180x128xf32> -> vector<180x128xf32>
    %79 = arith.addf %74, %78 : vector<180x128xf32>
    %c0_88 = arith.constant 0 : index
    %c0_89 = arith.constant 0 : index
    %80 = vector.load %arg6[%c0_88, %c0_89] : memref<1x128xf32, #tpu.memory_space<vmem>>, vector<1x128xf32>
    %81 = vector.broadcast %80 : vector<1x128xf32> to vector<180x128xf32>
    %82 = arith.addf %79, %81 : vector<180x128xf32>
    %cst_90 = arith.constant 0.000000e+00 : f32
    %83 = vector.broadcast %cst_90 : f32 to vector<180x128xf32>
    %84 = arith.maximumf %82, %83 : vector<180x128xf32>
    %c0_i32_91 = arith.constant 0 : i32
    %85 = arith.cmpi sgt, %arg1, %c0_i32_91 : i32
    %86 = arith.extui %85 : i1 to i32
    %c0_i32_92 = arith.constant 0 : i32
    %87 = arith.cmpi ne, %86, %c0_i32_92 : i32
    scf.if %87 {
      %193 = vector.extract_strided_slice %84 {offsets = [0, 0], sizes = [16, 128], strides = [1, 1]} : vector<180x128xf32> to vector<16x128xf32>
      %c1_201 = arith.constant 1 : index
      %c0_202 = arith.constant 0 : index
      %194 = vector.load %arg11[%c1_201, %c0_202] : memref<188x128xf32, #tpu.memory_space<vmem>>, vector<16x128xf32>
      tpu.vector_store %arg11[%c1_201, %c0_202], %193 {strides = array<i32>} : memref<188x128xf32, #tpu.memory_space<vmem>>, vector<16x128xf32>,
    } else {
    }
    %88 = vector.extract_strided_slice %84 {offsets = [18, 0], sizes = [16, 128], strides = [1, 1]} : vector<180x128xf32> to vector<16x128xf32>
    %c19_93 = arith.constant 19 : index
    %c0_94 = arith.constant 0 : index
    %89 = vector.load %arg11[%c19_93, %c0_94] : memref<188x128xf32, #tpu.memory_space<vmem>>, vector<16x128xf32>
    tpu.vector_store %arg11[%c19_93, %c0_94], %88 {strides = array<i32>} : memref<188x128xf32, #tpu.memory_space<vmem>>, vector<16x128xf32>,
    %90 = vector.extract_strided_slice %84 {offsets = [36, 0], sizes = [16, 128], strides = [1, 1]} : vector<180x128xf32> to vector<16x128xf32>
    %c37_95 = arith.constant 37 : index
    %c0_96 = arith.constant 0 : index
    %91 = vector.load %arg11[%c37_95, %c0_96] : memref<188x128xf32, #tpu.memory_space<vmem>>, vector<16x128xf32>
    tpu.vector_store %arg11[%c37_95, %c0_96], %90 {strides = array<i32>} : memref<188x128xf32, #tpu.memory_space<vmem>>, vector<16x128xf32>,
    %92 = vector.extract_strided_slice %84 {offsets = [54, 0], sizes = [16, 128], strides = [1, 1]} : vector<180x128xf32> to vector<16x128xf32>
    %c55_97 = arith.constant 55 : index
    %c0_98 = arith.constant 0 : index
    %93 = vector.load %arg11[%c55_97, %c0_98] : memref<188x128xf32, #tpu.memory_space<vmem>>, vector<16x128xf32>
    tpu.vector_store %arg11[%c55_97, %c0_98], %92 {strides = array<i32>} : memref<188x128xf32, #tpu.memory_space<vmem>>, vector<16x128xf32>,
    %94 = vector.extract_strided_slice %84 {offsets = [72, 0], sizes = [16, 128], strides = [1, 1]} : vector<180x128xf32> to vector<16x128xf32>
    %c73_99 = arith.constant 73 : index
    %c0_100 = arith.constant 0 : index
    %95 = vector.load %arg11[%c73_99, %c0_100] : memref<188x128xf32, #tpu.memory_space<vmem>>, vector<16x128xf32>
    tpu.vector_store %arg11[%c73_99, %c0_100], %94 {strides = array<i32>} : memref<188x128xf32, #tpu.memory_space<vmem>>, vector<16x128xf32>,
    %96 = vector.extract_strided_slice %84 {offsets = [90, 0], sizes = [16, 128], strides = [1, 1]} : vector<180x128xf32> to vector<16x128xf32>
    %c91_101 = arith.constant 91 : index
    %c0_102 = arith.constant 0 : index
    %97 = vector.load %arg11[%c91_101, %c0_102] : memref<188x128xf32, #tpu.memory_space<vmem>>, vector<16x128xf32>
    tpu.vector_store %arg11[%c91_101, %c0_102], %96 {strides = array<i32>} : memref<188x128xf32, #tpu.memory_space<vmem>>, vector<16x128xf32>,
    %98 = vector.extract_strided_slice %84 {offsets = [108, 0], sizes = [16, 128], strides = [1, 1]} : vector<180x128xf32> to vector<16x128xf32>
    %c109_103 = arith.constant 109 : index
    %c0_104 = arith.constant 0 : index
    %99 = vector.load %arg11[%c109_103, %c0_104] : memref<188x128xf32, #tpu.memory_space<vmem>>, vector<16x128xf32>
    tpu.vector_store %arg11[%c109_103, %c0_104], %98 {strides = array<i32>} : memref<188x128xf32, #tpu.memory_space<vmem>>, vector<16x128xf32>,
    %100 = vector.extract_strided_slice %84 {offsets = [126, 0], sizes = [16, 128], strides = [1, 1]} : vector<180x128xf32> to vector<16x128xf32>
    %c127_105 = arith.constant 127 : index
    %c0_106 = arith.constant 0 : index
    %101 = vector.load %arg11[%c127_105, %c0_106] : memref<188x128xf32, #tpu.memory_space<vmem>>, vector<16x128xf32>
    tpu.vector_store %arg11[%c127_105, %c0_106], %100 {strides = array<i32>} : memref<188x128xf32, #tpu.memory_space<vmem>>, vector<16x128xf32>,
    %102 = vector.extract_strided_slice %84 {offsets = [144, 0], sizes = [16, 128], strides = [1, 1]} : vector<180x128xf32> to vector<16x128xf32>
    %c145_107 = arith.constant 145 : index
    %c0_108 = arith.constant 0 : index
    %103 = vector.load %arg11[%c145_107, %c0_108] : memref<188x128xf32, #tpu.memory_space<vmem>>, vector<16x128xf32>
    tpu.vector_store %arg11[%c145_107, %c0_108], %102 {strides = array<i32>} : memref<188x128xf32, #tpu.memory_space<vmem>>, vector<16x128xf32>,
    %c1_i32_109 = arith.constant 1 : i32
    %104 = arith.cmpi slt, %arg1, %c1_i32_109 : i32
    %105 = arith.extui %104 : i1 to i32
    %c0_i32_110 = arith.constant 0 : i32
    %106 = arith.cmpi ne, %105, %c0_i32_110 : i32
    scf.if %106 {
      %193 = vector.extract_strided_slice %84 {offsets = [162, 0], sizes = [16, 128], strides = [1, 1]} : vector<180x128xf32> to vector<16x128xf32>
      %c163_201 = arith.constant 163 : index
      %c0_202 = arith.constant 0 : index
      %194 = vector.load %arg11[%c163_201, %c0_202] : memref<188x128xf32, #tpu.memory_space<vmem>>, vector<16x128xf32>
      tpu.vector_store %arg11[%c163_201, %c0_202], %193 {strides = array<i32>} : memref<188x128xf32, #tpu.memory_space<vmem>>, vector<16x128xf32>,
    } else {
    }
    %cst_111 = arith.constant 0.000000e+00 : f32
    %107 = vector.broadcast %cst_111 : f32 to vector<144x384xf32>
    %c0_112 = arith.constant 0 : index
    %c0_113 = arith.constant 0 : index
    %108 = vector.load %arg11[%c0_112, %c0_113] : memref<188x128xf32, #tpu.memory_space<vmem>>, vector<144x128xf32>
    %c0_114 = arith.constant 0 : index
    %c0_115 = arith.constant 0 : index
    %c0_116 = arith.constant 0 : index
    %109 = vector.load %arg7[%c0_114, %c0_115, %c0_116] : memref<9x128x384xf32, #tpu.memory_space<vmem>>, vector<1x128x384xf32>
    %110 = vector.shape_cast %109 : vector<1x128x384xf32> to vector<128x384xf32>
    %cst_117 = arith.constant dense<0.000000e+00> : vector<144x384xf32>
    %111 = tpu.matmul %108, %110, %cst_117 {dimension_numbers = #tpu.dot_dimension_numbers<[1], [0], [0], [1], [0, 0, 1, 1], [], []>} : vector<144x128xf32>, vector<128x384xf32>, vector<144x384xf32> -> vector<144x384xf32>
    %112 = arith.addf %107, %111 : vector<144x384xf32>
    %c1_118 = arith.constant 1 : index
    %c0_119 = arith.constant 0 : index
    %113 = vector.load %arg11[%c1_118, %c0_119] : memref<188x128xf32, #tpu.memory_space<vmem>>, vector<144x128xf32>
    %c1_120 = arith.constant 1 : index
    %c0_121 = arith.constant 0 : index
    %c0_122 = arith.constant 0 : index
    %114 = vector.load %arg7[%c1_120, %c0_121, %c0_122] : memref<9x128x384xf32, #tpu.memory_space<vmem>>, vector<1x128x384xf32>
    %115 = vector.shape_cast %114 : vector<1x128x384xf32> to vector<128x384xf32>
    %cst_123 = arith.constant dense<0.000000e+00> : vector<144x384xf32>
    %116 = tpu.matmul %113, %115, %cst_123 {dimension_numbers = #tpu.dot_dimension_numbers<[1], [0], [0], [1], [0, 0, 1, 1], [], []>} : vector<144x128xf32>, vector<128x384xf32>, vector<144x384xf32> -> vector<144x384xf32>
    %117 = arith.addf %112, %116 : vector<144x384xf32>
    %c2_124 = arith.constant 2 : index
    %c0_125 = arith.constant 0 : index
    %118 = vector.load %arg11[%c2_124, %c0_125] : memref<188x128xf32, #tpu.memory_space<vmem>>, vector<144x128xf32>
    %c2_126 = arith.constant 2 : index
    %c0_127 = arith.constant 0 : index
    %c0_128 = arith.constant 0 : index
    %119 = vector.load %arg7[%c2_126, %c0_127, %c0_128] : memref<9x128x384xf32, #tpu.memory_space<vmem>>, vector<1x128x384xf32>
    %120 = vector.shape_cast %119 : vector<1x128x384xf32> to vector<128x384xf32>
    %cst_129 = arith.constant dense<0.000000e+00> : vector<144x384xf32>
    %121 = tpu.matmul %118, %120, %cst_129 {dimension_numbers = #tpu.dot_dimension_numbers<[1], [0], [0], [1], [0, 0, 1, 1], [], []>} : vector<144x128xf32>, vector<128x384xf32>, vector<144x384xf32> -> vector<144x384xf32>
    %122 = arith.addf %117, %121 : vector<144x384xf32>
    %c18_130 = arith.constant 18 : index
    %c0_131 = arith.constant 0 : index
    %123 = vector.load %arg11[%c18_130, %c0_131] : memref<188x128xf32, #tpu.memory_space<vmem>>, vector<144x128xf32>
    %c3_132 = arith.constant 3 : index
    %c0_133 = arith.constant 0 : index
    %c0_134 = arith.constant 0 : index
    %124 = vector.load %arg7[%c3_132, %c0_133, %c0_134] : memref<9x128x384xf32, #tpu.memory_space<vmem>>, vector<1x128x384xf32>
    %125 = vector.shape_cast %124 : vector<1x128x384xf32> to vector<128x384xf32>
    %cst_135 = arith.constant dense<0.000000e+00> : vector<144x384xf32>
    %126 = tpu.matmul %123, %125, %cst_135 {dimension_numbers = #tpu.dot_dimension_numbers<[1], [0], [0], [1], [0, 0, 1, 1], [], []>} : vector<144x128xf32>, vector<128x384xf32>, vector<144x384xf32> -> vector<144x384xf32>
    %127 = arith.addf %122, %126 : vector<144x384xf32>
    %c19_136 = arith.constant 19 : index
    %c0_137 = arith.constant 0 : index
    %128 = vector.load %arg11[%c19_136, %c0_137] : memref<188x128xf32, #tpu.memory_space<vmem>>, vector<144x128xf32>
    %c4_138 = arith.constant 4 : index
    %c0_139 = arith.constant 0 : index
    %c0_140 = arith.constant 0 : index
    %129 = vector.load %arg7[%c4_138, %c0_139, %c0_140] : memref<9x128x384xf32, #tpu.memory_space<vmem>>, vector<1x128x384xf32>
    %130 = vector.shape_cast %129 : vector<1x128x384xf32> to vector<128x384xf32>
    %cst_141 = arith.constant dense<0.000000e+00> : vector<144x384xf32>
    %131 = tpu.matmul %128, %130, %cst_141 {dimension_numbers = #tpu.dot_dimension_numbers<[1], [0], [0], [1], [0, 0, 1, 1], [], []>} : vector<144x128xf32>, vector<128x384xf32>, vector<144x384xf32> -> vector<144x384xf32>
    %132 = arith.addf %127, %131 : vector<144x384xf32>
    %c20_142 = arith.constant 20 : index
    %c0_143 = arith.constant 0 : index
    %133 = vector.load %arg11[%c20_142, %c0_143] : memref<188x128xf32, #tpu.memory_space<vmem>>, vector<144x128xf32>
    %c5_144 = arith.constant 5 : index
    %c0_145 = arith.constant 0 : index
    %c0_146 = arith.constant 0 : index
    %134 = vector.load %arg7[%c5_144, %c0_145, %c0_146] : memref<9x128x384xf32, #tpu.memory_space<vmem>>, vector<1x128x384xf32>
    %135 = vector.shape_cast %134 : vector<1x128x384xf32> to vector<128x384xf32>
    %cst_147 = arith.constant dense<0.000000e+00> : vector<144x384xf32>
    %136 = tpu.matmul %133, %135, %cst_147 {dimension_numbers = #tpu.dot_dimension_numbers<[1], [0], [0], [1], [0, 0, 1, 1], [], []>} : vector<144x128xf32>, vector<128x384xf32>, vector<144x384xf32> -> vector<144x384xf32>
    %137 = arith.addf %132, %136 : vector<144x384xf32>
    %c36_148 = arith.constant 36 : index
    %c0_149 = arith.constant 0 : index
    %138 = vector.load %arg11[%c36_148, %c0_149] : memref<188x128xf32, #tpu.memory_space<vmem>>, vector<144x128xf32>
    %c6_150 = arith.constant 6 : index
    %c0_151 = arith.constant 0 : index
    %c0_152 = arith.constant 0 : index
    %139 = vector.load %arg7[%c6_150, %c0_151, %c0_152] : memref<9x128x384xf32, #tpu.memory_space<vmem>>, vector<1x128x384xf32>
    %140 = vector.shape_cast %139 : vector<1x128x384xf32> to vector<128x384xf32>
    %cst_153 = arith.constant dense<0.000000e+00> : vector<144x384xf32>
    %141 = tpu.matmul %138, %140, %cst_153 {dimension_numbers = #tpu.dot_dimension_numbers<[1], [0], [0], [1], [0, 0, 1, 1], [], []>} : vector<144x128xf32>, vector<128x384xf32>, vector<144x384xf32> -> vector<144x384xf32>
    %142 = arith.addf %137, %141 : vector<144x384xf32>
    %c37_154 = arith.constant 37 : index
    %c0_155 = arith.constant 0 : index
    %143 = vector.load %arg11[%c37_154, %c0_155] : memref<188x128xf32, #tpu.memory_space<vmem>>, vector<144x128xf32>
    %c7_156 = arith.constant 7 : index
    %c0_157 = arith.constant 0 : index
    %c0_158 = arith.constant 0 : index
    %144 = vector.load %arg7[%c7_156, %c0_157, %c0_158] : memref<9x128x384xf32, #tpu.memory_space<vmem>>, vector<1x128x384xf32>
    %145 = vector.shape_cast %144 : vector<1x128x384xf32> to vector<128x384xf32>
    %cst_159 = arith.constant dense<0.000000e+00> : vector<144x384xf32>
    %146 = tpu.matmul %143, %145, %cst_159 {dimension_numbers = #tpu.dot_dimension_numbers<[1], [0], [0], [1], [0, 0, 1, 1], [], []>} : vector<144x128xf32>, vector<128x384xf32>, vector<144x384xf32> -> vector<144x384xf32>
    %147 = arith.addf %142, %146 : vector<144x384xf32>
    %c38_160 = arith.constant 38 : index
    %c0_161 = arith.constant 0 : index
    %148 = vector.load %arg11[%c38_160, %c0_161] : memref<188x128xf32, #tpu.memory_space<vmem>>, vector<144x128xf32>
    %c8_162 = arith.constant 8 : index
    %c0_163 = arith.constant 0 : index
    %c0_164 = arith.constant 0 : index
    %149 = vector.load %arg7[%c8_162, %c0_163, %c0_164] : memref<9x128x384xf32, #tpu.memory_space<vmem>>, vector<1x128x384xf32>
    %150 = vector.shape_cast %149 : vector<1x128x384xf32> to vector<128x384xf32>
    %cst_165 = arith.constant dense<0.000000e+00> : vector<144x384xf32>
    %151 = tpu.matmul %148, %150, %cst_165 {dimension_numbers = #tpu.dot_dimension_numbers<[1], [0], [0], [1], [0, 0, 1, 1], [], []>} : vector<144x128xf32>, vector<128x384xf32>, vector<144x384xf32> -> vector<144x384xf32>
    %152 = arith.addf %147, %151 : vector<144x384xf32>
    %c0_166 = arith.constant 0 : index
    %c0_167 = arith.constant 0 : index
    %153 = vector.load %arg8[%c0_166, %c0_167] : memref<1x384xf32, #tpu.memory_space<vmem>>, vector<1x384xf32>
    %154 = vector.broadcast %153 : vector<1x384xf32> to vector<144x384xf32>
    %155 = arith.addf %152, %154 : vector<144x384xf32>
    %156 = arith.negf %155 : vector<144x384xf32>
    %157 = math.exp %156 : vector<144x384xf32>
    %cst_168 = arith.constant 1.000000e+00 : f32
    %158 = vector.broadcast %cst_168 : f32 to vector<144x384xf32>
    %159 = arith.addf %158, %157 : vector<144x384xf32>
    %160 = arith.divf %158, %159 : vector<144x384xf32>
    %161 = vector.extract_strided_slice %160 {offsets = [0, 0], sizes = [16, 384], strides = [1, 1]} : vector<144x384xf32> to vector<16x384xf32>
    %c0_169 = arith.constant 0 : index
    %c0_170 = arith.constant 0 : index
    %c0_171 = arith.constant 0 : index
    %c0_172 = arith.constant 0 : index
    %162 = vector.load %arg9[%c0_169, %c0_170, %c0_171, %c0_172] : memref<1x8x16x384xf32, #tpu.memory_space<vmem>>, vector<1x1x16x384xf32>
    %163 = vector.shape_cast %162 : vector<1x1x16x384xf32> to vector<16x384xf32>
    %164 = vector.shape_cast %161 : vector<16x384xf32> to vector<1x1x16x384xf32>
    tpu.vector_store %arg9[%c0_169, %c0_170, %c0_171, %c0_172], %164 {strides = array<i32>} : memref<1x8x16x384xf32, #tpu.memory_space<vmem>>, vector<1x1x16x384xf32>,
    %165 = vector.extract_strided_slice %160 {offsets = [18, 0], sizes = [16, 384], strides = [1, 1]} : vector<144x384xf32> to vector<16x384xf32>
    %c0_173 = arith.constant 0 : index
    %c1_174 = arith.constant 1 : index
    %c0_175 = arith.constant 0 : index
    %c0_176 = arith.constant 0 : index
    %166 = vector.load %arg9[%c0_173, %c1_174, %c0_175, %c0_176] : memref<1x8x16x384xf32, #tpu.memory_space<vmem>>, vector<1x1x16x384xf32>
    %167 = vector.shape_cast %166 : vector<1x1x16x384xf32> to vector<16x384xf32>
    %168 = vector.shape_cast %165 : vector<16x384xf32> to vector<1x1x16x384xf32>
    tpu.vector_store %arg9[%c0_173, %c1_174, %c0_175, %c0_176], %168 {strides = array<i32>} : memref<1x8x16x384xf32, #tpu.memory_space<vmem>>, vector<1x1x16x384xf32>,
    %169 = vector.extract_strided_slice %160 {offsets = [36, 0], sizes = [16, 384], strides = [1, 1]} : vector<144x384xf32> to vector<16x384xf32>
    %c0_177 = arith.constant 0 : index
    %c2_178 = arith.constant 2 : index
    %c0_179 = arith.constant 0 : index
    %c0_180 = arith.constant 0 : index
    %170 = vector.load %arg9[%c0_177, %c2_178, %c0_179, %c0_180] : memref<1x8x16x384xf32, #tpu.memory_space<vmem>>, vector<1x1x16x384xf32>
    %171 = vector.shape_cast %170 : vector<1x1x16x384xf32> to vector<16x384xf32>
    %172 = vector.shape_cast %169 : vector<16x384xf32> to vector<1x1x16x384xf32>
    tpu.vector_store %arg9[%c0_177, %c2_178, %c0_179, %c0_180], %172 {strides = array<i32>} : memref<1x8x16x384xf32, #tpu.memory_space<vmem>>, vector<1x1x16x384xf32>,
    %173 = vector.extract_strided_slice %160 {offsets = [54, 0], sizes = [16, 384], strides = [1, 1]} : vector<144x384xf32> to vector<16x384xf32>
    %c0_181 = arith.constant 0 : index
    %c3_182 = arith.constant 3 : index
    %c0_183 = arith.constant 0 : index
    %c0_184 = arith.constant 0 : index
    %174 = vector.load %arg9[%c0_181, %c3_182, %c0_183, %c0_184] : memref<1x8x16x384xf32, #tpu.memory_space<vmem>>, vector<1x1x16x384xf32>
    %175 = vector.shape_cast %174 : vector<1x1x16x384xf32> to vector<16x384xf32>
    %176 = vector.shape_cast %173 : vector<16x384xf32> to vector<1x1x16x384xf32>
    tpu.vector_store %arg9[%c0_181, %c3_182, %c0_183, %c0_184], %176 {strides = array<i32>} : memref<1x8x16x384xf32, #tpu.memory_space<vmem>>, vector<1x1x16x384xf32>,
    %177 = vector.extract_strided_slice %160 {offsets = [72, 0], sizes = [16, 384], strides = [1, 1]} : vector<144x384xf32> to vector<16x384xf32>
    %c0_185 = arith.constant 0 : index
    %c4_186 = arith.constant 4 : index
    %c0_187 = arith.constant 0 : index
    %c0_188 = arith.constant 0 : index
    %178 = vector.load %arg9[%c0_185, %c4_186, %c0_187, %c0_188] : memref<1x8x16x384xf32, #tpu.memory_space<vmem>>, vector<1x1x16x384xf32>
    %179 = vector.shape_cast %178 : vector<1x1x16x384xf32> to vector<16x384xf32>
    %180 = vector.shape_cast %177 : vector<16x384xf32> to vector<1x1x16x384xf32>
    tpu.vector_store %arg9[%c0_185, %c4_186, %c0_187, %c0_188], %180 {strides = array<i32>} : memref<1x8x16x384xf32, #tpu.memory_space<vmem>>, vector<1x1x16x384xf32>,
    %181 = vector.extract_strided_slice %160 {offsets = [90, 0], sizes = [16, 384], strides = [1, 1]} : vector<144x384xf32> to vector<16x384xf32>
    %c0_189 = arith.constant 0 : index
    %c5_190 = arith.constant 5 : index
    %c0_191 = arith.constant 0 : index
    %c0_192 = arith.constant 0 : index
    %182 = vector.load %arg9[%c0_189, %c5_190, %c0_191, %c0_192] : memref<1x8x16x384xf32, #tpu.memory_space<vmem>>, vector<1x1x16x384xf32>
    %183 = vector.shape_cast %182 : vector<1x1x16x384xf32> to vector<16x384xf32>
    %184 = vector.shape_cast %181 : vector<16x384xf32> to vector<1x1x16x384xf32>
    tpu.vector_store %arg9[%c0_189, %c5_190, %c0_191, %c0_192], %184 {strides = array<i32>} : memref<1x8x16x384xf32, #tpu.memory_space<vmem>>, vector<1x1x16x384xf32>,
    %185 = vector.extract_strided_slice %160 {offsets = [108, 0], sizes = [16, 384], strides = [1, 1]} : vector<144x384xf32> to vector<16x384xf32>
    %c0_193 = arith.constant 0 : index
    %c6_194 = arith.constant 6 : index
    %c0_195 = arith.constant 0 : index
    %c0_196 = arith.constant 0 : index
    %186 = vector.load %arg9[%c0_193, %c6_194, %c0_195, %c0_196] : memref<1x8x16x384xf32, #tpu.memory_space<vmem>>, vector<1x1x16x384xf32>
    %187 = vector.shape_cast %186 : vector<1x1x16x384xf32> to vector<16x384xf32>
    %188 = vector.shape_cast %185 : vector<16x384xf32> to vector<1x1x16x384xf32>
    tpu.vector_store %arg9[%c0_193, %c6_194, %c0_195, %c0_196], %188 {strides = array<i32>} : memref<1x8x16x384xf32, #tpu.memory_space<vmem>>, vector<1x1x16x384xf32>,
    %189 = vector.extract_strided_slice %160 {offsets = [126, 0], sizes = [16, 384], strides = [1, 1]} : vector<144x384xf32> to vector<16x384xf32>
    %c0_197 = arith.constant 0 : index
    %c7_198 = arith.constant 7 : index
    %c0_199 = arith.constant 0 : index
    %c0_200 = arith.constant 0 : index
    %190 = vector.load %arg9[%c0_197, %c7_198, %c0_199, %c0_200] : memref<1x8x16x384xf32, #tpu.memory_space<vmem>>, vector<1x1x16x384xf32>
    %191 = vector.shape_cast %190 : vector<1x1x16x384xf32> to vector<16x384xf32>
    %192 = vector.shape_cast %189 : vector<16x384xf32> to vector<1x1x16x384xf32>
    tpu.vector_store %arg9[%c0_197, %c7_198, %c0_199, %c0_200], %192 {strides = array<i32>} : memref<1x8x16x384xf32, #tpu.memory_space<vmem>>, vector<1x1x16x384xf32>,
    return
  }
  func.func @transform_0(%arg0: i32, %arg1: i32) -> (i32, i32, i32, i32) {
    %c0_i32 = arith.constant 0 : i32
    %c0_i32_0 = arith.constant 0 : i32
    %c0_i32_1 = arith.constant 0 : i32
    return %arg0, %arg1, %c0_i32, %c0_i32_0 : i32, i32, i32, i32
  }
  func.func @transform_1(%arg0: i32, %arg1: i32) -> (i32, i32, i32, i32) {
    %c4_i32 = arith.constant 4 : i32
    %0 = arith.muli %arg1, %c4_i32 : i32
    %c1_i32 = arith.constant 1 : i32
    %1 = arith.subi %0, %c1_i32 : i32
    %c0_i32 = arith.constant 0 : i32
    %2 = arith.maxsi %1, %c0_i32 : i32
    %c0_i32_0 = arith.constant 0 : i32
    %c0_i32_1 = arith.constant 0 : i32
    %c0_i32_2 = arith.constant 0 : i32
    return %arg0, %2, %c0_i32_0, %c0_i32_1 : i32, i32, i32, i32
  }
  func.func @transform_2(%arg0: i32, %arg1: i32) -> (i32, i32, i32, i32) {
    %c1_i32 = arith.constant 1 : i32
    %0 = arith.addi %arg1, %c1_i32 : i32
    %c4_i32 = arith.constant 4 : i32
    %1 = arith.muli %0, %c4_i32 : i32
    %c7_i32 = arith.constant 7 : i32
    %2 = arith.minsi %1, %c7_i32 : i32
    %c0_i32 = arith.constant 0 : i32
    %c0_i32_0 = arith.constant 0 : i32
    %c0_i32_1 = arith.constant 0 : i32
    return %arg0, %2, %c0_i32, %c0_i32_0 : i32, i32, i32, i32
  }
  func.func @transform_3(%arg0: i32, %arg1: i32) -> (i32, i32, i32) {
    %c0_i32 = arith.constant 0 : i32
    %c0_i32_0 = arith.constant 0 : i32
    %c0_i32_1 = arith.constant 0 : i32
    %c0_i32_2 = arith.constant 0 : i32
    return %c0_i32, %c0_i32_0, %c0_i32_1 : i32, i32, i32
  }
  func.func @transform_4(%arg0: i32, %arg1: i32) -> (i32, i32) {
    %c0_i32 = arith.constant 0 : i32
    %c0_i32_0 = arith.constant 0 : i32
    %c0_i32_1 = arith.constant 0 : i32
    return %c0_i32, %c0_i32_0 : i32, i32
  }
  func.func @transform_5(%arg0: i32, %arg1: i32) -> (i32, i32, i32) {
    %c0_i32 = arith.constant 0 : i32
    %c0_i32_0 = arith.constant 0 : i32
    %c0_i32_1 = arith.constant 0 : i32
    %c0_i32_2 = arith.constant 0 : i32
    return %c0_i32, %c0_i32_0, %c0_i32_1 : i32, i32, i32
  }
  func.func @transform_6(%arg0: i32, %arg1: i32) -> (i32, i32) {
    %c0_i32 = arith.constant 0 : i32
    %c0_i32_0 = arith.constant 0 : i32
    %c0_i32_1 = arith.constant 0 : i32
    return %c0_i32, %c0_i32_0 : i32, i32
  }
  func.func @transform_7(%arg0: i32, %arg1: i32) -> (i32, i32, i32, i32) {
    %c0_i32 = arith.constant 0 : i32
    %c0_i32_0 = arith.constant 0 : i32
    %c0_i32_1 = arith.constant 0 : i32
    return %arg0, %arg1, %c0_i32, %c0_i32_0 : i32, i32, i32, i32
  }
}

</mosaic_0001>

<llo_original>
// kernel: tpu_custom_call.1
$region0: #{tpu_custom_call.1}
  #allocation0 [shape = 'u32[]', space=smem, size = 0x4, offset = 0x4, fixed_abs, tag = 'smem constant byte address 0x4 - core index']
  #allocation1 [shape = 'u32[144,128]{1,0:T(1,128)}', space=vmem, size = 0x12000, scoped, tag = 'internal scratch']
  #allocation2 [shape = 'f32[224,8]{1,0:T(8,128)}', space=vmem, size = 0x1c000, scoped, tag = 'scratch operand']
  #allocation3 [shape = 'f32[188,128]{1,0:T(8,128)}', space=vmem, size = 0x18000, scoped, tag = 'scratch operand']
  %s0 = inlined_call_operand.hbm [shape: f32[2,16,16,8], index: 0, kind: input, shape index: {}]
  %s1 = inlined_call_operand.hbm [shape: f32[2,16,16,8], index: 1, kind: input, shape index: {}]
  %s2 = inlined_call_operand.hbm [shape: f32[2,16,16,8], index: 2, kind: input, shape index: {}]
  %s3 = inlined_call_operand.hbm [shape: f32[9,8,128], index: 3, kind: input, shape index: {}]
  %s4 = inlined_call_operand.hbm [shape: f32[1,128], index: 4, kind: input, shape index: {}]
  %s5 = inlined_call_operand.hbm [shape: f32[9,128,384], index: 5, kind: input, shape index: {}]
  %s6 = inlined_call_operand.hbm [shape: f32[1,384], index: 6, kind: input, shape index: {}]
  %s7 = inlined_call_operand.hbm [shape: f32[2,16,16,384], index: 7, kind: output, shape index: {}]
  %s8 = sld [smem:[#allocation0]]
  $region105: #{tpu_custom_call.1} parent=0
    _
  %s10 = ssub.s32 1, %s8
  %s11 = scalar_select 0, %s10, %s8
  $region1: #{tpu_custom_call.1} parent=0
    #allocation4 [shape = 'u8[131072]{0}', space=vmem, size = 0x20000, scoped, tag = 'input window, operand 0']
    #allocation5 [shape = 's32[2]{0}', space=sflag, size = 0x8, scoped, tag = 'scoped memory for tpu_custom_call.1']
    #allocation6 [shape = 's32[2]{0}', space=sflag, size = 0x8, scoped, tag = 'scoped memory for tpu_custom_call.1']
    #allocation7 [shape = 'u8[32768]{0}', space=vmem, size = 0x8000, scoped, tag = 'input window, operand 1']
    #allocation8 [shape = 's32[2]{0}', space=sflag, size = 0x8, scoped, tag = 'scoped memory for tpu_custom_call.1']
    #allocation9 [shape = 'u8[32768]{0}', space=vmem, size = 0x8000, scoped, tag = 'input window, operand 2']
    #allocation10 [shape = 'u8[36864]{0}', space=vmem, size = 0x9000, scoped, tag = 'input window, operand 3, single buffered']
    #allocation11 [shape = 's32[1]{0}', space=sflag, size = 0x4, scoped, tag = 'scoped memory for tpu_custom_call.1']
    #allocation12 [shape = 'u8[512]{0}', space=vmem, size = 0x400, scoped, tag = 'input window, operand 4, single buffered']
    #allocation13 [shape = 'u8[1769472]{0}', space=vmem, size = 0x1b0000, scoped, tag = 'input window, operand 5, single buffered']
    #allocation14 [shape = 's32[1]{0}', space=sflag, size = 0x4, scoped, tag = 'scoped memory for tpu_custom_call.1']
    #allocation15 [shape = 'u8[1536]{0}', space=vmem, size = 0x800, scoped, tag = 'input window, operand 6, single buffered']
    #allocation16 [shape = 'u8[393216]{0}', space=vmem, size = 0x60000, scoped, tag = 'output window, operand 0']
    %12 = vsyncpa [#allocation5], 0
    %s13 = scalar_lea.sflag [#allocation5], 1
    %14 = vsyncpa %s13, 0
    %15 = vsyncpa [#allocation8], 0
    %s16 = scalar_lea.sflag [#allocation8], 1
    %17 = vsyncpa %s16, 0
    %18 = vsyncpa [#allocation11], 0
    %19 = vsyncpa [#allocation14], 0
    %20 = vsyncpa [#allocation6], 0
    %s21 = scalar_lea.sflag [#allocation6], 1
    %22 = vsyncpa %s21, 0
    loop: start=0, step=1, limit=6
    $region2: #{tpu_custom_call.1} parent=1 // loop_pre_header
      _
    $region3: #{tpu_custom_call.1} parent=1 // loop_header
      %s24 = sphi 0, %s28
      %p25 = scmp.ge.s32.totalorder %s24, 6
      %s31 = sphi 0, %s43
      %s32 = sphi 0, %s39
      %s33 = sphi 0, %s31
      %s34 = sphi 0, %s32
      %s35 = sphi 0, %s33
      %s36 = sphi 0, %s34
      %s48 = sphi 0, %s50
      %s51 = sphi 0, %s48
      %s52 = sphi 0, %s51
      %s68 = sphi 0, %s52
      %s84 = sphi 0, %s86
      %s87 = sphi 0, %s84
      %s88 = sphi 0, %s87
      %s104 = sphi 0, %s88
      %s120 = sphi 0, %s122
      %s123 = sphi 0, %s120
      %s124 = sphi 0, %s123
      %s140 = sphi 0, %s124
      %s144 = sphi 0, %s144
      %s146 = sphi 0, %s144
      %s147 = sphi 0, %s146
      %s161 = sphi 0, %s147
      %s165 = sphi 0, %s165
      %s167 = sphi 0, %s165
      %s168 = sphi 0, %s167
      %s182 = sphi 0, %s168
      %s186 = sphi 0, %s186
      %s188 = sphi 0, %s186
      %s189 = sphi 0, %s188
      %s203 = sphi 0, %s189
      %s207 = sphi 0, %s207
      %s209 = sphi 0, %s207
      %s210 = sphi 0, %s209
      %s224 = sphi 0, %s210
      %s232 = sphi 0, %s234
      %s235 = sphi 0, %s232
      %s236 = sphi 0, %s235
      %s252 = sphi 0, %s236
    $region4: #{tpu_custom_call.1} parent=1 // loop_header_branch
      %27 = sbr.rel (%p25) target = $region8
    $region5: #{tpu_custom_call.1} parent=1 // loop_body
      %s29 = ssub.s32 %s24, 1
      %s30 = ssub.s32 %s24, 2
      %s37 = sadd.s32 1, %s32
      %p38 = scmp.ge.s32.totalorder %s37, 2
      %s39 = scalar_select %p38, 0, %s37
      %s40 = sadd.s32 1, %s31
      %s41 = scalar_select %p38, %s40, %s31
      %p42 = scmp.ge.s32.totalorder %s41, 2
      %s43 = scalar_select %p42, 0, %s41
      %s44 = ssub.s32 %s31, %s43
      %s45 = ssub.s32 %s32, %s39
      %s46 = sor.u32 %s44, %s45
      %p47 = scmp.eq.s32.totalorder %s46, 0
      %s49 = sadd.s32 %s48, 1
      %s50 = scalar_select %p47, %s48, %s49
      %p53 = pneg %p47
      %p54 = scmp.eq.s32.totalorder %s24, 3
      %p55 = por %p53, %p54
      %p56 = scmp.ne.s32.totalorder %s48, %s51
      %p57 = scmp.eq.s32.totalorder %s24, 0
      %p58 = por %p56, %p57
      %p59 = scmp.ne.s32.totalorder %s48, %s51
      %p60 = scmp.eq.s32.totalorder %s29, 3
      %p61 = por %p59, %p60
      %p62 = scmp.ne.s32.totalorder %s51, %s52
      %p63 = scmp.eq.s32.totalorder %s29, 0
      %p64 = por %p62, %p63
      %p65 = scmp.ne.s32.totalorder %s51, %s52
      %p66 = scmp.eq.s32.totalorder %s30, 3
      %p67 = por %p65, %p66
      %p69 = scmp.ne.s32.totalorder %s52, %s68
      %p70 = scmp.eq.s32.totalorder %s30, 0
      %p71 = por %p69, %p70
      %s72 = smul.u32 %s32, 4
      %s73 = ssub.s32 %s72, 1
      %p74 = scmp.gt.s32.totalorder %s73, 0
      %s75 = scalar_select %p74, %s73, 0
      %s76 = smul.u32 %s39, 4
      %s77 = ssub.s32 %s76, 1
      %p78 = scmp.gt.s32.totalorder %s77, 0
      %s79 = scalar_select %p78, %s77, 0
      %s80 = ssub.s32 %s31, %s43
      %s81 = ssub.s32 %s75, %s79
      %s82 = sor.u32 %s80, %s81
      %p83 = scmp.eq.s32.totalorder %s82, 0
      %s85 = sadd.s32 %s84, 1
      %s86 = scalar_select %p83, %s84, %s85
      %p89 = pneg %p83
      %p90 = scmp.eq.s32.totalorder %s24, 3
      %p91 = por %p89, %p90
      %p92 = scmp.ne.s32.totalorder %s84, %s87
      %p93 = scmp.eq.s32.totalorder %s24, 0
      %p94 = por %p92, %p93
      %p95 = scmp.ne.s32.totalorder %s84, %s87
      %p96 = scmp.eq.s32.totalorder %s29, 3
      %p97 = por %p95, %p96
      %p98 = scmp.ne.s32.totalorder %s87, %s88
      %p99 = scmp.eq.s32.totalorder %s29, 0
      %p100 = por %p98, %p99
      %p101 = scmp.ne.s32.totalorder %s87, %s88
      %p102 = scmp.eq.s32.totalorder %s30, 3
      %p103 = por %p101, %p102
      %p105 = scmp.ne.s32.totalorder %s88, %s104
      %p106 = scmp.eq.s32.totalorder %s30, 0
      %p107 = por %p105, %p106
      %s108 = sadd.s32 %s32, 1
      %s109 = smul.u32 %s108, 4
      %p110 = scmp.lt.s32.totalorder %s109, 7
      %s111 = scalar_select %p110, %s109, 7
      %s112 = sadd.s32 %s39, 1
      %s113 = smul.u32 %s112, 4
      %p114 = scmp.lt.s32.totalorder %s113, 7
      %s115 = scalar_select %p114, %s113, 7
      %s116 = ssub.s32 %s31, %s43
      %s117 = ssub.s32 %s111, %s115
      %s118 = sor.u32 %s116, %s117
      %p119 = scmp.eq.s32.totalorder %s118, 0
      %s121 = sadd.s32 %s120, 1
      %s122 = scalar_select %p119, %s120, %s121
      %p125 = pneg %p119
      %p126 = scmp.eq.s32.totalorder %s24, 3
      %p127 = por %p125, %p126
      %p128 = scmp.ne.s32.totalorder %s120, %s123
      %p129 = scmp.eq.s32.totalorder %s24, 0
      %p130 = por %p128, %p129
      %p131 = scmp.ne.s32.totalorder %s120, %s123
      %p132 = scmp.eq.s32.totalorder %s29, 3
      %p133 = por %p131, %p132
      %p134 = scmp.ne.s32.totalorder %s123, %s124
      %p135 = scmp.eq.s32.totalorder %s29, 0
      %p136 = por %p134, %p135
      %p137 = scmp.ne.s32.totalorder %s123, %s124
      %p138 = scmp.eq.s32.totalorder %s30, 3
      %p139 = por %p137, %p138
      %p141 = scmp.ne.s32.totalorder %s124, %s140
      %p142 = scmp.eq.s32.totalorder %s30, 0
      %p143 = por %p141, %p142
      %s145 = sadd.s32 %s144, 1
      %p148 = scmp.eq.s32.totalorder %s24, 3
      %p149 = scmp.ne.s32.totalorder %s144, %s146
      %p150 = scmp.eq.s32.totalorder %s24, 0
      %p151 = por %p149, %p150
      %p152 = scmp.ne.s32.totalorder %s144, %s146
      %p153 = scmp.eq.s32.totalorder %s29, 3
      %p154 = por %p152, %p153
      %p155 = scmp.ne.s32.totalorder %s146, %s147
      %p156 = scmp.eq.s32.totalorder %s29, 0
      %p157 = por %p155, %p156
      %p158 = scmp.ne.s32.totalorder %s146, %s147
      %p159 = scmp.eq.s32.totalorder %s30, 3
      %p160 = por %p158, %p159
      %p162 = scmp.ne.s32.totalorder %s147, %s161
      %p163 = scmp.eq.s32.totalorder %s30, 0
      %p164 = por %p162, %p163
      %s166 = sadd.s32 %s165, 1
      %p169 = scmp.eq.s32.totalorder %s24, 3
      %p170 = scmp.ne.s32.totalorder %s165, %s167
      %p171 = scmp.eq.s32.totalorder %s24, 0
      %p172 = por %p170, %p171
      %p173 = scmp.ne.s32.totalorder %s165, %s167
      %p174 = scmp.eq.s32.totalorder %s29, 3
      %p175 = por %p173, %p174
      %p176 = scmp.ne.s32.totalorder %s167, %s168
      %p177 = scmp.eq.s32.totalorder %s29, 0
      %p178 = por %p176, %p177
      %p179 = scmp.ne.s32.totalorder %s167, %s168
      %p180 = scmp.eq.s32.totalorder %s30, 3
      %p181 = por %p179, %p180
      %p183 = scmp.ne.s32.totalorder %s168, %s182
      %p184 = scmp.eq.s32.totalorder %s30, 0
      %p185 = por %p183, %p184
      %s187 = sadd.s32 %s186, 1
      %p190 = scmp.eq.s32.totalorder %s24, 3
      %p191 = scmp.ne.s32.totalorder %s186, %s188
      %p192 = scmp.eq.s32.totalorder %s24, 0
      %p193 = por %p191, %p192
      %p194 = scmp.ne.s32.totalorder %s186, %s188
      %p195 = scmp.eq.s32.totalorder %s29, 3
      %p196 = por %p194, %p195
      %p197 = scmp.ne.s32.totalorder %s188, %s189
      %p198 = scmp.eq.s32.totalorder %s29, 0
      %p199 = por %p197, %p198
      %p200 = scmp.ne.s32.totalorder %s188, %s189
      %p201 = scmp.eq.s32.totalorder %s30, 3
      %p202 = por %p200, %p201
      %p204 = scmp.ne.s32.totalorder %s189, %s203
      %p205 = scmp.eq.s32.totalorder %s30, 0
      %p206 = por %p204, %p205
      %s208 = sadd.s32 %s207, 1
      %p211 = scmp.eq.s32.totalorder %s24, 3
      %p212 = scmp.ne.s32.totalorder %s207, %s209
      %p213 = scmp.eq.s32.totalorder %s24, 0
      %p214 = por %p212, %p213
      %p215 = scmp.ne.s32.totalorder %s207, %s209
      %p216 = scmp.eq.s32.totalorder %s29, 3
      %p217 = por %p215, %p216
      %p218 = scmp.ne.s32.totalorder %s209, %s210
      %p219 = scmp.eq.s32.totalorder %s29, 0
      %p220 = por %p218, %p219
      %p221 = scmp.ne.s32.totalorder %s209, %s210
      %p222 = scmp.eq.s32.totalorder %s30, 3
      %p223 = por %p221, %p222
      %p225 = scmp.ne.s32.totalorder %s210, %s224
      %p226 = scmp.eq.s32.totalorder %s30, 0
      %p227 = por %p225, %p226
      %s228 = ssub.s32 %s31, %s43
      %s229 = ssub.s32 %s32, %s39
      %s230 = sor.u32 %s228, %s229
      %p231 = scmp.eq.s32.totalorder %s230, 0
      %s233 = sadd.s32 %s232, 1
      %s234 = scalar_select %p231, %s232, %s233
      %p237 = pneg %p231
      %p238 = scmp.eq.s32.totalorder %s24, 3
      %p239 = por %p237, %p238
      %p240 = scmp.ne.s32.totalorder %s232, %s235
      %p241 = scmp.eq.s32.totalorder %s24, 0
      %p242 = por %p240, %p241
      %p243 = scmp.ne.s32.totalorder %s232, %s235
      %p244 = scmp.eq.s32.totalorder %s29, 3
      %p245 = por %p243, %p244
      %p246 = scmp.ne.s32.totalorder %s235, %s236
      %p247 = scmp.eq.s32.totalorder %s29, 0
      %p248 = por %p246, %p247
      %p249 = scmp.ne.s32.totalorder %s235, %s236
      %p250 = scmp.eq.s32.totalorder %s30, 3
      %p251 = por %p249, %p250
      %p253 = scmp.ne.s32.totalorder %s236, %s252
      %p254 = scmp.eq.s32.totalorder %s30, 0
      %p255 = por %p253, %p254
      %p256 = scmp.le.s32.totalorder 1, %s24
      %p257 = scmp.lt.s32.totalorder %s24, 5
      %p258 = pnand %p256, %p257
      %p259 = pneg %p258
      // Predicated region
      $region9: #{tpu_custom_call.1} parent=5 // pred_check
        _
      $region10: #{tpu_custom_call.1} parent=5 // pred_check_branch
        %261 = sbr.rel (%p258) target = $region12
      $region11: #{tpu_custom_call.1} parent=5 // pred_region
        %s262 = ssub.s32 %s24, 1
        // Predicated region
        $region13: #{tpu_custom_call.1} parent=11 // pred_check
          %p263 = pneg %p157
        $region14: #{tpu_custom_call.1} parent=11 // pred_check_branch
          %265 = sbr.rel (%p263) target = $region16
        $region15: #{tpu_custom_call.1} parent=11 // pred_region
          %s267 = ssub.s32 1152, 1152
          %268 = vsyncadd [#allocation11], %s267
          %s269 = sshll.u32 [#allocation10], 4
          %s270 = int_to_ptr.vmem [resolvable:$true] %s269
          %275 = dma.hbm_to_vmem [thread:$0]  %s3, 1152, %s270, [#allocation11], 128, 128, 8
        $region16: #{tpu_custom_call.1} parent=11 // pred_fallthru
          _
        // Predicated region
        $region17: #{tpu_custom_call.1} parent=11 // pred_check
          %p276 = pneg %p178
        $region18: #{tpu_custom_call.1} parent=11 // pred_check_branch
          %278 = sbr.rel (%p276) target = $region20
        $region19: #{tpu_custom_call.1} parent=11 // pred_region
          %s280 = ssub.s32 16, 16
          %281 = vsyncadd [#allocation11], %s280
          %s283 = sshll.u32 [#allocation12], 4
          %s284 = int_to_ptr.vmem [resolvable:$true] %s283
          %286 = dma.hbm_to_vmem [thread:$0]  %s4, 16, %s284, [#allocation11]
        $region20: #{tpu_custom_call.1} parent=11 // pred_fallthru
          _
        // Predicated region
        $region21: #{tpu_custom_call.1} parent=11 // pred_check
          %p287 = pneg %p199
        $region22: #{tpu_custom_call.1} parent=11 // pred_check_branch
          %289 = sbr.rel (%p287) target = $region24
        $region23: #{tpu_custom_call.1} parent=11 // pred_region
          %s291 = ssub.s32 55296, 55296
          %292 = vsyncadd [#allocation14], %s291
          %s293 = sshll.u32 [#allocation13], 4
          %s294 = int_to_ptr.vmem [resolvable:$true] %s293
          %299 = dma.hbm_to_vmem [thread:$0]  %s5, 55296, %s294, [#allocation14], 384, 384, 24
        $region24: #{tpu_custom_call.1} parent=11 // pred_fallthru
          _
        // Predicated region
        $region25: #{tpu_custom_call.1} parent=11 // pred_check
          %p300 = pneg %p220
        $region26: #{tpu_custom_call.1} parent=11 // pred_check_branch
          %302 = sbr.rel (%p300) target = $region28
        $region27: #{tpu_custom_call.1} parent=11 // pred_region
          %s304 = ssub.s32 48, 48
          %305 = vsyncadd [#allocation14], %s304
          %s307 = sshll.u32 [#allocation15], 4
          %s308 = int_to_ptr.vmem [resolvable:$true] %s307
          %310 = dma.hbm_to_vmem [thread:$0]  %s6, 48, %s308, [#allocation14]
        $region28: #{tpu_custom_call.1} parent=11 // pred_fallthru
          _
      $region12: #{tpu_custom_call.1} parent=5 // pred_fallthru
        _
      %p311 = scmp.lt.s32.totalorder %s24, 4
      // Predicated region
      $region29: #{tpu_custom_call.1} parent=5 // pred_check
        %p312 = pneg %p311
      $region30: #{tpu_custom_call.1} parent=5 // pred_check_branch
        %314 = sbr.rel (%p312) target = $region32
      $region31: #{tpu_custom_call.1} parent=5 // pred_region
        // Predicated region
        $region33: #{tpu_custom_call.1} parent=31 // pred_check
          %p315 = pneg %p58
        $region34: #{tpu_custom_call.1} parent=31 // pred_check_branch
          %317 = sbr.rel (%p315) target = $region36
        $region35: #{tpu_custom_call.1} parent=31 // pred_region
          %s318 = sand.u32 %s48, 1
          %s319 = scalar_lea.sflag [#allocation5], %s318
          %s320 = sand.u32 %s48, 1
          %s321 = smul.addr %s320, 128
          %s322 = scalar_lea.vmem [#allocation4], %s321
          %s323 = smul.u32 8, %s32
          %s325 = ssub.s32 2048, 2048
          %326 = vsyncadd %s319, %s325
          %s327 = smul.addr %s323, 2
          %s328 = smul.addr %s31, 32
          %s329 = sadd.s32 %s327, %s328
          %s330 = smul.addr %s329, 128
          %s331 = scalar_lea.hbm %s0, %s330
          %s332 = sshll.u32 %s322, 4
          %s333 = int_to_ptr.vmem [resolvable:$true] %s332
          %338 = dma.hbm_to_vmem [thread:$0]  %s331, 2048, %s333, %s319, 128, 128, 8
        $region36: #{tpu_custom_call.1} parent=31 // pred_fallthru
          _
        // Predicated region
        $region37: #{tpu_custom_call.1} parent=31 // pred_check
          %p339 = pneg %p94
        $region38: #{tpu_custom_call.1} parent=31 // pred_check_branch
          %341 = sbr.rel (%p339) target = $region40
        $region39: #{tpu_custom_call.1} parent=31 // pred_region
          %s342 = sand.u32 %s24, 1
          %s343 = scalar_lea.sflag [#allocation8], %s342
          %s344 = sand.u32 %s84, 1
          %s345 = smul.addr %s344, 32
          %s346 = scalar_lea.vmem [#allocation7], %s345
          %s347 = smul.u32 %s32, 4
          %s348 = ssub.s32 %s347, 1
          %p349 = scmp.gt.s32.totalorder %s348, 0
          %s350 = scalar_select %p349, %s348, 0
          %s351 = smul.u32 2, %s350
          %s353 = ssub.s32 512, 512
          %354 = vsyncadd %s343, %s353
          %s355 = smul.addr %s351, 2
          %s356 = smul.addr %s31, 32
          %s357 = sadd.s32 %s355, %s356
          %s358 = smul.addr %s357, 128
          %s359 = scalar_lea.hbm %s1, %s358
          %s360 = sshll.u32 %s346, 4
          %s361 = int_to_ptr.vmem [resolvable:$true] %s360
          %366 = dma.hbm_to_vmem [thread:$0]  %s359, 512, %s361, %s343, 128, 128, 8
        $region40: #{tpu_custom_call.1} parent=31 // pred_fallthru
          _
        // Predicated region
        $region41: #{tpu_custom_call.1} parent=31 // pred_check
          %p367 = pneg %p130
        $region42: #{tpu_custom_call.1} parent=31 // pred_check_branch
          %369 = sbr.rel (%p367) target = $region44
        $region43: #{tpu_custom_call.1} parent=31 // pred_region
          %s370 = sand.u32 %s24, 1
          %s371 = scalar_lea.sflag [#allocation8], %s370
          %s372 = sand.u32 %s120, 1
          %s373 = smul.addr %s372, 32
          %s374 = scalar_lea.vmem [#allocation9], %s373
          %s375 = sadd.s32 %s32, 1
          %s376 = smul.u32 %s375, 4
          %p377 = scmp.lt.s32.totalorder %s376, 7
          %s378 = scalar_select %p377, %s376, 7
          %s379 = smul.u32 2, %s378
          %s381 = ssub.s32 512, 512
          %382 = vsyncadd %s371, %s381
          %s383 = smul.addr %s379, 2
          %s384 = smul.addr %s31, 32
          %s385 = sadd.s32 %s383, %s384
          %s386 = smul.addr %s385, 128
          %s387 = scalar_lea.hbm %s2, %s386
          %s388 = sshll.u32 %s374, 4
          %s389 = int_to_ptr.vmem [resolvable:$true] %s388
          %394 = dma.hbm_to_vmem [thread:$0]  %s387, 512, %s389, %s371, 128, 128, 8
        $region44: #{tpu_custom_call.1} parent=31 // pred_fallthru
          _
      $region32: #{tpu_custom_call.1} parent=5 // pred_fallthru
        _
      %p395 = scmp.le.s32.totalorder 1, %s24
      %p396 = scmp.lt.s32.totalorder %s24, 5
      %p397 = pnand %p395, %p396
      %p398 = pneg %p397
      // Predicated region
      $region45: #{tpu_custom_call.1} parent=5 // pred_check
        _
      $region46: #{tpu_custom_call.1} parent=5 // pred_check_branch
        %400 = sbr.rel (%p397) target = $region48
      $region47: #{tpu_custom_call.1} parent=5 // pred_region
        %s401 = ssub.s32 %s24, 1
        %s402 = sand.u32 %s51, 1
        %s403 = scalar_lea.sflag [#allocation5], %s402
        %s404 = sand.u32 %s51, 1
        %s405 = smul.addr %s404, 128
        %s406 = scalar_lea.vmem [#allocation4], %s405
        // Predicated region
        $region49: #{tpu_custom_call.1} parent=47 // pred_check
          %p407 = pneg %p64
        $region50: #{tpu_custom_call.1} parent=47 // pred_check_branch
          %409 = sbr.rel (%p407) target = $region52
        $region51: #{tpu_custom_call.1} parent=47 // pred_region
          %410 = dma.done %s403, 2048
        $region52: #{tpu_custom_call.1} parent=47 // pred_fallthru
          _
        %s411 = sand.u32 %s29, 1
        %s412 = scalar_lea.sflag [#allocation8], %s411
        %s413 = sand.u32 %s87, 1
        %s414 = smul.addr %s413, 32
        %s415 = scalar_lea.vmem [#allocation7], %s414
        // Predicated region
        $region53: #{tpu_custom_call.1} parent=47 // pred_check
          %p416 = pneg %p100
        $region54: #{tpu_custom_call.1} parent=47 // pred_check_branch
          %418 = sbr.rel (%p416) target = $region56
        $region55: #{tpu_custom_call.1} parent=47 // pred_region
          %419 = dma.done %s412, 512
        $region56: #{tpu_custom_call.1} parent=47 // pred_fallthru
          _
        %s420 = sand.u32 %s29, 1
        %s421 = scalar_lea.sflag [#allocation8], %s420
        %s422 = sand.u32 %s123, 1
        %s423 = smul.addr %s422, 32
        %s424 = scalar_lea.vmem [#allocation9], %s423
        // Predicated region
        $region57: #{tpu_custom_call.1} parent=47 // pred_check
          %p425 = pneg %p136
        $region58: #{tpu_custom_call.1} parent=47 // pred_check_branch
          %427 = sbr.rel (%p425) target = $region60
        $region59: #{tpu_custom_call.1} parent=47 // pred_region
          %428 = dma.done %s421, 512
        $region60: #{tpu_custom_call.1} parent=47 // pred_fallthru
          _
        // Predicated region
        $region61: #{tpu_custom_call.1} parent=47 // pred_check
          %p429 = pneg %p157
        $region62: #{tpu_custom_call.1} parent=47 // pred_check_branch
          %431 = sbr.rel (%p429) target = $region64
        $region63: #{tpu_custom_call.1} parent=47 // pred_region
          %432 = dma.done [#allocation11], 1152
        $region64: #{tpu_custom_call.1} parent=47 // pred_fallthru
          _
        // Predicated region
        $region65: #{tpu_custom_call.1} parent=47 // pred_check
          %p433 = pneg %p178
        $region66: #{tpu_custom_call.1} parent=47 // pred_check_branch
          %435 = sbr.rel (%p433) target = $region68
        $region67: #{tpu_custom_call.1} parent=47 // pred_region
          %436 = dma.done [#allocation11], 16
        $region68: #{tpu_custom_call.1} parent=47 // pred_fallthru
          _
        // Predicated region
        $region69: #{tpu_custom_call.1} parent=47 // pred_check
          %p437 = pneg %p199
        $region70: #{tpu_custom_call.1} parent=47 // pred_check_branch
          %439 = sbr.rel (%p437) target = $region72
        $region71: #{tpu_custom_call.1} parent=47 // pred_region
          %440 = dma.done [#allocation14], 55296
        $region72: #{tpu_custom_call.1} parent=47 // pred_fallthru
          _
        // Predicated region
        $region73: #{tpu_custom_call.1} parent=47 // pred_check
          %p441 = pneg %p220
        $region74: #{tpu_custom_call.1} parent=47 // pred_check_branch
          %443 = sbr.rel (%p441) target = $region76
        $region75: #{tpu_custom_call.1} parent=47 // pred_region
          %444 = dma.done [#allocation14], 48
        $region76: #{tpu_custom_call.1} parent=47 // pred_fallthru
          _
        %s445 = sand.u32 %s51, 1
        %s446 = scalar_lea.sflag [#allocation5], %s445
        %s447 = sand.u32 %s51, 1
        %s448 = smul.addr %s447, 128
        %s449 = scalar_lea.vmem [#allocation4], %s448
        %p450 = pneg %p64
        %p451 = pneg %p61
        %s452 = sand.u32 %s29, 1
        %s453 = scalar_lea.sflag [#allocation8], %s452
        %s454 = sand.u32 %s87, 1
        %s455 = smul.addr %s454, 32
        %s456 = scalar_lea.vmem [#allocation7], %s455
        %p457 = pneg %p100
        %p458 = pneg %p97
        %s459 = sand.u32 %s29, 1
        %s460 = scalar_lea.sflag [#allocation8], %s459
        %s461 = sand.u32 %s123, 1
        %s462 = smul.addr %s461, 32
        %s463 = scalar_lea.vmem [#allocation9], %s462
        %p464 = pneg %p136
        %p465 = pneg %p133
        %p466 = pneg %p157
        %p467 = pneg %p154
        %p468 = pneg %p178
        %p469 = pneg %p175
        %p470 = pneg %p199
        %p471 = pneg %p196
        %p472 = pneg %p220
        %p473 = pneg %p217
        %p474 = pneg %p248
        %p475 = pneg %p245
        %s476 = sand.u32 %s235, 1
        %s477 = scalar_lea.sflag [#allocation6], %s476
        %s478 = sand.u32 %s235, 1
        %s479 = smul.addr %s478, 384
        %s480 = scalar_lea.vmem [#allocation16], %s479
        %s481 = smul.u32 8, %s34
        %s482 = smul.u32 %s34, 4
        %s483 = ssub.s32 %s482, 1
        %p484 = scmp.gt.s32.totalorder %s483, 0
        %s485 = scalar_select %p484, %s483, 0
        %s486 = smul.u32 2, %s485
        %s487 = sadd.s32 %s34, 1
        %s488 = smul.u32 %s487, 4
        %p489 = scmp.lt.s32.totalorder %s488, 7
        %s490 = scalar_select %p489, %s488, 7
        %s491 = smul.u32 2, %s490
        %s492 = smul.u32 8, %s34
        %vm493 = vcmask 64512
        %494 = vst.msk [vmem:[#allocation2] sm:$0xff] %vm493, 0.0
        %495 = vst.msk [vmem:[#allocation2 + $0x8] sm:$0xff] %vm493, 0.0
        %496 = vst.msk [vmem:[#allocation2 + $0x10] sm:$0xff] %vm493, 0.0
        %497 = vst.msk [vmem:[#allocation2 + $0x18] sm:$0xff] %vm493, 0.0
        %498 = vst.msk [vmem:[#allocation2 + $0x20] sm:$0xff] %vm493, 0.0
        %499 = vst.msk [vmem:[#allocation2 + $0x28] sm:$0xff] %vm493, 0.0
        %500 = vst.msk [vmem:[#allocation2 + $0x30] sm:$0xff] %vm493, 0.0
        %501 = vst.msk [vmem:[#allocation2 + $0x38] sm:$0xff] %vm493, 0.0
        %502 = vst.msk [vmem:[#allocation2 + $0x40] sm:$0xff] %vm493, 0.0
        %503 = vst.msk [vmem:[#allocation2 + $0x48] sm:$0xff] %vm493, 0.0
        %504 = vst.msk [vmem:[#allocation2 + $0x50] sm:$0xff] %vm493, 0.0
        %505 = vst.msk [vmem:[#allocation2 + $0x58] sm:$0xff] %vm493, 0.0
        %506 = vst.msk [vmem:[#allocation2 + $0x60] sm:$0xff] %vm493, 0.0
        %507 = vst.msk [vmem:[#allocation2 + $0x68] sm:$0xff] %vm493, 0.0
        %508 = vst.msk [vmem:[#allocation2 + $0x70] sm:$0xff] %vm493, 0.0
        %509 = vst.msk [vmem:[#allocation2 + $0x78] sm:$0xff] %vm493, 0.0
        %510 = vst.msk [vmem:[#allocation2 + $0x80] sm:$0xff] %vm493, 0.0
        %511 = vst.msk [vmem:[#allocation2 + $0x88] sm:$0xff] %vm493, 0.0
        %512 = vst.msk [vmem:[#allocation2 + $0x90] sm:$0xff] %vm493, 0.0
        %513 = vst.msk [vmem:[#allocation2 + $0x98] sm:$0xff] %vm493, 0.0
        %514 = vst.msk [vmem:[#allocation2 + $0xa0] sm:$0xff] %vm493, 0.0
        %515 = vst.msk [vmem:[#allocation2 + $0xa8] sm:$0xff] %vm493, 0.0
        %516 = vst.msk [vmem:[#allocation2 + $0xb0] sm:$0xff] %vm493, 0.0
        %517 = vst.msk [vmem:[#allocation2 + $0xb8] sm:$0xff] %vm493, 0.0
        %518 = vst.msk [vmem:[#allocation2 + $0xc0] sm:$0xff] %vm493, 0.0
        %519 = vst.msk [vmem:[#allocation2 + $0xc8] sm:$0xff] %vm493, 0.0
        %520 = vst.msk [vmem:[#allocation2 + $0xd0] sm:$0xff] %vm493, 0.0
        %521 = vst.msk [vmem:[#allocation2 + $0xd8] sm:$0xff] %vm493, 0.0
        %522 = vst [vmem:[#allocation3] sm:$0xff] 0.0
        %523 = vst [vmem:[#allocation3 + $0x8] sm:$0xff] 0.0
        %524 = vst [vmem:[#allocation3 + $0x10] sm:$0xff] 0.0
        %525 = vst [vmem:[#allocation3 + $0x18] sm:$0xff] 0.0
        %526 = vst [vmem:[#allocation3 + $0x20] sm:$0xff] 0.0
        %527 = vst [vmem:[#allocation3 + $0x28] sm:$0xff] 0.0
        %528 = vst [vmem:[#allocation3 + $0x30] sm:$0xff] 0.0
        %529 = vst [vmem:[#allocation3 + $0x38] sm:$0xff] 0.0
        %530 = vst [vmem:[#allocation3 + $0x40] sm:$0xff] 0.0
        %531 = vst [vmem:[#allocation3 + $0x48] sm:$0xff] 0.0
        %532 = vst [vmem:[#allocation3 + $0x50] sm:$0xff] 0.0
        %533 = vst [vmem:[#allocation3 + $0x58] sm:$0xff] 0.0
        %534 = vst [vmem:[#allocation3 + $0x60] sm:$0xff] 0.0
        %535 = vst [vmem:[#allocation3 + $0x68] sm:$0xff] 0.0
        %536 = vst [vmem:[#allocation3 + $0x70] sm:$0xff] 0.0
        %537 = vst [vmem:[#allocation3 + $0x78] sm:$0xff] 0.0
        %538 = vst [vmem:[#allocation3 + $0x80] sm:$0xff] 0.0
        %539 = vst [vmem:[#allocation3 + $0x88] sm:$0xff] 0.0
        %540 = vst [vmem:[#allocation3 + $0x90] sm:$0xff] 0.0
        %541 = vst [vmem:[#allocation3 + $0x98] sm:$0xff] 0.0
        %542 = vst [vmem:[#allocation3 + $0xa0] sm:$0xff] 0.0
        %543 = vst [vmem:[#allocation3 + $0xa8] sm:$0xff] 0.0
        %544 = vst [vmem:[#allocation3 + $0xb0] sm:$0xff] 0.0
        %545 = vst [vmem:[#allocation3 + $0xb8] sm:$0xf] 0.0
        %v546 = vld [vmem:[%s406] sm:$0xff]
        %v547 = vld [vmem:[%s406 + $0x8] sm:$0xff]
        %548 = vst.msk [vmem:[#allocation2 + $0x25] sm:$0xff] %vm493, %v546
        %549 = vst.msk [vmem:[#allocation2 + $0x2d] sm:$0xff] %vm493, %v547
        %s550 = scalar_lea.vmem %s406, 16 [#allocation4]
        %v551 = vld [vmem:[%s550] sm:$0xff]
        %v552 = vld [vmem:[%s550 + $0x8] sm:$0xff]
        %553 = vst.msk [vmem:[#allocation2 + $0x37] sm:$0xff] %vm493, %v551
        %554 = vst.msk [vmem:[#allocation2 + $0x3f] sm:$0xff] %vm493, %v552
        %s555 = scalar_lea.vmem %s406, 32 [#allocation4]
        %v556 = vld [vmem:[%s555] sm:$0xff]
        %v557 = vld [vmem:[%s555 + $0x8] sm:$0xff]
        %558 = vst.msk [vmem:[#allocation2 + $0x49] sm:$0xff] %vm493, %v556
        %559 = vst.msk [vmem:[#allocation2 + $0x51] sm:$0xff] %vm493, %v557
        %s560 = scalar_lea.vmem %s406, 48 [#allocation4]
        %v561 = vld [vmem:[%s560] sm:$0xff]
        %v562 = vld [vmem:[%s560 + $0x8] sm:$0xff]
        %563 = vst.msk [vmem:[#allocation2 + $0x5b] sm:$0xff] %vm493, %v561
        %564 = vst.msk [vmem:[#allocation2 + $0x63] sm:$0xff] %vm493, %v562
        %s565 = scalar_lea.vmem %s406, 64 [#allocation4]
        %v566 = vld [vmem:[%s565] sm:$0xff]
        %v567 = vld [vmem:[%s565 + $0x8] sm:$0xff]
        %568 = vst.msk [vmem:[#allocation2 + $0x6d] sm:$0xff] %vm493, %v566
        %569 = vst.msk [vmem:[#allocation2 + $0x75] sm:$0xff] %vm493, %v567
        %s570 = scalar_lea.vmem %s406, 80 [#allocation4]
        %v571 = vld [vmem:[%s570] sm:$0xff]
        %v572 = vld [vmem:[%s570 + $0x8] sm:$0xff]
        %573 = vst.msk [vmem:[#allocation2 + $0x7f] sm:$0xff] %vm493, %v571
        %574 = vst.msk [vmem:[#allocation2 + $0x87] sm:$0xff] %vm493, %v572
        %s575 = scalar_lea.vmem %s406, 96 [#allocation4]
        %v576 = vld [vmem:[%s575] sm:$0xff]
        %v577 = vld [vmem:[%s575 + $0x8] sm:$0xff]
        %578 = vst.msk [vmem:[#allocation2 + $0x91] sm:$0xff] %vm493, %v576
        %579 = vst.msk [vmem:[#allocation2 + $0x99] sm:$0xff] %vm493, %v577
        %s580 = scalar_lea.vmem %s406, 112 [#allocation4]
        %v581 = vld [vmem:[%s580] sm:$0xff]
        %v582 = vld [vmem:[%s580 + $0x8] sm:$0xff]
        %583 = vst.msk [vmem:[#allocation2 + $0xa3] sm:$0xff] %vm493, %v581
        %584 = vst.msk [vmem:[#allocation2 + $0xab] sm:$0xff] %vm493, %v582
        %p585 = scmp.gt.s32.totalorder %s34, 0
        // Predicated region
        $region77: #{tpu_custom_call.1} parent=47 // pred_check
          %p586 = pneg %p585
        $region78: #{tpu_custom_call.1} parent=47 // pred_check_branch
          %588 = sbr.rel (%p586) target = $region80
        $region79: #{tpu_custom_call.1} parent=47 // pred_region
          %v589 = vld [vmem:[%s415] sm:$0xff]
          %v590 = vld [vmem:[%s415 + $0x8] sm:$0xff]
          %591 = vst.msk [vmem:[#allocation2 + $0x1] sm:$0xff] %vm493, %v589
          %592 = vst.msk [vmem:[#allocation2 + $0x9] sm:$0xff] %vm493, %v590
          %s593 = scalar_lea.vmem %s415, 16 [#allocation7]
          %v594 = vld [vmem:[%s593] sm:$0xff]
          %v595 = vld [vmem:[%s593 + $0x8] sm:$0xff]
          %596 = vst.msk [vmem:[#allocation2 + $0x13] sm:$0xff] %vm493, %v594
          %597 = vst.msk [vmem:[#allocation2 + $0x1b] sm:$0xff] %vm493, %v595
        $region80: #{tpu_custom_call.1} parent=47 // pred_fallthru
          _
        %p598 = scmp.lt.s32.totalorder %s34, 1
        // Predicated region
        $region81: #{tpu_custom_call.1} parent=47 // pred_check
          %p599 = pneg %p598
        $region82: #{tpu_custom_call.1} parent=47 // pred_check_branch
          %601 = sbr.rel (%p599) target = $region84
        $region83: #{tpu_custom_call.1} parent=47 // pred_region
          %v602 = vld [vmem:[%s424] sm:$0xff]
          %v603 = vld [vmem:[%s424 + $0x8] sm:$0xff]
          %604 = vst.msk [vmem:[#allocation2 + $0xb5] sm:$0xff] %vm493, %v602
          %605 = vst.msk [vmem:[#allocation2 + $0xbd] sm:$0xff] %vm493, %v603
          %s606 = scalar_lea.vmem %s424, 16 [#allocation9]
          %v607 = vld [vmem:[%s606] sm:$0xff]
          %v608 = vld [vmem:[%s606 + $0x8] sm:$0xff]
          %609 = vst.msk [vmem:[#allocation2 + $0xc7] sm:$0xff] %vm493, %v607
          %610 = vst.msk [vmem:[#allocation2 + $0xcf] sm:$0xff] %vm493, %v608
        $region84: #{tpu_custom_call.1} parent=47 // pred_fallthru
          _
        %v611 = vld [vmem:[#allocation2] sm:$0xff]
        %v612 = vld [vmem:[#allocation2 + $0x8] sm:$0xff]
        %v613 = vld [vmem:[#allocation2 + $0x10] sm:$0xff]
        %v614 = vld [vmem:[#allocation2 + $0x18] sm:$0xff]
        %v615 = vld [vmem:[#allocation2 + $0x20] sm:$0xff]
        %v616 = vld [vmem:[#allocation2 + $0x28] sm:$0xff]
        %v617 = vld [vmem:[#allocation2 + $0x30] sm:$0xff]
        %v618 = vld [vmem:[#allocation2 + $0x38] sm:$0xff]
        %v619 = vld [vmem:[#allocation2 + $0x40] sm:$0xff]
        %v620 = vld [vmem:[#allocation2 + $0x48] sm:$0xff]
        %v621 = vld [vmem:[#allocation2 + $0x50] sm:$0xff]
        %v622 = vld [vmem:[#allocation2 + $0x58] sm:$0xff]
        %v623 = vld [vmem:[#allocation2 + $0x60] sm:$0xff]
        %v624 = vld [vmem:[#allocation2 + $0x68] sm:$0xff]
        %v625 = vld [vmem:[#allocation2 + $0x70] sm:$0xff]
        %v626 = vld [vmem:[#allocation2 + $0x78] sm:$0xff]
        %v627 = vld [vmem:[#allocation2 + $0x80] sm:$0xff]
        %v628 = vld [vmem:[#allocation2 + $0x88] sm:$0xff]
        %v629 = vld [vmem:[#allocation2 + $0x90] sm:$0xff]
        %v630 = vld [vmem:[#allocation2 + $0x98] sm:$0xff]
        %v631 = vld [vmem:[#allocation2 + $0xa0] sm:$0xff]
        %v632 = vld [vmem:[#allocation2 + $0xa8] sm:$0xff]
        %v633 = vld [vmem:[#allocation2 + $0xb0] sm:$0xf]
        %v634 = vld [vmem:[#allocation10] sm:$0xff]
        %v635 = vld [vmem:[#allocation2 + $0x1] sm:$0xff]
        %v636 = vld [vmem:[#allocation2 + $0x9] sm:$0xff]
        %v637 = vld [vmem:[#allocation2 + $0x11] sm:$0xff]
        %v638 = vld [vmem:[#allocation2 + $0x19] sm:$0xff]
        %v639 = vld [vmem:[#allocation2 + $0x21] sm:$0xff]
        %v640 = vld [vmem:[#allocation2 + $0x29] sm:$0xff]
        %v641 = vld [vmem:[#allocation2 + $0x31] sm:$0xff]
        %v642 = vld [vmem:[#allocation2 + $0x39] sm:$0xff]
        %v643 = vld [vmem:[#allocation2 + $0x41] sm:$0xff]
        %v644 = vld [vmem:[#allocation2 + $0x49] sm:$0xff]
        %v645 = vld [vmem:[#allocation2 + $0x51] sm:$0xff]
        %v646 = vld [vmem:[#allocation2 + $0x59] sm:$0xff]
        %v647 = vld [vmem:[#allocation2 + $0x61] sm:$0xff]
        %v648 = vld [vmem:[#allocation2 + $0x69] sm:$0xff]
        %v649 = vld [vmem:[#allocation2 + $0x71] sm:$0xff]
        %v650 = vld [vmem:[#allocation2 + $0x79] sm:$0xff]
        %v651 = vld [vmem:[#allocation2 + $0x81] sm:$0xff]
        %v652 = vld [vmem:[#allocation2 + $0x89] sm:$0xff]
        %v653 = vld [vmem:[#allocation2 + $0x91] sm:$0xff]
        %v654 = vld [vmem:[#allocation2 + $0x99] sm:$0xff]
        %v655 = vld [vmem:[#allocation2 + $0xa1] sm:$0xff]
        %v656 = vld [vmem:[#allocation2 + $0xa9] sm:$0xff]
        %v657 = vld [vmem:[#allocation2 + $0xb1] sm:$0xf]
        %s658 = scalar_lea.vmem [#allocation10], 8
        %v659 = vld [vmem:[%s658] sm:$0xff]
        %v661 = vsel %vm493, %v635, 0
        %v664 = vsel %vm493, %v636, 0
        %v667 = vsel %vm493, %v637, 0
        %v670 = vsel %vm493, %v638, 0
        %v673 = vsel %vm493, %v639, 0
        %v676 = vsel %vm493, %v640, 0
        %v679 = vsel %vm493, %v641, 0
        %v682 = vsel %vm493, %v642, 0
        %v685 = vsel %vm493, %v643, 0
        %v688 = vsel %vm493, %v644, 0
        %v691 = vsel %vm493, %v645, 0
        %v694 = vsel %vm493, %v646, 0
        %v697 = vsel %vm493, %v647, 0
        %v700 = vsel %vm493, %v648, 0
        %v703 = vsel %vm493, %v649, 0
        %v706 = vsel %vm493, %v650, 0
        %v709 = vsel %vm493, %v651, 0
        %v712 = vsel %vm493, %v652, 0
        %v715 = vsel %vm493, %v653, 0
        %v718 = vsel %vm493, %v654, 0
        %v721 = vsel %vm493, %v655, 0
        %v724 = vsel %vm493, %v656, 0
        %v727 = vsel %vm493, %v657, 0
        %729 = vmatprep.subr.mxu0 0.0
        %730 = vmatpush1.msra.mxu0 %v659
        %731 = vmatprep.subr.mxu0 0.0
        %732 = vmatpush1.msra.mxu0 0.0
        %733 = vmatprep.subr.mxu0 0.0
        %734 = vmatpush1.msra.mxu0 0.0
        %735 = vmatprep.subr.mxu0 0.0
        %736 = vmatpush1.msra.mxu0 0.0
        %737 = vmatprep.subr.mxu0 0.0
        %738 = vmatpush1.msra.mxu0 0.0
        %739 = vmatprep.subr.mxu0 0.0
        %740 = vmatpush1.msra.mxu0 0.0
        %741 = vmatprep.subr.mxu0 0.0
        %742 = vmatpush1.msra.mxu0 0.0
        %743 = vmatprep.subr.mxu0 0.0
        %744 = vmatpush1.msra.mxu0 0.0
        %745 = vmatprep.subr.mxu0 0.0
        %746 = vmatpush1.msra.mxu0 0.0
        %747 = vmatprep.subr.mxu0 0.0
        %748 = vmatpush1.msra.mxu0 0.0
        %749 = vmatprep.subr.mxu0 0.0
        %750 = vmatpush1.msra.mxu0 0.0
        %751 = vmatprep.subr.mxu0 0.0
        %752 = vmatpush1.msra.mxu0 0.0
        %753 = vmatprep.subr.mxu0 0.0
        %754 = vmatpush1.msra.mxu0 0.0
        %755 = vmatprep.subr.mxu0 0.0
        %756 = vmatpush1.msra.mxu0 0.0
        %757 = vmatprep.subr.mxu0 0.0
        %758 = vmatpush1.msra.mxu0 0.0
        %759 = vmatprep.subr.mxu0 0.0
        %760 = vmatpush1.msra.mxu0 0.0
        %761 = vmatprep.subr.mxu0 0.0
        %762 = vmatpush1.msra.mxu0 0.0
        %763 = vmatprep.subr.mxu0 0.0
        %764 = vmatpush1.msra.mxu0 0.0
        %765 = vmatprep.subr.mxu0 0.0
        %766 = vmatpush1.msra.mxu0 0.0
        %767 = vmatprep.subr.mxu0 0.0
        %768 = vmatpush1.msra.mxu0 0.0
        %769 = vmatprep.subr.mxu0 0.0
        %770 = vmatpush1.msra.mxu0 0.0
        %771 = vmatprep.subr.mxu0 0.0
        %772 = vmatpush1.msra.mxu0 0.0
        %773 = vmatprep.subr.mxu0 0.0
        %774 = vmatpush1.msra.mxu0 0.0
        %775 = vmatprep.subr.mxu0 0.0
        %776 = vmatpush1.msra.mxu0 0.0
        %777 = vmatprep.subr.mxu0 0.0
        %778 = vmatpush1.msra.mxu0 0.0
        %779 = vmatprep.subr.mxu0 0.0
        %780 = vmatpush1.msra.mxu0 0.0
        %781 = vmatprep.subr.mxu0 0.0
        %782 = vmatpush1.msra.mxu0 0.0
        %783 = vmatprep.subr.mxu0 0.0
        %784 = vmatpush1.msra.mxu0 0.0
        %785 = vmatprep.subr.mxu0 0.0
        %786 = vmatpush1.msra.mxu0 0.0
        %787 = vmatprep.subr.mxu0 0.0
        %788 = vmatpush1.msra.mxu0 0.0
        %789 = vmatprep.subr.mxu0 0.0
        %790 = vmatpush1.msra.mxu0 0.0
        %791 = vmatprep.subr.mxu0 0.0
        %792 = vmatpush1.msra.mxu0 0.0
        %793 = vmatprep.mubr.f32.mxu0 0.0
        %794 = vmatmul.mubr.f32.gmra.mrb[0].mxu0 %v661
        %v795 = vpop.f32.mrb[0].mxu0
        %v796 = vadd.f32 0.0, %v795
        %v797 = vpop.f32.mrb[0].mxu0
        %798 = vmatprep.mubr.f32.mxu0 0.0
        %799 = vmatmul.mubr.f32.gmra.mrb[0].mxu0 %v664
        %v800 = vpop.f32.mrb[0].mxu0
        %v801 = vadd.f32 0.0, %v800
        %v802 = vpop.f32.mrb[0].mxu0
        %803 = vmatprep.mubr.f32.mxu0 0.0
        %804 = vmatmul.mubr.f32.gmra.mrb[0].mxu0 %v667
        %v805 = vpop.f32.mrb[0].mxu0
        %v806 = vadd.f32 0.0, %v805
        %v807 = vpop.f32.mrb[0].mxu0
        %808 = vmatprep.mubr.f32.mxu0 0.0
        %809 = vmatmul.mubr.f32.gmra.mrb[0].mxu0 %v670
        %v810 = vpop.f32.mrb[0].mxu0
        %v811 = vadd.f32 0.0, %v810
        %v812 = vpop.f32.mrb[0].mxu0
        %813 = vmatprep.mubr.f32.mxu0 0.0
        %814 = vmatmul.mubr.f32.gmra.mrb[0].mxu0 %v673
        %v815 = vpop.f32.mrb[0].mxu0
        %v816 = vadd.f32 0.0, %v815
        %v817 = vpop.f32.mrb[0].mxu0
        %818 = vmatprep.mubr.f32.mxu0 0.0
        %819 = vmatmul.mubr.f32.gmra.mrb[0].mxu0 %v676
        %v820 = vpop.f32.mrb[0].mxu0
        %v821 = vadd.f32 0.0, %v820
        %v822 = vpop.f32.mrb[0].mxu0
        %823 = vmatprep.mubr.f32.mxu0 0.0
        %824 = vmatmul.mubr.f32.gmra.mrb[0].mxu0 %v679
        %v825 = vpop.f32.mrb[0].mxu0
        %v826 = vadd.f32 0.0, %v825
        %v827 = vpop.f32.mrb[0].mxu0
        %828 = vmatprep.mubr.f32.mxu0 0.0
        %829 = vmatmul.mubr.f32.gmra.mrb[0].mxu0 %v682
        %v830 = vpop.f32.mrb[0].mxu0
        %v831 = vadd.f32 0.0, %v830
        %v832 = vpop.f32.mrb[0].mxu0
        %833 = vmatprep.mubr.f32.mxu0 0.0
        %834 = vmatmul.mubr.f32.gmra.mrb[0].mxu0 %v685
        %v835 = vpop.f32.mrb[0].mxu0
        %v836 = vadd.f32 0.0, %v835
        %v837 = vpop.f32.mrb[0].mxu0
        %838 = vmatprep.mubr.f32.mxu0 0.0
        %839 = vmatmul.mubr.f32.gmra.mrb[0].mxu0 %v688
        %v840 = vpop.f32.mrb[0].mxu0
        %v841 = vadd.f32 0.0, %v840
        %v842 = vpop.f32.mrb[0].mxu0
        %843 = vmatprep.mubr.f32.mxu0 0.0
        %844 = vmatmul.mubr.f32.gmra.mrb[0].mxu0 %v691
        %v845 = vpop.f32.mrb[0].mxu0
        %v846 = vadd.f32 0.0, %v845
        %v847 = vpop.f32.mrb[0].mxu0
        %848 = vmatprep.mubr.f32.mxu0 0.0
        %849 = vmatmul.mubr.f32.gmra.mrb[0].mxu0 %v694
        %v850 = vpop.f32.mrb[0].mxu0
        %v851 = vadd.f32 0.0, %v850
        %v852 = vpop.f32.mrb[0].mxu0
        %853 = vmatprep.mubr.f32.mxu0 0.0
        %854 = vmatmul.mubr.f32.gmra.mrb[0].mxu0 %v697
        %v855 = vpop.f32.mrb[0].mxu0
        %v856 = vadd.f32 0.0, %v855
        %v857 = vpop.f32.mrb[0].mxu0
        %858 = vmatprep.mubr.f32.mxu0 0.0
        %859 = vmatmul.mubr.f32.gmra.mrb[0].mxu0 %v700
        %v860 = vpop.f32.mrb[0].mxu0
        %v861 = vadd.f32 0.0, %v860
        %v862 = vpop.f32.mrb[0].mxu0
        %863 = vmatprep.mubr.f32.mxu0 0.0
        %864 = vmatmul.mubr.f32.gmra.mrb[0].mxu0 %v703
        %v865 = vpop.f32.mrb[0].mxu0
        %v866 = vadd.f32 0.0, %v865
        %v867 = vpop.f32.mrb[0].mxu0
        %868 = vmatprep.mubr.f32.mxu0 0.0
        %869 = vmatmul.mubr.f32.gmra.mrb[0].mxu0 %v706
        %v870 = vpop.f32.mrb[0].mxu0
        %v871 = vadd.f32 0.0, %v870
        %v872 = vpop.f32.mrb[0].mxu0
        %873 = vmatprep.mubr.f32.mxu0 0.0
        %874 = vmatmul.mubr.f32.gmra.mrb[0].mxu0 %v709
        %v875 = vpop.f32.mrb[0].mxu0
        %v876 = vadd.f32 0.0, %v875
        %v877 = vpop.f32.mrb[0].mxu0
        %878 = vmatprep.mubr.f32.mxu0 0.0
        %879 = vmatmul.mubr.f32.gmra.mrb[0].mxu0 %v712
        %v880 = vpop.f32.mrb[0].mxu0
        %v881 = vadd.f32 0.0, %v880
        %v882 = vpop.f32.mrb[0].mxu0
        %883 = vmatprep.mubr.f32.mxu0 0.0
        %884 = vmatmul.mubr.f32.gmra.mrb[0].mxu0 %v715
        %v885 = vpop.f32.mrb[0].mxu0
        %v886 = vadd.f32 0.0, %v885
        %v887 = vpop.f32.mrb[0].mxu0
        %888 = vmatprep.mubr.f32.mxu0 0.0
        %889 = vmatmul.mubr.f32.gmra.mrb[0].mxu0 %v718
        %v890 = vpop.f32.mrb[0].mxu0
        %v891 = vadd.f32 0.0, %v890
        %v892 = vpop.f32.mrb[0].mxu0
        %893 = vmatprep.mubr.f32.mxu0 0.0
        %894 = vmatmul.mubr.f32.gmra.mrb[0].mxu0 %v721
        %v895 = vpop.f32.mrb[0].mxu0
        %v896 = vadd.f32 0.0, %v895
        %v897 = vpop.f32.mrb[0].mxu0
        %898 = vmatprep.mubr.f32.mxu0 0.0
        %899 = vmatmul.mubr.f32.gmra.mrb[0].mxu0 %v724
        %v900 = vpop.f32.mrb[0].mxu0
        %v901 = vadd.f32 0.0, %v900
        %v902 = vpop.f32.mrb[0].mxu0
        %903 = vmatprep.mubr.f32.mxu0 0.0
        %904 = vmatmul.mubr.f32.gmra.mrb[0].mxu0 %v727
        %v905 = vpop.f32.mrb[0].mxu0
        %v906 = vadd.f32 0.0, %v905
        %v907 = vpop.f32.mrb[0].mxu0
        %908 = vdwg.mxu0
        %v910 = vsel %vm493, %v611, 0
        %v913 = vsel %vm493, %v612, 0
        %v916 = vsel %vm493, %v613, 0
        %v919 = vsel %vm493, %v614, 0
        %v922 = vsel %vm493, %v615, 0
        %v925 = vsel %vm493, %v616, 0
        %v928 = vsel %vm493, %v617, 0
        %v931 = vsel %vm493, %v618, 0
        %v934 = vsel %vm493, %v619, 0
        %v937 = vsel %vm493, %v620, 0
        %v940 = vsel %vm493, %v621, 0
        %v943 = vsel %vm493, %v622, 0
        %v946 = vsel %vm493, %v623, 0
        %v949 = vsel %vm493, %v624, 0
        %v952 = vsel %vm493, %v625, 0
        %v955 = vsel %vm493, %v626, 0
        %v958 = vsel %vm493, %v627, 0
        %v961 = vsel %vm493, %v628, 0
        %v964 = vsel %vm493, %v629, 0
        %v967 = vsel %vm493, %v630, 0
        %v970 = vsel %vm493, %v631, 0
        %v973 = vsel %vm493, %v632, 0
        %v976 = vsel %vm493, %v633, 0
        %978 = vmatprep.subr.mxu0 0.0
        %979 = vmatpush1.msra.mxu0 %v634
        %980 = vmatprep.subr.mxu0 0.0
        %981 = vmatpush1.msra.mxu0 0.0
        %982 = vmatprep.subr.mxu0 0.0
        %983 = vmatpush1.msra.mxu0 0.0
        %984 = vmatprep.subr.mxu0 0.0
        %985 = vmatpush1.msra.mxu0 0.0
        %986 = vmatprep.subr.mxu0 0.0
        %987 = vmatpush1.msra.mxu0 0.0
        %988 = vmatprep.subr.mxu0 0.0
        %989 = vmatpush1.msra.mxu0 0.0
        %990 = vmatprep.subr.mxu0 0.0
        %991 = vmatpush1.msra.mxu0 0.0
        %992 = vmatprep.subr.mxu0 0.0
        %993 = vmatpush1.msra.mxu0 0.0
        %994 = vmatprep.subr.mxu0 0.0
        %995 = vmatpush1.msra.mxu0 0.0
        %996 = vmatprep.subr.mxu0 0.0
        %997 = vmatpush1.msra.mxu0 0.0
        %998 = vmatprep.subr.mxu0 0.0
        %999 = vmatpush1.msra.mxu0 0.0
        %1000 = vmatprep.subr.mxu0 0.0
        %1001 = vmatpush1.msra.mxu0 0.0
        %1002 = vmatprep.subr.mxu0 0.0
        %1003 = vmatpush1.msra.mxu0 0.0
        %1004 = vmatprep.subr.mxu0 0.0
        %1005 = vmatpush1.msra.mxu0 0.0
        %1006 = vmatprep.subr.mxu0 0.0
        %1007 = vmatpush1.msra.mxu0 0.0
        %1008 = vmatprep.subr.mxu0 0.0
        %1009 = vmatpush1.msra.mxu0 0.0
        %1010 = vmatprep.subr.mxu0 0.0
        %1011 = vmatpush1.msra.mxu0 0.0
        %1012 = vmatprep.subr.mxu0 0.0
        %1013 = vmatpush1.msra.mxu0 0.0
        %1014 = vmatprep.subr.mxu0 0.0
        %1015 = vmatpush1.msra.mxu0 0.0
        %1016 = vmatprep.subr.mxu0 0.0
        %1017 = vmatpush1.msra.mxu0 0.0
        %1018 = vmatprep.subr.mxu0 0.0
        %1019 = vmatpush1.msra.mxu0 0.0
        %1020 = vmatprep.subr.mxu0 0.0
        %1021 = vmatpush1.msra.mxu0 0.0
        %1022 = vmatprep.subr.mxu0 0.0
        %1023 = vmatpush1.msra.mxu0 0.0
        %1024 = vmatprep.subr.mxu0 0.0
        %1025 = vmatpush1.msra.mxu0 0.0
        %1026 = vmatprep.subr.mxu0 0.0
        %1027 = vmatpush1.msra.mxu0 0.0
        %1028 = vmatprep.subr.mxu0 0.0
        %1029 = vmatpush1.msra.mxu0 0.0
        %1030 = vmatprep.subr.mxu0 0.0
        %1031 = vmatpush1.msra.mxu0 0.0
        %1032 = vmatprep.subr.mxu0 0.0
        %1033 = vmatpush1.msra.mxu0 0.0
        %1034 = vmatprep.subr.mxu0 0.0
        %1035 = vmatpush1.msra.mxu0 0.0
        %1036 = vmatprep.subr.mxu0 0.0
        %1037 = vmatpush1.msra.mxu0 0.0
        %1038 = vmatprep.subr.mxu0 0.0
        %1039 = vmatpush1.msra.mxu0 0.0
        %1040 = vmatprep.subr.mxu0 0.0
        %1041 = vmatpush1.msra.mxu0 0.0
        %1042 = vmatprep.mubr.f32.mxu0 0.0
        %1043 = vmatmul.mubr.f32.gmra.mrb[0].mxu0 %v910
        %v1044 = vpop.f32.mrb[0].mxu0
        %v1045 = vadd.f32 %v796, %v1044
        %v1046 = vpop.f32.mrb[0].mxu0
        %1047 = vmatprep.mubr.f32.mxu0 0.0
        %1048 = vmatmul.mubr.f32.gmra.mrb[0].mxu0 %v913
        %v1049 = vpop.f32.mrb[0].mxu0
        %v1050 = vadd.f32 %v801, %v1049
        %v1051 = vpop.f32.mrb[0].mxu0
        %1052 = vmatprep.mubr.f32.mxu0 0.0
        %1053 = vmatmul.mubr.f32.gmra.mrb[0].mxu0 %v916
        %v1054 = vpop.f32.mrb[0].mxu0
        %v1055 = vadd.f32 %v806, %v1054
        %v1056 = vpop.f32.mrb[0].mxu0
        %1057 = vmatprep.mubr.f32.mxu0 0.0
        %1058 = vmatmul.mubr.f32.gmra.mrb[0].mxu0 %v919
        %v1059 = vpop.f32.mrb[0].mxu0
        %v1060 = vadd.f32 %v811, %v1059
        %v1061 = vpop.f32.mrb[0].mxu0
        %1062 = vmatprep.mubr.f32.mxu0 0.0
        %1063 = vmatmul.mubr.f32.gmra.mrb[0].mxu0 %v922
        %v1064 = vpop.f32.mrb[0].mxu0
        %v1065 = vadd.f32 %v816, %v1064
        %v1066 = vpop.f32.mrb[0].mxu0
        %1067 = vmatprep.mubr.f32.mxu0 0.0
        %1068 = vmatmul.mubr.f32.gmra.mrb[0].mxu0 %v925
        %v1069 = vpop.f32.mrb[0].mxu0
        %v1070 = vadd.f32 %v821, %v1069
        %v1071 = vpop.f32.mrb[0].mxu0
        %1072 = vmatprep.mubr.f32.mxu0 0.0
        %1073 = vmatmul.mubr.f32.gmra.mrb[0].mxu0 %v928
        %v1074 = vpop.f32.mrb[0].mxu0
        %v1075 = vadd.f32 %v826, %v1074
        %v1076 = vpop.f32.mrb[0].mxu0
        %1077 = vmatprep.mubr.f32.mxu0 0.0
        %1078 = vmatmul.mubr.f32.gmra.mrb[0].mxu0 %v931
        %v1079 = vpop.f32.mrb[0].mxu0
        %v1080 = vadd.f32 %v831, %v1079
        %v1081 = vpop.f32.mrb[0].mxu0
        %1082 = vmatprep.mubr.f32.mxu0 0.0
        %1083 = vmatmul.mubr.f32.gmra.mrb[0].mxu0 %v934
        %v1084 = vpop.f32.mrb[0].mxu0
        %v1085 = vadd.f32 %v836, %v1084
        %v1086 = vpop.f32.mrb[0].mxu0
        %1087 = vmatprep.mubr.f32.mxu0 0.0
        %1088 = vmatmul.mubr.f32.gmra.mrb[0].mxu0 %v937
        %v1089 = vpop.f32.mrb[0].mxu0
        %v1090 = vadd.f32 %v841, %v1089
        %v1091 = vpop.f32.mrb[0].mxu0
        %1092 = vmatprep.mubr.f32.mxu0 0.0
        %1093 = vmatmul.mubr.f32.gmra.mrb[0].mxu0 %v940
        %v1094 = vpop.f32.mrb[0].mxu0
        %v1095 = vadd.f32 %v846, %v1094
        %v1096 = vpop.f32.mrb[0].mxu0
        %1097 = vmatprep.mubr.f32.mxu0 0.0
        %1098 = vmatmul.mubr.f32.gmra.mrb[0].mxu0 %v943
        %v1099 = vpop.f32.mrb[0].mxu0
        %v1100 = vadd.f32 %v851, %v1099
        %v1101 = vpop.f32.mrb[0].mxu0
        %1102 = vmatprep.mubr.f32.mxu0 0.0
        %1103 = vmatmul.mubr.f32.gmra.mrb[0].mxu0 %v946
        %v1104 = vpop.f32.mrb[0].mxu0
        %v1105 = vadd.f32 %v856, %v1104
        %v1106 = vpop.f32.mrb[0].mxu0
        %1107 = vmatprep.mubr.f32.mxu0 0.0
        %1108 = vmatmul.mubr.f32.gmra.mrb[0].mxu0 %v949
        %v1109 = vpop.f32.mrb[0].mxu0
        %v1110 = vadd.f32 %v861, %v1109
        %v1111 = vpop.f32.mrb[0].mxu0
        %1112 = vmatprep.mubr.f32.mxu0 0.0
        %1113 = vmatmul.mubr.f32.gmra.mrb[0].mxu0 %v952
        %v1114 = vpop.f32.mrb[0].mxu0
        %v1115 = vadd.f32 %v866, %v1114
        %v1116 = vpop.f32.mrb[0].mxu0
        %1117 = vmatprep.mubr.f32.mxu0 0.0
        %1118 = vmatmul.mubr.f32.gmra.mrb[0].mxu0 %v955
        %v1119 = vpop.f32.mrb[0].mxu0
        %v1120 = vadd.f32 %v871, %v1119
        %v1121 = vpop.f32.mrb[0].mxu0
        %1122 = vmatprep.mubr.f32.mxu0 0.0
        %1123 = vmatmul.mubr.f32.gmra.mrb[0].mxu0 %v958
        %v1124 = vpop.f32.mrb[0].mxu0
        %v1125 = vadd.f32 %v876, %v1124
        %v1126 = vpop.f32.mrb[0].mxu0
        %1127 = vmatprep.mubr.f32.mxu0 0.0
        %1128 = vmatmul.mubr.f32.gmra.mrb[0].mxu0 %v961
        %v1129 = vpop.f32.mrb[0].mxu0
        %v1130 = vadd.f32 %v881, %v1129
        %v1131 = vpop.f32.mrb[0].mxu0
        %1132 = vmatprep.mubr.f32.mxu0 0.0
        %1133 = vmatmul.mubr.f32.gmra.mrb[0].mxu0 %v964
        %v1134 = vpop.f32.mrb[0].mxu0
        %v1135 = vadd.f32 %v886, %v1134
        %v1136 = vpop.f32.mrb[0].mxu0
        %1137 = vmatprep.mubr.f32.mxu0 0.0
        %1138 = vmatmul.mubr.f32.gmra.mrb[0].mxu0 %v967
        %v1139 = vpop.f32.mrb[0].mxu0
        %v1140 = vadd.f32 %v891, %v1139
        %v1141 = vpop.f32.mrb[0].mxu0
        %1142 = vmatprep.mubr.f32.mxu0 0.0
        %1143 = vmatmul.mubr.f32.gmra.mrb[0].mxu0 %v970
        %v1144 = vpop.f32.mrb[0].mxu0
        %v1145 = vadd.f32 %v896, %v1144
        %v1146 = vpop.f32.mrb[0].mxu0
        %1147 = vmatprep.mubr.f32.mxu0 0.0
        %1148 = vmatmul.mubr.f32.gmra.mrb[0].mxu0 %v973
        %v1149 = vpop.f32.mrb[0].mxu0
        %v1150 = vadd.f32 %v901, %v1149
        %v1151 = vpop.f32.mrb[0].mxu0
        %1152 = vmatprep.mubr.f32.mxu0 0.0
        %1153 = vmatmul.mubr.f32.gmra.mrb[0].mxu0 %v976
        %v1154 = vpop.f32.mrb[0].mxu0
        %v1155 = vadd.f32 %v906, %v1154
        %v1156 = vpop.f32.mrb[0].mxu0
        %1157 = vdwg.mxu0
        %v1158 = vld [vmem:[#allocation2 + $0x2] sm:$0xff]
        %v1159 = vld [vmem:[#allocation2 + $0xa] sm:$0xff]
        %v1160 = vld [vmem:[#allocation2 + $0x12] sm:$0xff]
        %v1161 = vld [vmem:[#allocation2 + $0x1a] sm:$0xff]
        %v1162 = vld [vmem:[#allocation2 + $0x22] sm:$0xff]
        %v1163 = vld [vmem:[#allocation2 + $0x2a] sm:$0xff]
        %v1164 = vld [vmem:[#allocation2 + $0x32] sm:$0xff]
        %v1165 = vld [vmem:[#allocation2 + $0x3a] sm:$0xff]
        %v1166 = vld [vmem:[#allocation2 + $0x42] sm:$0xff]
        %v1167 = vld [vmem:[#allocation2 + $0x4a] sm:$0xff]
        %v1168 = vld [vmem:[#allocation2 + $0x52] sm:$0xff]
        %v1169 = vld [vmem:[#allocation2 + $0x5a] sm:$0xff]
        %v1170 = vld [vmem:[#allocation2 + $0x62] sm:$0xff]
        %v1171 = vld [vmem:[#allocation2 + $0x6a] sm:$0xff]
        %v1172 = vld [vmem:[#allocation2 + $0x72] sm:$0xff]
        %v1173 = vld [vmem:[#allocation2 + $0x7a] sm:$0xff]
        %v1174 = vld [vmem:[#allocation2 + $0x82] sm:$0xff]
        %v1175 = vld [vmem:[#allocation2 + $0x8a] sm:$0xff]
        %v1176 = vld [vmem:[#allocation2 + $0x92] sm:$0xff]
        %v1177 = vld [vmem:[#allocation2 + $0x9a] sm:$0xff]
        %v1178 = vld [vmem:[#allocation2 + $0xa2] sm:$0xff]
        %v1179 = vld [vmem:[#allocation2 + $0xaa] sm:$0xff]
        %v1180 = vld [vmem:[#allocation2 + $0xb2] sm:$0xf]
        %s1181 = scalar_lea.vmem [#allocation10], 16
        %v1182 = vld [vmem:[%s1181] sm:$0xff]
        %v1184 = vsel %vm493, %v1158, 0
        %v1187 = vsel %vm493, %v1159, 0
        %v1190 = vsel %vm493, %v1160, 0
        %v1193 = vsel %vm493, %v1161, 0
        %v1196 = vsel %vm493, %v1162, 0
        %v1199 = vsel %vm493, %v1163, 0
        %v1202 = vsel %vm493, %v1164, 0
        %v1205 = vsel %vm493, %v1165, 0
        %v1208 = vsel %vm493, %v1166, 0
        %v1211 = vsel %vm493, %v1167, 0
        %v1214 = vsel %vm493, %v1168, 0
        %v1217 = vsel %vm493, %v1169, 0
        %v1220 = vsel %vm493, %v1170, 0
        %v1223 = vsel %vm493, %v1171, 0
        %v1226 = vsel %vm493, %v1172, 0
        %v1229 = vsel %vm493, %v1173, 0
        %v1232 = vsel %vm493, %v1174, 0
        %v1235 = vsel %vm493, %v1175, 0
        %v1238 = vsel %vm493, %v1176, 0
        %v1241 = vsel %vm493, %v1177, 0
        %v1244 = vsel %vm493, %v1178, 0
        %v1247 = vsel %vm493, %v1179, 0
        %v1250 = vsel %vm493, %v1180, 0
        %1252 = vmatprep.subr.mxu0 0.0
        %1253 = vmatpush1.msra.mxu0 %v1182
        %1254 = vmatprep.subr.mxu0 0.0
        %1255 = vmatpush1.msra.mxu0 0.0
        %1256 = vmatprep.subr.mxu0 0.0
        %1257 = vmatpush1.msra.mxu0 0.0
        %1258 = vmatprep.subr.mxu0 0.0
        %1259 = vmatpush1.msra.mxu0 0.0
        %1260 = vmatprep.subr.mxu0 0.0
        %1261 = vmatpush1.msra.mxu0 0.0
        %1262 = vmatprep.subr.mxu0 0.0
        %1263 = vmatpush1.msra.mxu0 0.0
        %1264 = vmatprep.subr.mxu0 0.0
        %1265 = vmatpush1.msra.mxu0 0.0
        %1266 = vmatprep.subr.mxu0 0.0
        %1267 = vmatpush1.msra.mxu0 0.0
        %1268 = vmatprep.subr.mxu0 0.0
        %1269 = vmatpush1.msra.mxu0 0.0
        %1270 = vmatprep.subr.mxu0 0.0
        %1271 = vmatpush1.msra.mxu0 0.0
        %1272 = vmatprep.subr.mxu0 0.0
        %1273 = vmatpush1.msra.mxu0 0.0
        %1274 = vmatprep.subr.mxu0 0.0
        %1275 = vmatpush1.msra.mxu0 0.0
        %1276 = vmatprep.subr.mxu0 0.0
        %1277 = vmatpush1.msra.mxu0 0.0
        %1278 = vmatprep.subr.mxu0 0.0
        %1279 = vmatpush1.msra.mxu0 0.0
        %1280 = vmatprep.subr.mxu0 0.0
        %1281 = vmatpush1.msra.mxu0 0.0
        %1282 = vmatprep.subr.mxu0 0.0
        %1283 = vmatpush1.msra.mxu0 0.0
        %1284 = vmatprep.subr.mxu0 0.0
        %1285 = vmatpush1.msra.mxu0 0.0
        %1286 = vmatprep.subr.mxu0 0.0
        %1287 = vmatpush1.msra.mxu0 0.0
        %1288 = vmatprep.subr.mxu0 0.0
        %1289 = vmatpush1.msra.mxu0 0.0
        %1290 = vmatprep.subr.mxu0 0.0
        %1291 = vmatpush1.msra.mxu0 0.0
        %1292 = vmatprep.subr.mxu0 0.0
        %1293 = vmatpush1.msra.mxu0 0.0
        %1294 = vmatprep.subr.mxu0 0.0
        %1295 = vmatpush1.msra.mxu0 0.0
        %1296 = vmatprep.subr.mxu0 0.0
        %1297 = vmatpush1.msra.mxu0 0.0
        %1298 = vmatprep.subr.mxu0 0.0
        %1299 = vmatpush1.msra.mxu0 0.0
        %1300 = vmatprep.subr.mxu0 0.0
        %1301 = vmatpush1.msra.mxu0 0.0
        %1302 = vmatprep.subr.mxu0 0.0
        %1303 = vmatpush1.msra.mxu0 0.0
        %1304 = vmatprep.subr.mxu0 0.0
        %1305 = vmatpush1.msra.mxu0 0.0
        %1306 = vmatprep.subr.mxu0 0.0
        %1307 = vmatpush1.msra.mxu0 0.0
        %1308 = vmatprep.subr.mxu0 0.0
        %1309 = vmatpush1.msra.mxu0 0.0
        %1310 = vmatprep.subr.mxu0 0.0
        %1311 = vmatpush1.msra.mxu0 0.0
        %1312 = vmatprep.subr.mxu0 0.0
        %1313 = vmatpush1.msra.mxu0 0.0
        %1314 = vmatprep.subr.mxu0 0.0
        %1315 = vmatpush1.msra.mxu0 0.0
        %1316 = vmatprep.mubr.f32.mxu0 0.0
        %1317 = vmatmul.mubr.f32.gmra.mrb[0].mxu0 %v1184
        %v1318 = vpop.f32.mrb[0].mxu0
        %v1319 = vadd.f32 0.0, %v1318
        %v1320 = vpop.f32.mrb[0].mxu0
        %1321 = vmatprep.mubr.f32.mxu0 0.0
        %1322 = vmatmul.mubr.f32.gmra.mrb[0].mxu0 %v1187
        %v1323 = vpop.f32.mrb[0].mxu0
        %v1324 = vadd.f32 0.0, %v1323
        %v1325 = vpop.f32.mrb[0].mxu0
        %1326 = vmatprep.mubr.f32.mxu0 0.0
        %1327 = vmatmul.mubr.f32.gmra.mrb[0].mxu0 %v1190
        %v1328 = vpop.f32.mrb[0].mxu0
        %v1329 = vadd.f32 0.0, %v1328
        %v1330 = vpop.f32.mrb[0].mxu0
        %1331 = vmatprep.mubr.f32.mxu0 0.0
        %1332 = vmatmul.mubr.f32.gmra.mrb[0].mxu0 %v1193
        %v1333 = vpop.f32.mrb[0].mxu0
        %v1334 = vadd.f32 0.0, %v1333
        %v1335 = vpop.f32.mrb[0].mxu0
        %1336 = vmatprep.mubr.f32.mxu0 0.0
        %1337 = vmatmul.mubr.f32.gmra.mrb[0].mxu0 %v1196
        %v1338 = vpop.f32.mrb[0].mxu0
        %v1339 = vadd.f32 0.0, %v1338
        %v1340 = vpop.f32.mrb[0].mxu0
        %1341 = vmatprep.mubr.f32.mxu0 0.0
        %1342 = vmatmul.mubr.f32.gmra.mrb[0].mxu0 %v1199
        %v1343 = vpop.f32.mrb[0].mxu0
        %v1344 = vadd.f32 0.0, %v1343
        %v1345 = vpop.f32.mrb[0].mxu0
        %1346 = vmatprep.mubr.f32.mxu0 0.0
        %1347 = vmatmul.mubr.f32.gmra.mrb[0].mxu0 %v1202
        %v1348 = vpop.f32.mrb[0].mxu0
        %v1349 = vadd.f32 0.0, %v1348
        %v1350 = vpop.f32.mrb[0].mxu0
        %1351 = vmatprep.mubr.f32.mxu0 0.0
        %1352 = vmatmul.mubr.f32.gmra.mrb[0].mxu0 %v1205
        %v1353 = vpop.f32.mrb[0].mxu0
        %v1354 = vadd.f32 0.0, %v1353
        %v1355 = vpop.f32.mrb[0].mxu0
        %1356 = vmatprep.mubr.f32.mxu0 0.0
        %1357 = vmatmul.mubr.f32.gmra.mrb[0].mxu0 %v1208
        %v1358 = vpop.f32.mrb[0].mxu0
        %v1359 = vadd.f32 0.0, %v1358
        %v1360 = vpop.f32.mrb[0].mxu0
        %1361 = vmatprep.mubr.f32.mxu0 0.0
        %1362 = vmatmul.mubr.f32.gmra.mrb[0].mxu0 %v1211
        %v1363 = vpop.f32.mrb[0].mxu0
        %v1364 = vadd.f32 0.0, %v1363
        %v1365 = vpop.f32.mrb[0].mxu0
        %1366 = vmatprep.mubr.f32.mxu0 0.0
        %1367 = vmatmul.mubr.f32.gmra.mrb[0].mxu0 %v1214
        %v1368 = vpop.f32.mrb[0].mxu0
        %v1369 = vadd.f32 0.0, %v1368
        %v1370 = vpop.f32.mrb[0].mxu0
        %1371 = vmatprep.mubr.f32.mxu0 0.0
        %1372 = vmatmul.mubr.f32.gmra.mrb[0].mxu0 %v1217
        %v1373 = vpop.f32.mrb[0].mxu0
        %v1374 = vadd.f32 0.0, %v1373
        %v1375 = vpop.f32.mrb[0].mxu0
        %1376 = vmatprep.mubr.f32.mxu0 0.0
        %1377 = vmatmul.mubr.f32.gmra.mrb[0].mxu0 %v1220
        %v1378 = vpop.f32.mrb[0].mxu0
        %v1379 = vadd.f32 0.0, %v1378
        %v1380 = vpop.f32.mrb[0].mxu0
        %1381 = vmatprep.mubr.f32.mxu0 0.0
        %1382 = vmatmul.mubr.f32.gmra.mrb[0].mxu0 %v1223
        %v1383 = vpop.f32.mrb[0].mxu0
        %v1384 = vadd.f32 0.0, %v1383
        %v1385 = vpop.f32.mrb[0].mxu0
        %1386 = vmatprep.mubr.f32.mxu0 0.0
        %1387 = vmatmul.mubr.f32.gmra.mrb[0].mxu0 %v1226
        %v1388 = vpop.f32.mrb[0].mxu0
        %v1389 = vadd.f32 0.0, %v1388
        %v1390 = vpop.f32.mrb[0].mxu0
        %1391 = vmatprep.mubr.f32.mxu0 0.0
        %1392 = vmatmul.mubr.f32.gmra.mrb[0].mxu0 %v1229
        %v1393 = vpop.f32.mrb[0].mxu0
        %v1394 = vadd.f32 0.0, %v1393
        %v1395 = vpop.f32.mrb[0].mxu0
        %1396 = vmatprep.mubr.f32.mxu0 0.0
        %1397 = vmatmul.mubr.f32.gmra.mrb[0].mxu0 %v1232
        %v1398 = vpop.f32.mrb[0].mxu0
        %v1399 = vadd.f32 0.0, %v1398
        %v1400 = vpop.f32.mrb[0].mxu0
        %1401 = vmatprep.mubr.f32.mxu0 0.0
        %1402 = vmatmul.mubr.f32.gmra.mrb[0].mxu0 %v1235
        %v1403 = vpop.f32.mrb[0].mxu0
        %v1404 = vadd.f32 0.0, %v1403
        %v1405 = vpop.f32.mrb[0].mxu0
        %1406 = vmatprep.mubr.f32.mxu0 0.0
        %1407 = vmatmul.mubr.f32.gmra.mrb[0].mxu0 %v1238
        %v1408 = vpop.f32.mrb[0].mxu0
        %v1409 = vadd.f32 0.0, %v1408
        %v1410 = vpop.f32.mrb[0].mxu0
        %1411 = vmatprep.mubr.f32.mxu0 0.0
        %1412 = vmatmul.mubr.f32.gmra.mrb[0].mxu0 %v1241
        %v1413 = vpop.f32.mrb[0].mxu0
        %v1414 = vadd.f32 0.0, %v1413
        %v1415 = vpop.f32.mrb[0].mxu0
        %1416 = vmatprep.mubr.f32.mxu0 0.0
        %1417 = vmatmul.mubr.f32.gmra.mrb[0].mxu0 %v1244
        %v1418 = vpop.f32.mrb[0].mxu0
        %v1419 = vadd.f32 0.0, %v1418
        %v1420 = vpop.f32.mrb[0].mxu0
        %1421 = vmatprep.mubr.f32.mxu0 0.0
        %1422 = vmatmul.mubr.f32.gmra.mrb[0].mxu0 %v1247
        %v1423 = vpop.f32.mrb[0].mxu0
        %v1424 = vadd.f32 0.0, %v1423
        %v1425 = vpop.f32.mrb[0].mxu0
        %1426 = vmatprep.mubr.f32.mxu0 0.0
        %1427 = vmatmul.mubr.f32.gmra.mrb[0].mxu0 %v1250
        %v1428 = vpop.f32.mrb[0].mxu0
        %v1429 = vadd.f32 0.0, %v1428
        %v1430 = vpop.f32.mrb[0].mxu0
        %1431 = vdwg.mxu0
        %v1432 = vadd.f32 %v1045, %v1319
        %v1433 = vadd.f32 %v1050, %v1324
        %v1434 = vadd.f32 %v1055, %v1329
        %v1435 = vadd.f32 %v1060, %v1334
        %v1436 = vadd.f32 %v1065, %v1339
        %v1437 = vadd.f32 %v1070, %v1344
        %v1438 = vadd.f32 %v1075, %v1349
        %v1439 = vadd.f32 %v1080, %v1354
        %v1440 = vadd.f32 %v1085, %v1359
        %v1441 = vadd.f32 %v1090, %v1364
        %v1442 = vadd.f32 %v1095, %v1369
        %v1443 = vadd.f32 %v1100, %v1374
        %v1444 = vadd.f32 %v1105, %v1379
        %v1445 = vadd.f32 %v1110, %v1384
        %v1446 = vadd.f32 %v1115, %v1389
        %v1447 = vadd.f32 %v1120, %v1394
        %v1448 = vadd.f32 %v1125, %v1399
        %v1449 = vadd.f32 %v1130, %v1404
        %v1450 = vadd.f32 %v1135, %v1409
        %v1451 = vadd.f32 %v1140, %v1414
        %v1452 = vadd.f32 %v1145, %v1419
        %v1453 = vadd.f32 %v1150, %v1424
        %v1454 = vadd.f32 %v1155, %v1429
        %v1455 = vld [vmem:[#allocation2 + $0x12] sm:$0xff]
        %v1456 = vld [vmem:[#allocation2 + $0x1a] sm:$0xff]
        %v1457 = vld [vmem:[#allocation2 + $0x22] sm:$0xff]
        %v1458 = vld [vmem:[#allocation2 + $0x2a] sm:$0xff]
        %v1459 = vld [vmem:[#allocation2 + $0x32] sm:$0xff]
        %v1460 = vld [vmem:[#allocation2 + $0x3a] sm:$0xff]
        %v1461 = vld [vmem:[#allocation2 + $0x42] sm:$0xff]
        %v1462 = vld [vmem:[#allocation2 + $0x4a] sm:$0xff]
        %v1463 = vld [vmem:[#allocation2 + $0x52] sm:$0xff]
        %v1464 = vld [vmem:[#allocation2 + $0x5a] sm:$0xff]
        %v1465 = vld [vmem:[#allocation2 + $0x62] sm:$0xff]
        %v1466 = vld [vmem:[#allocation2 + $0x6a] sm:$0xff]
        %v1467 = vld [vmem:[#allocation2 + $0x72] sm:$0xff]
        %v1468 = vld [vmem:[#allocation2 + $0x7a] sm:$0xff]
        %v1469 = vld [vmem:[#allocation2 + $0x82] sm:$0xff]
        %v1470 = vld [vmem:[#allocation2 + $0x8a] sm:$0xff]
        %v1471 = vld [vmem:[#allocation2 + $0x92] sm:$0xff]
        %v1472 = vld [vmem:[#allocation2 + $0x9a] sm:$0xff]
        %v1473 = vld [vmem:[#allocation2 + $0xa2] sm:$0xff]
        %v1474 = vld [vmem:[#allocation2 + $0xaa] sm:$0xff]
        %v1475 = vld [vmem:[#allocation2 + $0xb2] sm:$0xff]
        %v1476 = vld [vmem:[#allocation2 + $0xba] sm:$0xff]
        %v1477 = vld [vmem:[#allocation2 + $0xc2] sm:$0xf]
        %s1478 = scalar_lea.vmem [#allocation10], 24
        %v1479 = vld [vmem:[%s1478] sm:$0xff]
        %v1481 = vsel %vm493, %v1455, 0
        %v1484 = vsel %vm493, %v1456, 0
        %v1487 = vsel %vm493, %v1457, 0
        %v1490 = vsel %vm493, %v1458, 0
        %v1493 = vsel %vm493, %v1459, 0
        %v1496 = vsel %vm493, %v1460, 0
        %v1499 = vsel %vm493, %v1461, 0
        %v1502 = vsel %vm493, %v1462, 0
        %v1505 = vsel %vm493, %v1463, 0
        %v1508 = vsel %vm493, %v1464, 0
        %v1511 = vsel %vm493, %v1465, 0
        %v1514 = vsel %vm493, %v1466, 0
        %v1517 = vsel %vm493, %v1467, 0
        %v1520 = vsel %vm493, %v1468, 0
        %v1523 = vsel %vm493, %v1469, 0
        %v1526 = vsel %vm493, %v1470, 0
        %v1529 = vsel %vm493, %v1471, 0
        %v1532 = vsel %vm493, %v1472, 0
        %v1535 = vsel %vm493, %v1473, 0
        %v1538 = vsel %vm493, %v1474, 0
        %v1541 = vsel %vm493, %v1475, 0
        %v1544 = vsel %vm493, %v1476, 0
        %v1547 = vsel %vm493, %v1477, 0
        %1549 = vmatprep.subr.mxu0 0.0
        %1550 = vmatpush1.msra.mxu0 %v1479
        %1551 = vmatprep.subr.mxu0 0.0
        %1552 = vmatpush1.msra.mxu0 0.0
        %1553 = vmatprep.subr.mxu0 0.0
        %1554 = vmatpush1.msra.mxu0 0.0
        %1555 = vmatprep.subr.mxu0 0.0
        %1556 = vmatpush1.msra.mxu0 0.0
        %1557 = vmatprep.subr.mxu0 0.0
        %1558 = vmatpush1.msra.mxu0 0.0
        %1559 = vmatprep.subr.mxu0 0.0
        %1560 = vmatpush1.msra.mxu0 0.0
        %1561 = vmatprep.subr.mxu0 0.0
        %1562 = vmatpush1.msra.mxu0 0.0
        %1563 = vmatprep.subr.mxu0 0.0
        %1564 = vmatpush1.msra.mxu0 0.0
        %1565 = vmatprep.subr.mxu0 0.0
        %1566 = vmatpush1.msra.mxu0 0.0
        %1567 = vmatprep.subr.mxu0 0.0
        %1568 = vmatpush1.msra.mxu0 0.0
        %1569 = vmatprep.subr.mxu0 0.0
        %1570 = vmatpush1.msra.mxu0 0.0
        %1571 = vmatprep.subr.mxu0 0.0
        %1572 = vmatpush1.msra.mxu0 0.0
        %1573 = vmatprep.subr.mxu0 0.0
        %1574 = vmatpush1.msra.mxu0 0.0
        %1575 = vmatprep.subr.mxu0 0.0
        %1576 = vmatpush1.msra.mxu0 0.0
        %1577 = vmatprep.subr.mxu0 0.0
        %1578 = vmatpush1.msra.mxu0 0.0
        %1579 = vmatprep.subr.mxu0 0.0
        %1580 = vmatpush1.msra.mxu0 0.0
        %1581 = vmatprep.subr.mxu0 0.0
        %1582 = vmatpush1.msra.mxu0 0.0
        %1583 = vmatprep.subr.mxu0 0.0
        %1584 = vmatpush1.msra.mxu0 0.0
        %1585 = vmatprep.subr.mxu0 0.0
        %1586 = vmatpush1.msra.mxu0 0.0
        %1587 = vmatprep.subr.mxu0 0.0
        %1588 = vmatpush1.msra.mxu0 0.0
        %1589 = vmatprep.subr.mxu0 0.0
        %1590 = vmatpush1.msra.mxu0 0.0
        %1591 = vmatprep.subr.mxu0 0.0
        %1592 = vmatpush1.msra.mxu0 0.0
        %1593 = vmatprep.subr.mxu0 0.0
        %1594 = vmatpush1.msra.mxu0 0.0
        %1595 = vmatprep.subr.mxu0 0.0
        %1596 = vmatpush1.msra.mxu0 0.0
        %1597 = vmatprep.subr.mxu0 0.0
        %1598 = vmatpush1.msra.mxu0 0.0
        %1599 = vmatprep.subr.mxu0 0.0
        %1600 = vmatpush1.msra.mxu0 0.0
        %1601 = vmatprep.subr.mxu0 0.0
        %1602 = vmatpush1.msra.mxu0 0.0
        %1603 = vmatprep.subr.mxu0 0.0
        %1604 = vmatpush1.msra.mxu0 0.0
        %1605 = vmatprep.subr.mxu0 0.0
        %1606 = vmatpush1.msra.mxu0 0.0
        %1607 = vmatprep.subr.mxu0 0.0
        %1608 = vmatpush1.msra.mxu0 0.0
        %1609 = vmatprep.subr.mxu0 0.0
        %1610 = vmatpush1.msra.mxu0 0.0
        %1611 = vmatprep.subr.mxu0 0.0
        %1612 = vmatpush1.msra.mxu0 0.0
        %1613 = vmatprep.mubr.f32.mxu0 0.0
        %1614 = vmatmul.mubr.f32.gmra.mrb[0].mxu0 %v1481
        %v1615 = vpop.f32.mrb[0].mxu0
        %v1616 = vadd.f32 0.0, %v1615
        %v1617 = vpop.f32.mrb[0].mxu0
        %1618 = vmatprep.mubr.f32.mxu0 0.0
        %1619 = vmatmul.mubr.f32.gmra.mrb[0].mxu0 %v1484
        %v1620 = vpop.f32.mrb[0].mxu0
        %v1621 = vadd.f32 0.0, %v1620
        %v1622 = vpop.f32.mrb[0].mxu0
        %1623 = vmatprep.mubr.f32.mxu0 0.0
        %1624 = vmatmul.mubr.f32.gmra.mrb[0].mxu0 %v1487
        %v1625 = vpop.f32.mrb[0].mxu0
        %v1626 = vadd.f32 0.0, %v1625
        %v1627 = vpop.f32.mrb[0].mxu0
        %1628 = vmatprep.mubr.f32.mxu0 0.0
        %1629 = vmatmul.mubr.f32.gmra.mrb[0].mxu0 %v1490
        %v1630 = vpop.f32.mrb[0].mxu0
        %v1631 = vadd.f32 0.0, %v1630
        %v1632 = vpop.f32.mrb[0].mxu0
        %1633 = vmatprep.mubr.f32.mxu0 0.0
        %1634 = vmatmul.mubr.f32.gmra.mrb[0].mxu0 %v1493
        %v1635 = vpop.f32.mrb[0].mxu0
        %v1636 = vadd.f32 0.0, %v1635
        %v1637 = vpop.f32.mrb[0].mxu0
        %1638 = vmatprep.mubr.f32.mxu0 0.0
        %1639 = vmatmul.mubr.f32.gmra.mrb[0].mxu0 %v1496
        %v1640 = vpop.f32.mrb[0].mxu0
        %v1641 = vadd.f32 0.0, %v1640
        %v1642 = vpop.f32.mrb[0].mxu0
        %1643 = vmatprep.mubr.f32.mxu0 0.0
        %1644 = vmatmul.mubr.f32.gmra.mrb[0].mxu0 %v1499
        %v1645 = vpop.f32.mrb[0].mxu0
        %v1646 = vadd.f32 0.0, %v1645
        %v1647 = vpop.f32.mrb[0].mxu0
        %1648 = vmatprep.mubr.f32.mxu0 0.0
        %1649 = vmatmul.mubr.f32.gmra.mrb[0].mxu0 %v1502
        %v1650 = vpop.f32.mrb[0].mxu0
        %v1651 = vadd.f32 0.0, %v1650
        %v1652 = vpop.f32.mrb[0].mxu0
        %1653 = vmatprep.mubr.f32.mxu0 0.0
        %1654 = vmatmul.mubr.f32.gmra.mrb[0].mxu0 %v1505
        %v1655 = vpop.f32.mrb[0].mxu0
        %v1656 = vadd.f32 0.0, %v1655
        %v1657 = vpop.f32.mrb[0].mxu0
        %1658 = vmatprep.mubr.f32.mxu0 0.0
        %1659 = vmatmul.mubr.f32.gmra.mrb[0].mxu0 %v1508
        %v1660 = vpop.f32.mrb[0].mxu0
        %v1661 = vadd.f32 0.0, %v1660
        %v1662 = vpop.f32.mrb[0].mxu0
        %1663 = vmatprep.mubr.f32.mxu0 0.0
        %1664 = vmatmul.mubr.f32.gmra.mrb[0].mxu0 %v1511
        %v1665 = vpop.f32.mrb[0].mxu0
        %v1666 = vadd.f32 0.0, %v1665
        %v1667 = vpop.f32.mrb[0].mxu0
        %1668 = vmatprep.mubr.f32.mxu0 0.0
        %1669 = vmatmul.mubr.f32.gmra.mrb[0].mxu0 %v1514
        %v1670 = vpop.f32.mrb[0].mxu0
        %v1671 = vadd.f32 0.0, %v1670
        %v1672 = vpop.f32.mrb[0].mxu0
        %1673 = vmatprep.mubr.f32.mxu0 0.0
        %1674 = vmatmul.mubr.f32.gmra.mrb[0].mxu0 %v1517
        %v1675 = vpop.f32.mrb[0].mxu0
        %v1676 = vadd.f32 0.0, %v1675
        %v1677 = vpop.f32.mrb[0].mxu0
        %1678 = vmatprep.mubr.f32.mxu0 0.0
        %1679 = vmatmul.mubr.f32.gmra.mrb[0].mxu0 %v1520
        %v1680 = vpop.f32.mrb[0].mxu0
        %v1681 = vadd.f32 0.0, %v1680
        %v1682 = vpop.f32.mrb[0].mxu0
        %1683 = vmatprep.mubr.f32.mxu0 0.0
        %1684 = vmatmul.mubr.f32.gmra.mrb[0].mxu0 %v1523
        %v1685 = vpop.f32.mrb[0].mxu0
        %v1686 = vadd.f32 0.0, %v1685
        %v1687 = vpop.f32.mrb[0].mxu0
        %1688 = vmatprep.mubr.f32.mxu0 0.0
        %1689 = vmatmul.mubr.f32.gmra.mrb[0].mxu0 %v1526
        %v1690 = vpop.f32.mrb[0].mxu0
        %v1691 = vadd.f32 0.0, %v1690
        %v1692 = vpop.f32.mrb[0].mxu0
        %1693 = vmatprep.mubr.f32.mxu0 0.0
        %1694 = vmatmul.mubr.f32.gmra.mrb[0].mxu0 %v1529
        %v1695 = vpop.f32.mrb[0].mxu0
        %v1696 = vadd.f32 0.0, %v1695
        %v1697 = vpop.f32.mrb[0].mxu0
        %1698 = vmatprep.mubr.f32.mxu0 0.0
        %1699 = vmatmul.mubr.f32.gmra.mrb[0].mxu0 %v1532
        %v1700 = vpop.f32.mrb[0].mxu0
        %v1701 = vadd.f32 0.0, %v1700
        %v1702 = vpop.f32.mrb[0].mxu0
        %1703 = vmatprep.mubr.f32.mxu0 0.0
        %1704 = vmatmul.mubr.f32.gmra.mrb[0].mxu0 %v1535
        %v1705 = vpop.f32.mrb[0].mxu0
        %v1706 = vadd.f32 0.0, %v1705
        %v1707 = vpop.f32.mrb[0].mxu0
        %1708 = vmatprep.mubr.f32.mxu0 0.0
        %1709 = vmatmul.mubr.f32.gmra.mrb[0].mxu0 %v1538
        %v1710 = vpop.f32.mrb[0].mxu0
        %v1711 = vadd.f32 0.0, %v1710
        %v1712 = vpop.f32.mrb[0].mxu0
        %1713 = vmatprep.mubr.f32.mxu0 0.0
        %1714 = vmatmul.mubr.f32.gmra.mrb[0].mxu0 %v1541
        %v1715 = vpop.f32.mrb[0].mxu0
        %v1716 = vadd.f32 0.0, %v1715
        %v1717 = vpop.f32.mrb[0].mxu0
        %1718 = vmatprep.mubr.f32.mxu0 0.0
        %1719 = vmatmul.mubr.f32.gmra.mrb[0].mxu0 %v1544
        %v1720 = vpop.f32.mrb[0].mxu0
        %v1721 = vadd.f32 0.0, %v1720
        %v1722 = vpop.f32.mrb[0].mxu0
        %1723 = vmatprep.mubr.f32.mxu0 0.0
        %1724 = vmatmul.mubr.f32.gmra.mrb[0].mxu0 %v1547
        %v1725 = vpop.f32.mrb[0].mxu0
        %v1726 = vadd.f32 0.0, %v1725
        %v1727 = vpop.f32.mrb[0].mxu0
        %1728 = vdwg.mxu0
        %v1729 = vadd.f32 %v1432, %v1616
        %v1730 = vadd.f32 %v1433, %v1621
        %v1731 = vadd.f32 %v1434, %v1626
        %v1732 = vadd.f32 %v1435, %v1631
        %v1733 = vadd.f32 %v1436, %v1636
        %v1734 = vadd.f32 %v1437, %v1641
        %v1735 = vadd.f32 %v1438, %v1646
        %v1736 = vadd.f32 %v1439, %v1651
        %v1737 = vadd.f32 %v1440, %v1656
        %v1738 = vadd.f32 %v1441, %v1661
        %v1739 = vadd.f32 %v1442, %v1666
        %v1740 = vadd.f32 %v1443, %v1671
        %v1741 = vadd.f32 %v1444, %v1676
        %v1742 = vadd.f32 %v1445, %v1681
        %v1743 = vadd.f32 %v1446, %v1686
        %v1744 = vadd.f32 %v1447, %v1691
        %v1745 = vadd.f32 %v1448, %v1696
        %v1746 = vadd.f32 %v1449, %v1701
        %v1747 = vadd.f32 %v1450, %v1706
        %v1748 = vadd.f32 %v1451, %v1711
        %v1749 = vadd.f32 %v1452, %v1716
        %v1750 = vadd.f32 %v1453, %v1721
        %v1751 = vadd.f32 %v1454, %v1726
        %v1752 = vld [vmem:[#allocation2 + $0x13] sm:$0xff]
        %v1753 = vld [vmem:[#allocation2 + $0x1b] sm:$0xff]
        %v1754 = vld [vmem:[#allocation2 + $0x23] sm:$0xff]
        %v1755 = vld [vmem:[#allocation2 + $0x2b] sm:$0xff]
        %v1756 = vld [vmem:[#allocation2 + $0x33] sm:$0xff]
        %v1757 = vld [vmem:[#allocation2 + $0x3b] sm:$0xff]
        %v1758 = vld [vmem:[#allocation2 + $0x43] sm:$0xff]
        %v1759 = vld [vmem:[#allocation2 + $0x4b] sm:$0xff]
        %v1760 = vld [vmem:[#allocation2 + $0x53] sm:$0xff]
        %v1761 = vld [vmem:[#allocation2 + $0x5b] sm:$0xff]
        %v1762 = vld [vmem:[#allocation2 + $0x63] sm:$0xff]
        %v1763 = vld [vmem:[#allocation2 + $0x6b] sm:$0xff]
        %v1764 = vld [vmem:[#allocation2 + $0x73] sm:$0xff]
        %v1765 = vld [vmem:[#allocation2 + $0x7b] sm:$0xff]
        %v1766 = vld [vmem:[#allocation2 + $0x83] sm:$0xff]
        %v1767 = vld [vmem:[#allocation2 + $0x8b] sm:$0xff]
        %v1768 = vld [vmem:[#allocation2 + $0x93] sm:$0xff]
        %v1769 = vld [vmem:[#allocation2 + $0x9b] sm:$0xff]
        %v1770 = vld [vmem:[#allocation2 + $0xa3] sm:$0xff]
        %v1771 = vld [vmem:[#allocation2 + $0xab] sm:$0xff]
        %v1772 = vld [vmem:[#allocation2 + $0xb3] sm:$0xff]
        %v1773 = vld [vmem:[#allocation2 + $0xbb] sm:$0xff]
        %v1774 = vld [vmem:[#allocation2 + $0xc3] sm:$0xf]
        %s1775 = scalar_lea.vmem [#allocation10], 32
        %v1776 = vld [vmem:[%s1775] sm:$0xff]
        %v1778 = vsel %vm493, %v1752, 0
        %v1781 = vsel %vm493, %v1753, 0
        %v1784 = vsel %vm493, %v1754, 0
        %v1787 = vsel %vm493, %v1755, 0
        %v1790 = vsel %vm493, %v1756, 0
        %v1793 = vsel %vm493, %v1757, 0
        %v1796 = vsel %vm493, %v1758, 0
        %v1799 = vsel %vm493, %v1759, 0
        %v1802 = vsel %vm493, %v1760, 0
        %v1805 = vsel %vm493, %v1761, 0
        %v1808 = vsel %vm493, %v1762, 0
        %v1811 = vsel %vm493, %v1763, 0
        %v1814 = vsel %vm493, %v1764, 0
        %v1817 = vsel %vm493, %v1765, 0
        %v1820 = vsel %vm493, %v1766, 0
        %v1823 = vsel %vm493, %v1767, 0
        %v1826 = vsel %vm493, %v1768, 0
        %v1829 = vsel %vm493, %v1769, 0
        %v1832 = vsel %vm493, %v1770, 0
        %v1835 = vsel %vm493, %v1771, 0
        %v1838 = vsel %vm493, %v1772, 0
        %v1841 = vsel %vm493, %v1773, 0
        %v1844 = vsel %vm493, %v1774, 0
        %1846 = vmatprep.subr.mxu0 0.0
        %1847 = vmatpush1.msra.mxu0 %v1776
        %1848 = vmatprep.subr.mxu0 0.0
        %1849 = vmatpush1.msra.mxu0 0.0
        %1850 = vmatprep.subr.mxu0 0.0
        %1851 = vmatpush1.msra.mxu0 0.0
        %1852 = vmatprep.subr.mxu0 0.0
        %1853 = vmatpush1.msra.mxu0 0.0
        %1854 = vmatprep.subr.mxu0 0.0
        %1855 = vmatpush1.msra.mxu0 0.0
        %1856 = vmatprep.subr.mxu0 0.0
        %1857 = vmatpush1.msra.mxu0 0.0
        %1858 = vmatprep.subr.mxu0 0.0
        %1859 = vmatpush1.msra.mxu0 0.0
        %1860 = vmatprep.subr.mxu0 0.0
        %1861 = vmatpush1.msra.mxu0 0.0
        %1862 = vmatprep.subr.mxu0 0.0
        %1863 = vmatpush1.msra.mxu0 0.0
        %1864 = vmatprep.subr.mxu0 0.0
        %1865 = vmatpush1.msra.mxu0 0.0
        %1866 = vmatprep.subr.mxu0 0.0
        %1867 = vmatpush1.msra.mxu0 0.0
        %1868 = vmatprep.subr.mxu0 0.0
        %1869 = vmatpush1.msra.mxu0 0.0
        %1870 = vmatprep.subr.mxu0 0.0
        %1871 = vmatpush1.msra.mxu0 0.0
        %1872 = vmatprep.subr.mxu0 0.0
        %1873 = vmatpush1.msra.mxu0 0.0
        %1874 = vmatprep.subr.mxu0 0.0
        %1875 = vmatpush1.msra.mxu0 0.0
        %1876 = vmatprep.subr.mxu0 0.0
        %1877 = vmatpush1.msra.mxu0 0.0
        %1878 = vmatprep.subr.mxu0 0.0
        %1879 = vmatpush1.msra.mxu0 0.0
        %1880 = vmatprep.subr.mxu0 0.0
        %1881 = vmatpush1.msra.mxu0 0.0
        %1882 = vmatprep.subr.mxu0 0.0
        %1883 = vmatpush1.msra.mxu0 0.0
        %1884 = vmatprep.subr.mxu0 0.0
        %1885 = vmatpush1.msra.mxu0 0.0
        %1886 = vmatprep.subr.mxu0 0.0
        %1887 = vmatpush1.msra.mxu0 0.0
        %1888 = vmatprep.subr.mxu0 0.0
        %1889 = vmatpush1.msra.mxu0 0.0
        %1890 = vmatprep.subr.mxu0 0.0
        %1891 = vmatpush1.msra.mxu0 0.0
        %1892 = vmatprep.subr.mxu0 0.0
        %1893 = vmatpush1.msra.mxu0 0.0
        %1894 = vmatprep.subr.mxu0 0.0
        %1895 = vmatpush1.msra.mxu0 0.0
        %1896 = vmatprep.subr.mxu0 0.0
        %1897 = vmatpush1.msra.mxu0 0.0
        %1898 = vmatprep.subr.mxu0 0.0
        %1899 = vmatpush1.msra.mxu0 0.0
        %1900 = vmatprep.subr.mxu0 0.0
        %1901 = vmatpush1.msra.mxu0 0.0
        %1902 = vmatprep.subr.mxu0 0.0
        %1903 = vmatpush1.msra.mxu0 0.0
        %1904 = vmatprep.subr.mxu0 0.0
        %1905 = vmatpush1.msra.mxu0 0.0
        %1906 = vmatprep.subr.mxu0 0.0
        %1907 = vmatpush1.msra.mxu0 0.0
        %1908 = vmatprep.subr.mxu0 0.0
        %1909 = vmatpush1.msra.mxu0 0.0
        %1910 = vmatprep.mubr.f32.mxu0 0.0
        %1911 = vmatmul.mubr.f32.gmra.mrb[0].mxu0 %v1778
        %v1912 = vpop.f32.mrb[0].mxu0
        %v1913 = vadd.f32 0.0, %v1912
        %v1914 = vpop.f32.mrb[0].mxu0
        %1915 = vmatprep.mubr.f32.mxu0 0.0
        %1916 = vmatmul.mubr.f32.gmra.mrb[0].mxu0 %v1781
        %v1917 = vpop.f32.mrb[0].mxu0
        %v1918 = vadd.f32 0.0, %v1917
        %v1919 = vpop.f32.mrb[0].mxu0
        %1920 = vmatprep.mubr.f32.mxu0 0.0
        %1921 = vmatmul.mubr.f32.gmra.mrb[0].mxu0 %v1784
        %v1922 = vpop.f32.mrb[0].mxu0
        %v1923 = vadd.f32 0.0, %v1922
        %v1924 = vpop.f32.mrb[0].mxu0
        %1925 = vmatprep.mubr.f32.mxu0 0.0
        %1926 = vmatmul.mubr.f32.gmra.mrb[0].mxu0 %v1787
        %v1927 = vpop.f32.mrb[0].mxu0
        %v1928 = vadd.f32 0.0, %v1927
        %v1929 = vpop.f32.mrb[0].mxu0
        %1930 = vmatprep.mubr.f32.mxu0 0.0
        %1931 = vmatmul.mubr.f32.gmra.mrb[0].mxu0 %v1790
        %v1932 = vpop.f32.mrb[0].mxu0
        %v1933 = vadd.f32 0.0, %v1932
        %v1934 = vpop.f32.mrb[0].mxu0
        %1935 = vmatprep.mubr.f32.mxu0 0.0
        %1936 = vmatmul.mubr.f32.gmra.mrb[0].mxu0 %v1793
        %v1937 = vpop.f32.mrb[0].mxu0
        %v1938 = vadd.f32 0.0, %v1937
        %v1939 = vpop.f32.mrb[0].mxu0
        %1940 = vmatprep.mubr.f32.mxu0 0.0
        %1941 = vmatmul.mubr.f32.gmra.mrb[0].mxu0 %v1796
        %v1942 = vpop.f32.mrb[0].mxu0
        %v1943 = vadd.f32 0.0, %v1942
        %v1944 = vpop.f32.mrb[0].mxu0
        %1945 = vmatprep.mubr.f32.mxu0 0.0
        %1946 = vmatmul.mubr.f32.gmra.mrb[0].mxu0 %v1799
        %v1947 = vpop.f32.mrb[0].mxu0
        %v1948 = vadd.f32 0.0, %v1947
        %v1949 = vpop.f32.mrb[0].mxu0
        %1950 = vmatprep.mubr.f32.mxu0 0.0
        %1951 = vmatmul.mubr.f32.gmra.mrb[0].mxu0 %v1802
        %v1952 = vpop.f32.mrb[0].mxu0
        %v1953 = vadd.f32 0.0, %v1952
        %v1954 = vpop.f32.mrb[0].mxu0
        %1955 = vmatprep.mubr.f32.mxu0 0.0
        %1956 = vmatmul.mubr.f32.gmra.mrb[0].mxu0 %v1805
        %v1957 = vpop.f32.mrb[0].mxu0
        %v1958 = vadd.f32 0.0, %v1957
        %v1959 = vpop.f32.mrb[0].mxu0
        %1960 = vmatprep.mubr.f32.mxu0 0.0
        %1961 = vmatmul.mubr.f32.gmra.mrb[0].mxu0 %v1808
        %v1962 = vpop.f32.mrb[0].mxu0
        %v1963 = vadd.f32 0.0, %v1962
        %v1964 = vpop.f32.mrb[0].mxu0
        %1965 = vmatprep.mubr.f32.mxu0 0.0
        %1966 = vmatmul.mubr.f32.gmra.mrb[0].mxu0 %v1811
        %v1967 = vpop.f32.mrb[0].mxu0
        %v1968 = vadd.f32 0.0, %v1967
        %v1969 = vpop.f32.mrb[0].mxu0
        %1970 = vmatprep.mubr.f32.mxu0 0.0
        %1971 = vmatmul.mubr.f32.gmra.mrb[0].mxu0 %v1814
        %v1972 = vpop.f32.mrb[0].mxu0
        %v1973 = vadd.f32 0.0, %v1972
        %v1974 = vpop.f32.mrb[0].mxu0
        %1975 = vmatprep.mubr.f32.mxu0 0.0
        %1976 = vmatmul.mubr.f32.gmra.mrb[0].mxu0 %v1817
        %v1977 = vpop.f32.mrb[0].mxu0
        %v1978 = vadd.f32 0.0, %v1977
        %v1979 = vpop.f32.mrb[0].mxu0
        %1980 = vmatprep.mubr.f32.mxu0 0.0
        %1981 = vmatmul.mubr.f32.gmra.mrb[0].mxu0 %v1820
        %v1982 = vpop.f32.mrb[0].mxu0
        %v1983 = vadd.f32 0.0, %v1982
        %v1984 = vpop.f32.mrb[0].mxu0
        %1985 = vmatprep.mubr.f32.mxu0 0.0
        %1986 = vmatmul.mubr.f32.gmra.mrb[0].mxu0 %v1823
        %v1987 = vpop.f32.mrb[0].mxu0
        %v1988 = vadd.f32 0.0, %v1987
        %v1989 = vpop.f32.mrb[0].mxu0
        %1990 = vmatprep.mubr.f32.mxu0 0.0
        %1991 = vmatmul.mubr.f32.gmra.mrb[0].mxu0 %v1826
        %v1992 = vpop.f32.mrb[0].mxu0
        %v1993 = vadd.f32 0.0, %v1992
        %v1994 = vpop.f32.mrb[0].mxu0
        %1995 = vmatprep.mubr.f32.mxu0 0.0
        %1996 = vmatmul.mubr.f32.gmra.mrb[0].mxu0 %v1829
        %v1997 = vpop.f32.mrb[0].mxu0
        %v1998 = vadd.f32 0.0, %v1997
        %v1999 = vpop.f32.mrb[0].mxu0
        %2000 = vmatprep.mubr.f32.mxu0 0.0
        %2001 = vmatmul.mubr.f32.gmra.mrb[0].mxu0 %v1832
        %v2002 = vpop.f32.mrb[0].mxu0
        %v2003 = vadd.f32 0.0, %v2002
        %v2004 = vpop.f32.mrb[0].mxu0
        %2005 = vmatprep.mubr.f32.mxu0 0.0
        %2006 = vmatmul.mubr.f32.gmra.mrb[0].mxu0 %v1835
        %v2007 = vpop.f32.mrb[0].mxu0
        %v2008 = vadd.f32 0.0, %v2007
        %v2009 = vpop.f32.mrb[0].mxu0
        %2010 = vmatprep.mubr.f32.mxu0 0.0
        %2011 = vmatmul.mubr.f32.gmra.mrb[0].mxu0 %v1838
        %v2012 = vpop.f32.mrb[0].mxu0
        %v2013 = vadd.f32 0.0, %v2012
        %v2014 = vpop.f32.mrb[0].mxu0
        %2015 = vmatprep.mubr.f32.mxu0 0.0
        %2016 = vmatmul.mubr.f32.gmra.mrb[0].mxu0 %v1841
        %v2017 = vpop.f32.mrb[0].mxu0
        %v2018 = vadd.f32 0.0, %v2017
        %v2019 = vpop.f32.mrb[0].mxu0
        %2020 = vmatprep.mubr.f32.mxu0 0.0
        %2021 = vmatmul.mubr.f32.gmra.mrb[0].mxu0 %v1844
        %v2022 = vpop.f32.mrb[0].mxu0
        %v2023 = vadd.f32 0.0, %v2022
        %v2024 = vpop.f32.mrb[0].mxu0
        %2025 = vdwg.mxu0
        %v2026 = vadd.f32 %v1729, %v1913
        %v2027 = vadd.f32 %v1730, %v1918
        %v2028 = vadd.f32 %v1731, %v1923
        %v2029 = vadd.f32 %v1732, %v1928
        %v2030 = vadd.f32 %v1733, %v1933
        %v2031 = vadd.f32 %v1734, %v1938
        %v2032 = vadd.f32 %v1735, %v1943
        %v2033 = vadd.f32 %v1736, %v1948
        %v2034 = vadd.f32 %v1737, %v1953
        %v2035 = vadd.f32 %v1738, %v1958
        %v2036 = vadd.f32 %v1739, %v1963
        %v2037 = vadd.f32 %v1740, %v1968
        %v2038 = vadd.f32 %v1741, %v1973
        %v2039 = vadd.f32 %v1742, %v1978
        %v2040 = vadd.f32 %v1743, %v1983
        %v2041 = vadd.f32 %v1744, %v1988
        %v2042 = vadd.f32 %v1745, %v1993
        %v2043 = vadd.f32 %v1746, %v1998
        %v2044 = vadd.f32 %v1747, %v2003
        %v2045 = vadd.f32 %v1748, %v2008
        %v2046 = vadd.f32 %v1749, %v2013
        %v2047 = vadd.f32 %v1750, %v2018
        %v2048 = vadd.f32 %v1751, %v2023
        %v2049 = vld [vmem:[#allocation2 + $0x14] sm:$0xff]
        %v2050 = vld [vmem:[#allocation2 + $0x1c] sm:$0xff]
        %v2051 = vld [vmem:[#allocation2 + $0x24] sm:$0xff]
        %v2052 = vld [vmem:[#allocation2 + $0x2c] sm:$0xff]
        %v2053 = vld [vmem:[#allocation2 + $0x34] sm:$0xff]
        %v2054 = vld [vmem:[#allocation2 + $0x3c] sm:$0xff]
        %v2055 = vld [vmem:[#allocation2 + $0x44] sm:$0xff]
        %v2056 = vld [vmem:[#allocation2 + $0x4c] sm:$0xff]
        %v2057 = vld [vmem:[#allocation2 + $0x54] sm:$0xff]
        %v2058 = vld [vmem:[#allocation2 + $0x5c] sm:$0xff]
        %v2059 = vld [vmem:[#allocation2 + $0x64] sm:$0xff]
        %v2060 = vld [vmem:[#allocation2 + $0x6c] sm:$0xff]
        %v2061 = vld [vmem:[#allocation2 + $0x74] sm:$0xff]
        %v2062 = vld [vmem:[#allocation2 + $0x7c] sm:$0xff]
        %v2063 = vld [vmem:[#allocation2 + $0x84] sm:$0xff]
        %v2064 = vld [vmem:[#allocation2 + $0x8c] sm:$0xff]
        %v2065 = vld [vmem:[#allocation2 + $0x94] sm:$0xff]
        %v2066 = vld [vmem:[#allocation2 + $0x9c] sm:$0xff]
        %v2067 = vld [vmem:[#allocation2 + $0xa4] sm:$0xff]
        %v2068 = vld [vmem:[#allocation2 + $0xac] sm:$0xff]
        %v2069 = vld [vmem:[#allocation2 + $0xb4] sm:$0xff]
        %v2070 = vld [vmem:[#allocation2 + $0xbc] sm:$0xff]
        %v2071 = vld [vmem:[#allocation2 + $0xc4] sm:$0xf]
        %s2072 = scalar_lea.vmem [#allocation10], 40
        %v2073 = vld [vmem:[%s2072] sm:$0xff]
        %v2075 = vsel %vm493, %v2049, 0
        %v2078 = vsel %vm493, %v2050, 0
        %v2081 = vsel %vm493, %v2051, 0
        %v2084 = vsel %vm493, %v2052, 0
        %v2087 = vsel %vm493, %v2053, 0
        %v2090 = vsel %vm493, %v2054, 0
        %v2093 = vsel %vm493, %v2055, 0
        %v2096 = vsel %vm493, %v2056, 0
        %v2099 = vsel %vm493, %v2057, 0
        %v2102 = vsel %vm493, %v2058, 0
        %v2105 = vsel %vm493, %v2059, 0
        %v2108 = vsel %vm493, %v2060, 0
        %v2111 = vsel %vm493, %v2061, 0
        %v2114 = vsel %vm493, %v2062, 0
        %v2117 = vsel %vm493, %v2063, 0
        %v2120 = vsel %vm493, %v2064, 0
        %v2123 = vsel %vm493, %v2065, 0
        %v2126 = vsel %vm493, %v2066, 0
        %v2129 = vsel %vm493, %v2067, 0
        %v2132 = vsel %vm493, %v2068, 0
        %v2135 = vsel %vm493, %v2069, 0
        %v2138 = vsel %vm493, %v2070, 0
        %v2141 = vsel %vm493, %v2071, 0
        %2143 = vmatprep.subr.mxu0 0.0
        %2144 = vmatpush1.msra.mxu0 %v2073
        %2145 = vmatprep.subr.mxu0 0.0
        %2146 = vmatpush1.msra.mxu0 0.0
        %2147 = vmatprep.subr.mxu0 0.0
        %2148 = vmatpush1.msra.mxu0 0.0
        %2149 = vmatprep.subr.mxu0 0.0
        %2150 = vmatpush1.msra.mxu0 0.0
        %2151 = vmatprep.subr.mxu0 0.0
        %2152 = vmatpush1.msra.mxu0 0.0
        %2153 = vmatprep.subr.mxu0 0.0
        %2154 = vmatpush1.msra.mxu0 0.0
        %2155 = vmatprep.subr.mxu0 0.0
        %2156 = vmatpush1.msra.mxu0 0.0
        %2157 = vmatprep.subr.mxu0 0.0
        %2158 = vmatpush1.msra.mxu0 0.0
        %2159 = vmatprep.subr.mxu0 0.0
        %2160 = vmatpush1.msra.mxu0 0.0
        %2161 = vmatprep.subr.mxu0 0.0
        %2162 = vmatpush1.msra.mxu0 0.0
        %2163 = vmatprep.subr.mxu0 0.0
        %2164 = vmatpush1.msra.mxu0 0.0
        %2165 = vmatprep.subr.mxu0 0.0
        %2166 = vmatpush1.msra.mxu0 0.0
        %2167 = vmatprep.subr.mxu0 0.0
        %2168 = vmatpush1.msra.mxu0 0.0
        %2169 = vmatprep.subr.mxu0 0.0
        %2170 = vmatpush1.msra.mxu0 0.0
        %2171 = vmatprep.subr.mxu0 0.0
        %2172 = vmatpush1.msra.mxu0 0.0
        %2173 = vmatprep.subr.mxu0 0.0
        %2174 = vmatpush1.msra.mxu0 0.0
        %2175 = vmatprep.subr.mxu0 0.0
        %2176 = vmatpush1.msra.mxu0 0.0
        %2177 = vmatprep.subr.mxu0 0.0
        %2178 = vmatpush1.msra.mxu0 0.0
        %2179 = vmatprep.subr.mxu0 0.0
        %2180 = vmatpush1.msra.mxu0 0.0
        %2181 = vmatprep.subr.mxu0 0.0
        %2182 = vmatpush1.msra.mxu0 0.0
        %2183 = vmatprep.subr.mxu0 0.0
        %2184 = vmatpush1.msra.mxu0 0.0
        %2185 = vmatprep.subr.mxu0 0.0
        %2186 = vmatpush1.msra.mxu0 0.0
        %2187 = vmatprep.subr.mxu0 0.0
        %2188 = vmatpush1.msra.mxu0 0.0
        %2189 = vmatprep.subr.mxu0 0.0
        %2190 = vmatpush1.msra.mxu0 0.0
        %2191 = vmatprep.subr.mxu0 0.0
        %2192 = vmatpush1.msra.mxu0 0.0
        %2193 = vmatprep.subr.mxu0 0.0
        %2194 = vmatpush1.msra.mxu0 0.0
        %2195 = vmatprep.subr.mxu0 0.0
        %2196 = vmatpush1.msra.mxu0 0.0
        %2197 = vmatprep.subr.mxu0 0.0
        %2198 = vmatpush1.msra.mxu0 0.0
        %2199 = vmatprep.subr.mxu0 0.0
        %2200 = vmatpush1.msra.mxu0 0.0
        %2201 = vmatprep.subr.mxu0 0.0
        %2202 = vmatpush1.msra.mxu0 0.0
        %2203 = vmatprep.subr.mxu0 0.0
        %2204 = vmatpush1.msra.mxu0 0.0
        %2205 = vmatprep.subr.mxu0 0.0
        %2206 = vmatpush1.msra.mxu0 0.0
        %2207 = vmatprep.mubr.f32.mxu0 0.0
        %2208 = vmatmul.mubr.f32.gmra.mrb[0].mxu0 %v2075
        %v2209 = vpop.f32.mrb[0].mxu0
        %v2210 = vadd.f32 0.0, %v2209
        %v2211 = vpop.f32.mrb[0].mxu0
        %2212 = vmatprep.mubr.f32.mxu0 0.0
        %2213 = vmatmul.mubr.f32.gmra.mrb[0].mxu0 %v2078
        %v2214 = vpop.f32.mrb[0].mxu0
        %v2215 = vadd.f32 0.0, %v2214
        %v2216 = vpop.f32.mrb[0].mxu0
        %2217 = vmatprep.mubr.f32.mxu0 0.0
        %2218 = vmatmul.mubr.f32.gmra.mrb[0].mxu0 %v2081
        %v2219 = vpop.f32.mrb[0].mxu0
        %v2220 = vadd.f32 0.0, %v2219
        %v2221 = vpop.f32.mrb[0].mxu0
        %2222 = vmatprep.mubr.f32.mxu0 0.0
        %2223 = vmatmul.mubr.f32.gmra.mrb[0].mxu0 %v2084
        %v2224 = vpop.f32.mrb[0].mxu0
        %v2225 = vadd.f32 0.0, %v2224
        %v2226 = vpop.f32.mrb[0].mxu0
        %2227 = vmatprep.mubr.f32.mxu0 0.0
        %2228 = vmatmul.mubr.f32.gmra.mrb[0].mxu0 %v2087
        %v2229 = vpop.f32.mrb[0].mxu0
        %v2230 = vadd.f32 0.0, %v2229
        %v2231 = vpop.f32.mrb[0].mxu0
        %2232 = vmatprep.mubr.f32.mxu0 0.0
        %2233 = vmatmul.mubr.f32.gmra.mrb[0].mxu0 %v2090
        %v2234 = vpop.f32.mrb[0].mxu0
        %v2235 = vadd.f32 0.0, %v2234
        %v2236 = vpop.f32.mrb[0].mxu0
        %2237 = vmatprep.mubr.f32.mxu0 0.0
        %2238 = vmatmul.mubr.f32.gmra.mrb[0].mxu0 %v2093
        %v2239 = vpop.f32.mrb[0].mxu0
        %v2240 = vadd.f32 0.0, %v2239
        %v2241 = vpop.f32.mrb[0].mxu0
        %2242 = vmatprep.mubr.f32.mxu0 0.0
        %2243 = vmatmul.mubr.f32.gmra.mrb[0].mxu0 %v2096
        %v2244 = vpop.f32.mrb[0].mxu0
        %v2245 = vadd.f32 0.0, %v2244
        %v2246 = vpop.f32.mrb[0].mxu0
        %2247 = vmatprep.mubr.f32.mxu0 0.0
        %2248 = vmatmul.mubr.f32.gmra.mrb[0].mxu0 %v2099
        %v2249 = vpop.f32.mrb[0].mxu0
        %v2250 = vadd.f32 0.0, %v2249
        %v2251 = vpop.f32.mrb[0].mxu0
        %2252 = vmatprep.mubr.f32.mxu0 0.0
        %2253 = vmatmul.mubr.f32.gmra.mrb[0].mxu0 %v2102
        %v2254 = vpop.f32.mrb[0].mxu0
        %v2255 = vadd.f32 0.0, %v2254
        %v2256 = vpop.f32.mrb[0].mxu0
        %2257 = vmatprep.mubr.f32.mxu0 0.0
        %2258 = vmatmul.mubr.f32.gmra.mrb[0].mxu0 %v2105
        %v2259 = vpop.f32.mrb[0].mxu0
        %v2260 = vadd.f32 0.0, %v2259
        %v2261 = vpop.f32.mrb[0].mxu0
        %2262 = vmatprep.mubr.f32.mxu0 0.0
        %2263 = vmatmul.mubr.f32.gmra.mrb[0].mxu0 %v2108
        %v2264 = vpop.f32.mrb[0].mxu0
        %v2265 = vadd.f32 0.0, %v2264
        %v2266 = vpop.f32.mrb[0].mxu0
        %2267 = vmatprep.mubr.f32.mxu0 0.0
        %2268 = vmatmul.mubr.f32.gmra.mrb[0].mxu0 %v2111
        %v2269 = vpop.f32.mrb[0].mxu0
        %v2270 = vadd.f32 0.0, %v2269
        %v2271 = vpop.f32.mrb[0].mxu0
        %2272 = vmatprep.mubr.f32.mxu0 0.0
        %2273 = vmatmul.mubr.f32.gmra.mrb[0].mxu0 %v2114
        %v2274 = vpop.f32.mrb[0].mxu0
        %v2275 = vadd.f32 0.0, %v2274
        %v2276 = vpop.f32.mrb[0].mxu0
        %2277 = vmatprep.mubr.f32.mxu0 0.0
        %2278 = vmatmul.mubr.f32.gmra.mrb[0].mxu0 %v2117
        %v2279 = vpop.f32.mrb[0].mxu0
        %v2280 = vadd.f32 0.0, %v2279
        %v2281 = vpop.f32.mrb[0].mxu0
        %2282 = vmatprep.mubr.f32.mxu0 0.0
        %2283 = vmatmul.mubr.f32.gmra.mrb[0].mxu0 %v2120
        %v2284 = vpop.f32.mrb[0].mxu0
        %v2285 = vadd.f32 0.0, %v2284
        %v2286 = vpop.f32.mrb[0].mxu0
        %2287 = vmatprep.mubr.f32.mxu0 0.0
        %2288 = vmatmul.mubr.f32.gmra.mrb[0].mxu0 %v2123
        %v2289 = vpop.f32.mrb[0].mxu0
        %v2290 = vadd.f32 0.0, %v2289
        %v2291 = vpop.f32.mrb[0].mxu0
        %2292 = vmatprep.mubr.f32.mxu0 0.0
        %2293 = vmatmul.mubr.f32.gmra.mrb[0].mxu0 %v2126
        %v2294 = vpop.f32.mrb[0].mxu0
        %v2295 = vadd.f32 0.0, %v2294
        %v2296 = vpop.f32.mrb[0].mxu0
        %2297 = vmatprep.mubr.f32.mxu0 0.0
        %2298 = vmatmul.mubr.f32.gmra.mrb[0].mxu0 %v2129
        %v2299 = vpop.f32.mrb[0].mxu0
        %v2300 = vadd.f32 0.0, %v2299
        %v2301 = vpop.f32.mrb[0].mxu0
        %2302 = vmatprep.mubr.f32.mxu0 0.0
        %2303 = vmatmul.mubr.f32.gmra.mrb[0].mxu0 %v2132
        %v2304 = vpop.f32.mrb[0].mxu0
        %v2305 = vadd.f32 0.0, %v2304
        %v2306 = vpop.f32.mrb[0].mxu0
        %2307 = vmatprep.mubr.f32.mxu0 0.0
        %2308 = vmatmul.mubr.f32.gmra.mrb[0].mxu0 %v2135
        %v2309 = vpop.f32.mrb[0].mxu0
        %v2310 = vadd.f32 0.0, %v2309
        %v2311 = vpop.f32.mrb[0].mxu0
        %2312 = vmatprep.mubr.f32.mxu0 0.0
        %2313 = vmatmul.mubr.f32.gmra.mrb[0].mxu0 %v2138
        %v2314 = vpop.f32.mrb[0].mxu0
        %v2315 = vadd.f32 0.0, %v2314
        %v2316 = vpop.f32.mrb[0].mxu0
        %2317 = vmatprep.mubr.f32.mxu0 0.0
        %2318 = vmatmul.mubr.f32.gmra.mrb[0].mxu0 %v2141
        %v2319 = vpop.f32.mrb[0].mxu0
        %v2320 = vadd.f32 0.0, %v2319
        %v2321 = vpop.f32.mrb[0].mxu0
        %2322 = vdwg.mxu0
        %v2323 = vadd.f32 %v2026, %v2210
        %v2324 = vadd.f32 %v2027, %v2215
        %v2325 = vadd.f32 %v2028, %v2220
        %v2326 = vadd.f32 %v2029, %v2225
        %v2327 = vadd.f32 %v2030, %v2230
        %v2328 = vadd.f32 %v2031, %v2235
        %v2329 = vadd.f32 %v2032, %v2240
        %v2330 = vadd.f32 %v2033, %v2245
        %v2331 = vadd.f32 %v2034, %v2250
        %v2332 = vadd.f32 %v2035, %v2255
        %v2333 = vadd.f32 %v2036, %v2260
        %v2334 = vadd.f32 %v2037, %v2265
        %v2335 = vadd.f32 %v2038, %v2270
        %v2336 = vadd.f32 %v2039, %v2275
        %v2337 = vadd.f32 %v2040, %v2280
        %v2338 = vadd.f32 %v2041, %v2285
        %v2339 = vadd.f32 %v2042, %v2290
        %v2340 = vadd.f32 %v2043, %v2295
        %v2341 = vadd.f32 %v2044, %v2300
        %v2342 = vadd.f32 %v2045, %v2305
        %v2343 = vadd.f32 %v2046, %v2310
        %v2344 = vadd.f32 %v2047, %v2315
        %v2345 = vadd.f32 %v2048, %v2320
        %v2346 = vld [vmem:[#allocation2 + $0x24] sm:$0xff]
        %v2347 = vld [vmem:[#allocation2 + $0x2c] sm:$0xff]
        %v2348 = vld [vmem:[#allocation2 + $0x34] sm:$0xff]
        %v2349 = vld [vmem:[#allocation2 + $0x3c] sm:$0xff]
        %v2350 = vld [vmem:[#allocation2 + $0x44] sm:$0xff]
        %v2351 = vld [vmem:[#allocation2 + $0x4c] sm:$0xff]
        %v2352 = vld [vmem:[#allocation2 + $0x54] sm:$0xff]
        %v2353 = vld [vmem:[#allocation2 + $0x5c] sm:$0xff]
        %v2354 = vld [vmem:[#allocation2 + $0x64] sm:$0xff]
        %v2355 = vld [vmem:[#allocation2 + $0x6c] sm:$0xff]
        %v2356 = vld [vmem:[#allocation2 + $0x74] sm:$0xff]
        %v2357 = vld [vmem:[#allocation2 + $0x7c] sm:$0xff]
        %v2358 = vld [vmem:[#allocation2 + $0x84] sm:$0xff]
        %v2359 = vld [vmem:[#allocation2 + $0x8c] sm:$0xff]
        %v2360 = vld [vmem:[#allocation2 + $0x94] sm:$0xff]
        %v2361 = vld [vmem:[#allocation2 + $0x9c] sm:$0xff]
        %v2362 = vld [vmem:[#allocation2 + $0xa4] sm:$0xff]
        %v2363 = vld [vmem:[#allocation2 + $0xac] sm:$0xff]
        %v2364 = vld [vmem:[#allocation2 + $0xb4] sm:$0xff]
        %v2365 = vld [vmem:[#allocation2 + $0xbc] sm:$0xff]
        %v2366 = vld [vmem:[#allocation2 + $0xc4] sm:$0xff]
        %v2367 = vld [vmem:[#allocation2 + $0xcc] sm:$0xff]
        %v2368 = vld [vmem:[#allocation2 + $0xd4] sm:$0xf]
        %s2369 = scalar_lea.vmem [#allocation10], 48
        %v2370 = vld [vmem:[%s2369] sm:$0xff]
        %v2372 = vsel %vm493, %v2346, 0
        %v2375 = vsel %vm493, %v2347, 0
        %v2378 = vsel %vm493, %v2348, 0
        %v2381 = vsel %vm493, %v2349, 0
        %v2384 = vsel %vm493, %v2350, 0
        %v2387 = vsel %vm493, %v2351, 0
        %v2390 = vsel %vm493, %v2352, 0
        %v2393 = vsel %vm493, %v2353, 0
        %v2396 = vsel %vm493, %v2354, 0
        %v2399 = vsel %vm493, %v2355, 0
        %v2402 = vsel %vm493, %v2356, 0
        %v2405 = vsel %vm493, %v2357, 0
        %v2408 = vsel %vm493, %v2358, 0
        %v2411 = vsel %vm493, %v2359, 0
        %v2414 = vsel %vm493, %v2360, 0
        %v2417 = vsel %vm493, %v2361, 0
        %v2420 = vsel %vm493, %v2362, 0
        %v2423 = vsel %vm493, %v2363, 0
        %v2426 = vsel %vm493, %v2364, 0
        %v2429 = vsel %vm493, %v2365, 0
        %v2432 = vsel %vm493, %v2366, 0
        %v2435 = vsel %vm493, %v2367, 0
        %v2438 = vsel %vm493, %v2368, 0
        %2440 = vmatprep.subr.mxu0 0.0
        %2441 = vmatpush1.msra.mxu0 %v2370
        %2442 = vmatprep.subr.mxu0 0.0
        %2443 = vmatpush1.msra.mxu0 0.0
        %2444 = vmatprep.subr.mxu0 0.0
        %2445 = vmatpush1.msra.mxu0 0.0
        %2446 = vmatprep.subr.mxu0 0.0
        %2447 = vmatpush1.msra.mxu0 0.0
        %2448 = vmatprep.subr.mxu0 0.0
        %2449 = vmatpush1.msra.mxu0 0.0
        %2450 = vmatprep.subr.mxu0 0.0
        %2451 = vmatpush1.msra.mxu0 0.0
        %2452 = vmatprep.subr.mxu0 0.0
        %2453 = vmatpush1.msra.mxu0 0.0
        %2454 = vmatprep.subr.mxu0 0.0
        %2455 = vmatpush1.msra.mxu0 0.0
        %2456 = vmatprep.subr.mxu0 0.0
        %2457 = vmatpush1.msra.mxu0 0.0
        %2458 = vmatprep.subr.mxu0 0.0
        %2459 = vmatpush1.msra.mxu0 0.0
        %2460 = vmatprep.subr.mxu0 0.0
        %2461 = vmatpush1.msra.mxu0 0.0
        %2462 = vmatprep.subr.mxu0 0.0
        %2463 = vmatpush1.msra.mxu0 0.0
        %2464 = vmatprep.subr.mxu0 0.0
        %2465 = vmatpush1.msra.mxu0 0.0
        %2466 = vmatprep.subr.mxu0 0.0
        %2467 = vmatpush1.msra.mxu0 0.0
        %2468 = vmatprep.subr.mxu0 0.0
        %2469 = vmatpush1.msra.mxu0 0.0
        %2470 = vmatprep.subr.mxu0 0.0
        %2471 = vmatpush1.msra.mxu0 0.0
        %2472 = vmatprep.subr.mxu0 0.0
        %2473 = vmatpush1.msra.mxu0 0.0
        %2474 = vmatprep.subr.mxu0 0.0
        %2475 = vmatpush1.msra.mxu0 0.0
        %2476 = vmatprep.subr.mxu0 0.0
        %2477 = vmatpush1.msra.mxu0 0.0
        %2478 = vmatprep.subr.mxu0 0.0
        %2479 = vmatpush1.msra.mxu0 0.0
        %2480 = vmatprep.subr.mxu0 0.0
        %2481 = vmatpush1.msra.mxu0 0.0
        %2482 = vmatprep.subr.mxu0 0.0
        %2483 = vmatpush1.msra.mxu0 0.0
        %2484 = vmatprep.subr.mxu0 0.0
        %2485 = vmatpush1.msra.mxu0 0.0
        %2486 = vmatprep.subr.mxu0 0.0
        %2487 = vmatpush1.msra.mxu0 0.0
        %2488 = vmatprep.subr.mxu0 0.0
        %2489 = vmatpush1.msra.mxu0 0.0
        %2490 = vmatprep.subr.mxu0 0.0
        %2491 = vmatpush1.msra.mxu0 0.0
        %2492 = vmatprep.subr.mxu0 0.0
        %2493 = vmatpush1.msra.mxu0 0.0
        %2494 = vmatprep.subr.mxu0 0.0
        %2495 = vmatpush1.msra.mxu0 0.0
        %2496 = vmatprep.subr.mxu0 0.0
        %2497 = vmatpush1.msra.mxu0 0.0
        %2498 = vmatprep.subr.mxu0 0.0
        %2499 = vmatpush1.msra.mxu0 0.0
        %2500 = vmatprep.subr.mxu0 0.0
        %2501 = vmatpush1.msra.mxu0 0.0
        %2502 = vmatprep.subr.mxu0 0.0
        %2503 = vmatpush1.msra.mxu0 0.0
        %2504 = vmatprep.mubr.f32.mxu0 0.0
        %2505 = vmatmul.mubr.f32.gmra.mrb[0].mxu0 %v2372
        %v2506 = vpop.f32.mrb[0].mxu0
        %v2507 = vadd.f32 0.0, %v2506
        %v2508 = vpop.f32.mrb[0].mxu0
        %2509 = vmatprep.mubr.f32.mxu0 0.0
        %2510 = vmatmul.mubr.f32.gmra.mrb[0].mxu0 %v2375
        %v2511 = vpop.f32.mrb[0].mxu0
        %v2512 = vadd.f32 0.0, %v2511
        %v2513 = vpop.f32.mrb[0].mxu0
        %2514 = vmatprep.mubr.f32.mxu0 0.0
        %2515 = vmatmul.mubr.f32.gmra.mrb[0].mxu0 %v2378
        %v2516 = vpop.f32.mrb[0].mxu0
        %v2517 = vadd.f32 0.0, %v2516
        %v2518 = vpop.f32.mrb[0].mxu0
        %2519 = vmatprep.mubr.f32.mxu0 0.0
        %2520 = vmatmul.mubr.f32.gmra.mrb[0].mxu0 %v2381
        %v2521 = vpop.f32.mrb[0].mxu0
        %v2522 = vadd.f32 0.0, %v2521
        %v2523 = vpop.f32.mrb[0].mxu0
        %2524 = vmatprep.mubr.f32.mxu0 0.0
        %2525 = vmatmul.mubr.f32.gmra.mrb[0].mxu0 %v2384
        %v2526 = vpop.f32.mrb[0].mxu0
        %v2527 = vadd.f32 0.0, %v2526
        %v2528 = vpop.f32.mrb[0].mxu0
        %2529 = vmatprep.mubr.f32.mxu0 0.0
        %2530 = vmatmul.mubr.f32.gmra.mrb[0].mxu0 %v2387
        %v2531 = vpop.f32.mrb[0].mxu0
        %v2532 = vadd.f32 0.0, %v2531
        %v2533 = vpop.f32.mrb[0].mxu0
        %2534 = vmatprep.mubr.f32.mxu0 0.0
        %2535 = vmatmul.mubr.f32.gmra.mrb[0].mxu0 %v2390
        %v2536 = vpop.f32.mrb[0].mxu0
        %v2537 = vadd.f32 0.0, %v2536
        %v2538 = vpop.f32.mrb[0].mxu0
        %2539 = vmatprep.mubr.f32.mxu0 0.0
        %2540 = vmatmul.mubr.f32.gmra.mrb[0].mxu0 %v2393
        %v2541 = vpop.f32.mrb[0].mxu0
        %v2542 = vadd.f32 0.0, %v2541
        %v2543 = vpop.f32.mrb[0].mxu0
        %2544 = vmatprep.mubr.f32.mxu0 0.0
        %2545 = vmatmul.mubr.f32.gmra.mrb[0].mxu0 %v2396
        %v2546 = vpop.f32.mrb[0].mxu0
        %v2547 = vadd.f32 0.0, %v2546
        %v2548 = vpop.f32.mrb[0].mxu0
        %2549 = vmatprep.mubr.f32.mxu0 0.0
        %2550 = vmatmul.mubr.f32.gmra.mrb[0].mxu0 %v2399
        %v2551 = vpop.f32.mrb[0].mxu0
        %v2552 = vadd.f32 0.0, %v2551
        %v2553 = vpop.f32.mrb[0].mxu0
        %2554 = vmatprep.mubr.f32.mxu0 0.0
        %2555 = vmatmul.mubr.f32.gmra.mrb[0].mxu0 %v2402
        %v2556 = vpop.f32.mrb[0].mxu0
        %v2557 = vadd.f32 0.0, %v2556
        %v2558 = vpop.f32.mrb[0].mxu0
        %2559 = vmatprep.mubr.f32.mxu0 0.0
        %2560 = vmatmul.mubr.f32.gmra.mrb[0].mxu0 %v2405
        %v2561 = vpop.f32.mrb[0].mxu0
        %v2562 = vadd.f32 0.0, %v2561
        %v2563 = vpop.f32.mrb[0].mxu0
        %2564 = vmatprep.mubr.f32.mxu0 0.0
        %2565 = vmatmul.mubr.f32.gmra.mrb[0].mxu0 %v2408
        %v2566 = vpop.f32.mrb[0].mxu0
        %v2567 = vadd.f32 0.0, %v2566
        %v2568 = vpop.f32.mrb[0].mxu0
        %2569 = vmatprep.mubr.f32.mxu0 0.0
        %2570 = vmatmul.mubr.f32.gmra.mrb[0].mxu0 %v2411
        %v2571 = vpop.f32.mrb[0].mxu0
        %v2572 = vadd.f32 0.0, %v2571
        %v2573 = vpop.f32.mrb[0].mxu0
        %2574 = vmatprep.mubr.f32.mxu0 0.0
        %2575 = vmatmul.mubr.f32.gmra.mrb[0].mxu0 %v2414
        %v2576 = vpop.f32.mrb[0].mxu0
        %v2577 = vadd.f32 0.0, %v2576
        %v2578 = vpop.f32.mrb[0].mxu0
        %2579 = vmatprep.mubr.f32.mxu0 0.0
        %2580 = vmatmul.mubr.f32.gmra.mrb[0].mxu0 %v2417
        %v2581 = vpop.f32.mrb[0].mxu0
        %v2582 = vadd.f32 0.0, %v2581
        %v2583 = vpop.f32.mrb[0].mxu0
        %2584 = vmatprep.mubr.f32.mxu0 0.0
        %2585 = vmatmul.mubr.f32.gmra.mrb[0].mxu0 %v2420
        %v2586 = vpop.f32.mrb[0].mxu0
        %v2587 = vadd.f32 0.0, %v2586
        %v2588 = vpop.f32.mrb[0].mxu0
        %2589 = vmatprep.mubr.f32.mxu0 0.0
        %2590 = vmatmul.mubr.f32.gmra.mrb[0].mxu0 %v2423
        %v2591 = vpop.f32.mrb[0].mxu0
        %v2592 = vadd.f32 0.0, %v2591
        %v2593 = vpop.f32.mrb[0].mxu0
        %2594 = vmatprep.mubr.f32.mxu0 0.0
        %2595 = vmatmul.mubr.f32.gmra.mrb[0].mxu0 %v2426
        %v2596 = vpop.f32.mrb[0].mxu0
        %v2597 = vadd.f32 0.0, %v2596
        %v2598 = vpop.f32.mrb[0].mxu0
        %2599 = vmatprep.mubr.f32.mxu0 0.0
        %2600 = vmatmul.mubr.f32.gmra.mrb[0].mxu0 %v2429
        %v2601 = vpop.f32.mrb[0].mxu0
        %v2602 = vadd.f32 0.0, %v2601
        %v2603 = vpop.f32.mrb[0].mxu0
        %2604 = vmatprep.mubr.f32.mxu0 0.0
        %2605 = vmatmul.mubr.f32.gmra.mrb[0].mxu0 %v2432
        %v2606 = vpop.f32.mrb[0].mxu0
        %v2607 = vadd.f32 0.0, %v2606
        %v2608 = vpop.f32.mrb[0].mxu0
        %2609 = vmatprep.mubr.f32.mxu0 0.0
        %2610 = vmatmul.mubr.f32.gmra.mrb[0].mxu0 %v2435
        %v2611 = vpop.f32.mrb[0].mxu0
        %v2612 = vadd.f32 0.0, %v2611
        %v2613 = vpop.f32.mrb[0].mxu0
        %2614 = vmatprep.mubr.f32.mxu0 0.0
        %2615 = vmatmul.mubr.f32.gmra.mrb[0].mxu0 %v2438
        %v2616 = vpop.f32.mrb[0].mxu0
        %v2617 = vadd.f32 0.0, %v2616
        %v2618 = vpop.f32.mrb[0].mxu0
        %2619 = vdwg.mxu0
        %v2620 = vadd.f32 %v2323, %v2507
        %v2621 = vadd.f32 %v2324, %v2512
        %v2622 = vadd.f32 %v2325, %v2517
        %v2623 = vadd.f32 %v2326, %v2522
        %v2624 = vadd.f32 %v2327, %v2527
        %v2625 = vadd.f32 %v2328, %v2532
        %v2626 = vadd.f32 %v2329, %v2537
        %v2627 = vadd.f32 %v2330, %v2542
        %v2628 = vadd.f32 %v2331, %v2547
        %v2629 = vadd.f32 %v2332, %v2552
        %v2630 = vadd.f32 %v2333, %v2557
        %v2631 = vadd.f32 %v2334, %v2562
        %v2632 = vadd.f32 %v2335, %v2567
        %v2633 = vadd.f32 %v2336, %v2572
        %v2634 = vadd.f32 %v2337, %v2577
        %v2635 = vadd.f32 %v2338, %v2582
        %v2636 = vadd.f32 %v2339, %v2587
        %v2637 = vadd.f32 %v2340, %v2592
        %v2638 = vadd.f32 %v2341, %v2597
        %v2639 = vadd.f32 %v2342, %v2602
        %v2640 = vadd.f32 %v2343, %v2607
        %v2641 = vadd.f32 %v2344, %v2612
        %v2642 = vadd.f32 %v2345, %v2617
        %v2643 = vld [vmem:[#allocation2 + $0x25] sm:$0xff]
        %v2644 = vld [vmem:[#allocation2 + $0x2d] sm:$0xff]
        %v2645 = vld [vmem:[#allocation2 + $0x35] sm:$0xff]
        %v2646 = vld [vmem:[#allocation2 + $0x3d] sm:$0xff]
        %v2647 = vld [vmem:[#allocation2 + $0x45] sm:$0xff]
        %v2648 = vld [vmem:[#allocation2 + $0x4d] sm:$0xff]
        %v2649 = vld [vmem:[#allocation2 + $0x55] sm:$0xff]
        %v2650 = vld [vmem:[#allocation2 + $0x5d] sm:$0xff]
        %v2651 = vld [vmem:[#allocation2 + $0x65] sm:$0xff]
        %v2652 = vld [vmem:[#allocation2 + $0x6d] sm:$0xff]
        %v2653 = vld [vmem:[#allocation2 + $0x75] sm:$0xff]
        %v2654 = vld [vmem:[#allocation2 + $0x7d] sm:$0xff]
        %v2655 = vld [vmem:[#allocation2 + $0x85] sm:$0xff]
        %v2656 = vld [vmem:[#allocation2 + $0x8d] sm:$0xff]
        %v2657 = vld [vmem:[#allocation2 + $0x95] sm:$0xff]
        %v2658 = vld [vmem:[#allocation2 + $0x9d] sm:$0xff]
        %v2659 = vld [vmem:[#allocation2 + $0xa5] sm:$0xff]
        %v2660 = vld [vmem:[#allocation2 + $0xad] sm:$0xff]
        %v2661 = vld [vmem:[#allocation2 + $0xb5] sm:$0xff]
        %v2662 = vld [vmem:[#allocation2 + $0xbd] sm:$0xff]
        %v2663 = vld [vmem:[#allocation2 + $0xc5] sm:$0xff]
        %v2664 = vld [vmem:[#allocation2 + $0xcd] sm:$0xff]
        %v2665 = vld [vmem:[#allocation2 + $0xd5] sm:$0xf]
        %s2666 = scalar_lea.vmem [#allocation10], 56
        %v2667 = vld [vmem:[%s2666] sm:$0xff]
        %v2669 = vsel %vm493, %v2643, 0
        %v2672 = vsel %vm493, %v2644, 0
        %v2675 = vsel %vm493, %v2645, 0
        %v2678 = vsel %vm493, %v2646, 0
        %v2681 = vsel %vm493, %v2647, 0
        %v2684 = vsel %vm493, %v2648, 0
        %v2687 = vsel %vm493, %v2649, 0
        %v2690 = vsel %vm493, %v2650, 0
        %v2693 = vsel %vm493, %v2651, 0
        %v2696 = vsel %vm493, %v2652, 0
        %v2699 = vsel %vm493, %v2653, 0
        %v2702 = vsel %vm493, %v2654, 0
        %v2705 = vsel %vm493, %v2655, 0
        %v2708 = vsel %vm493, %v2656, 0
        %v2711 = vsel %vm493, %v2657, 0
        %v2714 = vsel %vm493, %v2658, 0
        %v2717 = vsel %vm493, %v2659, 0
        %v2720 = vsel %vm493, %v2660, 0
        %v2723 = vsel %vm493, %v2661, 0
        %v2726 = vsel %vm493, %v2662, 0
        %v2729 = vsel %vm493, %v2663, 0
        %v2732 = vsel %vm493, %v2664, 0
        %v2735 = vsel %vm493, %v2665, 0
        %2737 = vmatprep.subr.mxu0 0.0
        %2738 = vmatpush1.msra.mxu0 %v2667
        %2739 = vmatprep.subr.mxu0 0.0
        %2740 = vmatpush1.msra.mxu0 0.0
        %2741 = vmatprep.subr.mxu0 0.0
        %2742 = vmatpush1.msra.mxu0 0.0
        %2743 = vmatprep.subr.mxu0 0.0
        %2744 = vmatpush1.msra.mxu0 0.0
        %2745 = vmatprep.subr.mxu0 0.0
        %2746 = vmatpush1.msra.mxu0 0.0
        %2747 = vmatprep.subr.mxu0 0.0
        %2748 = vmatpush1.msra.mxu0 0.0
        %2749 = vmatprep.subr.mxu0 0.0
        %2750 = vmatpush1.msra.mxu0 0.0
        %2751 = vmatprep.subr.mxu0 0.0
        %2752 = vmatpush1.msra.mxu0 0.0
        %2753 = vmatprep.subr.mxu0 0.0
        %2754 = vmatpush1.msra.mxu0 0.0
        %2755 = vmatprep.subr.mxu0 0.0
        %2756 = vmatpush1.msra.mxu0 0.0
        %2757 = vmatprep.subr.mxu0 0.0
        %2758 = vmatpush1.msra.mxu0 0.0
        %2759 = vmatprep.subr.mxu0 0.0
        %2760 = vmatpush1.msra.mxu0 0.0
        %2761 = vmatprep.subr.mxu0 0.0
        %2762 = vmatpush1.msra.mxu0 0.0
        %2763 = vmatprep.subr.mxu0 0.0
        %2764 = vmatpush1.msra.mxu0 0.0
        %2765 = vmatprep.subr.mxu0 0.0
        %2766 = vmatpush1.msra.mxu0 0.0
        %2767 = vmatprep.subr.mxu0 0.0
        %2768 = vmatpush1.msra.mxu0 0.0
        %2769 = vmatprep.subr.mxu0 0.0
        %2770 = vmatpush1.msra.mxu0 0.0
        %2771 = vmatprep.subr.mxu0 0.0
        %2772 = vmatpush1.msra.mxu0 0.0
        %2773 = vmatprep.subr.mxu0 0.0
        %2774 = vmatpush1.msra.mxu0 0.0
        %2775 = vmatprep.subr.mxu0 0.0
        %2776 = vmatpush1.msra.mxu0 0.0
        %2777 = vmatprep.subr.mxu0 0.0
        %2778 = vmatpush1.msra.mxu0 0.0
        %2779 = vmatprep.subr.mxu0 0.0
        %2780 = vmatpush1.msra.mxu0 0.0
        %2781 = vmatprep.subr.mxu0 0.0
        %2782 = vmatpush1.msra.mxu0 0.0
        %2783 = vmatprep.subr.mxu0 0.0
        %2784 = vmatpush1.msra.mxu0 0.0
        %2785 = vmatprep.subr.mxu0 0.0
        %2786 = vmatpush1.msra.mxu0 0.0
        %2787 = vmatprep.subr.mxu0 0.0
        %2788 = vmatpush1.msra.mxu0 0.0
        %2789 = vmatprep.subr.mxu0 0.0
        %2790 = vmatpush1.msra.mxu0 0.0
        %2791 = vmatprep.subr.mxu0 0.0
        %2792 = vmatpush1.msra.mxu0 0.0
        %2793 = vmatprep.subr.mxu0 0.0
        %2794 = vmatpush1.msra.mxu0 0.0
        %2795 = vmatprep.subr.mxu0 0.0
        %2796 = vmatpush1.msra.mxu0 0.0
        %2797 = vmatprep.subr.mxu0 0.0
        %2798 = vmatpush1.msra.mxu0 0.0
        %2799 = vmatprep.subr.mxu0 0.0
        %2800 = vmatpush1.msra.mxu0 0.0
        %2801 = vmatprep.mubr.f32.mxu0 0.0
        %2802 = vmatmul.mubr.f32.gmra.mrb[0].mxu0 %v2669
        %v2803 = vpop.f32.mrb[0].mxu0
        %v2804 = vadd.f32 0.0, %v2803
        %v2805 = vpop.f32.mrb[0].mxu0
        %2806 = vmatprep.mubr.f32.mxu0 0.0
        %2807 = vmatmul.mubr.f32.gmra.mrb[0].mxu0 %v2672
        %v2808 = vpop.f32.mrb[0].mxu0
        %v2809 = vadd.f32 0.0, %v2808
        %v2810 = vpop.f32.mrb[0].mxu0
        %2811 = vmatprep.mubr.f32.mxu0 0.0
        %2812 = vmatmul.mubr.f32.gmra.mrb[0].mxu0 %v2675
        %v2813 = vpop.f32.mrb[0].mxu0
        %v2814 = vadd.f32 0.0, %v2813
        %v2815 = vpop.f32.mrb[0].mxu0
        %2816 = vmatprep.mubr.f32.mxu0 0.0
        %2817 = vmatmul.mubr.f32.gmra.mrb[0].mxu0 %v2678
        %v2818 = vpop.f32.mrb[0].mxu0
        %v2819 = vadd.f32 0.0, %v2818
        %v2820 = vpop.f32.mrb[0].mxu0
        %2821 = vmatprep.mubr.f32.mxu0 0.0
        %2822 = vmatmul.mubr.f32.gmra.mrb[0].mxu0 %v2681
        %v2823 = vpop.f32.mrb[0].mxu0
        %v2824 = vadd.f32 0.0, %v2823
        %v2825 = vpop.f32.mrb[0].mxu0
        %2826 = vmatprep.mubr.f32.mxu0 0.0
        %2827 = vmatmul.mubr.f32.gmra.mrb[0].mxu0 %v2684
        %v2828 = vpop.f32.mrb[0].mxu0
        %v2829 = vadd.f32 0.0, %v2828
        %v2830 = vpop.f32.mrb[0].mxu0
        %2831 = vmatprep.mubr.f32.mxu0 0.0
        %2832 = vmatmul.mubr.f32.gmra.mrb[0].mxu0 %v2687
        %v2833 = vpop.f32.mrb[0].mxu0
        %v2834 = vadd.f32 0.0, %v2833
        %v2835 = vpop.f32.mrb[0].mxu0
        %2836 = vmatprep.mubr.f32.mxu0 0.0
        %2837 = vmatmul.mubr.f32.gmra.mrb[0].mxu0 %v2690
        %v2838 = vpop.f32.mrb[0].mxu0
        %v2839 = vadd.f32 0.0, %v2838
        %v2840 = vpop.f32.mrb[0].mxu0
        %2841 = vmatprep.mubr.f32.mxu0 0.0
        %2842 = vmatmul.mubr.f32.gmra.mrb[0].mxu0 %v2693
        %v2843 = vpop.f32.mrb[0].mxu0
        %v2844 = vadd.f32 0.0, %v2843
        %v2845 = vpop.f32.mrb[0].mxu0
        %2846 = vmatprep.mubr.f32.mxu0 0.0
        %2847 = vmatmul.mubr.f32.gmra.mrb[0].mxu0 %v2696
        %v2848 = vpop.f32.mrb[0].mxu0
        %v2849 = vadd.f32 0.0, %v2848
        %v2850 = vpop.f32.mrb[0].mxu0
        %2851 = vmatprep.mubr.f32.mxu0 0.0
        %2852 = vmatmul.mubr.f32.gmra.mrb[0].mxu0 %v2699
        %v2853 = vpop.f32.mrb[0].mxu0
        %v2854 = vadd.f32 0.0, %v2853
        %v2855 = vpop.f32.mrb[0].mxu0
        %2856 = vmatprep.mubr.f32.mxu0 0.0
        %2857 = vmatmul.mubr.f32.gmra.mrb[0].mxu0 %v2702
        %v2858 = vpop.f32.mrb[0].mxu0
        %v2859 = vadd.f32 0.0, %v2858
        %v2860 = vpop.f32.mrb[0].mxu0
        %2861 = vmatprep.mubr.f32.mxu0 0.0
        %2862 = vmatmul.mubr.f32.gmra.mrb[0].mxu0 %v2705
        %v2863 = vpop.f32.mrb[0].mxu0
        %v2864 = vadd.f32 0.0, %v2863
        %v2865 = vpop.f32.mrb[0].mxu0
        %2866 = vmatprep.mubr.f32.mxu0 0.0
        %2867 = vmatmul.mubr.f32.gmra.mrb[0].mxu0 %v2708
        %v2868 = vpop.f32.mrb[0].mxu0
        %v2869 = vadd.f32 0.0, %v2868
        %v2870 = vpop.f32.mrb[0].mxu0
        %2871 = vmatprep.mubr.f32.mxu0 0.0
        %2872 = vmatmul.mubr.f32.gmra.mrb[0].mxu0 %v2711
        %v2873 = vpop.f32.mrb[0].mxu0
        %v2874 = vadd.f32 0.0, %v2873
        %v2875 = vpop.f32.mrb[0].mxu0
        %2876 = vmatprep.mubr.f32.mxu0 0.0
        %2877 = vmatmul.mubr.f32.gmra.mrb[0].mxu0 %v2714
        %v2878 = vpop.f32.mrb[0].mxu0
        %v2879 = vadd.f32 0.0, %v2878
        %v2880 = vpop.f32.mrb[0].mxu0
        %2881 = vmatprep.mubr.f32.mxu0 0.0
        %2882 = vmatmul.mubr.f32.gmra.mrb[0].mxu0 %v2717
        %v2883 = vpop.f32.mrb[0].mxu0
        %v2884 = vadd.f32 0.0, %v2883
        %v2885 = vpop.f32.mrb[0].mxu0
        %2886 = vmatprep.mubr.f32.mxu0 0.0
        %2887 = vmatmul.mubr.f32.gmra.mrb[0].mxu0 %v2720
        %v2888 = vpop.f32.mrb[0].mxu0
        %v2889 = vadd.f32 0.0, %v2888
        %v2890 = vpop.f32.mrb[0].mxu0
        %2891 = vmatprep.mubr.f32.mxu0 0.0
        %2892 = vmatmul.mubr.f32.gmra.mrb[0].mxu0 %v2723
        %v2893 = vpop.f32.mrb[0].mxu0
        %v2894 = vadd.f32 0.0, %v2893
        %v2895 = vpop.f32.mrb[0].mxu0
        %2896 = vmatprep.mubr.f32.mxu0 0.0
        %2897 = vmatmul.mubr.f32.gmra.mrb[0].mxu0 %v2726
        %v2898 = vpop.f32.mrb[0].mxu0
        %v2899 = vadd.f32 0.0, %v2898
        %v2900 = vpop.f32.mrb[0].mxu0
        %2901 = vmatprep.mubr.f32.mxu0 0.0
        %2902 = vmatmul.mubr.f32.gmra.mrb[0].mxu0 %v2729
        %v2903 = vpop.f32.mrb[0].mxu0
        %v2904 = vadd.f32 0.0, %v2903
        %v2905 = vpop.f32.mrb[0].mxu0
        %2906 = vmatprep.mubr.f32.mxu0 0.0
        %2907 = vmatmul.mubr.f32.gmra.mrb[0].mxu0 %v2732
        %v2908 = vpop.f32.mrb[0].mxu0
        %v2909 = vadd.f32 0.0, %v2908
        %v2910 = vpop.f32.mrb[0].mxu0
        %2911 = vmatprep.mubr.f32.mxu0 0.0
        %2912 = vmatmul.mubr.f32.gmra.mrb[0].mxu0 %v2735
        %v2913 = vpop.f32.mrb[0].mxu0
        %v2914 = vadd.f32 0.0, %v2913
        %v2915 = vpop.f32.mrb[0].mxu0
        %2916 = vdwg.mxu0
        %v2917 = vadd.f32 %v2620, %v2804
        %v2918 = vadd.f32 %v2621, %v2809
        %v2919 = vadd.f32 %v2622, %v2814
        %v2920 = vadd.f32 %v2623, %v2819
        %v2921 = vadd.f32 %v2624, %v2824
        %v2922 = vadd.f32 %v2625, %v2829
        %v2923 = vadd.f32 %v2626, %v2834
        %v2924 = vadd.f32 %v2627, %v2839
        %v2925 = vadd.f32 %v2628, %v2844
        %v2926 = vadd.f32 %v2629, %v2849
        %v2927 = vadd.f32 %v2630, %v2854
        %v2928 = vadd.f32 %v2631, %v2859
        %v2929 = vadd.f32 %v2632, %v2864
        %v2930 = vadd.f32 %v2633, %v2869
        %v2931 = vadd.f32 %v2634, %v2874
        %v2932 = vadd.f32 %v2635, %v2879
        %v2933 = vadd.f32 %v2636, %v2884
        %v2934 = vadd.f32 %v2637, %v2889
        %v2935 = vadd.f32 %v2638, %v2894
        %v2936 = vadd.f32 %v2639, %v2899
        %v2937 = vadd.f32 %v2640, %v2904
        %v2938 = vadd.f32 %v2641, %v2909
        %v2939 = vadd.f32 %v2642, %v2914
        %v2940 = vld [vmem:[#allocation2 + $0x26] sm:$0xff]
        %v2941 = vld [vmem:[#allocation2 + $0x2e] sm:$0xff]
        %v2942 = vld [vmem:[#allocation2 + $0x36] sm:$0xff]
        %v2943 = vld [vmem:[#allocation2 + $0x3e] sm:$0xff]
        %v2944 = vld [vmem:[#allocation2 + $0x46] sm:$0xff]
        %v2945 = vld [vmem:[#allocation2 + $0x4e] sm:$0xff]
        %v2946 = vld [vmem:[#allocation2 + $0x56] sm:$0xff]
        %v2947 = vld [vmem:[#allocation2 + $0x5e] sm:$0xff]
        %v2948 = vld [vmem:[#allocation2 + $0x66] sm:$0xff]
        %v2949 = vld [vmem:[#allocation2 + $0x6e] sm:$0xff]
        %v2950 = vld [vmem:[#allocation2 + $0x76] sm:$0xff]
        %v2951 = vld [vmem:[#allocation2 + $0x7e] sm:$0xff]
        %v2952 = vld [vmem:[#allocation2 + $0x86] sm:$0xff]
        %v2953 = vld [vmem:[#allocation2 + $0x8e] sm:$0xff]
        %v2954 = vld [vmem:[#allocation2 + $0x96] sm:$0xff]
        %v2955 = vld [vmem:[#allocation2 + $0x9e] sm:$0xff]
        %v2956 = vld [vmem:[#allocation2 + $0xa6] sm:$0xff]
        %v2957 = vld [vmem:[#allocation2 + $0xae] sm:$0xff]
        %v2958 = vld [vmem:[#allocation2 + $0xb6] sm:$0xff]
        %v2959 = vld [vmem:[#allocation2 + $0xbe] sm:$0xff]
        %v2960 = vld [vmem:[#allocation2 + $0xc6] sm:$0xff]
        %v2961 = vld [vmem:[#allocation2 + $0xce] sm:$0xff]
        %v2962 = vld [vmem:[#allocation2 + $0xd6] sm:$0xf]
        %s2963 = scalar_lea.vmem [#allocation10], 64
        %v2964 = vld [vmem:[%s2963] sm:$0xff]
        %v2966 = vsel %vm493, %v2940, 0
        %v2969 = vsel %vm493, %v2941, 0
        %v2972 = vsel %vm493, %v2942, 0
        %v2975 = vsel %vm493, %v2943, 0
        %v2978 = vsel %vm493, %v2944, 0
        %v2981 = vsel %vm493, %v2945, 0
        %v2984 = vsel %vm493, %v2946, 0
        %v2987 = vsel %vm493, %v2947, 0
        %v2990 = vsel %vm493, %v2948, 0
        %v2993 = vsel %vm493, %v2949, 0
        %v2996 = vsel %vm493, %v2950, 0
        %v2999 = vsel %vm493, %v2951, 0
        %v3002 = vsel %vm493, %v2952, 0
        %v3005 = vsel %vm493, %v2953, 0
        %v3008 = vsel %vm493, %v2954, 0
        %v3011 = vsel %vm493, %v2955, 0
        %v3014 = vsel %vm493, %v2956, 0
        %v3017 = vsel %vm493, %v2957, 0
        %v3020 = vsel %vm493, %v2958, 0
        %v3023 = vsel %vm493, %v2959, 0
        %v3026 = vsel %vm493, %v2960, 0
        %v3029 = vsel %vm493, %v2961, 0
        %v3032 = vsel %vm493, %v2962, 0
        %3034 = vmatprep.subr.mxu0 0.0
        %3035 = vmatpush1.msra.mxu0 %v2964
        %3036 = vmatprep.subr.mxu0 0.0
        %3037 = vmatpush1.msra.mxu0 0.0
        %3038 = vmatprep.subr.mxu0 0.0
        %3039 = vmatpush1.msra.mxu0 0.0
        %3040 = vmatprep.subr.mxu0 0.0
        %3041 = vmatpush1.msra.mxu0 0.0
        %3042 = vmatprep.subr.mxu0 0.0
        %3043 = vmatpush1.msra.mxu0 0.0
        %3044 = vmatprep.subr.mxu0 0.0
        %3045 = vmatpush1.msra.mxu0 0.0
        %3046 = vmatprep.subr.mxu0 0.0
        %3047 = vmatpush1.msra.mxu0 0.0
        %3048 = vmatprep.subr.mxu0 0.0
        %3049 = vmatpush1.msra.mxu0 0.0
        %3050 = vmatprep.subr.mxu0 0.0
        %3051 = vmatpush1.msra.mxu0 0.0
        %3052 = vmatprep.subr.mxu0 0.0
        %3053 = vmatpush1.msra.mxu0 0.0
        %3054 = vmatprep.subr.mxu0 0.0
        %3055 = vmatpush1.msra.mxu0 0.0
        %3056 = vmatprep.subr.mxu0 0.0
        %3057 = vmatpush1.msra.mxu0 0.0
        %3058 = vmatprep.subr.mxu0 0.0
        %3059 = vmatpush1.msra.mxu0 0.0
        %3060 = vmatprep.subr.mxu0 0.0
        %3061 = vmatpush1.msra.mxu0 0.0
        %3062 = vmatprep.subr.mxu0 0.0
        %3063 = vmatpush1.msra.mxu0 0.0
        %3064 = vmatprep.subr.mxu0 0.0
        %3065 = vmatpush1.msra.mxu0 0.0
        %3066 = vmatprep.subr.mxu0 0.0
        %3067 = vmatpush1.msra.mxu0 0.0
        %3068 = vmatprep.subr.mxu0 0.0
        %3069 = vmatpush1.msra.mxu0 0.0
        %3070 = vmatprep.subr.mxu0 0.0
        %3071 = vmatpush1.msra.mxu0 0.0
        %3072 = vmatprep.subr.mxu0 0.0
        %3073 = vmatpush1.msra.mxu0 0.0
        %3074 = vmatprep.subr.mxu0 0.0
        %3075 = vmatpush1.msra.mxu0 0.0
        %3076 = vmatprep.subr.mxu0 0.0
        %3077 = vmatpush1.msra.mxu0 0.0
        %3078 = vmatprep.subr.mxu0 0.0
        %3079 = vmatpush1.msra.mxu0 0.0
        %3080 = vmatprep.subr.mxu0 0.0
        %3081 = vmatpush1.msra.mxu0 0.0
        %3082 = vmatprep.subr.mxu0 0.0
        %3083 = vmatpush1.msra.mxu0 0.0
        %3084 = vmatprep.subr.mxu0 0.0
        %3085 = vmatpush1.msra.mxu0 0.0
        %3086 = vmatprep.subr.mxu0 0.0
        %3087 = vmatpush1.msra.mxu0 0.0
        %3088 = vmatprep.subr.mxu0 0.0
        %3089 = vmatpush1.msra.mxu0 0.0
        %3090 = vmatprep.subr.mxu0 0.0
        %3091 = vmatpush1.msra.mxu0 0.0
        %3092 = vmatprep.subr.mxu0 0.0
        %3093 = vmatpush1.msra.mxu0 0.0
        %3094 = vmatprep.subr.mxu0 0.0
        %3095 = vmatpush1.msra.mxu0 0.0
        %3096 = vmatprep.subr.mxu0 0.0
        %3097 = vmatpush1.msra.mxu0 0.0
        %3098 = vmatprep.mubr.f32.mxu0 0.0
        %3099 = vmatmul.mubr.f32.gmra.mrb[0].mxu0 %v2966
        %v3100 = vpop.f32.mrb[0].mxu0
        %v3101 = vadd.f32 0.0, %v3100
        %v3102 = vpop.f32.mrb[0].mxu0
        %3103 = vmatprep.mubr.f32.mxu0 0.0
        %3104 = vmatmul.mubr.f32.gmra.mrb[0].mxu0 %v2969
        %v3105 = vpop.f32.mrb[0].mxu0
        %v3106 = vadd.f32 0.0, %v3105
        %v3107 = vpop.f32.mrb[0].mxu0
        %3108 = vmatprep.mubr.f32.mxu0 0.0
        %3109 = vmatmul.mubr.f32.gmra.mrb[0].mxu0 %v2972
        %v3110 = vpop.f32.mrb[0].mxu0
        %v3111 = vadd.f32 0.0, %v3110
        %v3112 = vpop.f32.mrb[0].mxu0
        %3113 = vmatprep.mubr.f32.mxu0 0.0
        %3114 = vmatmul.mubr.f32.gmra.mrb[0].mxu0 %v2975
        %v3115 = vpop.f32.mrb[0].mxu0
        %v3116 = vadd.f32 0.0, %v3115
        %v3117 = vpop.f32.mrb[0].mxu0
        %3118 = vmatprep.mubr.f32.mxu0 0.0
        %3119 = vmatmul.mubr.f32.gmra.mrb[0].mxu0 %v2978
        %v3120 = vpop.f32.mrb[0].mxu0
        %v3121 = vadd.f32 0.0, %v3120
        %v3122 = vpop.f32.mrb[0].mxu0
        %3123 = vmatprep.mubr.f32.mxu0 0.0
        %3124 = vmatmul.mubr.f32.gmra.mrb[0].mxu0 %v2981
        %v3125 = vpop.f32.mrb[0].mxu0
        %v3126 = vadd.f32 0.0, %v3125
        %v3127 = vpop.f32.mrb[0].mxu0
        %3128 = vmatprep.mubr.f32.mxu0 0.0
        %3129 = vmatmul.mubr.f32.gmra.mrb[0].mxu0 %v2984
        %v3130 = vpop.f32.mrb[0].mxu0
        %v3131 = vadd.f32 0.0, %v3130
        %v3132 = vpop.f32.mrb[0].mxu0
        %3133 = vmatprep.mubr.f32.mxu0 0.0
        %3134 = vmatmul.mubr.f32.gmra.mrb[0].mxu0 %v2987
        %v3135 = vpop.f32.mrb[0].mxu0
        %v3136 = vadd.f32 0.0, %v3135
        %v3137 = vpop.f32.mrb[0].mxu0
        %3138 = vmatprep.mubr.f32.mxu0 0.0
        %3139 = vmatmul.mubr.f32.gmra.mrb[0].mxu0 %v2990
        %v3140 = vpop.f32.mrb[0].mxu0
        %v3141 = vadd.f32 0.0, %v3140
        %v3142 = vpop.f32.mrb[0].mxu0
        %3143 = vmatprep.mubr.f32.mxu0 0.0
        %3144 = vmatmul.mubr.f32.gmra.mrb[0].mxu0 %v2993
        %v3145 = vpop.f32.mrb[0].mxu0
        %v3146 = vadd.f32 0.0, %v3145
        %v3147 = vpop.f32.mrb[0].mxu0
        %3148 = vmatprep.mubr.f32.mxu0 0.0
        %3149 = vmatmul.mubr.f32.gmra.mrb[0].mxu0 %v2996
        %v3150 = vpop.f32.mrb[0].mxu0
        %v3151 = vadd.f32 0.0, %v3150
        %v3152 = vpop.f32.mrb[0].mxu0
        %3153 = vmatprep.mubr.f32.mxu0 0.0
        %3154 = vmatmul.mubr.f32.gmra.mrb[0].mxu0 %v2999
        %v3155 = vpop.f32.mrb[0].mxu0
        %v3156 = vadd.f32 0.0, %v3155
        %v3157 = vpop.f32.mrb[0].mxu0
        %3158 = vmatprep.mubr.f32.mxu0 0.0
        %3159 = vmatmul.mubr.f32.gmra.mrb[0].mxu0 %v3002
        %v3160 = vpop.f32.mrb[0].mxu0
        %v3161 = vadd.f32 0.0, %v3160
        %v3162 = vpop.f32.mrb[0].mxu0
        %3163 = vmatprep.mubr.f32.mxu0 0.0
        %3164 = vmatmul.mubr.f32.gmra.mrb[0].mxu0 %v3005
        %v3165 = vpop.f32.mrb[0].mxu0
        %v3166 = vadd.f32 0.0, %v3165
        %v3167 = vpop.f32.mrb[0].mxu0
        %3168 = vmatprep.mubr.f32.mxu0 0.0
        %3169 = vmatmul.mubr.f32.gmra.mrb[0].mxu0 %v3008
        %v3170 = vpop.f32.mrb[0].mxu0
        %v3171 = vadd.f32 0.0, %v3170
        %v3172 = vpop.f32.mrb[0].mxu0
        %3173 = vmatprep.mubr.f32.mxu0 0.0
        %3174 = vmatmul.mubr.f32.gmra.mrb[0].mxu0 %v3011
        %v3175 = vpop.f32.mrb[0].mxu0
        %v3176 = vadd.f32 0.0, %v3175
        %v3177 = vpop.f32.mrb[0].mxu0
        %3178 = vmatprep.mubr.f32.mxu0 0.0
        %3179 = vmatmul.mubr.f32.gmra.mrb[0].mxu0 %v3014
        %v3180 = vpop.f32.mrb[0].mxu0
        %v3181 = vadd.f32 0.0, %v3180
        %v3182 = vpop.f32.mrb[0].mxu0
        %3183 = vmatprep.mubr.f32.mxu0 0.0
        %3184 = vmatmul.mubr.f32.gmra.mrb[0].mxu0 %v3017
        %v3185 = vpop.f32.mrb[0].mxu0
        %v3186 = vadd.f32 0.0, %v3185
        %v3187 = vpop.f32.mrb[0].mxu0
        %3188 = vmatprep.mubr.f32.mxu0 0.0
        %3189 = vmatmul.mubr.f32.gmra.mrb[0].mxu0 %v3020
        %v3190 = vpop.f32.mrb[0].mxu0
        %v3191 = vadd.f32 0.0, %v3190
        %v3192 = vpop.f32.mrb[0].mxu0
        %3193 = vmatprep.mubr.f32.mxu0 0.0
        %3194 = vmatmul.mubr.f32.gmra.mrb[0].mxu0 %v3023
        %v3195 = vpop.f32.mrb[0].mxu0
        %v3196 = vadd.f32 0.0, %v3195
        %v3197 = vpop.f32.mrb[0].mxu0
        %3198 = vmatprep.mubr.f32.mxu0 0.0
        %3199 = vmatmul.mubr.f32.gmra.mrb[0].mxu0 %v3026
        %v3200 = vpop.f32.mrb[0].mxu0
        %v3201 = vadd.f32 0.0, %v3200
        %v3202 = vpop.f32.mrb[0].mxu0
        %3203 = vmatprep.mubr.f32.mxu0 0.0
        %3204 = vmatmul.mubr.f32.gmra.mrb[0].mxu0 %v3029
        %v3205 = vpop.f32.mrb[0].mxu0
        %v3206 = vadd.f32 0.0, %v3205
        %v3207 = vpop.f32.mrb[0].mxu0
        %3208 = vmatprep.mubr.f32.mxu0 0.0
        %3209 = vmatmul.mubr.f32.gmra.mrb[0].mxu0 %v3032
        %v3210 = vpop.f32.mrb[0].mxu0
        %v3211 = vadd.f32 0.0, %v3210
        %v3212 = vpop.f32.mrb[0].mxu0
        %3213 = vdwg.mxu0
        %v3214 = vadd.f32 %v2917, %v3101
        %v3215 = vadd.f32 %v2918, %v3106
        %v3216 = vadd.f32 %v2919, %v3111
        %v3217 = vadd.f32 %v2920, %v3116
        %v3218 = vadd.f32 %v2921, %v3121
        %v3219 = vadd.f32 %v2922, %v3126
        %v3220 = vadd.f32 %v2923, %v3131
        %v3221 = vadd.f32 %v2924, %v3136
        %v3222 = vadd.f32 %v2925, %v3141
        %v3223 = vadd.f32 %v2926, %v3146
        %v3224 = vadd.f32 %v2927, %v3151
        %v3225 = vadd.f32 %v2928, %v3156
        %v3226 = vadd.f32 %v2929, %v3161
        %v3227 = vadd.f32 %v2930, %v3166
        %v3228 = vadd.f32 %v2931, %v3171
        %v3229 = vadd.f32 %v2932, %v3176
        %v3230 = vadd.f32 %v2933, %v3181
        %v3231 = vadd.f32 %v2934, %v3186
        %v3232 = vadd.f32 %v2935, %v3191
        %v3233 = vadd.f32 %v2936, %v3196
        %v3234 = vadd.f32 %v2937, %v3201
        %v3235 = vadd.f32 %v2938, %v3206
        %v3236 = vadd.f32 %v2939, %v3211
        %v3237 = vld [vmem:[#allocation12] sm:$0x1]
        %v3239 = vlaneseq
        %v3240 = vshrl.u32 %v3239, 7
        %v3241 = vsub.s32 0, %v3240
        %v3242 = vrot.slane %v3237, %v3241
        %v3244 = vadd.f32 %v3214, %v3242
        %v3245 = vadd.f32 %v3215, %v3242
        %v3246 = vadd.f32 %v3216, %v3242
        %v3247 = vadd.f32 %v3217, %v3242
        %v3248 = vadd.f32 %v3218, %v3242
        %v3249 = vadd.f32 %v3219, %v3242
        %v3250 = vadd.f32 %v3220, %v3242
        %v3251 = vadd.f32 %v3221, %v3242
        %v3252 = vadd.f32 %v3222, %v3242
        %v3253 = vadd.f32 %v3223, %v3242
        %v3254 = vadd.f32 %v3224, %v3242
        %v3255 = vadd.f32 %v3225, %v3242
        %v3256 = vadd.f32 %v3226, %v3242
        %v3257 = vadd.f32 %v3227, %v3242
        %v3258 = vadd.f32 %v3228, %v3242
        %v3259 = vadd.f32 %v3229, %v3242
        %v3260 = vadd.f32 %v3230, %v3242
        %v3261 = vadd.f32 %v3231, %v3242
        %v3262 = vadd.f32 %v3232, %v3242
        %v3263 = vadd.f32 %v3233, %v3242
        %v3264 = vadd.f32 %v3234, %v3242
        %v3265 = vadd.f32 %v3235, %v3242
        %v3266 = vadd.f32 %v3236, %v3242
        %v3267 = vmax.f32 %v3244, 0.0
        %v3268 = vmax.f32 %v3245, 0.0
        %v3269 = vmax.f32 %v3246, 0.0
        %v3270 = vmax.f32 %v3247, 0.0
        %v3271 = vmax.f32 %v3248, 0.0
        %v3272 = vmax.f32 %v3249, 0.0
        %v3273 = vmax.f32 %v3250, 0.0
        %v3274 = vmax.f32 %v3251, 0.0
        %v3275 = vmax.f32 %v3252, 0.0
        %v3276 = vmax.f32 %v3253, 0.0
        %v3277 = vmax.f32 %v3254, 0.0
        %v3278 = vmax.f32 %v3255, 0.0
        %v3279 = vmax.f32 %v3256, 0.0
        %v3280 = vmax.f32 %v3257, 0.0
        %v3281 = vmax.f32 %v3258, 0.0
        %v3282 = vmax.f32 %v3259, 0.0
        %v3283 = vmax.f32 %v3260, 0.0
        %v3284 = vmax.f32 %v3261, 0.0
        %v3285 = vmax.f32 %v3262, 0.0
        %v3286 = vmax.f32 %v3263, 0.0
        %v3287 = vmax.f32 %v3264, 0.0
        %v3288 = vmax.f32 %v3265, 0.0
        %v3289 = vmax.f32 %v3266, 0.0
        // Predicated region
        $region85: #{tpu_custom_call.1} parent=47 // pred_check
          %p3290 = pneg %p585
        $region86: #{tpu_custom_call.1} parent=47 // pred_check_branch
          %3292 = sbr.rel (%p3290) target = $region88
        $region87: #{tpu_custom_call.1} parent=47 // pred_region
          %3293 = vst [vmem:[#allocation3 + $0x1] sm:$0xff] %v3267
          %3294 = vst [vmem:[#allocation3 + $0x9] sm:$0xff] %v3268
        $region88: #{tpu_custom_call.1} parent=47 // pred_fallthru
          _
        %3295 = vst [vmem:[#allocation3 + $0x11] sm:$0xfc] %v3269
        %3296 = vst [vmem:[#allocation3 + $0x19] sm:$0xff] %v3270
        %3297 = vst [vmem:[#allocation3 + $0x21] sm:$0x3] %v3271
        %3298 = vst [vmem:[#allocation3 + $0x21] sm:$0xf0] %v3271
        %3299 = vst [vmem:[#allocation3 + $0x29] sm:$0xff] %v3272
        %3300 = vst [vmem:[#allocation3 + $0x31] sm:$0xf] %v3273
        %3301 = vst [vmem:[#allocation3 + $0x31] sm:$0xc0] %v3273
        %3302 = vst [vmem:[#allocation3 + $0x39] sm:$0xff] %v3274
        %3303 = vst [vmem:[#allocation3 + $0x41] sm:$0x3f] %v3275
        %3304 = vst [vmem:[#allocation3 + $0x49] sm:$0xff] %v3276
        %3305 = vst [vmem:[#allocation3 + $0x51] sm:$0xff] %v3277
        %3306 = vst [vmem:[#allocation3 + $0x59] sm:$0xfc] %v3278
        %3307 = vst [vmem:[#allocation3 + $0x61] sm:$0xff] %v3279
        %3308 = vst [vmem:[#allocation3 + $0x69] sm:$0x3] %v3280
        %3309 = vst [vmem:[#allocation3 + $0x69] sm:$0xf0] %v3280
        %3310 = vst [vmem:[#allocation3 + $0x71] sm:$0xff] %v3281
        %3311 = vst [vmem:[#allocation3 + $0x79] sm:$0xf] %v3282
        %3312 = vst [vmem:[#allocation3 + $0x79] sm:$0xc0] %v3282
        %3313 = vst [vmem:[#allocation3 + $0x81] sm:$0xff] %v3283
        %3314 = vst [vmem:[#allocation3 + $0x89] sm:$0x3f] %v3284
        %3315 = vst [vmem:[#allocation3 + $0x91] sm:$0xff] %v3285
        %3316 = vst [vmem:[#allocation3 + $0x99] sm:$0xff] %v3286
        // Predicated region
        $region89: #{tpu_custom_call.1} parent=47 // pred_check
          %p3317 = pneg %p598
        $region90: #{tpu_custom_call.1} parent=47 // pred_check_branch
          %3319 = sbr.rel (%p3317) target = $region92
        $region91: #{tpu_custom_call.1} parent=47 // pred_region
          %3320 = vst [vmem:[#allocation3 + $0xa1] sm:$0xfc] %v3287
          %3321 = vst [vmem:[#allocation3 + $0xa9] sm:$0xff] %v3288
          %3322 = vst [vmem:[#allocation3 + $0xb1] sm:$0x3] %v3289
        $region92: #{tpu_custom_call.1} parent=47 // pred_fallthru
          _
        %v3323 = vld [vmem:[#allocation3] sm:$0xff]
        %v3324 = vld [vmem:[#allocation3 + $0x8] sm:$0xff]
        %v3325 = vld [vmem:[#allocation3 + $0x10] sm:$0xff]
        %v3326 = vld [vmem:[#allocation3 + $0x18] sm:$0xff]
        %v3327 = vld [vmem:[#allocation3 + $0x20] sm:$0xff]
        %v3328 = vld [vmem:[#allocation3 + $0x28] sm:$0xff]
        %v3329 = vld [vmem:[#allocation3 + $0x30] sm:$0xff]
        %v3330 = vld [vmem:[#allocation3 + $0x38] sm:$0xff]
        %v3331 = vld [vmem:[#allocation3 + $0x40] sm:$0xff]
        %v3332 = vld [vmem:[#allocation3 + $0x48] sm:$0xff]
        %v3333 = vld [vmem:[#allocation3 + $0x50] sm:$0xff]
        %v3334 = vld [vmem:[#allocation3 + $0x58] sm:$0xff]
        %v3335 = vld [vmem:[#allocation3 + $0x60] sm:$0xff]
        %v3336 = vld [vmem:[#allocation3 + $0x68] sm:$0xff]
        %v3337 = vld [vmem:[#allocation3 + $0x70] sm:$0xff]
        %v3338 = vld [vmem:[#allocation3 + $0x78] sm:$0xff]
        %v3339 = vld [vmem:[#allocation3 + $0x80] sm:$0xff]
        %v3340 = vld [vmem:[#allocation3 + $0x88] sm:$0xff]
        %v3341 = vld [vmem:[#allocation13] sm:$0xff]
        %v3342 = vld [vmem:[#allocation13 + $0x8] sm:$0xff]
        %v3343 = vld [vmem:[#allocation13 + $0x10] sm:$0xff]
        %v3344 = vld [vmem:[#allocation13 + $0x18] sm:$0xff]
        %v3345 = vld [vmem:[#allocation13 + $0x20] sm:$0xff]
        %v3346 = vld [vmem:[#allocation13 + $0x28] sm:$0xff]
        %v3347 = vld [vmem:[#allocation13 + $0x30] sm:$0xff]
        %v3348 = vld [vmem:[#allocation13 + $0x38] sm:$0xff]
        %v3349 = vld [vmem:[#allocation13 + $0x40] sm:$0xff]
        %v3350 = vld [vmem:[#allocation13 + $0x48] sm:$0xff]
        %v3351 = vld [vmem:[#allocation13 + $0x50] sm:$0xff]
        %v3352 = vld [vmem:[#allocation13 + $0x58] sm:$0xff]
        %v3353 = vld [vmem:[#allocation13 + $0x60] sm:$0xff]
        %v3354 = vld [vmem:[#allocation13 + $0x68] sm:$0xff]
        %v3355 = vld [vmem:[#allocation13 + $0x70] sm:$0xff]
        %v3356 = vld [vmem:[#allocation13 + $0x78] sm:$0xff]
        %v3357 = vld [vmem:[#allocation13 + $0x80] sm:$0xff]
        %v3358 = vld [vmem:[#allocation13 + $0x88] sm:$0xff]
        %v3359 = vld [vmem:[#allocation13 + $0x90] sm:$0xff]
        %v3360 = vld [vmem:[#allocation13 + $0x98] sm:$0xff]
        %v3361 = vld [vmem:[#allocation13 + $0xa0] sm:$0xff]
        %v3362 = vld [vmem:[#allocation13 + $0xa8] sm:$0xff]
        %v3363 = vld [vmem:[#allocation13 + $0xb0] sm:$0xff]
        %v3364 = vld [vmem:[#allocation13 + $0xb8] sm:$0xff]
        %v3365 = vld [vmem:[#allocation13 + $0xc0] sm:$0xff]
        %v3366 = vld [vmem:[#allocation13 + $0xc8] sm:$0xff]
        %v3367 = vld [vmem:[#allocation13 + $0xd0] sm:$0xff]
        %v3368 = vld [vmem:[#allocation13 + $0xd8] sm:$0xff]
        %v3369 = vld [vmem:[#allocation13 + $0xe0] sm:$0xff]
        %v3370 = vld [vmem:[#allocation13 + $0xe8] sm:$0xff]
        %v3371 = vld [vmem:[#allocation13 + $0xf0] sm:$0xff]
        %v3372 = vld [vmem:[#allocation13 + $0xf8] sm:$0xff]
        %v3373 = vld [vmem:[#allocation13 + $0x100] sm:$0xff]
        %v3374 = vld [vmem:[#allocation13 + $0x108] sm:$0xff]
        %v3375 = vld [vmem:[#allocation13 + $0x110] sm:$0xff]
        %v3376 = vld [vmem:[#allocation13 + $0x118] sm:$0xff]
        %v3377 = vld [vmem:[#allocation13 + $0x120] sm:$0xff]
        %v3378 = vld [vmem:[#allocation13 + $0x128] sm:$0xff]
        %v3379 = vld [vmem:[#allocation13 + $0x130] sm:$0xff]
        %v3380 = vld [vmem:[#allocation13 + $0x138] sm:$0xff]
        %v3381 = vld [vmem:[#allocation13 + $0x140] sm:$0xff]
        %v3382 = vld [vmem:[#allocation13 + $0x148] sm:$0xff]
        %v3383 = vld [vmem:[#allocation13 + $0x150] sm:$0xff]
        %v3384 = vld [vmem:[#allocation13 + $0x158] sm:$0xff]
        %v3385 = vld [vmem:[#allocation13 + $0x160] sm:$0xff]
        %v3386 = vld [vmem:[#allocation13 + $0x168] sm:$0xff]
        %v3387 = vld [vmem:[#allocation13 + $0x170] sm:$0xff]
        %v3388 = vld [vmem:[#allocation13 + $0x178] sm:$0xff]
        %v3389 = vld [vmem:[#allocation3 + $0x1] sm:$0xff]
        %v3390 = vld [vmem:[#allocation3 + $0x9] sm:$0xff]
        %v3391 = vld [vmem:[#allocation3 + $0x11] sm:$0xff]
        %v3392 = vld [vmem:[#allocation3 + $0x19] sm:$0xff]
        %v3393 = vld [vmem:[#allocation3 + $0x21] sm:$0xff]
        %v3394 = vld [vmem:[#allocation3 + $0x29] sm:$0xff]
        %v3395 = vld [vmem:[#allocation3 + $0x31] sm:$0xff]
        %v3396 = vld [vmem:[#allocation3 + $0x39] sm:$0xff]
        %v3397 = vld [vmem:[#allocation3 + $0x41] sm:$0xff]
        %v3398 = vld [vmem:[#allocation3 + $0x49] sm:$0xff]
        %v3399 = vld [vmem:[#allocation3 + $0x51] sm:$0xff]
        %v3400 = vld [vmem:[#allocation3 + $0x59] sm:$0xff]
        %v3401 = vld [vmem:[#allocation3 + $0x61] sm:$0xff]
        %v3402 = vld [vmem:[#allocation3 + $0x69] sm:$0xff]
        %v3403 = vld [vmem:[#allocation3 + $0x71] sm:$0xff]
        %v3404 = vld [vmem:[#allocation3 + $0x79] sm:$0xff]
        %v3405 = vld [vmem:[#allocation3 + $0x81] sm:$0xff]
        %v3406 = vld [vmem:[#allocation3 + $0x89] sm:$0xff]
        %s3407 = scalar_lea.vmem [#allocation13], 384
        %v3408 = vld [vmem:[%s3407] sm:$0xff]
        %v3409 = vld [vmem:[%s3407 + $0x8] sm:$0xff]
        %v3410 = vld [vmem:[%s3407 + $0x10] sm:$0xff]
        %v3411 = vld [vmem:[%s3407 + $0x18] sm:$0xff]
        %v3412 = vld [vmem:[%s3407 + $0x20] sm:$0xff]
        %v3413 = vld [vmem:[%s3407 + $0x28] sm:$0xff]
        %v3414 = vld [vmem:[%s3407 + $0x30] sm:$0xff]
        %v3415 = vld [vmem:[%s3407 + $0x38] sm:$0xff]
        %v3416 = vld [vmem:[%s3407 + $0x40] sm:$0xff]
        %v3417 = vld [vmem:[%s3407 + $0x48] sm:$0xff]
        %v3418 = vld [vmem:[%s3407 + $0x50] sm:$0xff]
        %v3419 = vld [vmem:[%s3407 + $0x58] sm:$0xff]
        %v3420 = vld [vmem:[%s3407 + $0x60] sm:$0xff]
        %v3421 = vld [vmem:[%s3407 + $0x68] sm:$0xff]
        %v3422 = vld [vmem:[%s3407 + $0x70] sm:$0xff]
        %v3423 = vld [vmem:[%s3407 + $0x78] sm:$0xff]
        %v3424 = vld [vmem:[%s3407 + $0x80] sm:$0xff]
        %v3425 = vld [vmem:[%s3407 + $0x88] sm:$0xff]
        %v3426 = vld [vmem:[%s3407 + $0x90] sm:$0xff]
        %v3427 = vld [vmem:[%s3407 + $0x98] sm:$0xff]
        %v3428 = vld [vmem:[%s3407 + $0xa0] sm:$0xff]
        %v3429 = vld [vmem:[%s3407 + $0xa8] sm:$0xff]
        %v3430 = vld [vmem:[%s3407 + $0xb0] sm:$0xff]
        %v3431 = vld [vmem:[%s3407 + $0xb8] sm:$0xff]
        %v3432 = vld [vmem:[%s3407 + $0xc0] sm:$0xff]
        %v3433 = vld [vmem:[%s3407 + $0xc8] sm:$0xff]
        %v3434 = vld [vmem:[%s3407 + $0xd0] sm:$0xff]
        %v3435 = vld [vmem:[%s3407 + $0xd8] sm:$0xff]
        %v3436 = vld [vmem:[%s3407 + $0xe0] sm:$0xff]
        %v3437 = vld [vmem:[%s3407 + $0xe8] sm:$0xff]
        %v3438 = vld [vmem:[%s3407 + $0xf0] sm:$0xff]
        %v3439 = vld [vmem:[%s3407 + $0xf8] sm:$0xff]
        %v3440 = vld [vmem:[%s3407 + $0x100] sm:$0xff]
        %v3441 = vld [vmem:[%s3407 + $0x108] sm:$0xff]
        %v3442 = vld [vmem:[%s3407 + $0x110] sm:$0xff]
        %v3443 = vld [vmem:[%s3407 + $0x118] sm:$0xff]
        %v3444 = vld [vmem:[%s3407 + $0x120] sm:$0xff]
        %v3445 = vld [vmem:[%s3407 + $0x128] sm:$0xff]
        %v3446 = vld [vmem:[%s3407 + $0x130] sm:$0xff]
        %v3447 = vld [vmem:[%s3407 + $0x138] sm:$0xff]
        %v3448 = vld [vmem:[%s3407 + $0x140] sm:$0xff]
        %v3449 = vld [vmem:[%s3407 + $0x148] sm:$0xff]
        %v3450 = vld [vmem:[%s3407 + $0x150] sm:$0xff]
        %v3451 = vld [vmem:[%s3407 + $0x158] sm:$0xff]
        %v3452 = vld [vmem:[%s3407 + $0x160] sm:$0xff]
        %v3453 = vld [vmem:[%s3407 + $0x168] sm:$0xff]
        %v3454 = vld [vmem:[%s3407 + $0x170] sm:$0xff]
        %v3455 = vld [vmem:[%s3407 + $0x178] sm:$0xff]
        %3456 = vmatprep.subr.mxu0 %v3409
        %3457 = vmatpush1.msra.mxu0 %v3408
        %3458 = vmatprep.subr.mxu0 %v3412
        %3459 = vmatpush1.msra.mxu0 %v3411
        %3460 = vmatprep.subr.mxu0 %v3415
        %3461 = vmatpush1.msra.mxu0 %v3414
        %3462 = vmatprep.subr.mxu0 %v3418
        %3463 = vmatpush1.msra.mxu0 %v3417
        %3464 = vmatprep.subr.mxu0 %v3421
        %3465 = vmatpush1.msra.mxu0 %v3420
        %3466 = vmatprep.subr.mxu0 %v3424
        %3467 = vmatpush1.msra.mxu0 %v3423
        %3468 = vmatprep.subr.mxu0 %v3427
        %3469 = vmatpush1.msra.mxu0 %v3426
        %3470 = vmatprep.subr.mxu0 %v3430
        %3471 = vmatpush1.msra.mxu0 %v3429
        %3472 = vmatprep.subr.mxu0 %v3433
        %3473 = vmatpush1.msra.mxu0 %v3432
        %3474 = vmatprep.subr.mxu0 %v3436
        %3475 = vmatpush1.msra.mxu0 %v3435
        %3476 = vmatprep.subr.mxu0 %v3439
        %3477 = vmatpush1.msra.mxu0 %v3438
        %3478 = vmatprep.subr.mxu0 %v3442
        %3479 = vmatpush1.msra.mxu0 %v3441
        %3480 = vmatprep.subr.mxu0 %v3445
        %3481 = vmatpush1.msra.mxu0 %v3444
        %3482 = vmatprep.subr.mxu0 %v3448
        %3483 = vmatpush1.msra.mxu0 %v3447
        %3484 = vmatprep.subr.mxu0 %v3451
        %3485 = vmatpush1.msra.mxu0 %v3450
        %3486 = vmatprep.subr.mxu0 %v3454
        %3487 = vmatpush1.msra.mxu0 %v3453
        %3488 = vmatprep.subr.mxu0 0.0
        %3489 = vmatpush1.msra.mxu0 0.0
        %3490 = vmatprep.subr.mxu0 0.0
        %3491 = vmatpush1.msra.mxu0 0.0
        %3492 = vmatprep.subr.mxu0 0.0
        %3493 = vmatpush1.msra.mxu0 0.0
        %3494 = vmatprep.subr.mxu0 0.0
        %3495 = vmatpush1.msra.mxu0 0.0
        %3496 = vmatprep.subr.mxu0 0.0
        %3497 = vmatpush1.msra.mxu0 0.0
        %3498 = vmatprep.subr.mxu0 0.0
        %3499 = vmatpush1.msra.mxu0 0.0
        %3500 = vmatprep.subr.mxu0 0.0
        %3501 = vmatpush1.msra.mxu0 0.0
        %3502 = vmatprep.subr.mxu0 0.0
        %3503 = vmatpush1.msra.mxu0 0.0
        %3504 = vmatprep.subr.mxu0 0.0
        %3505 = vmatpush1.msra.mxu0 0.0
        %3506 = vmatprep.subr.mxu0 0.0
        %3507 = vmatpush1.msra.mxu0 0.0
        %3508 = vmatprep.subr.mxu0 0.0
        %3509 = vmatpush1.msra.mxu0 0.0
        %3510 = vmatprep.subr.mxu0 0.0
        %3511 = vmatpush1.msra.mxu0 0.0
        %3512 = vmatprep.subr.mxu0 0.0
        %3513 = vmatpush1.msra.mxu0 0.0
        %3514 = vmatprep.subr.mxu0 0.0
        %3515 = vmatpush1.msra.mxu0 0.0
        %3516 = vmatprep.subr.mxu0 0.0
        %3517 = vmatpush1.msra.mxu0 0.0
        %3518 = vmatprep.subr.mxu0 0.0
        %3519 = vmatpush1.msra.mxu0 0.0
        %3520 = vmatprep.mubr.f32.mxu0 0.0
        %3521 = vmatmul.mubr.f32.gmra.mrb[0].mxu0 %v3389
        %v3522 = vpop.f32.mrb[0].mxu0
        %v3523 = vadd.f32 0.0, %v3522
        %v3524 = vpop.f32.mrb[0].mxu0
        %v3525 = vadd.f32 0.0, %v3524
        %3526 = vmatprep.mubr.f32.mxu0 0.0
        %3527 = vmatmul.mubr.f32.gmra.mrb[0].mxu0 %v3390
        %v3528 = vpop.f32.mrb[0].mxu0
        %v3529 = vadd.f32 0.0, %v3528
        %v3530 = vpop.f32.mrb[0].mxu0
        %v3531 = vadd.f32 0.0, %v3530
        %3532 = vmatprep.mubr.f32.mxu0 0.0
        %3533 = vmatmul.mubr.f32.gmra.mrb[0].mxu0 %v3391
        %v3534 = vpop.f32.mrb[0].mxu0
        %v3535 = vadd.f32 0.0, %v3534
        %v3536 = vpop.f32.mrb[0].mxu0
        %v3537 = vadd.f32 0.0, %v3536
        %3538 = vmatprep.mubr.f32.mxu0 0.0
        %3539 = vmatmul.mubr.f32.gmra.mrb[0].mxu0 %v3392
        %v3540 = vpop.f32.mrb[0].mxu0
        %v3541 = vadd.f32 0.0, %v3540
        %v3542 = vpop.f32.mrb[0].mxu0
        %v3543 = vadd.f32 0.0, %v3542
        %3544 = vmatprep.mubr.f32.mxu0 0.0
        %3545 = vmatmul.mubr.f32.gmra.mrb[0].mxu0 %v3393
        %v3546 = vpop.f32.mrb[0].mxu0
        %v3547 = vadd.f32 0.0, %v3546
        %v3548 = vpop.f32.mrb[0].mxu0
        %v3549 = vadd.f32 0.0, %v3548
        %3550 = vmatprep.mubr.f32.mxu0 0.0
        %3551 = vmatmul.mubr.f32.gmra.mrb[0].mxu0 %v3394
        %v3552 = vpop.f32.mrb[0].mxu0
        %v3553 = vadd.f32 0.0, %v3552
        %v3554 = vpop.f32.mrb[0].mxu0
        %v3555 = vadd.f32 0.0, %v3554
        %3556 = vmatprep.mubr.f32.mxu0 0.0
        %3557 = vmatmul.mubr.f32.gmra.mrb[0].mxu0 %v3395
        %v3558 = vpop.f32.mrb[0].mxu0
        %v3559 = vadd.f32 0.0, %v3558
        %v3560 = vpop.f32.mrb[0].mxu0
        %v3561 = vadd.f32 0.0, %v3560
        %3562 = vmatprep.mubr.f32.mxu0 0.0
        %3563 = vmatmul.mubr.f32.gmra.mrb[0].mxu0 %v3396
        %v3564 = vpop.f32.mrb[0].mxu0
        %v3565 = vadd.f32 0.0, %v3564
        %v3566 = vpop.f32.mrb[0].mxu0
        %v3567 = vadd.f32 0.0, %v3566
        %3568 = vmatprep.mubr.f32.mxu0 0.0
        %3569 = vmatmul.mubr.f32.gmra.mrb[0].mxu0 %v3397
        %v3570 = vpop.f32.mrb[0].mxu0
        %v3571 = vadd.f32 0.0, %v3570
        %v3572 = vpop.f32.mrb[0].mxu0
        %v3573 = vadd.f32 0.0, %v3572
        %3574 = vmatprep.mubr.f32.mxu0 0.0
        %3575 = vmatmul.mubr.f32.gmra.mrb[0].mxu0 %v3398
        %v3576 = vpop.f32.mrb[0].mxu0
        %v3577 = vadd.f32 0.0, %v3576
        %v3578 = vpop.f32.mrb[0].mxu0
        %v3579 = vadd.f32 0.0, %v3578
        %3580 = vmatprep.mubr.f32.mxu0 0.0
        %3581 = vmatmul.mubr.f32.gmra.mrb[0].mxu0 %v3399
        %v3582 = vpop.f32.mrb[0].mxu0
        %v3583 = vadd.f32 0.0, %v3582
        %v3584 = vpop.f32.mrb[0].mxu0
        %v3585 = vadd.f32 0.0, %v3584
        %3586 = vmatprep.mubr.f32.mxu0 0.0
        %3587 = vmatmul.mubr.f32.gmra.mrb[0].mxu0 %v3400
        %v3588 = vpop.f32.mrb[0].mxu0
        %v3589 = vadd.f32 0.0, %v3588
        %v3590 = vpop.f32.mrb[0].mxu0
        %v3591 = vadd.f32 0.0, %v3590
        %3592 = vmatprep.mubr.f32.mxu0 0.0
        %3593 = vmatmul.mubr.f32.gmra.mrb[0].mxu0 %v3401
        %v3594 = vpop.f32.mrb[0].mxu0
        %v3595 = vadd.f32 0.0, %v3594
        %v3596 = vpop.f32.mrb[0].mxu0
        %v3597 = vadd.f32 0.0, %v3596
        %3598 = vmatprep.mubr.f32.mxu0 0.0
        %3599 = vmatmul.mubr.f32.gmra.mrb[0].mxu0 %v3402
        %v3600 = vpop.f32.mrb[0].mxu0
        %v3601 = vadd.f32 0.0, %v3600
        %v3602 = vpop.f32.mrb[0].mxu0
        %v3603 = vadd.f32 0.0, %v3602
        %3604 = vmatprep.mubr.f32.mxu0 0.0
        %3605 = vmatmul.mubr.f32.gmra.mrb[0].mxu0 %v3403
        %v3606 = vpop.f32.mrb[0].mxu0
        %v3607 = vadd.f32 0.0, %v3606
        %v3608 = vpop.f32.mrb[0].mxu0
        %v3609 = vadd.f32 0.0, %v3608
        %3610 = vmatprep.mubr.f32.mxu0 0.0
        %3611 = vmatmul.mubr.f32.gmra.mrb[0].mxu0 %v3404
        %v3612 = vpop.f32.mrb[0].mxu0
        %v3613 = vadd.f32 0.0, %v3612
        %v3614 = vpop.f32.mrb[0].mxu0
        %v3615 = vadd.f32 0.0, %v3614
        %3616 = vmatprep.mubr.f32.mxu0 0.0
        %3617 = vmatmul.mubr.f32.gmra.mrb[0].mxu0 %v3405
        %v3618 = vpop.f32.mrb[0].mxu0
        %v3619 = vadd.f32 0.0, %v3618
        %v3620 = vpop.f32.mrb[0].mxu0
        %v3621 = vadd.f32 0.0, %v3620
        %3622 = vmatprep.mubr.f32.mxu0 0.0
        %3623 = vmatmul.mubr.f32.gmra.mrb[0].mxu0 %v3406
        %v3624 = vpop.f32.mrb[0].mxu0
        %v3625 = vadd.f32 0.0, %v3624
        %v3626 = vpop.f32.mrb[0].mxu0
        %v3627 = vadd.f32 0.0, %v3626
        %3628 = vdwg.mxu0
        %3629 = vmatprep.subr.mxu0 0.0
        %3630 = vmatpush1.msra.mxu0 %v3410
        %3631 = vmatprep.subr.mxu0 0.0
        %3632 = vmatpush1.msra.mxu0 %v3413
        %3633 = vmatprep.subr.mxu0 0.0
        %3634 = vmatpush1.msra.mxu0 %v3416
        %3635 = vmatprep.subr.mxu0 0.0
        %3636 = vmatpush1.msra.mxu0 %v3419
        %3637 = vmatprep.subr.mxu0 0.0
        %3638 = vmatpush1.msra.mxu0 %v3422
        %3639 = vmatprep.subr.mxu0 0.0
        %3640 = vmatpush1.msra.mxu0 %v3425
        %3641 = vmatprep.subr.mxu0 0.0
        %3642 = vmatpush1.msra.mxu0 %v3428
        %3643 = vmatprep.subr.mxu0 0.0
        %3644 = vmatpush1.msra.mxu0 %v3431
        %3645 = vmatprep.subr.mxu0 0.0
        %3646 = vmatpush1.msra.mxu0 %v3434
        %3647 = vmatprep.subr.mxu0 0.0
        %3648 = vmatpush1.msra.mxu0 %v3437
        %3649 = vmatprep.subr.mxu0 0.0
        %3650 = vmatpush1.msra.mxu0 %v3440
        %3651 = vmatprep.subr.mxu0 0.0
        %3652 = vmatpush1.msra.mxu0 %v3443
        %3653 = vmatprep.subr.mxu0 0.0
        %3654 = vmatpush1.msra.mxu0 %v3446
        %3655 = vmatprep.subr.mxu0 0.0
        %3656 = vmatpush1.msra.mxu0 %v3449
        %3657 = vmatprep.subr.mxu0 0.0
        %3658 = vmatpush1.msra.mxu0 %v3452
        %3659 = vmatprep.subr.mxu0 0.0
        %3660 = vmatpush1.msra.mxu0 %v3455
        %3661 = vmatprep.subr.mxu0 0.0
        %3662 = vmatpush1.msra.mxu0 0.0
        %3663 = vmatprep.subr.mxu0 0.0
        %3664 = vmatpush1.msra.mxu0 0.0
        %3665 = vmatprep.subr.mxu0 0.0
        %3666 = vmatpush1.msra.mxu0 0.0
        %3667 = vmatprep.subr.mxu0 0.0
        %3668 = vmatpush1.msra.mxu0 0.0
        %3669 = vmatprep.subr.mxu0 0.0
        %3670 = vmatpush1.msra.mxu0 0.0
        %3671 = vmatprep.subr.mxu0 0.0
        %3672 = vmatpush1.msra.mxu0 0.0
        %3673 = vmatprep.subr.mxu0 0.0
        %3674 = vmatpush1.msra.mxu0 0.0
        %3675 = vmatprep.subr.mxu0 0.0
        %3676 = vmatpush1.msra.mxu0 0.0
        %3677 = vmatprep.subr.mxu0 0.0
        %3678 = vmatpush1.msra.mxu0 0.0
        %3679 = vmatprep.subr.mxu0 0.0
        %3680 = vmatpush1.msra.mxu0 0.0
        %3681 = vmatprep.subr.mxu0 0.0
        %3682 = vmatpush1.msra.mxu0 0.0
        %3683 = vmatprep.subr.mxu0 0.0
        %3684 = vmatpush1.msra.mxu0 0.0
        %3685 = vmatprep.subr.mxu0 0.0
        %3686 = vmatpush1.msra.mxu0 0.0
        %3687 = vmatprep.subr.mxu0 0.0
        %3688 = vmatpush1.msra.mxu0 0.0
        %3689 = vmatprep.subr.mxu0 0.0
        %3690 = vmatpush1.msra.mxu0 0.0
        %3691 = vmatprep.subr.mxu0 0.0
        %3692 = vmatpush1.msra.mxu0 0.0
        %3693 = vmatprep.mubr.f32.mxu0 0.0
        %3694 = vmatmul.mubr.f32.gmra.mrb[0].mxu0 %v3389
        %v3695 = vpop.f32.mrb[0].mxu0
        %v3696 = vadd.f32 0.0, %v3695
        %v3697 = vpop.f32.mrb[0].mxu0
        %3698 = vmatprep.mubr.f32.mxu0 0.0
        %3699 = vmatmul.mubr.f32.gmra.mrb[0].mxu0 %v3390
        %v3700 = vpop.f32.mrb[0].mxu0
        %v3701 = vadd.f32 0.0, %v3700
        %v3702 = vpop.f32.mrb[0].mxu0
        %3703 = vmatprep.mubr.f32.mxu0 0.0
        %3704 = vmatmul.mubr.f32.gmra.mrb[0].mxu0 %v3391
        %v3705 = vpop.f32.mrb[0].mxu0
        %v3706 = vadd.f32 0.0, %v3705
        %v3707 = vpop.f32.mrb[0].mxu0
        %3708 = vmatprep.mubr.f32.mxu0 0.0
        %3709 = vmatmul.mubr.f32.gmra.mrb[0].mxu0 %v3392
        %v3710 = vpop.f32.mrb[0].mxu0
        %v3711 = vadd.f32 0.0, %v3710
        %v3712 = vpop.f32.mrb[0].mxu0
        %3713 = vmatprep.mubr.f32.mxu0 0.0
        %3714 = vmatmul.mubr.f32.gmra.mrb[0].mxu0 %v3393
        %v3715 = vpop.f32.mrb[0].mxu0
        %v3716 = vadd.f32 0.0, %v3715
        %v3717 = vpop.f32.mrb[0].mxu0
        %3718 = vmatprep.mubr.f32.mxu0 0.0
        %3719 = vmatmul.mubr.f32.gmra.mrb[0].mxu0 %v3394
        %v3720 = vpop.f32.mrb[0].mxu0
        %v3721 = vadd.f32 0.0, %v3720
        %v3722 = vpop.f32.mrb[0].mxu0
        %3723 = vmatprep.mubr.f32.mxu0 0.0
        %3724 = vmatmul.mubr.f32.gmra.mrb[0].mxu0 %v3395
        %v3725 = vpop.f32.mrb[0].mxu0
        %v3726 = vadd.f32 0.0, %v3725
        %v3727 = vpop.f32.mrb[0].mxu0
        %3728 = vmatprep.mubr.f32.mxu0 0.0
        %3729 = vmatmul.mubr.f32.gmra.mrb[0].mxu0 %v3396
        %v3730 = vpop.f32.mrb[0].mxu0
        %v3731 = vadd.f32 0.0, %v3730
        %v3732 = vpop.f32.mrb[0].mxu0
        %3733 = vmatprep.mubr.f32.mxu0 0.0
        %3734 = vmatmul.mubr.f32.gmra.mrb[0].mxu0 %v3397
        %v3735 = vpop.f32.mrb[0].mxu0
        %v3736 = vadd.f32 0.0, %v3735
        %v3737 = vpop.f32.mrb[0].mxu0
        %3738 = vmatprep.mubr.f32.mxu0 0.0
        %3739 = vmatmul.mubr.f32.gmra.mrb[0].mxu0 %v3398
        %v3740 = vpop.f32.mrb[0].mxu0
        %v3741 = vadd.f32 0.0, %v3740
        %v3742 = vpop.f32.mrb[0].mxu0
        %3743 = vmatprep.mubr.f32.mxu0 0.0
        %3744 = vmatmul.mubr.f32.gmra.mrb[0].mxu0 %v3399
        %v3745 = vpop.f32.mrb[0].mxu0
        %v3746 = vadd.f32 0.0, %v3745
        %v3747 = vpop.f32.mrb[0].mxu0
        %3748 = vmatprep.mubr.f32.mxu0 0.0
        %3749 = vmatmul.mubr.f32.gmra.mrb[0].mxu0 %v3400
        %v3750 = vpop.f32.mrb[0].mxu0
        %v3751 = vadd.f32 0.0, %v3750
        %v3752 = vpop.f32.mrb[0].mxu0
        %3753 = vmatprep.mubr.f32.mxu0 0.0
        %3754 = vmatmul.mubr.f32.gmra.mrb[0].mxu0 %v3401
        %v3755 = vpop.f32.mrb[0].mxu0
        %v3756 = vadd.f32 0.0, %v3755
        %v3757 = vpop.f32.mrb[0].mxu0
        %3758 = vmatprep.mubr.f32.mxu0 0.0
        %3759 = vmatmul.mubr.f32.gmra.mrb[0].mxu0 %v3402
        %v3760 = vpop.f32.mrb[0].mxu0
        %v3761 = vadd.f32 0.0, %v3760
        %v3762 = vpop.f32.mrb[0].mxu0
        %3763 = vmatprep.mubr.f32.mxu0 0.0
        %3764 = vmatmul.mubr.f32.gmra.mrb[0].mxu0 %v3403
        %v3765 = vpop.f32.mrb[0].mxu0
        %v3766 = vadd.f32 0.0, %v3765
        %v3767 = vpop.f32.mrb[0].mxu0
        %3768 = vmatprep.mubr.f32.mxu0 0.0
        %3769 = vmatmul.mubr.f32.gmra.mrb[0].mxu0 %v3404
        %v3770 = vpop.f32.mrb[0].mxu0
        %v3771 = vadd.f32 0.0, %v3770
        %v3772 = vpop.f32.mrb[0].mxu0
        %3773 = vmatprep.mubr.f32.mxu0 0.0
        %3774 = vmatmul.mubr.f32.gmra.mrb[0].mxu0 %v3405
        %v3775 = vpop.f32.mrb[0].mxu0
        %v3776 = vadd.f32 0.0, %v3775
        %v3777 = vpop.f32.mrb[0].mxu0
        %3778 = vmatprep.mubr.f32.mxu0 0.0
        %3779 = vmatmul.mubr.f32.gmra.mrb[0].mxu0 %v3406
        %v3780 = vpop.f32.mrb[0].mxu0
        %v3781 = vadd.f32 0.0, %v3780
        %v3782 = vpop.f32.mrb[0].mxu0
        %3783 = vdwg.mxu0
        %3784 = vmatprep.subr.mxu0 %v3342
        %3785 = vmatpush1.msra.mxu0 %v3341
        %3786 = vmatprep.subr.mxu0 %v3345
        %3787 = vmatpush1.msra.mxu0 %v3344
        %3788 = vmatprep.subr.mxu0 %v3348
        %3789 = vmatpush1.msra.mxu0 %v3347
        %3790 = vmatprep.subr.mxu0 %v3351
        %3791 = vmatpush1.msra.mxu0 %v3350
        %3792 = vmatprep.subr.mxu0 %v3354
        %3793 = vmatpush1.msra.mxu0 %v3353
        %3794 = vmatprep.subr.mxu0 %v3357
        %3795 = vmatpush1.msra.mxu0 %v3356
        %3796 = vmatprep.subr.mxu0 %v3360
        %3797 = vmatpush1.msra.mxu0 %v3359
        %3798 = vmatprep.subr.mxu0 %v3363
        %3799 = vmatpush1.msra.mxu0 %v3362
        %3800 = vmatprep.subr.mxu0 %v3366
        %3801 = vmatpush1.msra.mxu0 %v3365
        %3802 = vmatprep.subr.mxu0 %v3369
        %3803 = vmatpush1.msra.mxu0 %v3368
        %3804 = vmatprep.subr.mxu0 %v3372
        %3805 = vmatpush1.msra.mxu0 %v3371
        %3806 = vmatprep.subr.mxu0 %v3375
        %3807 = vmatpush1.msra.mxu0 %v3374
        %3808 = vmatprep.subr.mxu0 %v3378
        %3809 = vmatpush1.msra.mxu0 %v3377
        %3810 = vmatprep.subr.mxu0 %v3381
        %3811 = vmatpush1.msra.mxu0 %v3380
        %3812 = vmatprep.subr.mxu0 %v3384
        %3813 = vmatpush1.msra.mxu0 %v3383
        %3814 = vmatprep.subr.mxu0 %v3387
        %3815 = vmatpush1.msra.mxu0 %v3386
        %3816 = vmatprep.subr.mxu0 0.0
        %3817 = vmatpush1.msra.mxu0 0.0
        %3818 = vmatprep.subr.mxu0 0.0
        %3819 = vmatpush1.msra.mxu0 0.0
        %3820 = vmatprep.subr.mxu0 0.0
        %3821 = vmatpush1.msra.mxu0 0.0
        %3822 = vmatprep.subr.mxu0 0.0
        %3823 = vmatpush1.msra.mxu0 0.0
        %3824 = vmatprep.subr.mxu0 0.0
        %3825 = vmatpush1.msra.mxu0 0.0
        %3826 = vmatprep.subr.mxu0 0.0
        %3827 = vmatpush1.msra.mxu0 0.0
        %3828 = vmatprep.subr.mxu0 0.0
        %3829 = vmatpush1.msra.mxu0 0.0
        %3830 = vmatprep.subr.mxu0 0.0
        %3831 = vmatpush1.msra.mxu0 0.0
        %3832 = vmatprep.subr.mxu0 0.0
        %3833 = vmatpush1.msra.mxu0 0.0
        %3834 = vmatprep.subr.mxu0 0.0
        %3835 = vmatpush1.msra.mxu0 0.0
        %3836 = vmatprep.subr.mxu0 0.0
        %3837 = vmatpush1.msra.mxu0 0.0
        %3838 = vmatprep.subr.mxu0 0.0
        %3839 = vmatpush1.msra.mxu0 0.0
        %3840 = vmatprep.subr.mxu0 0.0
        %3841 = vmatpush1.msra.mxu0 0.0
        %3842 = vmatprep.subr.mxu0 0.0
        %3843 = vmatpush1.msra.mxu0 0.0
        %3844 = vmatprep.subr.mxu0 0.0
        %3845 = vmatpush1.msra.mxu0 0.0
        %3846 = vmatprep.subr.mxu0 0.0
        %3847 = vmatpush1.msra.mxu0 0.0
        %3848 = vmatprep.mubr.f32.mxu0 0.0
        %3849 = vmatmul.mubr.f32.gmra.mrb[0].mxu0 %v3323
        %v3850 = vpop.f32.mrb[0].mxu0
        %v3851 = vadd.f32 %v3523, %v3850
        %v3852 = vpop.f32.mrb[0].mxu0
        %v3853 = vadd.f32 %v3525, %v3852
        %3854 = vmatprep.mubr.f32.mxu0 0.0
        %3855 = vmatmul.mubr.f32.gmra.mrb[0].mxu0 %v3324
        %v3856 = vpop.f32.mrb[0].mxu0
        %v3857 = vadd.f32 %v3529, %v3856
        %v3858 = vpop.f32.mrb[0].mxu0
        %v3859 = vadd.f32 %v3531, %v3858
        %3860 = vmatprep.mubr.f32.mxu0 0.0
        %3861 = vmatmul.mubr.f32.gmra.mrb[0].mxu0 %v3325
        %v3862 = vpop.f32.mrb[0].mxu0
        %v3863 = vadd.f32 %v3535, %v3862
        %v3864 = vpop.f32.mrb[0].mxu0
        %v3865 = vadd.f32 %v3537, %v3864
        %3866 = vmatprep.mubr.f32.mxu0 0.0
        %3867 = vmatmul.mubr.f32.gmra.mrb[0].mxu0 %v3326
        %v3868 = vpop.f32.mrb[0].mxu0
        %v3869 = vadd.f32 %v3541, %v3868
        %v3870 = vpop.f32.mrb[0].mxu0
        %v3871 = vadd.f32 %v3543, %v3870
        %3872 = vmatprep.mubr.f32.mxu0 0.0
        %3873 = vmatmul.mubr.f32.gmra.mrb[0].mxu0 %v3327
        %v3874 = vpop.f32.mrb[0].mxu0
        %v3875 = vadd.f32 %v3547, %v3874
        %v3876 = vpop.f32.mrb[0].mxu0
        %v3877 = vadd.f32 %v3549, %v3876
        %3878 = vmatprep.mubr.f32.mxu0 0.0
        %3879 = vmatmul.mubr.f32.gmra.mrb[0].mxu0 %v3328
        %v3880 = vpop.f32.mrb[0].mxu0
        %v3881 = vadd.f32 %v3553, %v3880
        %v3882 = vpop.f32.mrb[0].mxu0
        %v3883 = vadd.f32 %v3555, %v3882
        %3884 = vmatprep.mubr.f32.mxu0 0.0
        %3885 = vmatmul.mubr.f32.gmra.mrb[0].mxu0 %v3329
        %v3886 = vpop.f32.mrb[0].mxu0
        %v3887 = vadd.f32 %v3559, %v3886
        %v3888 = vpop.f32.mrb[0].mxu0
        %v3889 = vadd.f32 %v3561, %v3888
        %3890 = vmatprep.mubr.f32.mxu0 0.0
        %3891 = vmatmul.mubr.f32.gmra.mrb[0].mxu0 %v3330
        %v3892 = vpop.f32.mrb[0].mxu0
        %v3893 = vadd.f32 %v3565, %v3892
        %v3894 = vpop.f32.mrb[0].mxu0
        %v3895 = vadd.f32 %v3567, %v3894
        %3896 = vmatprep.mubr.f32.mxu0 0.0
        %3897 = vmatmul.mubr.f32.gmra.mrb[0].mxu0 %v3331
        %v3898 = vpop.f32.mrb[0].mxu0
        %v3899 = vadd.f32 %v3571, %v3898
        %v3900 = vpop.f32.mrb[0].mxu0
        %v3901 = vadd.f32 %v3573, %v3900
        %3902 = vmatprep.mubr.f32.mxu0 0.0
        %3903 = vmatmul.mubr.f32.gmra.mrb[0].mxu0 %v3332
        %v3904 = vpop.f32.mrb[0].mxu0
        %v3905 = vadd.f32 %v3577, %v3904
        %v3906 = vpop.f32.mrb[0].mxu0
        %v3907 = vadd.f32 %v3579, %v3906
        %3908 = vmatprep.mubr.f32.mxu0 0.0
        %3909 = vmatmul.mubr.f32.gmra.mrb[0].mxu0 %v3333
        %v3910 = vpop.f32.mrb[0].mxu0
        %v3911 = vadd.f32 %v3583, %v3910
        %v3912 = vpop.f32.mrb[0].mxu0
        %v3913 = vadd.f32 %v3585, %v3912
        %3914 = vmatprep.mubr.f32.mxu0 0.0
        %3915 = vmatmul.mubr.f32.gmra.mrb[0].mxu0 %v3334
        %v3916 = vpop.f32.mrb[0].mxu0
        %v3917 = vadd.f32 %v3589, %v3916
        %v3918 = vpop.f32.mrb[0].mxu0
        %v3919 = vadd.f32 %v3591, %v3918
        %3920 = vmatprep.mubr.f32.mxu0 0.0
        %3921 = vmatmul.mubr.f32.gmra.mrb[0].mxu0 %v3335
        %v3922 = vpop.f32.mrb[0].mxu0
        %v3923 = vadd.f32 %v3595, %v3922
        %v3924 = vpop.f32.mrb[0].mxu0
        %v3925 = vadd.f32 %v3597, %v3924
        %3926 = vmatprep.mubr.f32.mxu0 0.0
        %3927 = vmatmul.mubr.f32.gmra.mrb[0].mxu0 %v3336
        %v3928 = vpop.f32.mrb[0].mxu0
        %v3929 = vadd.f32 %v3601, %v3928
        %v3930 = vpop.f32.mrb[0].mxu0
        %v3931 = vadd.f32 %v3603, %v3930
        %3932 = vmatprep.mubr.f32.mxu0 0.0
        %3933 = vmatmul.mubr.f32.gmra.mrb[0].mxu0 %v3337
        %v3934 = vpop.f32.mrb[0].mxu0
        %v3935 = vadd.f32 %v3607, %v3934
        %v3936 = vpop.f32.mrb[0].mxu0
        %v3937 = vadd.f32 %v3609, %v3936
        %3938 = vmatprep.mubr.f32.mxu0 0.0
        %3939 = vmatmul.mubr.f32.gmra.mrb[0].mxu0 %v3338
        %v3940 = vpop.f32.mrb[0].mxu0
        %v3941 = vadd.f32 %v3613, %v3940
        %v3942 = vpop.f32.mrb[0].mxu0
        %v3943 = vadd.f32 %v3615, %v3942
        %3944 = vmatprep.mubr.f32.mxu0 0.0
        %3945 = vmatmul.mubr.f32.gmra.mrb[0].mxu0 %v3339
        %v3946 = vpop.f32.mrb[0].mxu0
        %v3947 = vadd.f32 %v3619, %v3946
        %v3948 = vpop.f32.mrb[0].mxu0
        %v3949 = vadd.f32 %v3621, %v3948
        %3950 = vmatprep.mubr.f32.mxu0 0.0
        %3951 = vmatmul.mubr.f32.gmra.mrb[0].mxu0 %v3340
        %v3952 = vpop.f32.mrb[0].mxu0
        %v3953 = vadd.f32 %v3625, %v3952
        %v3954 = vpop.f32.mrb[0].mxu0
        %v3955 = vadd.f32 %v3627, %v3954
        %3956 = vdwg.mxu0
        %3957 = vmatprep.subr.mxu0 0.0
        %3958 = vmatpush1.msra.mxu0 %v3343
        %3959 = vmatprep.subr.mxu0 0.0
        %3960 = vmatpush1.msra.mxu0 %v3346
        %3961 = vmatprep.subr.mxu0 0.0
        %3962 = vmatpush1.msra.mxu0 %v3349
        %3963 = vmatprep.subr.mxu0 0.0
        %3964 = vmatpush1.msra.mxu0 %v3352
        %3965 = vmatprep.subr.mxu0 0.0
        %3966 = vmatpush1.msra.mxu0 %v3355
        %3967 = vmatprep.subr.mxu0 0.0
        %3968 = vmatpush1.msra.mxu0 %v3358
        %3969 = vmatprep.subr.mxu0 0.0
        %3970 = vmatpush1.msra.mxu0 %v3361
        %3971 = vmatprep.subr.mxu0 0.0
        %3972 = vmatpush1.msra.mxu0 %v3364
        %3973 = vmatprep.subr.mxu0 0.0
        %3974 = vmatpush1.msra.mxu0 %v3367
        %3975 = vmatprep.subr.mxu0 0.0
        %3976 = vmatpush1.msra.mxu0 %v3370
        %3977 = vmatprep.subr.mxu0 0.0
        %3978 = vmatpush1.msra.mxu0 %v3373
        %3979 = vmatprep.subr.mxu0 0.0
        %3980 = vmatpush1.msra.mxu0 %v3376
        %3981 = vmatprep.subr.mxu0 0.0
        %3982 = vmatpush1.msra.mxu0 %v3379
        %3983 = vmatprep.subr.mxu0 0.0
        %3984 = vmatpush1.msra.mxu0 %v3382
        %3985 = vmatprep.subr.mxu0 0.0
        %3986 = vmatpush1.msra.mxu0 %v3385
        %3987 = vmatprep.subr.mxu0 0.0
        %3988 = vmatpush1.msra.mxu0 %v3388
        %3989 = vmatprep.subr.mxu0 0.0
        %3990 = vmatpush1.msra.mxu0 0.0
        %3991 = vmatprep.subr.mxu0 0.0
        %3992 = vmatpush1.msra.mxu0 0.0
        %3993 = vmatprep.subr.mxu0 0.0
        %3994 = vmatpush1.msra.mxu0 0.0
        %3995 = vmatprep.subr.mxu0 0.0
        %3996 = vmatpush1.msra.mxu0 0.0
        %3997 = vmatprep.subr.mxu0 0.0
        %3998 = vmatpush1.msra.mxu0 0.0
        %3999 = vmatprep.subr.mxu0 0.0
        %4000 = vmatpush1.msra.mxu0 0.0
        %4001 = vmatprep.subr.mxu0 0.0
        %4002 = vmatpush1.msra.mxu0 0.0
        %4003 = vmatprep.subr.mxu0 0.0
        %4004 = vmatpush1.msra.mxu0 0.0
        %4005 = vmatprep.subr.mxu0 0.0
        %4006 = vmatpush1.msra.mxu0 0.0
        %4007 = vmatprep.subr.mxu0 0.0
        %4008 = vmatpush1.msra.mxu0 0.0
        %4009 = vmatprep.subr.mxu0 0.0
        %4010 = vmatpush1.msra.mxu0 0.0
        %4011 = vmatprep.subr.mxu0 0.0
        %4012 = vmatpush1.msra.mxu0 0.0
        %4013 = vmatprep.subr.mxu0 0.0
        %4014 = vmatpush1.msra.mxu0 0.0
        %4015 = vmatprep.subr.mxu0 0.0
        %4016 = vmatpush1.msra.mxu0 0.0
        %4017 = vmatprep.subr.mxu0 0.0
        %4018 = vmatpush1.msra.mxu0 0.0
        %4019 = vmatprep.subr.mxu0 0.0
        %4020 = vmatpush1.msra.mxu0 0.0
        %4021 = vmatprep.mubr.f32.mxu0 0.0
        %4022 = vmatmul.mubr.f32.gmra.mrb[0].mxu0 %v3323
        %v4023 = vpop.f32.mrb[0].mxu0
        %v4024 = vadd.f32 %v3696, %v4023
        %v4025 = vpop.f32.mrb[0].mxu0
        %4026 = vmatprep.mubr.f32.mxu0 0.0
        %4027 = vmatmul.mubr.f32.gmra.mrb[0].mxu0 %v3324
        %v4028 = vpop.f32.mrb[0].mxu0
        %v4029 = vadd.f32 %v3701, %v4028
        %v4030 = vpop.f32.mrb[0].mxu0
        %4031 = vmatprep.mubr.f32.mxu0 0.0
        %4032 = vmatmul.mubr.f32.gmra.mrb[0].mxu0 %v3325
        %v4033 = vpop.f32.mrb[0].mxu0
        %v4034 = vadd.f32 %v3706, %v4033
        %v4035 = vpop.f32.mrb[0].mxu0
        %4036 = vmatprep.mubr.f32.mxu0 0.0
        %4037 = vmatmul.mubr.f32.gmra.mrb[0].mxu0 %v3326
        %v4038 = vpop.f32.mrb[0].mxu0
        %v4039 = vadd.f32 %v3711, %v4038
        %v4040 = vpop.f32.mrb[0].mxu0
        %4041 = vmatprep.mubr.f32.mxu0 0.0
        %4042 = vmatmul.mubr.f32.gmra.mrb[0].mxu0 %v3327
        %v4043 = vpop.f32.mrb[0].mxu0
        %v4044 = vadd.f32 %v3716, %v4043
        %v4045 = vpop.f32.mrb[0].mxu0
        %4046 = vmatprep.mubr.f32.mxu0 0.0
        %4047 = vmatmul.mubr.f32.gmra.mrb[0].mxu0 %v3328
        %v4048 = vpop.f32.mrb[0].mxu0
        %v4049 = vadd.f32 %v3721, %v4048
        %v4050 = vpop.f32.mrb[0].mxu0
        %4051 = vmatprep.mubr.f32.mxu0 0.0
        %4052 = vmatmul.mubr.f32.gmra.mrb[0].mxu0 %v3329
        %v4053 = vpop.f32.mrb[0].mxu0
        %v4054 = vadd.f32 %v3726, %v4053
        %v4055 = vpop.f32.mrb[0].mxu0
        %4056 = vmatprep.mubr.f32.mxu0 0.0
        %4057 = vmatmul.mubr.f32.gmra.mrb[0].mxu0 %v3330
        %v4058 = vpop.f32.mrb[0].mxu0
        %v4059 = vadd.f32 %v3731, %v4058
        %v4060 = vpop.f32.mrb[0].mxu0
        %4061 = vmatprep.mubr.f32.mxu0 0.0
        %4062 = vmatmul.mubr.f32.gmra.mrb[0].mxu0 %v3331
        %v4063 = vpop.f32.mrb[0].mxu0
        %v4064 = vadd.f32 %v3736, %v4063
        %v4065 = vpop.f32.mrb[0].mxu0
        %4066 = vmatprep.mubr.f32.mxu0 0.0
        %4067 = vmatmul.mubr.f32.gmra.mrb[0].mxu0 %v3332
        %v4068 = vpop.f32.mrb[0].mxu0
        %v4069 = vadd.f32 %v3741, %v4068
        %v4070 = vpop.f32.mrb[0].mxu0
        %4071 = vmatprep.mubr.f32.mxu0 0.0
        %4072 = vmatmul.mubr.f32.gmra.mrb[0].mxu0 %v3333
        %v4073 = vpop.f32.mrb[0].mxu0
        %v4074 = vadd.f32 %v3746, %v4073
        %v4075 = vpop.f32.mrb[0].mxu0
        %4076 = vmatprep.mubr.f32.mxu0 0.0
        %4077 = vmatmul.mubr.f32.gmra.mrb[0].mxu0 %v3334
        %v4078 = vpop.f32.mrb[0].mxu0
        %v4079 = vadd.f32 %v3751, %v4078
        %v4080 = vpop.f32.mrb[0].mxu0
        %4081 = vmatprep.mubr.f32.mxu0 0.0
        %4082 = vmatmul.mubr.f32.gmra.mrb[0].mxu0 %v3335
        %v4083 = vpop.f32.mrb[0].mxu0
        %v4084 = vadd.f32 %v3756, %v4083
        %v4085 = vpop.f32.mrb[0].mxu0
        %4086 = vmatprep.mubr.f32.mxu0 0.0
        %4087 = vmatmul.mubr.f32.gmra.mrb[0].mxu0 %v3336
        %v4088 = vpop.f32.mrb[0].mxu0
        %v4089 = vadd.f32 %v3761, %v4088
        %v4090 = vpop.f32.mrb[0].mxu0
        %4091 = vmatprep.mubr.f32.mxu0 0.0
        %4092 = vmatmul.mubr.f32.gmra.mrb[0].mxu0 %v3337
        %v4093 = vpop.f32.mrb[0].mxu0
        %v4094 = vadd.f32 %v3766, %v4093
        %v4095 = vpop.f32.mrb[0].mxu0
        %4096 = vmatprep.mubr.f32.mxu0 0.0
        %4097 = vmatmul.mubr.f32.gmra.mrb[0].mxu0 %v3338
        %v4098 = vpop.f32.mrb[0].mxu0
        %v4099 = vadd.f32 %v3771, %v4098
        %v4100 = vpop.f32.mrb[0].mxu0
        %4101 = vmatprep.mubr.f32.mxu0 0.0
        %4102 = vmatmul.mubr.f32.gmra.mrb[0].mxu0 %v3339
        %v4103 = vpop.f32.mrb[0].mxu0
        %v4104 = vadd.f32 %v3776, %v4103
        %v4105 = vpop.f32.mrb[0].mxu0
        %4106 = vmatprep.mubr.f32.mxu0 0.0
        %4107 = vmatmul.mubr.f32.gmra.mrb[0].mxu0 %v3340
        %v4108 = vpop.f32.mrb[0].mxu0
        %v4109 = vadd.f32 %v3781, %v4108
        %v4110 = vpop.f32.mrb[0].mxu0
        %4111 = vdwg.mxu0
        %v4112 = vld [vmem:[#allocation3 + $0x2] sm:$0xff]
        %v4113 = vld [vmem:[#allocation3 + $0xa] sm:$0xff]
        %v4114 = vld [vmem:[#allocation3 + $0x12] sm:$0xff]
        %v4115 = vld [vmem:[#allocation3 + $0x1a] sm:$0xff]
        %v4116 = vld [vmem:[#allocation3 + $0x22] sm:$0xff]
        %v4117 = vld [vmem:[#allocation3 + $0x2a] sm:$0xff]
        %v4118 = vld [vmem:[#allocation3 + $0x32] sm:$0xff]
        %v4119 = vld [vmem:[#allocation3 + $0x3a] sm:$0xff]
        %v4120 = vld [vmem:[#allocation3 + $0x42] sm:$0xff]
        %v4121 = vld [vmem:[#allocation3 + $0x4a] sm:$0xff]
        %v4122 = vld [vmem:[#allocation3 + $0x52] sm:$0xff]
        %v4123 = vld [vmem:[#allocation3 + $0x5a] sm:$0xff]
        %v4124 = vld [vmem:[#allocation3 + $0x62] sm:$0xff]
        %v4125 = vld [vmem:[#allocation3 + $0x6a] sm:$0xff]
        %v4126 = vld [vmem:[#allocation3 + $0x72] sm:$0xff]
        %v4127 = vld [vmem:[#allocation3 + $0x7a] sm:$0xff]
        %v4128 = vld [vmem:[#allocation3 + $0x82] sm:$0xff]
        %v4129 = vld [vmem:[#allocation3 + $0x8a] sm:$0xff]
        %s4130 = scalar_lea.vmem [#allocation13], 768
        %v4131 = vld [vmem:[%s4130] sm:$0xff]
        %v4132 = vld [vmem:[%s4130 + $0x8] sm:$0xff]
        %v4133 = vld [vmem:[%s4130 + $0x10] sm:$0xff]
        %v4134 = vld [vmem:[%s4130 + $0x18] sm:$0xff]
        %v4135 = vld [vmem:[%s4130 + $0x20] sm:$0xff]
        %v4136 = vld [vmem:[%s4130 + $0x28] sm:$0xff]
        %v4137 = vld [vmem:[%s4130 + $0x30] sm:$0xff]
        %v4138 = vld [vmem:[%s4130 + $0x38] sm:$0xff]
        %v4139 = vld [vmem:[%s4130 + $0x40] sm:$0xff]
        %v4140 = vld [vmem:[%s4130 + $0x48] sm:$0xff]
        %v4141 = vld [vmem:[%s4130 + $0x50] sm:$0xff]
        %v4142 = vld [vmem:[%s4130 + $0x58] sm:$0xff]
        %v4143 = vld [vmem:[%s4130 + $0x60] sm:$0xff]
        %v4144 = vld [vmem:[%s4130 + $0x68] sm:$0xff]
        %v4145 = vld [vmem:[%s4130 + $0x70] sm:$0xff]
        %v4146 = vld [vmem:[%s4130 + $0x78] sm:$0xff]
        %v4147 = vld [vmem:[%s4130 + $0x80] sm:$0xff]
        %v4148 = vld [vmem:[%s4130 + $0x88] sm:$0xff]
        %v4149 = vld [vmem:[%s4130 + $0x90] sm:$0xff]
        %v4150 = vld [vmem:[%s4130 + $0x98] sm:$0xff]
        %v4151 = vld [vmem:[%s4130 + $0xa0] sm:$0xff]
        %v4152 = vld [vmem:[%s4130 + $0xa8] sm:$0xff]
        %v4153 = vld [vmem:[%s4130 + $0xb0] sm:$0xff]
        %v4154 = vld [vmem:[%s4130 + $0xb8] sm:$0xff]
        %v4155 = vld [vmem:[%s4130 + $0xc0] sm:$0xff]
        %v4156 = vld [vmem:[%s4130 + $0xc8] sm:$0xff]
        %v4157 = vld [vmem:[%s4130 + $0xd0] sm:$0xff]
        %v4158 = vld [vmem:[%s4130 + $0xd8] sm:$0xff]
        %v4159 = vld [vmem:[%s4130 + $0xe0] sm:$0xff]
        %v4160 = vld [vmem:[%s4130 + $0xe8] sm:$0xff]
        %v4161 = vld [vmem:[%s4130 + $0xf0] sm:$0xff]
        %v4162 = vld [vmem:[%s4130 + $0xf8] sm:$0xff]
        %v4163 = vld [vmem:[%s4130 + $0x100] sm:$0xff]
        %v4164 = vld [vmem:[%s4130 + $0x108] sm:$0xff]
        %v4165 = vld [vmem:[%s4130 + $0x110] sm:$0xff]
        %v4166 = vld [vmem:[%s4130 + $0x118] sm:$0xff]
        %v4167 = vld [vmem:[%s4130 + $0x120] sm:$0xff]
        %v4168 = vld [vmem:[%s4130 + $0x128] sm:$0xff]
        %v4169 = vld [vmem:[%s4130 + $0x130] sm:$0xff]
        %v4170 = vld [vmem:[%s4130 + $0x138] sm:$0xff]
        %v4171 = vld [vmem:[%s4130 + $0x140] sm:$0xff]
        %v4172 = vld [vmem:[%s4130 + $0x148] sm:$0xff]
        %v4173 = vld [vmem:[%s4130 + $0x150] sm:$0xff]
        %v4174 = vld [vmem:[%s4130 + $0x158] sm:$0xff]
        %v4175 = vld [vmem:[%s4130 + $0x160] sm:$0xff]
        %v4176 = vld [vmem:[%s4130 + $0x168] sm:$0xff]
        %v4177 = vld [vmem:[%s4130 + $0x170] sm:$0xff]
        %v4178 = vld [vmem:[%s4130 + $0x178] sm:$0xff]
        %4179 = vmatprep.subr.mxu0 %v4132
        %4180 = vmatpush1.msra.mxu0 %v4131
        %4181 = vmatprep.subr.mxu0 %v4135
        %4182 = vmatpush1.msra.mxu0 %v4134
        %4183 = vmatprep.subr.mxu0 %v4138
        %4184 = vmatpush1.msra.mxu0 %v4137
        %4185 = vmatprep.subr.mxu0 %v4141
        %4186 = vmatpush1.msra.mxu0 %v4140
        %4187 = vmatprep.subr.mxu0 %v4144
        %4188 = vmatpush1.msra.mxu0 %v4143
        %4189 = vmatprep.subr.mxu0 %v4147
        %4190 = vmatpush1.msra.mxu0 %v4146
        %4191 = vmatprep.subr.mxu0 %v4150
        %4192 = vmatpush1.msra.mxu0 %v4149
        %4193 = vmatprep.subr.mxu0 %v4153
        %4194 = vmatpush1.msra.mxu0 %v4152
        %4195 = vmatprep.subr.mxu0 %v4156
        %4196 = vmatpush1.msra.mxu0 %v4155
        %4197 = vmatprep.subr.mxu0 %v4159
        %4198 = vmatpush1.msra.mxu0 %v4158
        %4199 = vmatprep.subr.mxu0 %v4162
        %4200 = vmatpush1.msra.mxu0 %v4161
        %4201 = vmatprep.subr.mxu0 %v4165
        %4202 = vmatpush1.msra.mxu0 %v4164
        %4203 = vmatprep.subr.mxu0 %v4168
        %4204 = vmatpush1.msra.mxu0 %v4167
        %4205 = vmatprep.subr.mxu0 %v4171
        %4206 = vmatpush1.msra.mxu0 %v4170
        %4207 = vmatprep.subr.mxu0 %v4174
        %4208 = vmatpush1.msra.mxu0 %v4173
        %4209 = vmatprep.subr.mxu0 %v4177
        %4210 = vmatpush1.msra.mxu0 %v4176
        %4211 = vmatprep.subr.mxu0 0.0
        %4212 = vmatpush1.msra.mxu0 0.0
        %4213 = vmatprep.subr.mxu0 0.0
        %4214 = vmatpush1.msra.mxu0 0.0
        %4215 = vmatprep.subr.mxu0 0.0
        %4216 = vmatpush1.msra.mxu0 0.0
        %4217 = vmatprep.subr.mxu0 0.0
        %4218 = vmatpush1.msra.mxu0 0.0
        %4219 = vmatprep.subr.mxu0 0.0
        %4220 = vmatpush1.msra.mxu0 0.0
        %4221 = vmatprep.subr.mxu0 0.0
        %4222 = vmatpush1.msra.mxu0 0.0
        %4223 = vmatprep.subr.mxu0 0.0
        %4224 = vmatpush1.msra.mxu0 0.0
        %4225 = vmatprep.subr.mxu0 0.0
        %4226 = vmatpush1.msra.mxu0 0.0
        %4227 = vmatprep.subr.mxu0 0.0
        %4228 = vmatpush1.msra.mxu0 0.0
        %4229 = vmatprep.subr.mxu0 0.0
        %4230 = vmatpush1.msra.mxu0 0.0
        %4231 = vmatprep.subr.mxu0 0.0
        %4232 = vmatpush1.msra.mxu0 0.0
        %4233 = vmatprep.subr.mxu0 0.0
        %4234 = vmatpush1.msra.mxu0 0.0
        %4235 = vmatprep.subr.mxu0 0.0
        %4236 = vmatpush1.msra.mxu0 0.0
        %4237 = vmatprep.subr.mxu0 0.0
        %4238 = vmatpush1.msra.mxu0 0.0
        %4239 = vmatprep.subr.mxu0 0.0
        %4240 = vmatpush1.msra.mxu0 0.0
        %4241 = vmatprep.subr.mxu0 0.0
        %4242 = vmatpush1.msra.mxu0 0.0
        %4243 = vmatprep.mubr.f32.mxu0 0.0
        %4244 = vmatmul.mubr.f32.gmra.mrb[0].mxu0 %v4112
        %v4245 = vpop.f32.mrb[0].mxu0
        %v4246 = vadd.f32 0.0, %v4245
        %v4247 = vpop.f32.mrb[0].mxu0
        %v4248 = vadd.f32 0.0, %v4247
        %4249 = vmatprep.mubr.f32.mxu0 0.0
        %4250 = vmatmul.mubr.f32.gmra.mrb[0].mxu0 %v4113
        %v4251 = vpop.f32.mrb[0].mxu0
        %v4252 = vadd.f32 0.0, %v4251
        %v4253 = vpop.f32.mrb[0].mxu0
        %v4254 = vadd.f32 0.0, %v4253
        %4255 = vmatprep.mubr.f32.mxu0 0.0
        %4256 = vmatmul.mubr.f32.gmra.mrb[0].mxu0 %v4114
        %v4257 = vpop.f32.mrb[0].mxu0
        %v4258 = vadd.f32 0.0, %v4257
        %v4259 = vpop.f32.mrb[0].mxu0
        %v4260 = vadd.f32 0.0, %v4259
        %4261 = vmatprep.mubr.f32.mxu0 0.0
        %4262 = vmatmul.mubr.f32.gmra.mrb[0].mxu0 %v4115
        %v4263 = vpop.f32.mrb[0].mxu0
        %v4264 = vadd.f32 0.0, %v4263
        %v4265 = vpop.f32.mrb[0].mxu0
        %v4266 = vadd.f32 0.0, %v4265
        %4267 = vmatprep.mubr.f32.mxu0 0.0
        %4268 = vmatmul.mubr.f32.gmra.mrb[0].mxu0 %v4116
        %v4269 = vpop.f32.mrb[0].mxu0
        %v4270 = vadd.f32 0.0, %v4269
        %v4271 = vpop.f32.mrb[0].mxu0
        %v4272 = vadd.f32 0.0, %v4271
        %4273 = vmatprep.mubr.f32.mxu0 0.0
        %4274 = vmatmul.mubr.f32.gmra.mrb[0].mxu0 %v4117
        %v4275 = vpop.f32.mrb[0].mxu0
        %v4276 = vadd.f32 0.0, %v4275
        %v4277 = vpop.f32.mrb[0].mxu0
        %v4278 = vadd.f32 0.0, %v4277
        %4279 = vmatprep.mubr.f32.mxu0 0.0
        %4280 = vmatmul.mubr.f32.gmra.mrb[0].mxu0 %v4118
        %v4281 = vpop.f32.mrb[0].mxu0
        %v4282 = vadd.f32 0.0, %v4281
        %v4283 = vpop.f32.mrb[0].mxu0
        %v4284 = vadd.f32 0.0, %v4283
        %4285 = vmatprep.mubr.f32.mxu0 0.0
        %4286 = vmatmul.mubr.f32.gmra.mrb[0].mxu0 %v4119
        %v4287 = vpop.f32.mrb[0].mxu0
        %v4288 = vadd.f32 0.0, %v4287
        %v4289 = vpop.f32.mrb[0].mxu0
        %v4290 = vadd.f32 0.0, %v4289
        %4291 = vmatprep.mubr.f32.mxu0 0.0
        %4292 = vmatmul.mubr.f32.gmra.mrb[0].mxu0 %v4120
        %v4293 = vpop.f32.mrb[0].mxu0
        %v4294 = vadd.f32 0.0, %v4293
        %v4295 = vpop.f32.mrb[0].mxu0
        %v4296 = vadd.f32 0.0, %v4295
        %4297 = vmatprep.mubr.f32.mxu0 0.0
        %4298 = vmatmul.mubr.f32.gmra.mrb[0].mxu0 %v4121
        %v4299 = vpop.f32.mrb[0].mxu0
        %v4300 = vadd.f32 0.0, %v4299
        %v4301 = vpop.f32.mrb[0].mxu0
        %v4302 = vadd.f32 0.0, %v4301
        %4303 = vmatprep.mubr.f32.mxu0 0.0
        %4304 = vmatmul.mubr.f32.gmra.mrb[0].mxu0 %v4122
        %v4305 = vpop.f32.mrb[0].mxu0
        %v4306 = vadd.f32 0.0, %v4305
        %v4307 = vpop.f32.mrb[0].mxu0
        %v4308 = vadd.f32 0.0, %v4307
        %4309 = vmatprep.mubr.f32.mxu0 0.0
        %4310 = vmatmul.mubr.f32.gmra.mrb[0].mxu0 %v4123
        %v4311 = vpop.f32.mrb[0].mxu0
        %v4312 = vadd.f32 0.0, %v4311
        %v4313 = vpop.f32.mrb[0].mxu0
        %v4314 = vadd.f32 0.0, %v4313
        %4315 = vmatprep.mubr.f32.mxu0 0.0
        %4316 = vmatmul.mubr.f32.gmra.mrb[0].mxu0 %v4124
        %v4317 = vpop.f32.mrb[0].mxu0
        %v4318 = vadd.f32 0.0, %v4317
        %v4319 = vpop.f32.mrb[0].mxu0
        %v4320 = vadd.f32 0.0, %v4319
        %4321 = vmatprep.mubr.f32.mxu0 0.0
        %4322 = vmatmul.mubr.f32.gmra.mrb[0].mxu0 %v4125
        %v4323 = vpop.f32.mrb[0].mxu0
        %v4324 = vadd.f32 0.0, %v4323
        %v4325 = vpop.f32.mrb[0].mxu0
        %v4326 = vadd.f32 0.0, %v4325
        %4327 = vmatprep.mubr.f32.mxu0 0.0
        %4328 = vmatmul.mubr.f32.gmra.mrb[0].mxu0 %v4126
        %v4329 = vpop.f32.mrb[0].mxu0
        %v4330 = vadd.f32 0.0, %v4329
        %v4331 = vpop.f32.mrb[0].mxu0
        %v4332 = vadd.f32 0.0, %v4331
        %4333 = vmatprep.mubr.f32.mxu0 0.0
        %4334 = vmatmul.mubr.f32.gmra.mrb[0].mxu0 %v4127
        %v4335 = vpop.f32.mrb[0].mxu0
        %v4336 = vadd.f32 0.0, %v4335
        %v4337 = vpop.f32.mrb[0].mxu0
        %v4338 = vadd.f32 0.0, %v4337
        %4339 = vmatprep.mubr.f32.mxu0 0.0
        %4340 = vmatmul.mubr.f32.gmra.mrb[0].mxu0 %v4128
        %v4341 = vpop.f32.mrb[0].mxu0
        %v4342 = vadd.f32 0.0, %v4341
        %v4343 = vpop.f32.mrb[0].mxu0
        %v4344 = vadd.f32 0.0, %v4343
        %4345 = vmatprep.mubr.f32.mxu0 0.0
        %4346 = vmatmul.mubr.f32.gmra.mrb[0].mxu0 %v4129
        %v4347 = vpop.f32.mrb[0].mxu0
        %v4348 = vadd.f32 0.0, %v4347
        %v4349 = vpop.f32.mrb[0].mxu0
        %v4350 = vadd.f32 0.0, %v4349
        %4351 = vdwg.mxu0
        %4352 = vmatprep.subr.mxu0 0.0
        %4353 = vmatpush1.msra.mxu0 %v4133
        %4354 = vmatprep.subr.mxu0 0.0
        %4355 = vmatpush1.msra.mxu0 %v4136
        %4356 = vmatprep.subr.mxu0 0.0
        %4357 = vmatpush1.msra.mxu0 %v4139
        %4358 = vmatprep.subr.mxu0 0.0
        %4359 = vmatpush1.msra.mxu0 %v4142
        %4360 = vmatprep.subr.mxu0 0.0
        %4361 = vmatpush1.msra.mxu0 %v4145
        %4362 = vmatprep.subr.mxu0 0.0
        %4363 = vmatpush1.msra.mxu0 %v4148
        %4364 = vmatprep.subr.mxu0 0.0
        %4365 = vmatpush1.msra.mxu0 %v4151
        %4366 = vmatprep.subr.mxu0 0.0
        %4367 = vmatpush1.msra.mxu0 %v4154
        %4368 = vmatprep.subr.mxu0 0.0
        %4369 = vmatpush1.msra.mxu0 %v4157
        %4370 = vmatprep.subr.mxu0 0.0
        %4371 = vmatpush1.msra.mxu0 %v4160
        %4372 = vmatprep.subr.mxu0 0.0
        %4373 = vmatpush1.msra.mxu0 %v4163
        %4374 = vmatprep.subr.mxu0 0.0
        %4375 = vmatpush1.msra.mxu0 %v4166
        %4376 = vmatprep.subr.mxu0 0.0
        %4377 = vmatpush1.msra.mxu0 %v4169
        %4378 = vmatprep.subr.mxu0 0.0
        %4379 = vmatpush1.msra.mxu0 %v4172
        %4380 = vmatprep.subr.mxu0 0.0
        %4381 = vmatpush1.msra.mxu0 %v4175
        %4382 = vmatprep.subr.mxu0 0.0
        %4383 = vmatpush1.msra.mxu0 %v4178
        %4384 = vmatprep.subr.mxu0 0.0
        %4385 = vmatpush1.msra.mxu0 0.0
        %4386 = vmatprep.subr.mxu0 0.0
        %4387 = vmatpush1.msra.mxu0 0.0
        %4388 = vmatprep.subr.mxu0 0.0
        %4389 = vmatpush1.msra.mxu0 0.0
        %4390 = vmatprep.subr.mxu0 0.0
        %4391 = vmatpush1.msra.mxu0 0.0
        %4392 = vmatprep.subr.mxu0 0.0
        %4393 = vmatpush1.msra.mxu0 0.0
        %4394 = vmatprep.subr.mxu0 0.0
        %4395 = vmatpush1.msra.mxu0 0.0
        %4396 = vmatprep.subr.mxu0 0.0
        %4397 = vmatpush1.msra.mxu0 0.0
        %4398 = vmatprep.subr.mxu0 0.0
        %4399 = vmatpush1.msra.mxu0 0.0
        %4400 = vmatprep.subr.mxu0 0.0
        %4401 = vmatpush1.msra.mxu0 0.0
        %4402 = vmatprep.subr.mxu0 0.0
        %4403 = vmatpush1.msra.mxu0 0.0
        %4404 = vmatprep.subr.mxu0 0.0
        %4405 = vmatpush1.msra.mxu0 0.0
        %4406 = vmatprep.subr.mxu0 0.0
        %4407 = vmatpush1.msra.mxu0 0.0
        %4408 = vmatprep.subr.mxu0 0.0
        %4409 = vmatpush1.msra.mxu0 0.0
        %4410 = vmatprep.subr.mxu0 0.0
        %4411 = vmatpush1.msra.mxu0 0.0
        %4412 = vmatprep.subr.mxu0 0.0
        %4413 = vmatpush1.msra.mxu0 0.0
        %4414 = vmatprep.subr.mxu0 0.0
        %4415 = vmatpush1.msra.mxu0 0.0
        %4416 = vmatprep.mubr.f32.mxu0 0.0
        %4417 = vmatmul.mubr.f32.gmra.mrb[0].mxu0 %v4112
        %v4418 = vpop.f32.mrb[0].mxu0
        %v4419 = vadd.f32 0.0, %v4418
        %v4420 = vpop.f32.mrb[0].mxu0
        %4421 = vmatprep.mubr.f32.mxu0 0.0
        %4422 = vmatmul.mubr.f32.gmra.mrb[0].mxu0 %v4113
        %v4423 = vpop.f32.mrb[0].mxu0
        %v4424 = vadd.f32 0.0, %v4423
        %v4425 = vpop.f32.mrb[0].mxu0
        %4426 = vmatprep.mubr.f32.mxu0 0.0
        %4427 = vmatmul.mubr.f32.gmra.mrb[0].mxu0 %v4114
        %v4428 = vpop.f32.mrb[0].mxu0
        %v4429 = vadd.f32 0.0, %v4428
        %v4430 = vpop.f32.mrb[0].mxu0
        %4431 = vmatprep.mubr.f32.mxu0 0.0
        %4432 = vmatmul.mubr.f32.gmra.mrb[0].mxu0 %v4115
        %v4433 = vpop.f32.mrb[0].mxu0
        %v4434 = vadd.f32 0.0, %v4433
        %v4435 = vpop.f32.mrb[0].mxu0
        %4436 = vmatprep.mubr.f32.mxu0 0.0
        %4437 = vmatmul.mubr.f32.gmra.mrb[0].mxu0 %v4116
        %v4438 = vpop.f32.mrb[0].mxu0
        %v4439 = vadd.f32 0.0, %v4438
        %v4440 = vpop.f32.mrb[0].mxu0
        %4441 = vmatprep.mubr.f32.mxu0 0.0
        %4442 = vmatmul.mubr.f32.gmra.mrb[0].mxu0 %v4117
        %v4443 = vpop.f32.mrb[0].mxu0
        %v4444 = vadd.f32 0.0, %v4443
        %v4445 = vpop.f32.mrb[0].mxu0
        %4446 = vmatprep.mubr.f32.mxu0 0.0
        %4447 = vmatmul.mubr.f32.gmra.mrb[0].mxu0 %v4118
        %v4448 = vpop.f32.mrb[0].mxu0
        %v4449 = vadd.f32 0.0, %v4448
        %v4450 = vpop.f32.mrb[0].mxu0
        %4451 = vmatprep.mubr.f32.mxu0 0.0
        %4452 = vmatmul.mubr.f32.gmra.mrb[0].mxu0 %v4119
        %v4453 = vpop.f32.mrb[0].mxu0
        %v4454 = vadd.f32 0.0, %v4453
        %v4455 = vpop.f32.mrb[0].mxu0
        %4456 = vmatprep.mubr.f32.mxu0 0.0
        %4457 = vmatmul.mubr.f32.gmra.mrb[0].mxu0 %v4120
        %v4458 = vpop.f32.mrb[0].mxu0
        %v4459 = vadd.f32 0.0, %v4458
        %v4460 = vpop.f32.mrb[0].mxu0
        %4461 = vmatprep.mubr.f32.mxu0 0.0
        %4462 = vmatmul.mubr.f32.gmra.mrb[0].mxu0 %v4121
        %v4463 = vpop.f32.mrb[0].mxu0
        %v4464 = vadd.f32 0.0, %v4463
        %v4465 = vpop.f32.mrb[0].mxu0
        %4466 = vmatprep.mubr.f32.mxu0 0.0
        %4467 = vmatmul.mubr.f32.gmra.mrb[0].mxu0 %v4122
        %v4468 = vpop.f32.mrb[0].mxu0
        %v4469 = vadd.f32 0.0, %v4468
        %v4470 = vpop.f32.mrb[0].mxu0
        %4471 = vmatprep.mubr.f32.mxu0 0.0
        %4472 = vmatmul.mubr.f32.gmra.mrb[0].mxu0 %v4123
        %v4473 = vpop.f32.mrb[0].mxu0
        %v4474 = vadd.f32 0.0, %v4473
        %v4475 = vpop.f32.mrb[0].mxu0
        %4476 = vmatprep.mubr.f32.mxu0 0.0
        %4477 = vmatmul.mubr.f32.gmra.mrb[0].mxu0 %v4124
        %v4478 = vpop.f32.mrb[0].mxu0
        %v4479 = vadd.f32 0.0, %v4478
        %v4480 = vpop.f32.mrb[0].mxu0
        %4481 = vmatprep.mubr.f32.mxu0 0.0
        %4482 = vmatmul.mubr.f32.gmra.mrb[0].mxu0 %v4125
        %v4483 = vpop.f32.mrb[0].mxu0
        %v4484 = vadd.f32 0.0, %v4483
        %v4485 = vpop.f32.mrb[0].mxu0
        %4486 = vmatprep.mubr.f32.mxu0 0.0
        %4487 = vmatmul.mubr.f32.gmra.mrb[0].mxu0 %v4126
        %v4488 = vpop.f32.mrb[0].mxu0
        %v4489 = vadd.f32 0.0, %v4488
        %v4490 = vpop.f32.mrb[0].mxu0
        %4491 = vmatprep.mubr.f32.mxu0 0.0
        %4492 = vmatmul.mubr.f32.gmra.mrb[0].mxu0 %v4127
        %v4493 = vpop.f32.mrb[0].mxu0
        %v4494 = vadd.f32 0.0, %v4493
        %v4495 = vpop.f32.mrb[0].mxu0
        %4496 = vmatprep.mubr.f32.mxu0 0.0
        %4497 = vmatmul.mubr.f32.gmra.mrb[0].mxu0 %v4128
        %v4498 = vpop.f32.mrb[0].mxu0
        %v4499 = vadd.f32 0.0, %v4498
        %v4500 = vpop.f32.mrb[0].mxu0
        %4501 = vmatprep.mubr.f32.mxu0 0.0
        %4502 = vmatmul.mubr.f32.gmra.mrb[0].mxu0 %v4129
        %v4503 = vpop.f32.mrb[0].mxu0
        %v4504 = vadd.f32 0.0, %v4503
        %v4505 = vpop.f32.mrb[0].mxu0
        %4506 = vdwg.mxu0
        %v4507 = vadd.f32 %v3851, %v4246
        %v4508 = vadd.f32 %v3853, %v4248
        %v4509 = vadd.f32 %v4024, %v4419
        %v4510 = vadd.f32 %v3857, %v4252
        %v4511 = vadd.f32 %v3859, %v4254
        %v4512 = vadd.f32 %v4029, %v4424
        %v4513 = vadd.f32 %v3863, %v4258
        %v4514 = vadd.f32 %v3865, %v4260
        %v4515 = vadd.f32 %v4034, %v4429
        %v4516 = vadd.f32 %v3869, %v4264
        %v4517 = vadd.f32 %v3871, %v4266
        %v4518 = vadd.f32 %v4039, %v4434
        %v4519 = vadd.f32 %v3875, %v4270
        %v4520 = vadd.f32 %v3877, %v4272
        %v4521 = vadd.f32 %v4044, %v4439
        %v4522 = vadd.f32 %v3881, %v4276
        %v4523 = vadd.f32 %v3883, %v4278
        %v4524 = vadd.f32 %v4049, %v4444
        %v4525 = vadd.f32 %v3887, %v4282
        %v4526 = vadd.f32 %v3889, %v4284
        %v4527 = vadd.f32 %v4054, %v4449
        %v4528 = vadd.f32 %v3893, %v4288
        %v4529 = vadd.f32 %v3895, %v4290
        %v4530 = vadd.f32 %v4059, %v4454
        %v4531 = vadd.f32 %v3899, %v4294
        %v4532 = vadd.f32 %v3901, %v4296
        %v4533 = vadd.f32 %v4064, %v4459
        %v4534 = vadd.f32 %v3905, %v4300
        %v4535 = vadd.f32 %v3907, %v4302
        %v4536 = vadd.f32 %v4069, %v4464
        %v4537 = vadd.f32 %v3911, %v4306
        %v4538 = vadd.f32 %v3913, %v4308
        %v4539 = vadd.f32 %v4074, %v4469
        %v4540 = vadd.f32 %v3917, %v4312
        %v4541 = vadd.f32 %v3919, %v4314
        %v4542 = vadd.f32 %v4079, %v4474
        %v4543 = vadd.f32 %v3923, %v4318
        %v4544 = vadd.f32 %v3925, %v4320
        %v4545 = vadd.f32 %v4084, %v4479
        %v4546 = vadd.f32 %v3929, %v4324
        %v4547 = vadd.f32 %v3931, %v4326
        %v4548 = vadd.f32 %v4089, %v4484
        %v4549 = vadd.f32 %v3935, %v4330
        %v4550 = vadd.f32 %v3937, %v4332
        %v4551 = vadd.f32 %v4094, %v4489
        %v4552 = vadd.f32 %v3941, %v4336
        %v4553 = vadd.f32 %v3943, %v4338
        %v4554 = vadd.f32 %v4099, %v4494
        %v4555 = vadd.f32 %v3947, %v4342
        %v4556 = vadd.f32 %v3949, %v4344
        %v4557 = vadd.f32 %v4104, %v4499
        %v4558 = vadd.f32 %v3953, %v4348
        %v4559 = vadd.f32 %v3955, %v4350
        %v4560 = vadd.f32 %v4109, %v4504
        %v4561 = vld [vmem:[#allocation3 + $0x12] sm:$0xff]
        %v4562 = vld [vmem:[#allocation3 + $0x1a] sm:$0xff]
        %v4563 = vld [vmem:[#allocation3 + $0x22] sm:$0xff]
        %v4564 = vld [vmem:[#allocation3 + $0x2a] sm:$0xff]
        %v4565 = vld [vmem:[#allocation3 + $0x32] sm:$0xff]
        %v4566 = vld [vmem:[#allocation3 + $0x3a] sm:$0xff]
        %v4567 = vld [vmem:[#allocation3 + $0x42] sm:$0xff]
        %v4568 = vld [vmem:[#allocation3 + $0x4a] sm:$0xff]
        %v4569 = vld [vmem:[#allocation3 + $0x52] sm:$0xff]
        %v4570 = vld [vmem:[#allocation3 + $0x5a] sm:$0xff]
        %v4571 = vld [vmem:[#allocation3 + $0x62] sm:$0xff]
        %v4572 = vld [vmem:[#allocation3 + $0x6a] sm:$0xff]
        %v4573 = vld [vmem:[#allocation3 + $0x72] sm:$0xff]
        %v4574 = vld [vmem:[#allocation3 + $0x7a] sm:$0xff]
        %v4575 = vld [vmem:[#allocation3 + $0x82] sm:$0xff]
        %v4576 = vld [vmem:[#allocation3 + $0x8a] sm:$0xff]
        %v4577 = vld [vmem:[#allocation3 + $0x92] sm:$0xff]
        %v4578 = vld [vmem:[#allocation3 + $0x9a] sm:$0xff]
        %s4579 = scalar_lea.vmem [#allocation13], 1152
        %v4580 = vld [vmem:[%s4579] sm:$0xff]
        %v4581 = vld [vmem:[%s4579 + $0x8] sm:$0xff]
        %v4582 = vld [vmem:[%s4579 + $0x10] sm:$0xff]
        %v4583 = vld [vmem:[%s4579 + $0x18] sm:$0xff]
        %v4584 = vld [vmem:[%s4579 + $0x20] sm:$0xff]
        %v4585 = vld [vmem:[%s4579 + $0x28] sm:$0xff]
        %v4586 = vld [vmem:[%s4579 + $0x30] sm:$0xff]
        %v4587 = vld [vmem:[%s4579 + $0x38] sm:$0xff]
        %v4588 = vld [vmem:[%s4579 + $0x40] sm:$0xff]
        %v4589 = vld [vmem:[%s4579 + $0x48] sm:$0xff]
        %v4590 = vld [vmem:[%s4579 + $0x50] sm:$0xff]
        %v4591 = vld [vmem:[%s4579 + $0x58] sm:$0xff]
        %v4592 = vld [vmem:[%s4579 + $0x60] sm:$0xff]
        %v4593 = vld [vmem:[%s4579 + $0x68] sm:$0xff]
        %v4594 = vld [vmem:[%s4579 + $0x70] sm:$0xff]
        %v4595 = vld [vmem:[%s4579 + $0x78] sm:$0xff]
        %v4596 = vld [vmem:[%s4579 + $0x80] sm:$0xff]
        %v4597 = vld [vmem:[%s4579 + $0x88] sm:$0xff]
        %v4598 = vld [vmem:[%s4579 + $0x90] sm:$0xff]
        %v4599 = vld [vmem:[%s4579 + $0x98] sm:$0xff]
        %v4600 = vld [vmem:[%s4579 + $0xa0] sm:$0xff]
        %v4601 = vld [vmem:[%s4579 + $0xa8] sm:$0xff]
        %v4602 = vld [vmem:[%s4579 + $0xb0] sm:$0xff]
        %v4603 = vld [vmem:[%s4579 + $0xb8] sm:$0xff]
        %v4604 = vld [vmem:[%s4579 + $0xc0] sm:$0xff]
        %v4605 = vld [vmem:[%s4579 + $0xc8] sm:$0xff]
        %v4606 = vld [vmem:[%s4579 + $0xd0] sm:$0xff]
        %v4607 = vld [vmem:[%s4579 + $0xd8] sm:$0xff]
        %v4608 = vld [vmem:[%s4579 + $0xe0] sm:$0xff]
        %v4609 = vld [vmem:[%s4579 + $0xe8] sm:$0xff]
        %v4610 = vld [vmem:[%s4579 + $0xf0] sm:$0xff]
        %v4611 = vld [vmem:[%s4579 + $0xf8] sm:$0xff]
        %v4612 = vld [vmem:[%s4579 + $0x100] sm:$0xff]
        %v4613 = vld [vmem:[%s4579 + $0x108] sm:$0xff]
        %v4614 = vld [vmem:[%s4579 + $0x110] sm:$0xff]
        %v4615 = vld [vmem:[%s4579 + $0x118] sm:$0xff]
        %v4616 = vld [vmem:[%s4579 + $0x120] sm:$0xff]
        %v4617 = vld [vmem:[%s4579 + $0x128] sm:$0xff]
        %v4618 = vld [vmem:[%s4579 + $0x130] sm:$0xff]
        %v4619 = vld [vmem:[%s4579 + $0x138] sm:$0xff]
        %v4620 = vld [vmem:[%s4579 + $0x140] sm:$0xff]
        %v4621 = vld [vmem:[%s4579 + $0x148] sm:$0xff]
        %v4622 = vld [vmem:[%s4579 + $0x150] sm:$0xff]
        %v4623 = vld [vmem:[%s4579 + $0x158] sm:$0xff]
        %v4624 = vld [vmem:[%s4579 + $0x160] sm:$0xff]
        %v4625 = vld [vmem:[%s4579 + $0x168] sm:$0xff]
        %v4626 = vld [vmem:[%s4579 + $0x170] sm:$0xff]
        %v4627 = vld [vmem:[%s4579 + $0x178] sm:$0xff]
        %4628 = vmatprep.subr.mxu0 %v4581
        %4629 = vmatpush1.msra.mxu0 %v4580
        %4630 = vmatprep.subr.mxu0 %v4584
        %4631 = vmatpush1.msra.mxu0 %v4583
        %4632 = vmatprep.subr.mxu0 %v4587
        %4633 = vmatpush1.msra.mxu0 %v4586
        %4634 = vmatprep.subr.mxu0 %v4590
        %4635 = vmatpush1.msra.mxu0 %v4589
        %4636 = vmatprep.subr.mxu0 %v4593
        %4637 = vmatpush1.msra.mxu0 %v4592
        %4638 = vmatprep.subr.mxu0 %v4596
        %4639 = vmatpush1.msra.mxu0 %v4595
        %4640 = vmatprep.subr.mxu0 %v4599
        %4641 = vmatpush1.msra.mxu0 %v4598
        %4642 = vmatprep.subr.mxu0 %v4602
        %4643 = vmatpush1.msra.mxu0 %v4601
        %4644 = vmatprep.subr.mxu0 %v4605
        %4645 = vmatpush1.msra.mxu0 %v4604
        %4646 = vmatprep.subr.mxu0 %v4608
        %4647 = vmatpush1.msra.mxu0 %v4607
        %4648 = vmatprep.subr.mxu0 %v4611
        %4649 = vmatpush1.msra.mxu0 %v4610
        %4650 = vmatprep.subr.mxu0 %v4614
        %4651 = vmatpush1.msra.mxu0 %v4613
        %4652 = vmatprep.subr.mxu0 %v4617
        %4653 = vmatpush1.msra.mxu0 %v4616
        %4654 = vmatprep.subr.mxu0 %v4620
        %4655 = vmatpush1.msra.mxu0 %v4619
        %4656 = vmatprep.subr.mxu0 %v4623
        %4657 = vmatpush1.msra.mxu0 %v4622
        %4658 = vmatprep.subr.mxu0 %v4626
        %4659 = vmatpush1.msra.mxu0 %v4625
        %4660 = vmatprep.subr.mxu0 0.0
        %4661 = vmatpush1.msra.mxu0 0.0
        %4662 = vmatprep.subr.mxu0 0.0
        %4663 = vmatpush1.msra.mxu0 0.0
        %4664 = vmatprep.subr.mxu0 0.0
        %4665 = vmatpush1.msra.mxu0 0.0
        %4666 = vmatprep.subr.mxu0 0.0
        %4667 = vmatpush1.msra.mxu0 0.0
        %4668 = vmatprep.subr.mxu0 0.0
        %4669 = vmatpush1.msra.mxu0 0.0
        %4670 = vmatprep.subr.mxu0 0.0
        %4671 = vmatpush1.msra.mxu0 0.0
        %4672 = vmatprep.subr.mxu0 0.0
        %4673 = vmatpush1.msra.mxu0 0.0
        %4674 = vmatprep.subr.mxu0 0.0
        %4675 = vmatpush1.msra.mxu0 0.0
        %4676 = vmatprep.subr.mxu0 0.0
        %4677 = vmatpush1.msra.mxu0 0.0
        %4678 = vmatprep.subr.mxu0 0.0
        %4679 = vmatpush1.msra.mxu0 0.0
        %4680 = vmatprep.subr.mxu0 0.0
        %4681 = vmatpush1.msra.mxu0 0.0
        %4682 = vmatprep.subr.mxu0 0.0
        %4683 = vmatpush1.msra.mxu0 0.0
        %4684 = vmatprep.subr.mxu0 0.0
        %4685 = vmatpush1.msra.mxu0 0.0
        %4686 = vmatprep.subr.mxu0 0.0
        %4687 = vmatpush1.msra.mxu0 0.0
        %4688 = vmatprep.subr.mxu0 0.0
        %4689 = vmatpush1.msra.mxu0 0.0
        %4690 = vmatprep.subr.mxu0 0.0
        %4691 = vmatpush1.msra.mxu0 0.0
        %4692 = vmatprep.mubr.f32.mxu0 0.0
        %4693 = vmatmul.mubr.f32.gmra.mrb[0].mxu0 %v4561
        %v4694 = vpop.f32.mrb[0].mxu0
        %v4695 = vadd.f32 0.0, %v4694
        %v4696 = vpop.f32.mrb[0].mxu0
        %v4697 = vadd.f32 0.0, %v4696
        %4698 = vmatprep.mubr.f32.mxu0 0.0
        %4699 = vmatmul.mubr.f32.gmra.mrb[0].mxu0 %v4562
        %v4700 = vpop.f32.mrb[0].mxu0
        %v4701 = vadd.f32 0.0, %v4700
        %v4702 = vpop.f32.mrb[0].mxu0
        %v4703 = vadd.f32 0.0, %v4702
        %4704 = vmatprep.mubr.f32.mxu0 0.0
        %4705 = vmatmul.mubr.f32.gmra.mrb[0].mxu0 %v4563
        %v4706 = vpop.f32.mrb[0].mxu0
        %v4707 = vadd.f32 0.0, %v4706
        %v4708 = vpop.f32.mrb[0].mxu0
        %v4709 = vadd.f32 0.0, %v4708
        %4710 = vmatprep.mubr.f32.mxu0 0.0
        %4711 = vmatmul.mubr.f32.gmra.mrb[0].mxu0 %v4564
        %v4712 = vpop.f32.mrb[0].mxu0
        %v4713 = vadd.f32 0.0, %v4712
        %v4714 = vpop.f32.mrb[0].mxu0
        %v4715 = vadd.f32 0.0, %v4714
        %4716 = vmatprep.mubr.f32.mxu0 0.0
        %4717 = vmatmul.mubr.f32.gmra.mrb[0].mxu0 %v4565
        %v4718 = vpop.f32.mrb[0].mxu0
        %v4719 = vadd.f32 0.0, %v4718
        %v4720 = vpop.f32.mrb[0].mxu0
        %v4721 = vadd.f32 0.0, %v4720
        %4722 = vmatprep.mubr.f32.mxu0 0.0
        %4723 = vmatmul.mubr.f32.gmra.mrb[0].mxu0 %v4566
        %v4724 = vpop.f32.mrb[0].mxu0
        %v4725 = vadd.f32 0.0, %v4724
        %v4726 = vpop.f32.mrb[0].mxu0
        %v4727 = vadd.f32 0.0, %v4726
        %4728 = vmatprep.mubr.f32.mxu0 0.0
        %4729 = vmatmul.mubr.f32.gmra.mrb[0].mxu0 %v4567
        %v4730 = vpop.f32.mrb[0].mxu0
        %v4731 = vadd.f32 0.0, %v4730
        %v4732 = vpop.f32.mrb[0].mxu0
        %v4733 = vadd.f32 0.0, %v4732
        %4734 = vmatprep.mubr.f32.mxu0 0.0
        %4735 = vmatmul.mubr.f32.gmra.mrb[0].mxu0 %v4568
        %v4736 = vpop.f32.mrb[0].mxu0
        %v4737 = vadd.f32 0.0, %v4736
        %v4738 = vpop.f32.mrb[0].mxu0
        %v4739 = vadd.f32 0.0, %v4738
        %4740 = vmatprep.mubr.f32.mxu0 0.0
        %4741 = vmatmul.mubr.f32.gmra.mrb[0].mxu0 %v4569
        %v4742 = vpop.f32.mrb[0].mxu0
        %v4743 = vadd.f32 0.0, %v4742
        %v4744 = vpop.f32.mrb[0].mxu0
        %v4745 = vadd.f32 0.0, %v4744
        %4746 = vmatprep.mubr.f32.mxu0 0.0
        %4747 = vmatmul.mubr.f32.gmra.mrb[0].mxu0 %v4570
        %v4748 = vpop.f32.mrb[0].mxu0
        %v4749 = vadd.f32 0.0, %v4748
        %v4750 = vpop.f32.mrb[0].mxu0
        %v4751 = vadd.f32 0.0, %v4750
        %4752 = vmatprep.mubr.f32.mxu0 0.0
        %4753 = vmatmul.mubr.f32.gmra.mrb[0].mxu0 %v4571
        %v4754 = vpop.f32.mrb[0].mxu0
        %v4755 = vadd.f32 0.0, %v4754
        %v4756 = vpop.f32.mrb[0].mxu0
        %v4757 = vadd.f32 0.0, %v4756
        %4758 = vmatprep.mubr.f32.mxu0 0.0
        %4759 = vmatmul.mubr.f32.gmra.mrb[0].mxu0 %v4572
        %v4760 = vpop.f32.mrb[0].mxu0
        %v4761 = vadd.f32 0.0, %v4760
        %v4762 = vpop.f32.mrb[0].mxu0
        %v4763 = vadd.f32 0.0, %v4762
        %4764 = vmatprep.mubr.f32.mxu0 0.0
        %4765 = vmatmul.mubr.f32.gmra.mrb[0].mxu0 %v4573
        %v4766 = vpop.f32.mrb[0].mxu0
        %v4767 = vadd.f32 0.0, %v4766
        %v4768 = vpop.f32.mrb[0].mxu0
        %v4769 = vadd.f32 0.0, %v4768
        %4770 = vmatprep.mubr.f32.mxu0 0.0
        %4771 = vmatmul.mubr.f32.gmra.mrb[0].mxu0 %v4574
        %v4772 = vpop.f32.mrb[0].mxu0
        %v4773 = vadd.f32 0.0, %v4772
        %v4774 = vpop.f32.mrb[0].mxu0
        %v4775 = vadd.f32 0.0, %v4774
        %4776 = vmatprep.mubr.f32.mxu0 0.0
        %4777 = vmatmul.mubr.f32.gmra.mrb[0].mxu0 %v4575
        %v4778 = vpop.f32.mrb[0].mxu0
        %v4779 = vadd.f32 0.0, %v4778
        %v4780 = vpop.f32.mrb[0].mxu0
        %v4781 = vadd.f32 0.0, %v4780
        %4782 = vmatprep.mubr.f32.mxu0 0.0
        %4783 = vmatmul.mubr.f32.gmra.mrb[0].mxu0 %v4576
        %v4784 = vpop.f32.mrb[0].mxu0
        %v4785 = vadd.f32 0.0, %v4784
        %v4786 = vpop.f32.mrb[0].mxu0
        %v4787 = vadd.f32 0.0, %v4786
        %4788 = vmatprep.mubr.f32.mxu0 0.0
        %4789 = vmatmul.mubr.f32.gmra.mrb[0].mxu0 %v4577
        %v4790 = vpop.f32.mrb[0].mxu0
        %v4791 = vadd.f32 0.0, %v4790
        %v4792 = vpop.f32.mrb[0].mxu0
        %v4793 = vadd.f32 0.0, %v4792
        %4794 = vmatprep.mubr.f32.mxu0 0.0
        %4795 = vmatmul.mubr.f32.gmra.mrb[0].mxu0 %v4578
        %v4796 = vpop.f32.mrb[0].mxu0
        %v4797 = vadd.f32 0.0, %v4796
        %v4798 = vpop.f32.mrb[0].mxu0
        %v4799 = vadd.f32 0.0, %v4798
        %4800 = vdwg.mxu0
        %4801 = vmatprep.subr.mxu0 0.0
        %4802 = vmatpush1.msra.mxu0 %v4582
        %4803 = vmatprep.subr.mxu0 0.0
        %4804 = vmatpush1.msra.mxu0 %v4585
        %4805 = vmatprep.subr.mxu0 0.0
        %4806 = vmatpush1.msra.mxu0 %v4588
        %4807 = vmatprep.subr.mxu0 0.0
        %4808 = vmatpush1.msra.mxu0 %v4591
        %4809 = vmatprep.subr.mxu0 0.0
        %4810 = vmatpush1.msra.mxu0 %v4594
        %4811 = vmatprep.subr.mxu0 0.0
        %4812 = vmatpush1.msra.mxu0 %v4597
        %4813 = vmatprep.subr.mxu0 0.0
        %4814 = vmatpush1.msra.mxu0 %v4600
        %4815 = vmatprep.subr.mxu0 0.0
        %4816 = vmatpush1.msra.mxu0 %v4603
        %4817 = vmatprep.subr.mxu0 0.0
        %4818 = vmatpush1.msra.mxu0 %v4606
        %4819 = vmatprep.subr.mxu0 0.0
        %4820 = vmatpush1.msra.mxu0 %v4609
        %4821 = vmatprep.subr.mxu0 0.0
        %4822 = vmatpush1.msra.mxu0 %v4612
        %4823 = vmatprep.subr.mxu0 0.0
        %4824 = vmatpush1.msra.mxu0 %v4615
        %4825 = vmatprep.subr.mxu0 0.0
        %4826 = vmatpush1.msra.mxu0 %v4618
        %4827 = vmatprep.subr.mxu0 0.0
        %4828 = vmatpush1.msra.mxu0 %v4621
        %4829 = vmatprep.subr.mxu0 0.0
        %4830 = vmatpush1.msra.mxu0 %v4624
        %4831 = vmatprep.subr.mxu0 0.0
        %4832 = vmatpush1.msra.mxu0 %v4627
        %4833 = vmatprep.subr.mxu0 0.0
        %4834 = vmatpush1.msra.mxu0 0.0
        %4835 = vmatprep.subr.mxu0 0.0
        %4836 = vmatpush1.msra.mxu0 0.0
        %4837 = vmatprep.subr.mxu0 0.0
        %4838 = vmatpush1.msra.mxu0 0.0
        %4839 = vmatprep.subr.mxu0 0.0
        %4840 = vmatpush1.msra.mxu0 0.0
        %4841 = vmatprep.subr.mxu0 0.0
        %4842 = vmatpush1.msra.mxu0 0.0
        %4843 = vmatprep.subr.mxu0 0.0
        %4844 = vmatpush1.msra.mxu0 0.0
        %4845 = vmatprep.subr.mxu0 0.0
        %4846 = vmatpush1.msra.mxu0 0.0
        %4847 = vmatprep.subr.mxu0 0.0
        %4848 = vmatpush1.msra.mxu0 0.0
        %4849 = vmatprep.subr.mxu0 0.0
        %4850 = vmatpush1.msra.mxu0 0.0
        %4851 = vmatprep.subr.mxu0 0.0
        %4852 = vmatpush1.msra.mxu0 0.0
        %4853 = vmatprep.subr.mxu0 0.0
        %4854 = vmatpush1.msra.mxu0 0.0
        %4855 = vmatprep.subr.mxu0 0.0
        %4856 = vmatpush1.msra.mxu0 0.0
        %4857 = vmatprep.subr.mxu0 0.0
        %4858 = vmatpush1.msra.mxu0 0.0
        %4859 = vmatprep.subr.mxu0 0.0
        %4860 = vmatpush1.msra.mxu0 0.0
        %4861 = vmatprep.subr.mxu0 0.0
        %4862 = vmatpush1.msra.mxu0 0.0
        %4863 = vmatprep.subr.mxu0 0.0
        %4864 = vmatpush1.msra.mxu0 0.0
        %4865 = vmatprep.mubr.f32.mxu0 0.0
        %4866 = vmatmul.mubr.f32.gmra.mrb[0].mxu0 %v4561
        %v4867 = vpop.f32.mrb[0].mxu0
        %v4868 = vadd.f32 0.0, %v4867
        %v4869 = vpop.f32.mrb[0].mxu0
        %4870 = vmatprep.mubr.f32.mxu0 0.0
        %4871 = vmatmul.mubr.f32.gmra.mrb[0].mxu0 %v4562
        %v4872 = vpop.f32.mrb[0].mxu0
        %v4873 = vadd.f32 0.0, %v4872
        %v4874 = vpop.f32.mrb[0].mxu0
        %4875 = vmatprep.mubr.f32.mxu0 0.0
        %4876 = vmatmul.mubr.f32.gmra.mrb[0].mxu0 %v4563
        %v4877 = vpop.f32.mrb[0].mxu0
        %v4878 = vadd.f32 0.0, %v4877
        %v4879 = vpop.f32.mrb[0].mxu0
        %4880 = vmatprep.mubr.f32.mxu0 0.0
        %4881 = vmatmul.mubr.f32.gmra.mrb[0].mxu0 %v4564
        %v4882 = vpop.f32.mrb[0].mxu0
        %v4883 = vadd.f32 0.0, %v4882
        %v4884 = vpop.f32.mrb[0].mxu0
        %4885 = vmatprep.mubr.f32.mxu0 0.0
        %4886 = vmatmul.mubr.f32.gmra.mrb[0].mxu0 %v4565
        %v4887 = vpop.f32.mrb[0].mxu0
        %v4888 = vadd.f32 0.0, %v4887
        %v4889 = vpop.f32.mrb[0].mxu0
        %4890 = vmatprep.mubr.f32.mxu0 0.0
        %4891 = vmatmul.mubr.f32.gmra.mrb[0].mxu0 %v4566
        %v4892 = vpop.f32.mrb[0].mxu0
        %v4893 = vadd.f32 0.0, %v4892
        %v4894 = vpop.f32.mrb[0].mxu0
        %4895 = vmatprep.mubr.f32.mxu0 0.0
        %4896 = vmatmul.mubr.f32.gmra.mrb[0].mxu0 %v4567
        %v4897 = vpop.f32.mrb[0].mxu0
        %v4898 = vadd.f32 0.0, %v4897
        %v4899 = vpop.f32.mrb[0].mxu0
        %4900 = vmatprep.mubr.f32.mxu0 0.0
        %4901 = vmatmul.mubr.f32.gmra.mrb[0].mxu0 %v4568
        %v4902 = vpop.f32.mrb[0].mxu0
        %v4903 = vadd.f32 0.0, %v4902
        %v4904 = vpop.f32.mrb[0].mxu0
        %4905 = vmatprep.mubr.f32.mxu0 0.0
        %4906 = vmatmul.mubr.f32.gmra.mrb[0].mxu0 %v4569
        %v4907 = vpop.f32.mrb[0].mxu0
        %v4908 = vadd.f32 0.0, %v4907
        %v4909 = vpop.f32.mrb[0].mxu0
        %4910 = vmatprep.mubr.f32.mxu0 0.0
        %4911 = vmatmul.mubr.f32.gmra.mrb[0].mxu0 %v4570
        %v4912 = vpop.f32.mrb[0].mxu0
        %v4913 = vadd.f32 0.0, %v4912
        %v4914 = vpop.f32.mrb[0].mxu0
        %4915 = vmatprep.mubr.f32.mxu0 0.0
        %4916 = vmatmul.mubr.f32.gmra.mrb[0].mxu0 %v4571
        %v4917 = vpop.f32.mrb[0].mxu0
        %v4918 = vadd.f32 0.0, %v4917
        %v4919 = vpop.f32.mrb[0].mxu0
        %4920 = vmatprep.mubr.f32.mxu0 0.0
        %4921 = vmatmul.mubr.f32.gmra.mrb[0].mxu0 %v4572
        %v4922 = vpop.f32.mrb[0].mxu0
        %v4923 = vadd.f32 0.0, %v4922
        %v4924 = vpop.f32.mrb[0].mxu0
        %4925 = vmatprep.mubr.f32.mxu0 0.0
        %4926 = vmatmul.mubr.f32.gmra.mrb[0].mxu0 %v4573
        %v4927 = vpop.f32.mrb[0].mxu0
        %v4928 = vadd.f32 0.0, %v4927
        %v4929 = vpop.f32.mrb[0].mxu0
        %4930 = vmatprep.mubr.f32.mxu0 0.0
        %4931 = vmatmul.mubr.f32.gmra.mrb[0].mxu0 %v4574
        %v4932 = vpop.f32.mrb[0].mxu0
        %v4933 = vadd.f32 0.0, %v4932
        %v4934 = vpop.f32.mrb[0].mxu0
        %4935 = vmatprep.mubr.f32.mxu0 0.0
        %4936 = vmatmul.mubr.f32.gmra.mrb[0].mxu0 %v4575
        %v4937 = vpop.f32.mrb[0].mxu0
        %v4938 = vadd.f32 0.0, %v4937
        %v4939 = vpop.f32.mrb[0].mxu0
        %4940 = vmatprep.mubr.f32.mxu0 0.0
        %4941 = vmatmul.mubr.f32.gmra.mrb[0].mxu0 %v4576
        %v4942 = vpop.f32.mrb[0].mxu0
        %v4943 = vadd.f32 0.0, %v4942
        %v4944 = vpop.f32.mrb[0].mxu0
        %4945 = vmatprep.mubr.f32.mxu0 0.0
        %4946 = vmatmul.mubr.f32.gmra.mrb[0].mxu0 %v4577
        %v4947 = vpop.f32.mrb[0].mxu0
        %v4948 = vadd.f32 0.0, %v4947
        %v4949 = vpop.f32.mrb[0].mxu0
        %4950 = vmatprep.mubr.f32.mxu0 0.0
        %4951 = vmatmul.mubr.f32.gmra.mrb[0].mxu0 %v4578
        %v4952 = vpop.f32.mrb[0].mxu0
        %v4953 = vadd.f32 0.0, %v4952
        %v4954 = vpop.f32.mrb[0].mxu0
        %4955 = vdwg.mxu0
        %v4956 = vadd.f32 %v4507, %v4695
        %v4957 = vadd.f32 %v4508, %v4697
        %v4958 = vadd.f32 %v4509, %v4868
        %v4959 = vadd.f32 %v4510, %v4701
        %v4960 = vadd.f32 %v4511, %v4703
        %v4961 = vadd.f32 %v4512, %v4873
        %v4962 = vadd.f32 %v4513, %v4707
        %v4963 = vadd.f32 %v4514, %v4709
        %v4964 = vadd.f32 %v4515, %v4878
        %v4965 = vadd.f32 %v4516, %v4713
        %v4966 = vadd.f32 %v4517, %v4715
        %v4967 = vadd.f32 %v4518, %v4883
        %v4968 = vadd.f32 %v4519, %v4719
        %v4969 = vadd.f32 %v4520, %v4721
        %v4970 = vadd.f32 %v4521, %v4888
        %v4971 = vadd.f32 %v4522, %v4725
        %v4972 = vadd.f32 %v4523, %v4727
        %v4973 = vadd.f32 %v4524, %v4893
        %v4974 = vadd.f32 %v4525, %v4731
        %v4975 = vadd.f32 %v4526, %v4733
        %v4976 = vadd.f32 %v4527, %v4898
        %v4977 = vadd.f32 %v4528, %v4737
        %v4978 = vadd.f32 %v4529, %v4739
        %v4979 = vadd.f32 %v4530, %v4903
        %v4980 = vadd.f32 %v4531, %v4743
        %v4981 = vadd.f32 %v4532, %v4745
        %v4982 = vadd.f32 %v4533, %v4908
        %v4983 = vadd.f32 %v4534, %v4749
        %v4984 = vadd.f32 %v4535, %v4751
        %v4985 = vadd.f32 %v4536, %v4913
        %v4986 = vadd.f32 %v4537, %v4755
        %v4987 = vadd.f32 %v4538, %v4757
        %v4988 = vadd.f32 %v4539, %v4918
        %v4989 = vadd.f32 %v4540, %v4761
        %v4990 = vadd.f32 %v4541, %v4763
        %v4991 = vadd.f32 %v4542, %v4923
        %v4992 = vadd.f32 %v4543, %v4767
        %v4993 = vadd.f32 %v4544, %v4769
        %v4994 = vadd.f32 %v4545, %v4928
        %v4995 = vadd.f32 %v4546, %v4773
        %v4996 = vadd.f32 %v4547, %v4775
        %v4997 = vadd.f32 %v4548, %v4933
        %v4998 = vadd.f32 %v4549, %v4779
        %v4999 = vadd.f32 %v4550, %v4781
        %v5000 = vadd.f32 %v4551, %v4938
        %v5001 = vadd.f32 %v4552, %v4785
        %v5002 = vadd.f32 %v4553, %v4787
        %v5003 = vadd.f32 %v4554, %v4943
        %v5004 = vadd.f32 %v4555, %v4791
        %v5005 = vadd.f32 %v4556, %v4793
        %v5006 = vadd.f32 %v4557, %v4948
        %v5007 = vadd.f32 %v4558, %v4797
        %v5008 = vadd.f32 %v4559, %v4799
        %v5009 = vadd.f32 %v4560, %v4953
        %v5010 = vld [vmem:[#allocation3 + $0x13] sm:$0xff]
        %v5011 = vld [vmem:[#allocation3 + $0x1b] sm:$0xff]
        %v5012 = vld [vmem:[#allocation3 + $0x23] sm:$0xff]
        %v5013 = vld [vmem:[#allocation3 + $0x2b] sm:$0xff]
        %v5014 = vld [vmem:[#allocation3 + $0x33] sm:$0xff]
        %v5015 = vld [vmem:[#allocation3 + $0x3b] sm:$0xff]
        %v5016 = vld [vmem:[#allocation3 + $0x43] sm:$0xff]
        %v5017 = vld [vmem:[#allocation3 + $0x4b] sm:$0xff]
        %v5018 = vld [vmem:[#allocation3 + $0x53] sm:$0xff]
        %v5019 = vld [vmem:[#allocation3 + $0x5b] sm:$0xff]
        %v5020 = vld [vmem:[#allocation3 + $0x63] sm:$0xff]
        %v5021 = vld [vmem:[#allocation3 + $0x6b] sm:$0xff]
        %v5022 = vld [vmem:[#allocation3 + $0x73] sm:$0xff]
        %v5023 = vld [vmem:[#allocation3 + $0x7b] sm:$0xff]
        %v5024 = vld [vmem:[#allocation3 + $0x83] sm:$0xff]
        %v5025 = vld [vmem:[#allocation3 + $0x8b] sm:$0xff]
        %v5026 = vld [vmem:[#allocation3 + $0x93] sm:$0xff]
        %v5027 = vld [vmem:[#allocation3 + $0x9b] sm:$0xff]
        %s5028 = scalar_lea.vmem [#allocation13], 1536
        %v5029 = vld [vmem:[%s5028] sm:$0xff]
        %v5030 = vld [vmem:[%s5028 + $0x8] sm:$0xff]
        %v5031 = vld [vmem:[%s5028 + $0x10] sm:$0xff]
        %v5032 = vld [vmem:[%s5028 + $0x18] sm:$0xff]
        %v5033 = vld [vmem:[%s5028 + $0x20] sm:$0xff]
        %v5034 = vld [vmem:[%s5028 + $0x28] sm:$0xff]
        %v5035 = vld [vmem:[%s5028 + $0x30] sm:$0xff]
        %v5036 = vld [vmem:[%s5028 + $0x38] sm:$0xff]
        %v5037 = vld [vmem:[%s5028 + $0x40] sm:$0xff]
        %v5038 = vld [vmem:[%s5028 + $0x48] sm:$0xff]
        %v5039 = vld [vmem:[%s5028 + $0x50] sm:$0xff]
        %v5040 = vld [vmem:[%s5028 + $0x58] sm:$0xff]
        %v5041 = vld [vmem:[%s5028 + $0x60] sm:$0xff]
        %v5042 = vld [vmem:[%s5028 + $0x68] sm:$0xff]
        %v5043 = vld [vmem:[%s5028 + $0x70] sm:$0xff]
        %v5044 = vld [vmem:[%s5028 + $0x78] sm:$0xff]
        %v5045 = vld [vmem:[%s5028 + $0x80] sm:$0xff]
        %v5046 = vld [vmem:[%s5028 + $0x88] sm:$0xff]
        %v5047 = vld [vmem:[%s5028 + $0x90] sm:$0xff]
        %v5048 = vld [vmem:[%s5028 + $0x98] sm:$0xff]
        %v5049 = vld [vmem:[%s5028 + $0xa0] sm:$0xff]
        %v5050 = vld [vmem:[%s5028 + $0xa8] sm:$0xff]
        %v5051 = vld [vmem:[%s5028 + $0xb0] sm:$0xff]
        %v5052 = vld [vmem:[%s5028 + $0xb8] sm:$0xff]
        %v5053 = vld [vmem:[%s5028 + $0xc0] sm:$0xff]
        %v5054 = vld [vmem:[%s5028 + $0xc8] sm:$0xff]
        %v5055 = vld [vmem:[%s5028 + $0xd0] sm:$0xff]
        %v5056 = vld [vmem:[%s5028 + $0xd8] sm:$0xff]
        %v5057 = vld [vmem:[%s5028 + $0xe0] sm:$0xff]
        %v5058 = vld [vmem:[%s5028 + $0xe8] sm:$0xff]
        %v5059 = vld [vmem:[%s5028 + $0xf0] sm:$0xff]
        %v5060 = vld [vmem:[%s5028 + $0xf8] sm:$0xff]
        %v5061 = vld [vmem:[%s5028 + $0x100] sm:$0xff]
        %v5062 = vld [vmem:[%s5028 + $0x108] sm:$0xff]
        %v5063 = vld [vmem:[%s5028 + $0x110] sm:$0xff]
        %v5064 = vld [vmem:[%s5028 + $0x118] sm:$0xff]
        %v5065 = vld [vmem:[%s5028 + $0x120] sm:$0xff]
        %v5066 = vld [vmem:[%s5028 + $0x128] sm:$0xff]
        %v5067 = vld [vmem:[%s5028 + $0x130] sm:$0xff]
        %v5068 = vld [vmem:[%s5028 + $0x138] sm:$0xff]
        %v5069 = vld [vmem:[%s5028 + $0x140] sm:$0xff]
        %v5070 = vld [vmem:[%s5028 + $0x148] sm:$0xff]
        %v5071 = vld [vmem:[%s5028 + $0x150] sm:$0xff]
        %v5072 = vld [vmem:[%s5028 + $0x158] sm:$0xff]
        %v5073 = vld [vmem:[%s5028 + $0x160] sm:$0xff]
        %v5074 = vld [vmem:[%s5028 + $0x168] sm:$0xff]
        %v5075 = vld [vmem:[%s5028 + $0x170] sm:$0xff]
        %v5076 = vld [vmem:[%s5028 + $0x178] sm:$0xff]
        %5077 = vmatprep.subr.mxu0 %v5030
        %5078 = vmatpush1.msra.mxu0 %v5029
        %5079 = vmatprep.subr.mxu0 %v5033
        %5080 = vmatpush1.msra.mxu0 %v5032
        %5081 = vmatprep.subr.mxu0 %v5036
        %5082 = vmatpush1.msra.mxu0 %v5035
        %5083 = vmatprep.subr.mxu0 %v5039
        %5084 = vmatpush1.msra.mxu0 %v5038
        %5085 = vmatprep.subr.mxu0 %v5042
        %5086 = vmatpush1.msra.mxu0 %v5041
        %5087 = vmatprep.subr.mxu0 %v5045
        %5088 = vmatpush1.msra.mxu0 %v5044
        %5089 = vmatprep.subr.mxu0 %v5048
        %5090 = vmatpush1.msra.mxu0 %v5047
        %5091 = vmatprep.subr.mxu0 %v5051
        %5092 = vmatpush1.msra.mxu0 %v5050
        %5093 = vmatprep.subr.mxu0 %v5054
        %5094 = vmatpush1.msra.mxu0 %v5053
        %5095 = vmatprep.subr.mxu0 %v5057
        %5096 = vmatpush1.msra.mxu0 %v5056
        %5097 = vmatprep.subr.mxu0 %v5060
        %5098 = vmatpush1.msra.mxu0 %v5059
        %5099 = vmatprep.subr.mxu0 %v5063
        %5100 = vmatpush1.msra.mxu0 %v5062
        %5101 = vmatprep.subr.mxu0 %v5066
        %5102 = vmatpush1.msra.mxu0 %v5065
        %5103 = vmatprep.subr.mxu0 %v5069
        %5104 = vmatpush1.msra.mxu0 %v5068
        %5105 = vmatprep.subr.mxu0 %v5072
        %5106 = vmatpush1.msra.mxu0 %v5071
        %5107 = vmatprep.subr.mxu0 %v5075
        %5108 = vmatpush1.msra.mxu0 %v5074
        %5109 = vmatprep.subr.mxu0 0.0
        %5110 = vmatpush1.msra.mxu0 0.0
        %5111 = vmatprep.subr.mxu0 0.0
        %5112 = vmatpush1.msra.mxu0 0.0
        %5113 = vmatprep.subr.mxu0 0.0
        %5114 = vmatpush1.msra.mxu0 0.0
        %5115 = vmatprep.subr.mxu0 0.0
        %5116 = vmatpush1.msra.mxu0 0.0
        %5117 = vmatprep.subr.mxu0 0.0
        %5118 = vmatpush1.msra.mxu0 0.0
        %5119 = vmatprep.subr.mxu0 0.0
        %5120 = vmatpush1.msra.mxu0 0.0
        %5121 = vmatprep.subr.mxu0 0.0
        %5122 = vmatpush1.msra.mxu0 0.0
        %5123 = vmatprep.subr.mxu0 0.0
        %5124 = vmatpush1.msra.mxu0 0.0
        %5125 = vmatprep.subr.mxu0 0.0
        %5126 = vmatpush1.msra.mxu0 0.0
        %5127 = vmatprep.subr.mxu0 0.0
        %5128 = vmatpush1.msra.mxu0 0.0
        %5129 = vmatprep.subr.mxu0 0.0
        %5130 = vmatpush1.msra.mxu0 0.0
        %5131 = vmatprep.subr.mxu0 0.0
        %5132 = vmatpush1.msra.mxu0 0.0
        %5133 = vmatprep.subr.mxu0 0.0
        %5134 = vmatpush1.msra.mxu0 0.0
        %5135 = vmatprep.subr.mxu0 0.0
        %5136 = vmatpush1.msra.mxu0 0.0
        %5137 = vmatprep.subr.mxu0 0.0
        %5138 = vmatpush1.msra.mxu0 0.0
        %5139 = vmatprep.subr.mxu0 0.0
        %5140 = vmatpush1.msra.mxu0 0.0
        %5141 = vmatprep.mubr.f32.mxu0 0.0
        %5142 = vmatmul.mubr.f32.gmra.mrb[0].mxu0 %v5010
        %v5143 = vpop.f32.mrb[0].mxu0
        %v5144 = vadd.f32 0.0, %v5143
        %v5145 = vpop.f32.mrb[0].mxu0
        %v5146 = vadd.f32 0.0, %v5145
        %5147 = vmatprep.mubr.f32.mxu0 0.0
        %5148 = vmatmul.mubr.f32.gmra.mrb[0].mxu0 %v5011
        %v5149 = vpop.f32.mrb[0].mxu0
        %v5150 = vadd.f32 0.0, %v5149
        %v5151 = vpop.f32.mrb[0].mxu0
        %v5152 = vadd.f32 0.0, %v5151
        %5153 = vmatprep.mubr.f32.mxu0 0.0
        %5154 = vmatmul.mubr.f32.gmra.mrb[0].mxu0 %v5012
        %v5155 = vpop.f32.mrb[0].mxu0
        %v5156 = vadd.f32 0.0, %v5155
        %v5157 = vpop.f32.mrb[0].mxu0
        %v5158 = vadd.f32 0.0, %v5157
        %5159 = vmatprep.mubr.f32.mxu0 0.0
        %5160 = vmatmul.mubr.f32.gmra.mrb[0].mxu0 %v5013
        %v5161 = vpop.f32.mrb[0].mxu0
        %v5162 = vadd.f32 0.0, %v5161
        %v5163 = vpop.f32.mrb[0].mxu0
        %v5164 = vadd.f32 0.0, %v5163
        %5165 = vmatprep.mubr.f32.mxu0 0.0
        %5166 = vmatmul.mubr.f32.gmra.mrb[0].mxu0 %v5014
        %v5167 = vpop.f32.mrb[0].mxu0
        %v5168 = vadd.f32 0.0, %v5167
        %v5169 = vpop.f32.mrb[0].mxu0
        %v5170 = vadd.f32 0.0, %v5169
        %5171 = vmatprep.mubr.f32.mxu0 0.0
        %5172 = vmatmul.mubr.f32.gmra.mrb[0].mxu0 %v5015
        %v5173 = vpop.f32.mrb[0].mxu0
        %v5174 = vadd.f32 0.0, %v5173
        %v5175 = vpop.f32.mrb[0].mxu0
        %v5176 = vadd.f32 0.0, %v5175
        %5177 = vmatprep.mubr.f32.mxu0 0.0
        %5178 = vmatmul.mubr.f32.gmra.mrb[0].mxu0 %v5016
        %v5179 = vpop.f32.mrb[0].mxu0
        %v5180 = vadd.f32 0.0, %v5179
        %v5181 = vpop.f32.mrb[0].mxu0
        %v5182 = vadd.f32 0.0, %v5181
        %5183 = vmatprep.mubr.f32.mxu0 0.0
        %5184 = vmatmul.mubr.f32.gmra.mrb[0].mxu0 %v5017
        %v5185 = vpop.f32.mrb[0].mxu0
        %v5186 = vadd.f32 0.0, %v5185
        %v5187 = vpop.f32.mrb[0].mxu0
        %v5188 = vadd.f32 0.0, %v5187
        %5189 = vmatprep.mubr.f32.mxu0 0.0
        %5190 = vmatmul.mubr.f32.gmra.mrb[0].mxu0 %v5018
        %v5191 = vpop.f32.mrb[0].mxu0
        %v5192 = vadd.f32 0.0, %v5191
        %v5193 = vpop.f32.mrb[0].mxu0
        %v5194 = vadd.f32 0.0, %v5193
        %5195 = vmatprep.mubr.f32.mxu0 0.0
        %5196 = vmatmul.mubr.f32.gmra.mrb[0].mxu0 %v5019
        %v5197 = vpop.f32.mrb[0].mxu0
        %v5198 = vadd.f32 0.0, %v5197
        %v5199 = vpop.f32.mrb[0].mxu0
        %v5200 = vadd.f32 0.0, %v5199
        %5201 = vmatprep.mubr.f32.mxu0 0.0
        %5202 = vmatmul.mubr.f32.gmra.mrb[0].mxu0 %v5020
        %v5203 = vpop.f32.mrb[0].mxu0
        %v5204 = vadd.f32 0.0, %v5203
        %v5205 = vpop.f32.mrb[0].mxu0
        %v5206 = vadd.f32 0.0, %v5205
        %5207 = vmatprep.mubr.f32.mxu0 0.0
        %5208 = vmatmul.mubr.f32.gmra.mrb[0].mxu0 %v5021
        %v5209 = vpop.f32.mrb[0].mxu0
        %v5210 = vadd.f32 0.0, %v5209
        %v5211 = vpop.f32.mrb[0].mxu0
        %v5212 = vadd.f32 0.0, %v5211
        %5213 = vmatprep.mubr.f32.mxu0 0.0
        %5214 = vmatmul.mubr.f32.gmra.mrb[0].mxu0 %v5022
        %v5215 = vpop.f32.mrb[0].mxu0
        %v5216 = vadd.f32 0.0, %v5215
        %v5217 = vpop.f32.mrb[0].mxu0
        %v5218 = vadd.f32 0.0, %v5217
        %5219 = vmatprep.mubr.f32.mxu0 0.0
        %5220 = vmatmul.mubr.f32.gmra.mrb[0].mxu0 %v5023
        %v5221 = vpop.f32.mrb[0].mxu0
        %v5222 = vadd.f32 0.0, %v5221
        %v5223 = vpop.f32.mrb[0].mxu0
        %v5224 = vadd.f32 0.0, %v5223
        %5225 = vmatprep.mubr.f32.mxu0 0.0
        %5226 = vmatmul.mubr.f32.gmra.mrb[0].mxu0 %v5024
        %v5227 = vpop.f32.mrb[0].mxu0
        %v5228 = vadd.f32 0.0, %v5227
        %v5229 = vpop.f32.mrb[0].mxu0
        %v5230 = vadd.f32 0.0, %v5229
        %5231 = vmatprep.mubr.f32.mxu0 0.0
        %5232 = vmatmul.mubr.f32.gmra.mrb[0].mxu0 %v5025
        %v5233 = vpop.f32.mrb[0].mxu0
        %v5234 = vadd.f32 0.0, %v5233
        %v5235 = vpop.f32.mrb[0].mxu0
        %v5236 = vadd.f32 0.0, %v5235
        %5237 = vmatprep.mubr.f32.mxu0 0.0
        %5238 = vmatmul.mubr.f32.gmra.mrb[0].mxu0 %v5026
        %v5239 = vpop.f32.mrb[0].mxu0
        %v5240 = vadd.f32 0.0, %v5239
        %v5241 = vpop.f32.mrb[0].mxu0
        %v5242 = vadd.f32 0.0, %v5241
        %5243 = vmatprep.mubr.f32.mxu0 0.0
        %5244 = vmatmul.mubr.f32.gmra.mrb[0].mxu0 %v5027
        %v5245 = vpop.f32.mrb[0].mxu0
        %v5246 = vadd.f32 0.0, %v5245
        %v5247 = vpop.f32.mrb[0].mxu0
        %v5248 = vadd.f32 0.0, %v5247
        %5249 = vdwg.mxu0
        %5250 = vmatprep.subr.mxu0 0.0
        %5251 = vmatpush1.msra.mxu0 %v5031
        %5252 = vmatprep.subr.mxu0 0.0
        %5253 = vmatpush1.msra.mxu0 %v5034
        %5254 = vmatprep.subr.mxu0 0.0
        %5255 = vmatpush1.msra.mxu0 %v5037
        %5256 = vmatprep.subr.mxu0 0.0
        %5257 = vmatpush1.msra.mxu0 %v5040
        %5258 = vmatprep.subr.mxu0 0.0
        %5259 = vmatpush1.msra.mxu0 %v5043
        %5260 = vmatprep.subr.mxu0 0.0
        %5261 = vmatpush1.msra.mxu0 %v5046
        %5262 = vmatprep.subr.mxu0 0.0
        %5263 = vmatpush1.msra.mxu0 %v5049
        %5264 = vmatprep.subr.mxu0 0.0
        %5265 = vmatpush1.msra.mxu0 %v5052
        %5266 = vmatprep.subr.mxu0 0.0
        %5267 = vmatpush1.msra.mxu0 %v5055
        %5268 = vmatprep.subr.mxu0 0.0
        %5269 = vmatpush1.msra.mxu0 %v5058
        %5270 = vmatprep.subr.mxu0 0.0
        %5271 = vmatpush1.msra.mxu0 %v5061
        %5272 = vmatprep.subr.mxu0 0.0
        %5273 = vmatpush1.msra.mxu0 %v5064
        %5274 = vmatprep.subr.mxu0 0.0
        %5275 = vmatpush1.msra.mxu0 %v5067
        %5276 = vmatprep.subr.mxu0 0.0
        %5277 = vmatpush1.msra.mxu0 %v5070
        %5278 = vmatprep.subr.mxu0 0.0
        %5279 = vmatpush1.msra.mxu0 %v5073
        %5280 = vmatprep.subr.mxu0 0.0
        %5281 = vmatpush1.msra.mxu0 %v5076
        %5282 = vmatprep.subr.mxu0 0.0
        %5283 = vmatpush1.msra.mxu0 0.0
        %5284 = vmatprep.subr.mxu0 0.0
        %5285 = vmatpush1.msra.mxu0 0.0
        %5286 = vmatprep.subr.mxu0 0.0
        %5287 = vmatpush1.msra.mxu0 0.0
        %5288 = vmatprep.subr.mxu0 0.0
        %5289 = vmatpush1.msra.mxu0 0.0
        %5290 = vmatprep.subr.mxu0 0.0
        %5291 = vmatpush1.msra.mxu0 0.0
        %5292 = vmatprep.subr.mxu0 0.0
        %5293 = vmatpush1.msra.mxu0 0.0
        %5294 = vmatprep.subr.mxu0 0.0
        %5295 = vmatpush1.msra.mxu0 0.0
        %5296 = vmatprep.subr.mxu0 0.0
        %5297 = vmatpush1.msra.mxu0 0.0
        %5298 = vmatprep.subr.mxu0 0.0
        %5299 = vmatpush1.msra.mxu0 0.0
        %5300 = vmatprep.subr.mxu0 0.0
        %5301 = vmatpush1.msra.mxu0 0.0
        %5302 = vmatprep.subr.mxu0 0.0
        %5303 = vmatpush1.msra.mxu0 0.0
        %5304 = vmatprep.subr.mxu0 0.0
        %5305 = vmatpush1.msra.mxu0 0.0
        %5306 = vmatprep.subr.mxu0 0.0
        %5307 = vmatpush1.msra.mxu0 0.0
        %5308 = vmatprep.subr.mxu0 0.0
        %5309 = vmatpush1.msra.mxu0 0.0
        %5310 = vmatprep.subr.mxu0 0.0
        %5311 = vmatpush1.msra.mxu0 0.0
        %5312 = vmatprep.subr.mxu0 0.0
        %5313 = vmatpush1.msra.mxu0 0.0
        %5314 = vmatprep.mubr.f32.mxu0 0.0
        %5315 = vmatmul.mubr.f32.gmra.mrb[0].mxu0 %v5010
        %v5316 = vpop.f32.mrb[0].mxu0
        %v5317 = vadd.f32 0.0, %v5316
        %v5318 = vpop.f32.mrb[0].mxu0
        %5319 = vmatprep.mubr.f32.mxu0 0.0
        %5320 = vmatmul.mubr.f32.gmra.mrb[0].mxu0 %v5011
        %v5321 = vpop.f32.mrb[0].mxu0
        %v5322 = vadd.f32 0.0, %v5321
        %v5323 = vpop.f32.mrb[0].mxu0
        %5324 = vmatprep.mubr.f32.mxu0 0.0
        %5325 = vmatmul.mubr.f32.gmra.mrb[0].mxu0 %v5012
        %v5326 = vpop.f32.mrb[0].mxu0
        %v5327 = vadd.f32 0.0, %v5326
        %v5328 = vpop.f32.mrb[0].mxu0
        %5329 = vmatprep.mubr.f32.mxu0 0.0
        %5330 = vmatmul.mubr.f32.gmra.mrb[0].mxu0 %v5013
        %v5331 = vpop.f32.mrb[0].mxu0
        %v5332 = vadd.f32 0.0, %v5331
        %v5333 = vpop.f32.mrb[0].mxu0
        %5334 = vmatprep.mubr.f32.mxu0 0.0
        %5335 = vmatmul.mubr.f32.gmra.mrb[0].mxu0 %v5014
        %v5336 = vpop.f32.mrb[0].mxu0
        %v5337 = vadd.f32 0.0, %v5336
        %v5338 = vpop.f32.mrb[0].mxu0
        %5339 = vmatprep.mubr.f32.mxu0 0.0
        %5340 = vmatmul.mubr.f32.gmra.mrb[0].mxu0 %v5015
        %v5341 = vpop.f32.mrb[0].mxu0
        %v5342 = vadd.f32 0.0, %v5341
        %v5343 = vpop.f32.mrb[0].mxu0
        %5344 = vmatprep.mubr.f32.mxu0 0.0
        %5345 = vmatmul.mubr.f32.gmra.mrb[0].mxu0 %v5016
        %v5346 = vpop.f32.mrb[0].mxu0
        %v5347 = vadd.f32 0.0, %v5346
        %v5348 = vpop.f32.mrb[0].mxu0
        %5349 = vmatprep.mubr.f32.mxu0 0.0
        %5350 = vmatmul.mubr.f32.gmra.mrb[0].mxu0 %v5017
        %v5351 = vpop.f32.mrb[0].mxu0
        %v5352 = vadd.f32 0.0, %v5351
        %v5353 = vpop.f32.mrb[0].mxu0
        %5354 = vmatprep.mubr.f32.mxu0 0.0
        %5355 = vmatmul.mubr.f32.gmra.mrb[0].mxu0 %v5018
        %v5356 = vpop.f32.mrb[0].mxu0
        %v5357 = vadd.f32 0.0, %v5356
        %v5358 = vpop.f32.mrb[0].mxu0
        %5359 = vmatprep.mubr.f32.mxu0 0.0
        %5360 = vmatmul.mubr.f32.gmra.mrb[0].mxu0 %v5019
        %v5361 = vpop.f32.mrb[0].mxu0
        %v5362 = vadd.f32 0.0, %v5361
        %v5363 = vpop.f32.mrb[0].mxu0
        %5364 = vmatprep.mubr.f32.mxu0 0.0
        %5365 = vmatmul.mubr.f32.gmra.mrb[0].mxu0 %v5020
        %v5366 = vpop.f32.mrb[0].mxu0
        %v5367 = vadd.f32 0.0, %v5366
        %v5368 = vpop.f32.mrb[0].mxu0
        %5369 = vmatprep.mubr.f32.mxu0 0.0
        %5370 = vmatmul.mubr.f32.gmra.mrb[0].mxu0 %v5021
        %v5371 = vpop.f32.mrb[0].mxu0
        %v5372 = vadd.f32 0.0, %v5371
        %v5373 = vpop.f32.mrb[0].mxu0
        %5374 = vmatprep.mubr.f32.mxu0 0.0
        %5375 = vmatmul.mubr.f32.gmra.mrb[0].mxu0 %v5022
        %v5376 = vpop.f32.mrb[0].mxu0
        %v5377 = vadd.f32 0.0, %v5376
        %v5378 = vpop.f32.mrb[0].mxu0
        %5379 = vmatprep.mubr.f32.mxu0 0.0
        %5380 = vmatmul.mubr.f32.gmra.mrb[0].mxu0 %v5023
        %v5381 = vpop.f32.mrb[0].mxu0
        %v5382 = vadd.f32 0.0, %v5381
        %v5383 = vpop.f32.mrb[0].mxu0
        %5384 = vmatprep.mubr.f32.mxu0 0.0
        %5385 = vmatmul.mubr.f32.gmra.mrb[0].mxu0 %v5024
        %v5386 = vpop.f32.mrb[0].mxu0
        %v5387 = vadd.f32 0.0, %v5386
        %v5388 = vpop.f32.mrb[0].mxu0
        %5389 = vmatprep.mubr.f32.mxu0 0.0
        %5390 = vmatmul.mubr.f32.gmra.mrb[0].mxu0 %v5025
        %v5391 = vpop.f32.mrb[0].mxu0
        %v5392 = vadd.f32 0.0, %v5391
        %v5393 = vpop.f32.mrb[0].mxu0
        %5394 = vmatprep.mubr.f32.mxu0 0.0
        %5395 = vmatmul.mubr.f32.gmra.mrb[0].mxu0 %v5026
        %v5396 = vpop.f32.mrb[0].mxu0
        %v5397 = vadd.f32 0.0, %v5396
        %v5398 = vpop.f32.mrb[0].mxu0
        %5399 = vmatprep.mubr.f32.mxu0 0.0
        %5400 = vmatmul.mubr.f32.gmra.mrb[0].mxu0 %v5027
        %v5401 = vpop.f32.mrb[0].mxu0
        %v5402 = vadd.f32 0.0, %v5401
        %v5403 = vpop.f32.mrb[0].mxu0
        %5404 = vdwg.mxu0
        %v5405 = vadd.f32 %v4956, %v5144
        %v5406 = vadd.f32 %v4957, %v5146
        %v5407 = vadd.f32 %v4958, %v5317
        %v5408 = vadd.f32 %v4959, %v5150
        %v5409 = vadd.f32 %v4960, %v5152
        %v5410 = vadd.f32 %v4961, %v5322
        %v5411 = vadd.f32 %v4962, %v5156
        %v5412 = vadd.f32 %v4963, %v5158
        %v5413 = vadd.f32 %v4964, %v5327
        %v5414 = vadd.f32 %v4965, %v5162
        %v5415 = vadd.f32 %v4966, %v5164
        %v5416 = vadd.f32 %v4967, %v5332
        %v5417 = vadd.f32 %v4968, %v5168
        %v5418 = vadd.f32 %v4969, %v5170
        %v5419 = vadd.f32 %v4970, %v5337
        %v5420 = vadd.f32 %v4971, %v5174
        %v5421 = vadd.f32 %v4972, %v5176
        %v5422 = vadd.f32 %v4973, %v5342
        %v5423 = vadd.f32 %v4974, %v5180
        %v5424 = vadd.f32 %v4975, %v5182
        %v5425 = vadd.f32 %v4976, %v5347
        %v5426 = vadd.f32 %v4977, %v5186
        %v5427 = vadd.f32 %v4978, %v5188
        %v5428 = vadd.f32 %v4979, %v5352
        %v5429 = vadd.f32 %v4980, %v5192
        %v5430 = vadd.f32 %v4981, %v5194
        %v5431 = vadd.f32 %v4982, %v5357
        %v5432 = vadd.f32 %v4983, %v5198
        %v5433 = vadd.f32 %v4984, %v5200
        %v5434 = vadd.f32 %v4985, %v5362
        %v5435 = vadd.f32 %v4986, %v5204
        %v5436 = vadd.f32 %v4987, %v5206
        %v5437 = vadd.f32 %v4988, %v5367
        %v5438 = vadd.f32 %v4989, %v5210
        %v5439 = vadd.f32 %v4990, %v5212
        %v5440 = vadd.f32 %v4991, %v5372
        %v5441 = vadd.f32 %v4992, %v5216
        %v5442 = vadd.f32 %v4993, %v5218
        %v5443 = vadd.f32 %v4994, %v5377
        %v5444 = vadd.f32 %v4995, %v5222
        %v5445 = vadd.f32 %v4996, %v5224
        %v5446 = vadd.f32 %v4997, %v5382
        %v5447 = vadd.f32 %v4998, %v5228
        %v5448 = vadd.f32 %v4999, %v5230
        %v5449 = vadd.f32 %v5000, %v5387
        %v5450 = vadd.f32 %v5001, %v5234
        %v5451 = vadd.f32 %v5002, %v5236
        %v5452 = vadd.f32 %v5003, %v5392
        %v5453 = vadd.f32 %v5004, %v5240
        %v5454 = vadd.f32 %v5005, %v5242
        %v5455 = vadd.f32 %v5006, %v5397
        %v5456 = vadd.f32 %v5007, %v5246
        %v5457 = vadd.f32 %v5008, %v5248
        %v5458 = vadd.f32 %v5009, %v5402
        %v5459 = vld [vmem:[#allocation3 + $0x14] sm:$0xff]
        %v5460 = vld [vmem:[#allocation3 + $0x1c] sm:$0xff]
        %v5461 = vld [vmem:[#allocation3 + $0x24] sm:$0xff]
        %v5462 = vld [vmem:[#allocation3 + $0x2c] sm:$0xff]
        %v5463 = vld [vmem:[#allocation3 + $0x34] sm:$0xff]
        %v5464 = vld [vmem:[#allocation3 + $0x3c] sm:$0xff]
        %v5465 = vld [vmem:[#allocation3 + $0x44] sm:$0xff]
        %v5466 = vld [vmem:[#allocation3 + $0x4c] sm:$0xff]
        %v5467 = vld [vmem:[#allocation3 + $0x54] sm:$0xff]
        %v5468 = vld [vmem:[#allocation3 + $0x5c] sm:$0xff]
        %v5469 = vld [vmem:[#allocation3 + $0x64] sm:$0xff]
        %v5470 = vld [vmem:[#allocation3 + $0x6c] sm:$0xff]
        %v5471 = vld [vmem:[#allocation3 + $0x74] sm:$0xff]
        %v5472 = vld [vmem:[#allocation3 + $0x7c] sm:$0xff]
        %v5473 = vld [vmem:[#allocation3 + $0x84] sm:$0xff]
        %v5474 = vld [vmem:[#allocation3 + $0x8c] sm:$0xff]
        %v5475 = vld [vmem:[#allocation3 + $0x94] sm:$0xff]
        %v5476 = vld [vmem:[#allocation3 + $0x9c] sm:$0xff]
        %s5477 = scalar_lea.vmem [#allocation13], 1920
        %v5478 = vld [vmem:[%s5477] sm:$0xff]
        %v5479 = vld [vmem:[%s5477 + $0x8] sm:$0xff]
        %v5480 = vld [vmem:[%s5477 + $0x10] sm:$0xff]
        %v5481 = vld [vmem:[%s5477 + $0x18] sm:$0xff]
        %v5482 = vld [vmem:[%s5477 + $0x20] sm:$0xff]
        %v5483 = vld [vmem:[%s5477 + $0x28] sm:$0xff]
        %v5484 = vld [vmem:[%s5477 + $0x30] sm:$0xff]
        %v5485 = vld [vmem:[%s5477 + $0x38] sm:$0xff]
        %v5486 = vld [vmem:[%s5477 + $0x40] sm:$0xff]
        %v5487 = vld [vmem:[%s5477 + $0x48] sm:$0xff]
        %v5488 = vld [vmem:[%s5477 + $0x50] sm:$0xff]
        %v5489 = vld [vmem:[%s5477 + $0x58] sm:$0xff]
        %v5490 = vld [vmem:[%s5477 + $0x60] sm:$0xff]
        %v5491 = vld [vmem:[%s5477 + $0x68] sm:$0xff]
        %v5492 = vld [vmem:[%s5477 + $0x70] sm:$0xff]
        %v5493 = vld [vmem:[%s5477 + $0x78] sm:$0xff]
        %v5494 = vld [vmem:[%s5477 + $0x80] sm:$0xff]
        %v5495 = vld [vmem:[%s5477 + $0x88] sm:$0xff]
        %v5496 = vld [vmem:[%s5477 + $0x90] sm:$0xff]
        %v5497 = vld [vmem:[%s5477 + $0x98] sm:$0xff]
        %v5498 = vld [vmem:[%s5477 + $0xa0] sm:$0xff]
        %v5499 = vld [vmem:[%s5477 + $0xa8] sm:$0xff]
        %v5500 = vld [vmem:[%s5477 + $0xb0] sm:$0xff]
        %v5501 = vld [vmem:[%s5477 + $0xb8] sm:$0xff]
        %v5502 = vld [vmem:[%s5477 + $0xc0] sm:$0xff]
        %v5503 = vld [vmem:[%s5477 + $0xc8] sm:$0xff]
        %v5504 = vld [vmem:[%s5477 + $0xd0] sm:$0xff]
        %v5505 = vld [vmem:[%s5477 + $0xd8] sm:$0xff]
        %v5506 = vld [vmem:[%s5477 + $0xe0] sm:$0xff]
        %v5507 = vld [vmem:[%s5477 + $0xe8] sm:$0xff]
        %v5508 = vld [vmem:[%s5477 + $0xf0] sm:$0xff]
        %v5509 = vld [vmem:[%s5477 + $0xf8] sm:$0xff]
        %v5510 = vld [vmem:[%s5477 + $0x100] sm:$0xff]
        %v5511 = vld [vmem:[%s5477 + $0x108] sm:$0xff]
        %v5512 = vld [vmem:[%s5477 + $0x110] sm:$0xff]
        %v5513 = vld [vmem:[%s5477 + $0x118] sm:$0xff]
        %v5514 = vld [vmem:[%s5477 + $0x120] sm:$0xff]
        %v5515 = vld [vmem:[%s5477 + $0x128] sm:$0xff]
        %v5516 = vld [vmem:[%s5477 + $0x130] sm:$0xff]
        %v5517 = vld [vmem:[%s5477 + $0x138] sm:$0xff]
        %v5518 = vld [vmem:[%s5477 + $0x140] sm:$0xff]
        %v5519 = vld [vmem:[%s5477 + $0x148] sm:$0xff]
        %v5520 = vld [vmem:[%s5477 + $0x150] sm:$0xff]
        %v5521 = vld [vmem:[%s5477 + $0x158] sm:$0xff]
        %v5522 = vld [vmem:[%s5477 + $0x160] sm:$0xff]
        %v5523 = vld [vmem:[%s5477 + $0x168] sm:$0xff]
        %v5524 = vld [vmem:[%s5477 + $0x170] sm:$0xff]
        %v5525 = vld [vmem:[%s5477 + $0x178] sm:$0xff]
        %5526 = vmatprep.subr.mxu0 %v5479
        %5527 = vmatpush1.msra.mxu0 %v5478
        %5528 = vmatprep.subr.mxu0 %v5482
        %5529 = vmatpush1.msra.mxu0 %v5481
        %5530 = vmatprep.subr.mxu0 %v5485
        %5531 = vmatpush1.msra.mxu0 %v5484
        %5532 = vmatprep.subr.mxu0 %v5488
        %5533 = vmatpush1.msra.mxu0 %v5487
        %5534 = vmatprep.subr.mxu0 %v5491
        %5535 = vmatpush1.msra.mxu0 %v5490
        %5536 = vmatprep.subr.mxu0 %v5494
        %5537 = vmatpush1.msra.mxu0 %v5493
        %5538 = vmatprep.subr.mxu0 %v5497
        %5539 = vmatpush1.msra.mxu0 %v5496
        %5540 = vmatprep.subr.mxu0 %v5500
        %5541 = vmatpush1.msra.mxu0 %v5499
        %5542 = vmatprep.subr.mxu0 %v5503
        %5543 = vmatpush1.msra.mxu0 %v5502
        %5544 = vmatprep.subr.mxu0 %v5506
        %5545 = vmatpush1.msra.mxu0 %v5505
        %5546 = vmatprep.subr.mxu0 %v5509
        %5547 = vmatpush1.msra.mxu0 %v5508
        %5548 = vmatprep.subr.mxu0 %v5512
        %5549 = vmatpush1.msra.mxu0 %v5511
        %5550 = vmatprep.subr.mxu0 %v5515
        %5551 = vmatpush1.msra.mxu0 %v5514
        %5552 = vmatprep.subr.mxu0 %v5518
        %5553 = vmatpush1.msra.mxu0 %v5517
        %5554 = vmatprep.subr.mxu0 %v5521
        %5555 = vmatpush1.msra.mxu0 %v5520
        %5556 = vmatprep.subr.mxu0 %v5524
        %5557 = vmatpush1.msra.mxu0 %v5523
        %5558 = vmatprep.subr.mxu0 0.0
        %5559 = vmatpush1.msra.mxu0 0.0
        %5560 = vmatprep.subr.mxu0 0.0
        %5561 = vmatpush1.msra.mxu0 0.0
        %5562 = vmatprep.subr.mxu0 0.0
        %5563 = vmatpush1.msra.mxu0 0.0
        %5564 = vmatprep.subr.mxu0 0.0
        %5565 = vmatpush1.msra.mxu0 0.0
        %5566 = vmatprep.subr.mxu0 0.0
        %5567 = vmatpush1.msra.mxu0 0.0
        %5568 = vmatprep.subr.mxu0 0.0
        %5569 = vmatpush1.msra.mxu0 0.0
        %5570 = vmatprep.subr.mxu0 0.0
        %5571 = vmatpush1.msra.mxu0 0.0
        %5572 = vmatprep.subr.mxu0 0.0
        %5573 = vmatpush1.msra.mxu0 0.0
        %5574 = vmatprep.subr.mxu0 0.0
        %5575 = vmatpush1.msra.mxu0 0.0
        %5576 = vmatprep.subr.mxu0 0.0
        %5577 = vmatpush1.msra.mxu0 0.0
        %5578 = vmatprep.subr.mxu0 0.0
        %5579 = vmatpush1.msra.mxu0 0.0
        %5580 = vmatprep.subr.mxu0 0.0
        %5581 = vmatpush1.msra.mxu0 0.0
        %5582 = vmatprep.subr.mxu0 0.0
        %5583 = vmatpush1.msra.mxu0 0.0
        %5584 = vmatprep.subr.mxu0 0.0
        %5585 = vmatpush1.msra.mxu0 0.0
        %5586 = vmatprep.subr.mxu0 0.0
        %5587 = vmatpush1.msra.mxu0 0.0
        %5588 = vmatprep.subr.mxu0 0.0
        %5589 = vmatpush1.msra.mxu0 0.0
        %5590 = vmatprep.mubr.f32.mxu0 0.0
        %5591 = vmatmul.mubr.f32.gmra.mrb[0].mxu0 %v5459
        %v5592 = vpop.f32.mrb[0].mxu0
        %v5593 = vadd.f32 0.0, %v5592
        %v5594 = vpop.f32.mrb[0].mxu0
        %v5595 = vadd.f32 0.0, %v5594
        %5596 = vmatprep.mubr.f32.mxu0 0.0
        %5597 = vmatmul.mubr.f32.gmra.mrb[0].mxu0 %v5460
        %v5598 = vpop.f32.mrb[0].mxu0
        %v5599 = vadd.f32 0.0, %v5598
        %v5600 = vpop.f32.mrb[0].mxu0
        %v5601 = vadd.f32 0.0, %v5600
        %5602 = vmatprep.mubr.f32.mxu0 0.0
        %5603 = vmatmul.mubr.f32.gmra.mrb[0].mxu0 %v5461
        %v5604 = vpop.f32.mrb[0].mxu0
        %v5605 = vadd.f32 0.0, %v5604
        %v5606 = vpop.f32.mrb[0].mxu0
        %v5607 = vadd.f32 0.0, %v5606
        %5608 = vmatprep.mubr.f32.mxu0 0.0
        %5609 = vmatmul.mubr.f32.gmra.mrb[0].mxu0 %v5462
        %v5610 = vpop.f32.mrb[0].mxu0
        %v5611 = vadd.f32 0.0, %v5610
        %v5612 = vpop.f32.mrb[0].mxu0
        %v5613 = vadd.f32 0.0, %v5612
        %5614 = vmatprep.mubr.f32.mxu0 0.0
        %5615 = vmatmul.mubr.f32.gmra.mrb[0].mxu0 %v5463
        %v5616 = vpop.f32.mrb[0].mxu0
        %v5617 = vadd.f32 0.0, %v5616
        %v5618 = vpop.f32.mrb[0].mxu0
        %v5619 = vadd.f32 0.0, %v5618
        %5620 = vmatprep.mubr.f32.mxu0 0.0
        %5621 = vmatmul.mubr.f32.gmra.mrb[0].mxu0 %v5464
        %v5622 = vpop.f32.mrb[0].mxu0
        %v5623 = vadd.f32 0.0, %v5622
        %v5624 = vpop.f32.mrb[0].mxu0
        %v5625 = vadd.f32 0.0, %v5624
        %5626 = vmatprep.mubr.f32.mxu0 0.0
        %5627 = vmatmul.mubr.f32.gmra.mrb[0].mxu0 %v5465
        %v5628 = vpop.f32.mrb[0].mxu0
        %v5629 = vadd.f32 0.0, %v5628
        %v5630 = vpop.f32.mrb[0].mxu0
        %v5631 = vadd.f32 0.0, %v5630
        %5632 = vmatprep.mubr.f32.mxu0 0.0
        %5633 = vmatmul.mubr.f32.gmra.mrb[0].mxu0 %v5466
        %v5634 = vpop.f32.mrb[0].mxu0
        %v5635 = vadd.f32 0.0, %v5634
        %v5636 = vpop.f32.mrb[0].mxu0
        %v5637 = vadd.f32 0.0, %v5636
        %5638 = vmatprep.mubr.f32.mxu0 0.0
        %5639 = vmatmul.mubr.f32.gmra.mrb[0].mxu0 %v5467
        %v5640 = vpop.f32.mrb[0].mxu0
        %v5641 = vadd.f32 0.0, %v5640
        %v5642 = vpop.f32.mrb[0].mxu0
        %v5643 = vadd.f32 0.0, %v5642
        %5644 = vmatprep.mubr.f32.mxu0 0.0
        %5645 = vmatmul.mubr.f32.gmra.mrb[0].mxu0 %v5468
        %v5646 = vpop.f32.mrb[0].mxu0
        %v5647 = vadd.f32 0.0, %v5646
        %v5648 = vpop.f32.mrb[0].mxu0
        %v5649 = vadd.f32 0.0, %v5648
        %5650 = vmatprep.mubr.f32.mxu0 0.0
        %5651 = vmatmul.mubr.f32.gmra.mrb[0].mxu0 %v5469
        %v5652 = vpop.f32.mrb[0].mxu0
        %v5653 = vadd.f32 0.0, %v5652
        %v5654 = vpop.f32.mrb[0].mxu0
        %v5655 = vadd.f32 0.0, %v5654
        %5656 = vmatprep.mubr.f32.mxu0 0.0
        %5657 = vmatmul.mubr.f32.gmra.mrb[0].mxu0 %v5470
        %v5658 = vpop.f32.mrb[0].mxu0
        %v5659 = vadd.f32 0.0, %v5658
        %v5660 = vpop.f32.mrb[0].mxu0
        %v5661 = vadd.f32 0.0, %v5660
        %5662 = vmatprep.mubr.f32.mxu0 0.0
        %5663 = vmatmul.mubr.f32.gmra.mrb[0].mxu0 %v5471
        %v5664 = vpop.f32.mrb[0].mxu0
        %v5665 = vadd.f32 0.0, %v5664
        %v5666 = vpop.f32.mrb[0].mxu0
        %v5667 = vadd.f32 0.0, %v5666
        %5668 = vmatprep.mubr.f32.mxu0 0.0
        %5669 = vmatmul.mubr.f32.gmra.mrb[0].mxu0 %v5472
        %v5670 = vpop.f32.mrb[0].mxu0
        %v5671 = vadd.f32 0.0, %v5670
        %v5672 = vpop.f32.mrb[0].mxu0
        %v5673 = vadd.f32 0.0, %v5672
        %5674 = vmatprep.mubr.f32.mxu0 0.0
        %5675 = vmatmul.mubr.f32.gmra.mrb[0].mxu0 %v5473
        %v5676 = vpop.f32.mrb[0].mxu0
        %v5677 = vadd.f32 0.0, %v5676
        %v5678 = vpop.f32.mrb[0].mxu0
        %v5679 = vadd.f32 0.0, %v5678
        %5680 = vmatprep.mubr.f32.mxu0 0.0
        %5681 = vmatmul.mubr.f32.gmra.mrb[0].mxu0 %v5474
        %v5682 = vpop.f32.mrb[0].mxu0
        %v5683 = vadd.f32 0.0, %v5682
        %v5684 = vpop.f32.mrb[0].mxu0
        %v5685 = vadd.f32 0.0, %v5684
        %5686 = vmatprep.mubr.f32.mxu0 0.0
        %5687 = vmatmul.mubr.f32.gmra.mrb[0].mxu0 %v5475
        %v5688 = vpop.f32.mrb[0].mxu0
        %v5689 = vadd.f32 0.0, %v5688
        %v5690 = vpop.f32.mrb[0].mxu0
        %v5691 = vadd.f32 0.0, %v5690
        %5692 = vmatprep.mubr.f32.mxu0 0.0
        %5693 = vmatmul.mubr.f32.gmra.mrb[0].mxu0 %v5476
        %v5694 = vpop.f32.mrb[0].mxu0
        %v5695 = vadd.f32 0.0, %v5694
        %v5696 = vpop.f32.mrb[0].mxu0
        %v5697 = vadd.f32 0.0, %v5696
        %5698 = vdwg.mxu0
        %5699 = vmatprep.subr.mxu0 0.0
        %5700 = vmatpush1.msra.mxu0 %v5480
        %5701 = vmatprep.subr.mxu0 0.0
        %5702 = vmatpush1.msra.mxu0 %v5483
        %5703 = vmatprep.subr.mxu0 0.0
        %5704 = vmatpush1.msra.mxu0 %v5486
        %5705 = vmatprep.subr.mxu0 0.0
        %5706 = vmatpush1.msra.mxu0 %v5489
        %5707 = vmatprep.subr.mxu0 0.0
        %5708 = vmatpush1.msra.mxu0 %v5492
        %5709 = vmatprep.subr.mxu0 0.0
        %5710 = vmatpush1.msra.mxu0 %v5495
        %5711 = vmatprep.subr.mxu0 0.0
        %5712 = vmatpush1.msra.mxu0 %v5498
        %5713 = vmatprep.subr.mxu0 0.0
        %5714 = vmatpush1.msra.mxu0 %v5501
        %5715 = vmatprep.subr.mxu0 0.0
        %5716 = vmatpush1.msra.mxu0 %v5504
        %5717 = vmatprep.subr.mxu0 0.0
        %5718 = vmatpush1.msra.mxu0 %v5507
        %5719 = vmatprep.subr.mxu0 0.0
        %5720 = vmatpush1.msra.mxu0 %v5510
        %5721 = vmatprep.subr.mxu0 0.0
        %5722 = vmatpush1.msra.mxu0 %v5513
        %5723 = vmatprep.subr.mxu0 0.0
        %5724 = vmatpush1.msra.mxu0 %v5516
        %5725 = vmatprep.subr.mxu0 0.0
        %5726 = vmatpush1.msra.mxu0 %v5519
        %5727 = vmatprep.subr.mxu0 0.0
        %5728 = vmatpush1.msra.mxu0 %v5522
        %5729 = vmatprep.subr.mxu0 0.0
        %5730 = vmatpush1.msra.mxu0 %v5525
        %5731 = vmatprep.subr.mxu0 0.0
        %5732 = vmatpush1.msra.mxu0 0.0
        %5733 = vmatprep.subr.mxu0 0.0
        %5734 = vmatpush1.msra.mxu0 0.0
        %5735 = vmatprep.subr.mxu0 0.0
        %5736 = vmatpush1.msra.mxu0 0.0
        %5737 = vmatprep.subr.mxu0 0.0
        %5738 = vmatpush1.msra.mxu0 0.0
        %5739 = vmatprep.subr.mxu0 0.0
        %5740 = vmatpush1.msra.mxu0 0.0
        %5741 = vmatprep.subr.mxu0 0.0
        %5742 = vmatpush1.msra.mxu0 0.0
        %5743 = vmatprep.subr.mxu0 0.0
        %5744 = vmatpush1.msra.mxu0 0.0
        %5745 = vmatprep.subr.mxu0 0.0
        %5746 = vmatpush1.msra.mxu0 0.0
        %5747 = vmatprep.subr.mxu0 0.0
        %5748 = vmatpush1.msra.mxu0 0.0
        %5749 = vmatprep.subr.mxu0 0.0
        %5750 = vmatpush1.msra.mxu0 0.0
        %5751 = vmatprep.subr.mxu0 0.0
        %5752 = vmatpush1.msra.mxu0 0.0
        %5753 = vmatprep.subr.mxu0 0.0
        %5754 = vmatpush1.msra.mxu0 0.0
        %5755 = vmatprep.subr.mxu0 0.0
        %5756 = vmatpush1.msra.mxu0 0.0
        %5757 = vmatprep.subr.mxu0 0.0
        %5758 = vmatpush1.msra.mxu0 0.0
        %5759 = vmatprep.subr.mxu0 0.0
        %5760 = vmatpush1.msra.mxu0 0.0
        %5761 = vmatprep.subr.mxu0 0.0
        %5762 = vmatpush1.msra.mxu0 0.0
        %5763 = vmatprep.mubr.f32.mxu0 0.0
        %5764 = vmatmul.mubr.f32.gmra.mrb[0].mxu0 %v5459
        %v5765 = vpop.f32.mrb[0].mxu0
        %v5766 = vadd.f32 0.0, %v5765
        %v5767 = vpop.f32.mrb[0].mxu0
        %5768 = vmatprep.mubr.f32.mxu0 0.0
        %5769 = vmatmul.mubr.f32.gmra.mrb[0].mxu0 %v5460
        %v5770 = vpop.f32.mrb[0].mxu0
        %v5771 = vadd.f32 0.0, %v5770
        %v5772 = vpop.f32.mrb[0].mxu0
        %5773 = vmatprep.mubr.f32.mxu0 0.0
        %5774 = vmatmul.mubr.f32.gmra.mrb[0].mxu0 %v5461
        %v5775 = vpop.f32.mrb[0].mxu0
        %v5776 = vadd.f32 0.0, %v5775
        %v5777 = vpop.f32.mrb[0].mxu0
        %5778 = vmatprep.mubr.f32.mxu0 0.0
        %5779 = vmatmul.mubr.f32.gmra.mrb[0].mxu0 %v5462
        %v5780 = vpop.f32.mrb[0].mxu0
        %v5781 = vadd.f32 0.0, %v5780
        %v5782 = vpop.f32.mrb[0].mxu0
        %5783 = vmatprep.mubr.f32.mxu0 0.0
        %5784 = vmatmul.mubr.f32.gmra.mrb[0].mxu0 %v5463
        %v5785 = vpop.f32.mrb[0].mxu0
        %v5786 = vadd.f32 0.0, %v5785
        %v5787 = vpop.f32.mrb[0].mxu0
        %5788 = vmatprep.mubr.f32.mxu0 0.0
        %5789 = vmatmul.mubr.f32.gmra.mrb[0].mxu0 %v5464
        %v5790 = vpop.f32.mrb[0].mxu0
        %v5791 = vadd.f32 0.0, %v5790
        %v5792 = vpop.f32.mrb[0].mxu0
        %5793 = vmatprep.mubr.f32.mxu0 0.0
        %5794 = vmatmul.mubr.f32.gmra.mrb[0].mxu0 %v5465
        %v5795 = vpop.f32.mrb[0].mxu0
        %v5796 = vadd.f32 0.0, %v5795
        %v5797 = vpop.f32.mrb[0].mxu0
        %5798 = vmatprep.mubr.f32.mxu0 0.0
        %5799 = vmatmul.mubr.f32.gmra.mrb[0].mxu0 %v5466
        %v5800 = vpop.f32.mrb[0].mxu0
        %v5801 = vadd.f32 0.0, %v5800
        %v5802 = vpop.f32.mrb[0].mxu0
        %5803 = vmatprep.mubr.f32.mxu0 0.0
        %5804 = vmatmul.mubr.f32.gmra.mrb[0].mxu0 %v5467
        %v5805 = vpop.f32.mrb[0].mxu0
        %v5806 = vadd.f32 0.0, %v5805
        %v5807 = vpop.f32.mrb[0].mxu0
        %5808 = vmatprep.mubr.f32.mxu0 0.0
        %5809 = vmatmul.mubr.f32.gmra.mrb[0].mxu0 %v5468
        %v5810 = vpop.f32.mrb[0].mxu0
        %v5811 = vadd.f32 0.0, %v5810
        %v5812 = vpop.f32.mrb[0].mxu0
        %5813 = vmatprep.mubr.f32.mxu0 0.0
        %5814 = vmatmul.mubr.f32.gmra.mrb[0].mxu0 %v5469
        %v5815 = vpop.f32.mrb[0].mxu0
        %v5816 = vadd.f32 0.0, %v5815
        %v5817 = vpop.f32.mrb[0].mxu0
        %5818 = vmatprep.mubr.f32.mxu0 0.0
        %5819 = vmatmul.mubr.f32.gmra.mrb[0].mxu0 %v5470
        %v5820 = vpop.f32.mrb[0].mxu0
        %v5821 = vadd.f32 0.0, %v5820
        %v5822 = vpop.f32.mrb[0].mxu0
        %5823 = vmatprep.mubr.f32.mxu0 0.0
        %5824 = vmatmul.mubr.f32.gmra.mrb[0].mxu0 %v5471
        %v5825 = vpop.f32.mrb[0].mxu0
        %v5826 = vadd.f32 0.0, %v5825
        %v5827 = vpop.f32.mrb[0].mxu0
        %5828 = vmatprep.mubr.f32.mxu0 0.0
        %5829 = vmatmul.mubr.f32.gmra.mrb[0].mxu0 %v5472
        %v5830 = vpop.f32.mrb[0].mxu0
        %v5831 = vadd.f32 0.0, %v5830
        %v5832 = vpop.f32.mrb[0].mxu0
        %5833 = vmatprep.mubr.f32.mxu0 0.0
        %5834 = vmatmul.mubr.f32.gmra.mrb[0].mxu0 %v5473
        %v5835 = vpop.f32.mrb[0].mxu0
        %v5836 = vadd.f32 0.0, %v5835
        %v5837 = vpop.f32.mrb[0].mxu0
        %5838 = vmatprep.mubr.f32.mxu0 0.0
        %5839 = vmatmul.mubr.f32.gmra.mrb[0].mxu0 %v5474
        %v5840 = vpop.f32.mrb[0].mxu0
        %v5841 = vadd.f32 0.0, %v5840
        %v5842 = vpop.f32.mrb[0].mxu0
        %5843 = vmatprep.mubr.f32.mxu0 0.0
        %5844 = vmatmul.mubr.f32.gmra.mrb[0].mxu0 %v5475
        %v5845 = vpop.f32.mrb[0].mxu0
        %v5846 = vadd.f32 0.0, %v5845
        %v5847 = vpop.f32.mrb[0].mxu0
        %5848 = vmatprep.mubr.f32.mxu0 0.0
        %5849 = vmatmul.mubr.f32.gmra.mrb[0].mxu0 %v5476
        %v5850 = vpop.f32.mrb[0].mxu0
        %v5851 = vadd.f32 0.0, %v5850
        %v5852 = vpop.f32.mrb[0].mxu0
        %5853 = vdwg.mxu0
        %v5854 = vadd.f32 %v5405, %v5593
        %v5855 = vadd.f32 %v5406, %v5595
        %v5856 = vadd.f32 %v5407, %v5766
        %v5857 = vadd.f32 %v5408, %v5599
        %v5858 = vadd.f32 %v5409, %v5601
        %v5859 = vadd.f32 %v5410, %v5771
        %v5860 = vadd.f32 %v5411, %v5605
        %v5861 = vadd.f32 %v5412, %v5607
        %v5862 = vadd.f32 %v5413, %v5776
        %v5863 = vadd.f32 %v5414, %v5611
        %v5864 = vadd.f32 %v5415, %v5613
        %v5865 = vadd.f32 %v5416, %v5781
        %v5866 = vadd.f32 %v5417, %v5617
        %v5867 = vadd.f32 %v5418, %v5619
        %v5868 = vadd.f32 %v5419, %v5786
        %v5869 = vadd.f32 %v5420, %v5623
        %v5870 = vadd.f32 %v5421, %v5625
        %v5871 = vadd.f32 %v5422, %v5791
        %v5872 = vadd.f32 %v5423, %v5629
        %v5873 = vadd.f32 %v5424, %v5631
        %v5874 = vadd.f32 %v5425, %v5796
        %v5875 = vadd.f32 %v5426, %v5635
        %v5876 = vadd.f32 %v5427, %v5637
        %v5877 = vadd.f32 %v5428, %v5801
        %v5878 = vadd.f32 %v5429, %v5641
        %v5879 = vadd.f32 %v5430, %v5643
        %v5880 = vadd.f32 %v5431, %v5806
        %v5881 = vadd.f32 %v5432, %v5647
        %v5882 = vadd.f32 %v5433, %v5649
        %v5883 = vadd.f32 %v5434, %v5811
        %v5884 = vadd.f32 %v5435, %v5653
        %v5885 = vadd.f32 %v5436, %v5655
        %v5886 = vadd.f32 %v5437, %v5816
        %v5887 = vadd.f32 %v5438, %v5659
        %v5888 = vadd.f32 %v5439, %v5661
        %v5889 = vadd.f32 %v5440, %v5821
        %v5890 = vadd.f32 %v5441, %v5665
        %v5891 = vadd.f32 %v5442, %v5667
        %v5892 = vadd.f32 %v5443, %v5826
        %v5893 = vadd.f32 %v5444, %v5671
        %v5894 = vadd.f32 %v5445, %v5673
        %v5895 = vadd.f32 %v5446, %v5831
        %v5896 = vadd.f32 %v5447, %v5677
        %v5897 = vadd.f32 %v5448, %v5679
        %v5898 = vadd.f32 %v5449, %v5836
        %v5899 = vadd.f32 %v5450, %v5683
        %v5900 = vadd.f32 %v5451, %v5685
        %v5901 = vadd.f32 %v5452, %v5841
        %v5902 = vadd.f32 %v5453, %v5689
        %v5903 = vadd.f32 %v5454, %v5691
        %v5904 = vadd.f32 %v5455, %v5846
        %v5905 = vadd.f32 %v5456, %v5695
        %v5906 = vadd.f32 %v5457, %v5697
        %v5907 = vadd.f32 %v5458, %v5851
        %v5908 = vld [vmem:[#allocation3 + $0x24] sm:$0xff]
        %v5909 = vld [vmem:[#allocation3 + $0x2c] sm:$0xff]
        %v5910 = vld [vmem:[#allocation3 + $0x34] sm:$0xff]
        %v5911 = vld [vmem:[#allocation3 + $0x3c] sm:$0xff]
        %v5912 = vld [vmem:[#allocation3 + $0x44] sm:$0xff]
        %v5913 = vld [vmem:[#allocation3 + $0x4c] sm:$0xff]
        %v5914 = vld [vmem:[#allocation3 + $0x54] sm:$0xff]
        %v5915 = vld [vmem:[#allocation3 + $0x5c] sm:$0xff]
        %v5916 = vld [vmem:[#allocation3 + $0x64] sm:$0xff]
        %v5917 = vld [vmem:[#allocation3 + $0x6c] sm:$0xff]
        %v5918 = vld [vmem:[#allocation3 + $0x74] sm:$0xff]
        %v5919 = vld [vmem:[#allocation3 + $0x7c] sm:$0xff]
        %v5920 = vld [vmem:[#allocation3 + $0x84] sm:$0xff]
        %v5921 = vld [vmem:[#allocation3 + $0x8c] sm:$0xff]
        %v5922 = vld [vmem:[#allocation3 + $0x94] sm:$0xff]
        %v5923 = vld [vmem:[#allocation3 + $0x9c] sm:$0xff]
        %v5924 = vld [vmem:[#allocation3 + $0xa4] sm:$0xff]
        %v5925 = vld [vmem:[#allocation3 + $0xac] sm:$0xff]
        %s5926 = scalar_lea.vmem [#allocation13], 2304
        %v5927 = vld [vmem:[%s5926] sm:$0xff]
        %v5928 = vld [vmem:[%s5926 + $0x8] sm:$0xff]
        %v5929 = vld [vmem:[%s5926 + $0x10] sm:$0xff]
        %v5930 = vld [vmem:[%s5926 + $0x18] sm:$0xff]
        %v5931 = vld [vmem:[%s5926 + $0x20] sm:$0xff]
        %v5932 = vld [vmem:[%s5926 + $0x28] sm:$0xff]
        %v5933 = vld [vmem:[%s5926 + $0x30] sm:$0xff]
        %v5934 = vld [vmem:[%s5926 + $0x38] sm:$0xff]
        %v5935 = vld [vmem:[%s5926 + $0x40] sm:$0xff]
        %v5936 = vld [vmem:[%s5926 + $0x48] sm:$0xff]
        %v5937 = vld [vmem:[%s5926 + $0x50] sm:$0xff]
        %v5938 = vld [vmem:[%s5926 + $0x58] sm:$0xff]
        %v5939 = vld [vmem:[%s5926 + $0x60] sm:$0xff]
        %v5940 = vld [vmem:[%s5926 + $0x68] sm:$0xff]
        %v5941 = vld [vmem:[%s5926 + $0x70] sm:$0xff]
        %v5942 = vld [vmem:[%s5926 + $0x78] sm:$0xff]
        %v5943 = vld [vmem:[%s5926 + $0x80] sm:$0xff]
        %v5944 = vld [vmem:[%s5926 + $0x88] sm:$0xff]
        %v5945 = vld [vmem:[%s5926 + $0x90] sm:$0xff]
        %v5946 = vld [vmem:[%s5926 + $0x98] sm:$0xff]
        %v5947 = vld [vmem:[%s5926 + $0xa0] sm:$0xff]
        %v5948 = vld [vmem:[%s5926 + $0xa8] sm:$0xff]
        %v5949 = vld [vmem:[%s5926 + $0xb0] sm:$0xff]
        %v5950 = vld [vmem:[%s5926 + $0xb8] sm:$0xff]
        %v5951 = vld [vmem:[%s5926 + $0xc0] sm:$0xff]
        %v5952 = vld [vmem:[%s5926 + $0xc8] sm:$0xff]
        %v5953 = vld [vmem:[%s5926 + $0xd0] sm:$0xff]
        %v5954 = vld [vmem:[%s5926 + $0xd8] sm:$0xff]
        %v5955 = vld [vmem:[%s5926 + $0xe0] sm:$0xff]
        %v5956 = vld [vmem:[%s5926 + $0xe8] sm:$0xff]
        %v5957 = vld [vmem:[%s5926 + $0xf0] sm:$0xff]
        %v5958 = vld [vmem:[%s5926 + $0xf8] sm:$0xff]
        %v5959 = vld [vmem:[%s5926 + $0x100] sm:$0xff]
        %v5960 = vld [vmem:[%s5926 + $0x108] sm:$0xff]
        %v5961 = vld [vmem:[%s5926 + $0x110] sm:$0xff]
        %v5962 = vld [vmem:[%s5926 + $0x118] sm:$0xff]
        %v5963 = vld [vmem:[%s5926 + $0x120] sm:$0xff]
        %v5964 = vld [vmem:[%s5926 + $0x128] sm:$0xff]
        %v5965 = vld [vmem:[%s5926 + $0x130] sm:$0xff]
        %v5966 = vld [vmem:[%s5926 + $0x138] sm:$0xff]
        %v5967 = vld [vmem:[%s5926 + $0x140] sm:$0xff]
        %v5968 = vld [vmem:[%s5926 + $0x148] sm:$0xff]
        %v5969 = vld [vmem:[%s5926 + $0x150] sm:$0xff]
        %v5970 = vld [vmem:[%s5926 + $0x158] sm:$0xff]
        %v5971 = vld [vmem:[%s5926 + $0x160] sm:$0xff]
        %v5972 = vld [vmem:[%s5926 + $0x168] sm:$0xff]
        %v5973 = vld [vmem:[%s5926 + $0x170] sm:$0xff]
        %v5974 = vld [vmem:[%s5926 + $0x178] sm:$0xff]
        %5975 = vmatprep.subr.mxu0 %v5928
        %5976 = vmatpush1.msra.mxu0 %v5927
        %5977 = vmatprep.subr.mxu0 %v5931
        %5978 = vmatpush1.msra.mxu0 %v5930
        %5979 = vmatprep.subr.mxu0 %v5934
        %5980 = vmatpush1.msra.mxu0 %v5933
        %5981 = vmatprep.subr.mxu0 %v5937
        %5982 = vmatpush1.msra.mxu0 %v5936
        %5983 = vmatprep.subr.mxu0 %v5940
        %5984 = vmatpush1.msra.mxu0 %v5939
        %5985 = vmatprep.subr.mxu0 %v5943
        %5986 = vmatpush1.msra.mxu0 %v5942
        %5987 = vmatprep.subr.mxu0 %v5946
        %5988 = vmatpush1.msra.mxu0 %v5945
        %5989 = vmatprep.subr.mxu0 %v5949
        %5990 = vmatpush1.msra.mxu0 %v5948
        %5991 = vmatprep.subr.mxu0 %v5952
        %5992 = vmatpush1.msra.mxu0 %v5951
        %5993 = vmatprep.subr.mxu0 %v5955
        %5994 = vmatpush1.msra.mxu0 %v5954
        %5995 = vmatprep.subr.mxu0 %v5958
        %5996 = vmatpush1.msra.mxu0 %v5957
        %5997 = vmatprep.subr.mxu0 %v5961
        %5998 = vmatpush1.msra.mxu0 %v5960
        %5999 = vmatprep.subr.mxu0 %v5964
        %6000 = vmatpush1.msra.mxu0 %v5963
        %6001 = vmatprep.subr.mxu0 %v5967
        %6002 = vmatpush1.msra.mxu0 %v5966
        %6003 = vmatprep.subr.mxu0 %v5970
        %6004 = vmatpush1.msra.mxu0 %v5969
        %6005 = vmatprep.subr.mxu0 %v5973
        %6006 = vmatpush1.msra.mxu0 %v5972
        %6007 = vmatprep.subr.mxu0 0.0
        %6008 = vmatpush1.msra.mxu0 0.0
        %6009 = vmatprep.subr.mxu0 0.0
        %6010 = vmatpush1.msra.mxu0 0.0
        %6011 = vmatprep.subr.mxu0 0.0
        %6012 = vmatpush1.msra.mxu0 0.0
        %6013 = vmatprep.subr.mxu0 0.0
        %6014 = vmatpush1.msra.mxu0 0.0
        %6015 = vmatprep.subr.mxu0 0.0
        %6016 = vmatpush1.msra.mxu0 0.0
        %6017 = vmatprep.subr.mxu0 0.0
        %6018 = vmatpush1.msra.mxu0 0.0
        %6019 = vmatprep.subr.mxu0 0.0
        %6020 = vmatpush1.msra.mxu0 0.0
        %6021 = vmatprep.subr.mxu0 0.0
        %6022 = vmatpush1.msra.mxu0 0.0
        %6023 = vmatprep.subr.mxu0 0.0
        %6024 = vmatpush1.msra.mxu0 0.0
        %6025 = vmatprep.subr.mxu0 0.0
        %6026 = vmatpush1.msra.mxu0 0.0
        %6027 = vmatprep.subr.mxu0 0.0
        %6028 = vmatpush1.msra.mxu0 0.0
        %6029 = vmatprep.subr.mxu0 0.0
        %6030 = vmatpush1.msra.mxu0 0.0
        %6031 = vmatprep.subr.mxu0 0.0
        %6032 = vmatpush1.msra.mxu0 0.0
        %6033 = vmatprep.subr.mxu0 0.0
        %6034 = vmatpush1.msra.mxu0 0.0
        %6035 = vmatprep.subr.mxu0 0.0
        %6036 = vmatpush1.msra.mxu0 0.0
        %6037 = vmatprep.subr.mxu0 0.0
        %6038 = vmatpush1.msra.mxu0 0.0
        %6039 = vmatprep.mubr.f32.mxu0 0.0
        %6040 = vmatmul.mubr.f32.gmra.mrb[0].mxu0 %v5908
        %v6041 = vpop.f32.mrb[0].mxu0
        %v6042 = vadd.f32 0.0, %v6041
        %v6043 = vpop.f32.mrb[0].mxu0
        %v6044 = vadd.f32 0.0, %v6043
        %6045 = vmatprep.mubr.f32.mxu0 0.0
        %6046 = vmatmul.mubr.f32.gmra.mrb[0].mxu0 %v5909
        %v6047 = vpop.f32.mrb[0].mxu0
        %v6048 = vadd.f32 0.0, %v6047
        %v6049 = vpop.f32.mrb[0].mxu0
        %v6050 = vadd.f32 0.0, %v6049
        %6051 = vmatprep.mubr.f32.mxu0 0.0
        %6052 = vmatmul.mubr.f32.gmra.mrb[0].mxu0 %v5910
        %v6053 = vpop.f32.mrb[0].mxu0
        %v6054 = vadd.f32 0.0, %v6053
        %v6055 = vpop.f32.mrb[0].mxu0
        %v6056 = vadd.f32 0.0, %v6055
        %6057 = vmatprep.mubr.f32.mxu0 0.0
        %6058 = vmatmul.mubr.f32.gmra.mrb[0].mxu0 %v5911
        %v6059 = vpop.f32.mrb[0].mxu0
        %v6060 = vadd.f32 0.0, %v6059
        %v6061 = vpop.f32.mrb[0].mxu0
        %v6062 = vadd.f32 0.0, %v6061
        %6063 = vmatprep.mubr.f32.mxu0 0.0
        %6064 = vmatmul.mubr.f32.gmra.mrb[0].mxu0 %v5912
        %v6065 = vpop.f32.mrb[0].mxu0
        %v6066 = vadd.f32 0.0, %v6065
        %v6067 = vpop.f32.mrb[0].mxu0
        %v6068 = vadd.f32 0.0, %v6067
        %6069 = vmatprep.mubr.f32.mxu0 0.0
        %6070 = vmatmul.mubr.f32.gmra.mrb[0].mxu0 %v5913
        %v6071 = vpop.f32.mrb[0].mxu0
        %v6072 = vadd.f32 0.0, %v6071
        %v6073 = vpop.f32.mrb[0].mxu0
        %v6074 = vadd.f32 0.0, %v6073
        %6075 = vmatprep.mubr.f32.mxu0 0.0
        %6076 = vmatmul.mubr.f32.gmra.mrb[0].mxu0 %v5914
        %v6077 = vpop.f32.mrb[0].mxu0
        %v6078 = vadd.f32 0.0, %v6077
        %v6079 = vpop.f32.mrb[0].mxu0
        %v6080 = vadd.f32 0.0, %v6079
        %6081 = vmatprep.mubr.f32.mxu0 0.0
        %6082 = vmatmul.mubr.f32.gmra.mrb[0].mxu0 %v5915
        %v6083 = vpop.f32.mrb[0].mxu0
        %v6084 = vadd.f32 0.0, %v6083
        %v6085 = vpop.f32.mrb[0].mxu0
        %v6086 = vadd.f32 0.0, %v6085
        %6087 = vmatprep.mubr.f32.mxu0 0.0
        %6088 = vmatmul.mubr.f32.gmra.mrb[0].mxu0 %v5916
        %v6089 = vpop.f32.mrb[0].mxu0
        %v6090 = vadd.f32 0.0, %v6089
        %v6091 = vpop.f32.mrb[0].mxu0
        %v6092 = vadd.f32 0.0, %v6091
        %6093 = vmatprep.mubr.f32.mxu0 0.0
        %6094 = vmatmul.mubr.f32.gmra.mrb[0].mxu0 %v5917
        %v6095 = vpop.f32.mrb[0].mxu0
        %v6096 = vadd.f32 0.0, %v6095
        %v6097 = vpop.f32.mrb[0].mxu0
        %v6098 = vadd.f32 0.0, %v6097
        %6099 = vmatprep.mubr.f32.mxu0 0.0
        %6100 = vmatmul.mubr.f32.gmra.mrb[0].mxu0 %v5918
        %v6101 = vpop.f32.mrb[0].mxu0
        %v6102 = vadd.f32 0.0, %v6101
        %v6103 = vpop.f32.mrb[0].mxu0
        %v6104 = vadd.f32 0.0, %v6103
        %6105 = vmatprep.mubr.f32.mxu0 0.0
        %6106 = vmatmul.mubr.f32.gmra.mrb[0].mxu0 %v5919
        %v6107 = vpop.f32.mrb[0].mxu0
        %v6108 = vadd.f32 0.0, %v6107
        %v6109 = vpop.f32.mrb[0].mxu0
        %v6110 = vadd.f32 0.0, %v6109
        %6111 = vmatprep.mubr.f32.mxu0 0.0
        %6112 = vmatmul.mubr.f32.gmra.mrb[0].mxu0 %v5920
        %v6113 = vpop.f32.mrb[0].mxu0
        %v6114 = vadd.f32 0.0, %v6113
        %v6115 = vpop.f32.mrb[0].mxu0
        %v6116 = vadd.f32 0.0, %v6115
        %6117 = vmatprep.mubr.f32.mxu0 0.0
        %6118 = vmatmul.mubr.f32.gmra.mrb[0].mxu0 %v5921
        %v6119 = vpop.f32.mrb[0].mxu0
        %v6120 = vadd.f32 0.0, %v6119
        %v6121 = vpop.f32.mrb[0].mxu0
        %v6122 = vadd.f32 0.0, %v6121
        %6123 = vmatprep.mubr.f32.mxu0 0.0
        %6124 = vmatmul.mubr.f32.gmra.mrb[0].mxu0 %v5922
        %v6125 = vpop.f32.mrb[0].mxu0
        %v6126 = vadd.f32 0.0, %v6125
        %v6127 = vpop.f32.mrb[0].mxu0
        %v6128 = vadd.f32 0.0, %v6127
        %6129 = vmatprep.mubr.f32.mxu0 0.0
        %6130 = vmatmul.mubr.f32.gmra.mrb[0].mxu0 %v5923
        %v6131 = vpop.f32.mrb[0].mxu0
        %v6132 = vadd.f32 0.0, %v6131
        %v6133 = vpop.f32.mrb[0].mxu0
        %v6134 = vadd.f32 0.0, %v6133
        %6135 = vmatprep.mubr.f32.mxu0 0.0
        %6136 = vmatmul.mubr.f32.gmra.mrb[0].mxu0 %v5924
        %v6137 = vpop.f32.mrb[0].mxu0
        %v6138 = vadd.f32 0.0, %v6137
        %v6139 = vpop.f32.mrb[0].mxu0
        %v6140 = vadd.f32 0.0, %v6139
        %6141 = vmatprep.mubr.f32.mxu0 0.0
        %6142 = vmatmul.mubr.f32.gmra.mrb[0].mxu0 %v5925
        %v6143 = vpop.f32.mrb[0].mxu0
        %v6144 = vadd.f32 0.0, %v6143
        %v6145 = vpop.f32.mrb[0].mxu0
        %v6146 = vadd.f32 0.0, %v6145
        %6147 = vdwg.mxu0
        %6148 = vmatprep.subr.mxu0 0.0
        %6149 = vmatpush1.msra.mxu0 %v5929
        %6150 = vmatprep.subr.mxu0 0.0
        %6151 = vmatpush1.msra.mxu0 %v5932
        %6152 = vmatprep.subr.mxu0 0.0
        %6153 = vmatpush1.msra.mxu0 %v5935
        %6154 = vmatprep.subr.mxu0 0.0
        %6155 = vmatpush1.msra.mxu0 %v5938
        %6156 = vmatprep.subr.mxu0 0.0
        %6157 = vmatpush1.msra.mxu0 %v5941
        %6158 = vmatprep.subr.mxu0 0.0
        %6159 = vmatpush1.msra.mxu0 %v5944
        %6160 = vmatprep.subr.mxu0 0.0
        %6161 = vmatpush1.msra.mxu0 %v5947
        %6162 = vmatprep.subr.mxu0 0.0
        %6163 = vmatpush1.msra.mxu0 %v5950
        %6164 = vmatprep.subr.mxu0 0.0
        %6165 = vmatpush1.msra.mxu0 %v5953
        %6166 = vmatprep.subr.mxu0 0.0
        %6167 = vmatpush1.msra.mxu0 %v5956
        %6168 = vmatprep.subr.mxu0 0.0
        %6169 = vmatpush1.msra.mxu0 %v5959
        %6170 = vmatprep.subr.mxu0 0.0
        %6171 = vmatpush1.msra.mxu0 %v5962
        %6172 = vmatprep.subr.mxu0 0.0
        %6173 = vmatpush1.msra.mxu0 %v5965
        %6174 = vmatprep.subr.mxu0 0.0
        %6175 = vmatpush1.msra.mxu0 %v5968
        %6176 = vmatprep.subr.mxu0 0.0
        %6177 = vmatpush1.msra.mxu0 %v5971
        %6178 = vmatprep.subr.mxu0 0.0
        %6179 = vmatpush1.msra.mxu0 %v5974
        %6180 = vmatprep.subr.mxu0 0.0
        %6181 = vmatpush1.msra.mxu0 0.0
        %6182 = vmatprep.subr.mxu0 0.0
        %6183 = vmatpush1.msra.mxu0 0.0
        %6184 = vmatprep.subr.mxu0 0.0
        %6185 = vmatpush1.msra.mxu0 0.0
        %6186 = vmatprep.subr.mxu0 0.0
        %6187 = vmatpush1.msra.mxu0 0.0
        %6188 = vmatprep.subr.mxu0 0.0
        %6189 = vmatpush1.msra.mxu0 0.0
        %6190 = vmatprep.subr.mxu0 0.0
        %6191 = vmatpush1.msra.mxu0 0.0
        %6192 = vmatprep.subr.mxu0 0.0
        %6193 = vmatpush1.msra.mxu0 0.0
        %6194 = vmatprep.subr.mxu0 0.0
        %6195 = vmatpush1.msra.mxu0 0.0
        %6196 = vmatprep.subr.mxu0 0.0
        %6197 = vmatpush1.msra.mxu0 0.0
        %6198 = vmatprep.subr.mxu0 0.0
        %6199 = vmatpush1.msra.mxu0 0.0
        %6200 = vmatprep.subr.mxu0 0.0
        %6201 = vmatpush1.msra.mxu0 0.0
        %6202 = vmatprep.subr.mxu0 0.0
        %6203 = vmatpush1.msra.mxu0 0.0
        %6204 = vmatprep.subr.mxu0 0.0
        %6205 = vmatpush1.msra.mxu0 0.0
        %6206 = vmatprep.subr.mxu0 0.0
        %6207 = vmatpush1.msra.mxu0 0.0
        %6208 = vmatprep.subr.mxu0 0.0
        %6209 = vmatpush1.msra.mxu0 0.0
        %6210 = vmatprep.subr.mxu0 0.0
        %6211 = vmatpush1.msra.mxu0 0.0
        %6212 = vmatprep.mubr.f32.mxu0 0.0
        %6213 = vmatmul.mubr.f32.gmra.mrb[0].mxu0 %v5908
        %v6214 = vpop.f32.mrb[0].mxu0
        %v6215 = vadd.f32 0.0, %v6214
        %v6216 = vpop.f32.mrb[0].mxu0
        %6217 = vmatprep.mubr.f32.mxu0 0.0
        %6218 = vmatmul.mubr.f32.gmra.mrb[0].mxu0 %v5909
        %v6219 = vpop.f32.mrb[0].mxu0
        %v6220 = vadd.f32 0.0, %v6219
        %v6221 = vpop.f32.mrb[0].mxu0
        %6222 = vmatprep.mubr.f32.mxu0 0.0
        %6223 = vmatmul.mubr.f32.gmra.mrb[0].mxu0 %v5910
        %v6224 = vpop.f32.mrb[0].mxu0
        %v6225 = vadd.f32 0.0, %v6224
        %v6226 = vpop.f32.mrb[0].mxu0
        %6227 = vmatprep.mubr.f32.mxu0 0.0
        %6228 = vmatmul.mubr.f32.gmra.mrb[0].mxu0 %v5911
        %v6229 = vpop.f32.mrb[0].mxu0
        %v6230 = vadd.f32 0.0, %v6229
        %v6231 = vpop.f32.mrb[0].mxu0
        %6232 = vmatprep.mubr.f32.mxu0 0.0
        %6233 = vmatmul.mubr.f32.gmra.mrb[0].mxu0 %v5912
        %v6234 = vpop.f32.mrb[0].mxu0
        %v6235 = vadd.f32 0.0, %v6234
        %v6236 = vpop.f32.mrb[0].mxu0
        %6237 = vmatprep.mubr.f32.mxu0 0.0
        %6238 = vmatmul.mubr.f32.gmra.mrb[0].mxu0 %v5913
        %v6239 = vpop.f32.mrb[0].mxu0
        %v6240 = vadd.f32 0.0, %v6239
        %v6241 = vpop.f32.mrb[0].mxu0
        %6242 = vmatprep.mubr.f32.mxu0 0.0
        %6243 = vmatmul.mubr.f32.gmra.mrb[0].mxu0 %v5914
        %v6244 = vpop.f32.mrb[0].mxu0
        %v6245 = vadd.f32 0.0, %v6244
        %v6246 = vpop.f32.mrb[0].mxu0
        %6247 = vmatprep.mubr.f32.mxu0 0.0
        %6248 = vmatmul.mubr.f32.gmra.mrb[0].mxu0 %v5915
        %v6249 = vpop.f32.mrb[0].mxu0
        %v6250 = vadd.f32 0.0, %v6249
        %v6251 = vpop.f32.mrb[0].mxu0
        %6252 = vmatprep.mubr.f32.mxu0 0.0
        %6253 = vmatmul.mubr.f32.gmra.mrb[0].mxu0 %v5916
        %v6254 = vpop.f32.mrb[0].mxu0
        %v6255 = vadd.f32 0.0, %v6254
        %v6256 = vpop.f32.mrb[0].mxu0
        %6257 = vmatprep.mubr.f32.mxu0 0.0
        %6258 = vmatmul.mubr.f32.gmra.mrb[0].mxu0 %v5917
        %v6259 = vpop.f32.mrb[0].mxu0
        %v6260 = vadd.f32 0.0, %v6259
        %v6261 = vpop.f32.mrb[0].mxu0
        %6262 = vmatprep.mubr.f32.mxu0 0.0
        %6263 = vmatmul.mubr.f32.gmra.mrb[0].mxu0 %v5918
        %v6264 = vpop.f32.mrb[0].mxu0
        %v6265 = vadd.f32 0.0, %v6264
        %v6266 = vpop.f32.mrb[0].mxu0
        %6267 = vmatprep.mubr.f32.mxu0 0.0
        %6268 = vmatmul.mubr.f32.gmra.mrb[0].mxu0 %v5919
        %v6269 = vpop.f32.mrb[0].mxu0
        %v6270 = vadd.f32 0.0, %v6269
        %v6271 = vpop.f32.mrb[0].mxu0
        %6272 = vmatprep.mubr.f32.mxu0 0.0
        %6273 = vmatmul.mubr.f32.gmra.mrb[0].mxu0 %v5920
        %v6274 = vpop.f32.mrb[0].mxu0
        %v6275 = vadd.f32 0.0, %v6274
        %v6276 = vpop.f32.mrb[0].mxu0
        %6277 = vmatprep.mubr.f32.mxu0 0.0
        %6278 = vmatmul.mubr.f32.gmra.mrb[0].mxu0 %v5921
        %v6279 = vpop.f32.mrb[0].mxu0
        %v6280 = vadd.f32 0.0, %v6279
        %v6281 = vpop.f32.mrb[0].mxu0
        %6282 = vmatprep.mubr.f32.mxu0 0.0
        %6283 = vmatmul.mubr.f32.gmra.mrb[0].mxu0 %v5922
        %v6284 = vpop.f32.mrb[0].mxu0
        %v6285 = vadd.f32 0.0, %v6284
        %v6286 = vpop.f32.mrb[0].mxu0
        %6287 = vmatprep.mubr.f32.mxu0 0.0
        %6288 = vmatmul.mubr.f32.gmra.mrb[0].mxu0 %v5923
        %v6289 = vpop.f32.mrb[0].mxu0
        %v6290 = vadd.f32 0.0, %v6289
        %v6291 = vpop.f32.mrb[0].mxu0
        %6292 = vmatprep.mubr.f32.mxu0 0.0
        %6293 = vmatmul.mubr.f32.gmra.mrb[0].mxu0 %v5924
        %v6294 = vpop.f32.mrb[0].mxu0
        %v6295 = vadd.f32 0.0, %v6294
        %v6296 = vpop.f32.mrb[0].mxu0
        %6297 = vmatprep.mubr.f32.mxu0 0.0
        %6298 = vmatmul.mubr.f32.gmra.mrb[0].mxu0 %v5925
        %v6299 = vpop.f32.mrb[0].mxu0
        %v6300 = vadd.f32 0.0, %v6299
        %v6301 = vpop.f32.mrb[0].mxu0
        %6302 = vdwg.mxu0
        %v6303 = vadd.f32 %v5854, %v6042
        %v6304 = vadd.f32 %v5855, %v6044
        %v6305 = vadd.f32 %v5856, %v6215
        %v6306 = vadd.f32 %v5857, %v6048
        %v6307 = vadd.f32 %v5858, %v6050
        %v6308 = vadd.f32 %v5859, %v6220
        %v6309 = vadd.f32 %v5860, %v6054
        %v6310 = vadd.f32 %v5861, %v6056
        %v6311 = vadd.f32 %v5862, %v6225
        %v6312 = vadd.f32 %v5863, %v6060
        %v6313 = vadd.f32 %v5864, %v6062
        %v6314 = vadd.f32 %v5865, %v6230
        %v6315 = vadd.f32 %v5866, %v6066
        %v6316 = vadd.f32 %v5867, %v6068
        %v6317 = vadd.f32 %v5868, %v6235
        %v6318 = vadd.f32 %v5869, %v6072
        %v6319 = vadd.f32 %v5870, %v6074
        %v6320 = vadd.f32 %v5871, %v6240
        %v6321 = vadd.f32 %v5872, %v6078
        %v6322 = vadd.f32 %v5873, %v6080
        %v6323 = vadd.f32 %v5874, %v6245
        %v6324 = vadd.f32 %v5875, %v6084
        %v6325 = vadd.f32 %v5876, %v6086
        %v6326 = vadd.f32 %v5877, %v6250
        %v6327 = vadd.f32 %v5878, %v6090
        %v6328 = vadd.f32 %v5879, %v6092
        %v6329 = vadd.f32 %v5880, %v6255
        %v6330 = vadd.f32 %v5881, %v6096
        %v6331 = vadd.f32 %v5882, %v6098
        %v6332 = vadd.f32 %v5883, %v6260
        %v6333 = vadd.f32 %v5884, %v6102
        %v6334 = vadd.f32 %v5885, %v6104
        %v6335 = vadd.f32 %v5886, %v6265
        %v6336 = vadd.f32 %v5887, %v6108
        %v6337 = vadd.f32 %v5888, %v6110
        %v6338 = vadd.f32 %v5889, %v6270
        %v6339 = vadd.f32 %v5890, %v6114
        %v6340 = vadd.f32 %v5891, %v6116
        %v6341 = vadd.f32 %v5892, %v6275
        %v6342 = vadd.f32 %v5893, %v6120
        %v6343 = vadd.f32 %v5894, %v6122
        %v6344 = vadd.f32 %v5895, %v6280
        %v6345 = vadd.f32 %v5896, %v6126
        %v6346 = vadd.f32 %v5897, %v6128
        %v6347 = vadd.f32 %v5898, %v6285
        %v6348 = vadd.f32 %v5899, %v6132
        %v6349 = vadd.f32 %v5900, %v6134
        %v6350 = vadd.f32 %v5901, %v6290
        %v6351 = vadd.f32 %v5902, %v6138
        %v6352 = vadd.f32 %v5903, %v6140
        %v6353 = vadd.f32 %v5904, %v6295
        %v6354 = vadd.f32 %v5905, %v6144
        %v6355 = vadd.f32 %v5906, %v6146
        %v6356 = vadd.f32 %v5907, %v6300
        %v6357 = vld [vmem:[#allocation3 + $0x25] sm:$0xff]
        %v6358 = vld [vmem:[#allocation3 + $0x2d] sm:$0xff]
        %v6359 = vld [vmem:[#allocation3 + $0x35] sm:$0xff]
        %v6360 = vld [vmem:[#allocation3 + $0x3d] sm:$0xff]
        %v6361 = vld [vmem:[#allocation3 + $0x45] sm:$0xff]
        %v6362 = vld [vmem:[#allocation3 + $0x4d] sm:$0xff]
        %v6363 = vld [vmem:[#allocation3 + $0x55] sm:$0xff]
        %v6364 = vld [vmem:[#allocation3 + $0x5d] sm:$0xff]
        %v6365 = vld [vmem:[#allocation3 + $0x65] sm:$0xff]
        %v6366 = vld [vmem:[#allocation3 + $0x6d] sm:$0xff]
        %v6367 = vld [vmem:[#allocation3 + $0x75] sm:$0xff]
        %v6368 = vld [vmem:[#allocation3 + $0x7d] sm:$0xff]
        %v6369 = vld [vmem:[#allocation3 + $0x85] sm:$0xff]
        %v6370 = vld [vmem:[#allocation3 + $0x8d] sm:$0xff]
        %v6371 = vld [vmem:[#allocation3 + $0x95] sm:$0xff]
        %v6372 = vld [vmem:[#allocation3 + $0x9d] sm:$0xff]
        %v6373 = vld [vmem:[#allocation3 + $0xa5] sm:$0xff]
        %v6374 = vld [vmem:[#allocation3 + $0xad] sm:$0xff]
        %s6375 = scalar_lea.vmem [#allocation13], 2688
        %v6376 = vld [vmem:[%s6375] sm:$0xff]
        %v6377 = vld [vmem:[%s6375 + $0x8] sm:$0xff]
        %v6378 = vld [vmem:[%s6375 + $0x10] sm:$0xff]
        %v6379 = vld [vmem:[%s6375 + $0x18] sm:$0xff]
        %v6380 = vld [vmem:[%s6375 + $0x20] sm:$0xff]
        %v6381 = vld [vmem:[%s6375 + $0x28] sm:$0xff]
        %v6382 = vld [vmem:[%s6375 + $0x30] sm:$0xff]
        %v6383 = vld [vmem:[%s6375 + $0x38] sm:$0xff]
        %v6384 = vld [vmem:[%s6375 + $0x40] sm:$0xff]
        %v6385 = vld [vmem:[%s6375 + $0x48] sm:$0xff]
        %v6386 = vld [vmem:[%s6375 + $0x50] sm:$0xff]
        %v6387 = vld [vmem:[%s6375 + $0x58] sm:$0xff]
        %v6388 = vld [vmem:[%s6375 + $0x60] sm:$0xff]
        %v6389 = vld [vmem:[%s6375 + $0x68] sm:$0xff]
        %v6390 = vld [vmem:[%s6375 + $0x70] sm:$0xff]
        %v6391 = vld [vmem:[%s6375 + $0x78] sm:$0xff]
        %v6392 = vld [vmem:[%s6375 + $0x80] sm:$0xff]
        %v6393 = vld [vmem:[%s6375 + $0x88] sm:$0xff]
        %v6394 = vld [vmem:[%s6375 + $0x90] sm:$0xff]
        %v6395 = vld [vmem:[%s6375 + $0x98] sm:$0xff]
        %v6396 = vld [vmem:[%s6375 + $0xa0] sm:$0xff]
        %v6397 = vld [vmem:[%s6375 + $0xa8] sm:$0xff]
        %v6398 = vld [vmem:[%s6375 + $0xb0] sm:$0xff]
        %v6399 = vld [vmem:[%s6375 + $0xb8] sm:$0xff]
        %v6400 = vld [vmem:[%s6375 + $0xc0] sm:$0xff]
        %v6401 = vld [vmem:[%s6375 + $0xc8] sm:$0xff]
        %v6402 = vld [vmem:[%s6375 + $0xd0] sm:$0xff]
        %v6403 = vld [vmem:[%s6375 + $0xd8] sm:$0xff]
        %v6404 = vld [vmem:[%s6375 + $0xe0] sm:$0xff]
        %v6405 = vld [vmem:[%s6375 + $0xe8] sm:$0xff]
        %v6406 = vld [vmem:[%s6375 + $0xf0] sm:$0xff]
        %v6407 = vld [vmem:[%s6375 + $0xf8] sm:$0xff]
        %v6408 = vld [vmem:[%s6375 + $0x100] sm:$0xff]
        %v6409 = vld [vmem:[%s6375 + $0x108] sm:$0xff]
        %v6410 = vld [vmem:[%s6375 + $0x110] sm:$0xff]
        %v6411 = vld [vmem:[%s6375 + $0x118] sm:$0xff]
        %v6412 = vld [vmem:[%s6375 + $0x120] sm:$0xff]
        %v6413 = vld [vmem:[%s6375 + $0x128] sm:$0xff]
        %v6414 = vld [vmem:[%s6375 + $0x130] sm:$0xff]
        %v6415 = vld [vmem:[%s6375 + $0x138] sm:$0xff]
        %v6416 = vld [vmem:[%s6375 + $0x140] sm:$0xff]
        %v6417 = vld [vmem:[%s6375 + $0x148] sm:$0xff]
        %v6418 = vld [vmem:[%s6375 + $0x150] sm:$0xff]
        %v6419 = vld [vmem:[%s6375 + $0x158] sm:$0xff]
        %v6420 = vld [vmem:[%s6375 + $0x160] sm:$0xff]
        %v6421 = vld [vmem:[%s6375 + $0x168] sm:$0xff]
        %v6422 = vld [vmem:[%s6375 + $0x170] sm:$0xff]
        %v6423 = vld [vmem:[%s6375 + $0x178] sm:$0xff]
        %6424 = vmatprep.subr.mxu0 %v6377
        %6425 = vmatpush1.msra.mxu0 %v6376
        %6426 = vmatprep.subr.mxu0 %v6380
        %6427 = vmatpush1.msra.mxu0 %v6379
        %6428 = vmatprep.subr.mxu0 %v6383
        %6429 = vmatpush1.msra.mxu0 %v6382
        %6430 = vmatprep.subr.mxu0 %v6386
        %6431 = vmatpush1.msra.mxu0 %v6385
        %6432 = vmatprep.subr.mxu0 %v6389
        %6433 = vmatpush1.msra.mxu0 %v6388
        %6434 = vmatprep.subr.mxu0 %v6392
        %6435 = vmatpush1.msra.mxu0 %v6391
        %6436 = vmatprep.subr.mxu0 %v6395
        %6437 = vmatpush1.msra.mxu0 %v6394
        %6438 = vmatprep.subr.mxu0 %v6398
        %6439 = vmatpush1.msra.mxu0 %v6397
        %6440 = vmatprep.subr.mxu0 %v6401
        %6441 = vmatpush1.msra.mxu0 %v6400
        %6442 = vmatprep.subr.mxu0 %v6404
        %6443 = vmatpush1.msra.mxu0 %v6403
        %6444 = vmatprep.subr.mxu0 %v6407
        %6445 = vmatpush1.msra.mxu0 %v6406
        %6446 = vmatprep.subr.mxu0 %v6410
        %6447 = vmatpush1.msra.mxu0 %v6409
        %6448 = vmatprep.subr.mxu0 %v6413
        %6449 = vmatpush1.msra.mxu0 %v6412
        %6450 = vmatprep.subr.mxu0 %v6416
        %6451 = vmatpush1.msra.mxu0 %v6415
        %6452 = vmatprep.subr.mxu0 %v6419
        %6453 = vmatpush1.msra.mxu0 %v6418
        %6454 = vmatprep.subr.mxu0 %v6422
        %6455 = vmatpush1.msra.mxu0 %v6421
        %6456 = vmatprep.subr.mxu0 0.0
        %6457 = vmatpush1.msra.mxu0 0.0
        %6458 = vmatprep.subr.mxu0 0.0
        %6459 = vmatpush1.msra.mxu0 0.0
        %6460 = vmatprep.subr.mxu0 0.0
        %6461 = vmatpush1.msra.mxu0 0.0
        %6462 = vmatprep.subr.mxu0 0.0
        %6463 = vmatpush1.msra.mxu0 0.0
        %6464 = vmatprep.subr.mxu0 0.0
        %6465 = vmatpush1.msra.mxu0 0.0
        %6466 = vmatprep.subr.mxu0 0.0
        %6467 = vmatpush1.msra.mxu0 0.0
        %6468 = vmatprep.subr.mxu0 0.0
        %6469 = vmatpush1.msra.mxu0 0.0
        %6470 = vmatprep.subr.mxu0 0.0
        %6471 = vmatpush1.msra.mxu0 0.0
        %6472 = vmatprep.subr.mxu0 0.0
        %6473 = vmatpush1.msra.mxu0 0.0
        %6474 = vmatprep.subr.mxu0 0.0
        %6475 = vmatpush1.msra.mxu0 0.0
        %6476 = vmatprep.subr.mxu0 0.0
        %6477 = vmatpush1.msra.mxu0 0.0
        %6478 = vmatprep.subr.mxu0 0.0
        %6479 = vmatpush1.msra.mxu0 0.0
        %6480 = vmatprep.subr.mxu0 0.0
        %6481 = vmatpush1.msra.mxu0 0.0
        %6482 = vmatprep.subr.mxu0 0.0
        %6483 = vmatpush1.msra.mxu0 0.0
        %6484 = vmatprep.subr.mxu0 0.0
        %6485 = vmatpush1.msra.mxu0 0.0
        %6486 = vmatprep.subr.mxu0 0.0
        %6487 = vmatpush1.msra.mxu0 0.0
        %6488 = vmatprep.mubr.f32.mxu0 0.0
        %6489 = vmatmul.mubr.f32.gmra.mrb[0].mxu0 %v6357
        %v6490 = vpop.f32.mrb[0].mxu0
        %v6491 = vadd.f32 0.0, %v6490
        %v6492 = vpop.f32.mrb[0].mxu0
        %v6493 = vadd.f32 0.0, %v6492
        %6494 = vmatprep.mubr.f32.mxu0 0.0
        %6495 = vmatmul.mubr.f32.gmra.mrb[0].mxu0 %v6358
        %v6496 = vpop.f32.mrb[0].mxu0
        %v6497 = vadd.f32 0.0, %v6496
        %v6498 = vpop.f32.mrb[0].mxu0
        %v6499 = vadd.f32 0.0, %v6498
        %6500 = vmatprep.mubr.f32.mxu0 0.0
        %6501 = vmatmul.mubr.f32.gmra.mrb[0].mxu0 %v6359
        %v6502 = vpop.f32.mrb[0].mxu0
        %v6503 = vadd.f32 0.0, %v6502
        %v6504 = vpop.f32.mrb[0].mxu0
        %v6505 = vadd.f32 0.0, %v6504
        %6506 = vmatprep.mubr.f32.mxu0 0.0
        %6507 = vmatmul.mubr.f32.gmra.mrb[0].mxu0 %v6360
        %v6508 = vpop.f32.mrb[0].mxu0
        %v6509 = vadd.f32 0.0, %v6508
        %v6510 = vpop.f32.mrb[0].mxu0
        %v6511 = vadd.f32 0.0, %v6510
        %6512 = vmatprep.mubr.f32.mxu0 0.0
        %6513 = vmatmul.mubr.f32.gmra.mrb[0].mxu0 %v6361
        %v6514 = vpop.f32.mrb[0].mxu0
        %v6515 = vadd.f32 0.0, %v6514
        %v6516 = vpop.f32.mrb[0].mxu0
        %v6517 = vadd.f32 0.0, %v6516
        %6518 = vmatprep.mubr.f32.mxu0 0.0
        %6519 = vmatmul.mubr.f32.gmra.mrb[0].mxu0 %v6362
        %v6520 = vpop.f32.mrb[0].mxu0
        %v6521 = vadd.f32 0.0, %v6520
        %v6522 = vpop.f32.mrb[0].mxu0
        %v6523 = vadd.f32 0.0, %v6522
        %6524 = vmatprep.mubr.f32.mxu0 0.0
        %6525 = vmatmul.mubr.f32.gmra.mrb[0].mxu0 %v6363
        %v6526 = vpop.f32.mrb[0].mxu0
        %v6527 = vadd.f32 0.0, %v6526
        %v6528 = vpop.f32.mrb[0].mxu0
        %v6529 = vadd.f32 0.0, %v6528
        %6530 = vmatprep.mubr.f32.mxu0 0.0
        %6531 = vmatmul.mubr.f32.gmra.mrb[0].mxu0 %v6364
        %v6532 = vpop.f32.mrb[0].mxu0
        %v6533 = vadd.f32 0.0, %v6532
        %v6534 = vpop.f32.mrb[0].mxu0
        %v6535 = vadd.f32 0.0, %v6534
        %6536 = vmatprep.mubr.f32.mxu0 0.0
        %6537 = vmatmul.mubr.f32.gmra.mrb[0].mxu0 %v6365
        %v6538 = vpop.f32.mrb[0].mxu0
        %v6539 = vadd.f32 0.0, %v6538
        %v6540 = vpop.f32.mrb[0].mxu0
        %v6541 = vadd.f32 0.0, %v6540
        %6542 = vmatprep.mubr.f32.mxu0 0.0
        %6543 = vmatmul.mubr.f32.gmra.mrb[0].mxu0 %v6366
        %v6544 = vpop.f32.mrb[0].mxu0
        %v6545 = vadd.f32 0.0, %v6544
        %v6546 = vpop.f32.mrb[0].mxu0
        %v6547 = vadd.f32 0.0, %v6546
        %6548 = vmatprep.mubr.f32.mxu0 0.0
        %6549 = vmatmul.mubr.f32.gmra.mrb[0].mxu0 %v6367
        %v6550 = vpop.f32.mrb[0].mxu0
        %v6551 = vadd.f32 0.0, %v6550
        %v6552 = vpop.f32.mrb[0].mxu0
        %v6553 = vadd.f32 0.0, %v6552
        %6554 = vmatprep.mubr.f32.mxu0 0.0
        %6555 = vmatmul.mubr.f32.gmra.mrb[0].mxu0 %v6368
        %v6556 = vpop.f32.mrb[0].mxu0
        %v6557 = vadd.f32 0.0, %v6556
        %v6558 = vpop.f32.mrb[0].mxu0
        %v6559 = vadd.f32 0.0, %v6558
        %6560 = vmatprep.mubr.f32.mxu0 0.0
        %6561 = vmatmul.mubr.f32.gmra.mrb[0].mxu0 %v6369
        %v6562 = vpop.f32.mrb[0].mxu0
        %v6563 = vadd.f32 0.0, %v6562
        %v6564 = vpop.f32.mrb[0].mxu0
        %v6565 = vadd.f32 0.0, %v6564
        %6566 = vmatprep.mubr.f32.mxu0 0.0
        %6567 = vmatmul.mubr.f32.gmra.mrb[0].mxu0 %v6370
        %v6568 = vpop.f32.mrb[0].mxu0
        %v6569 = vadd.f32 0.0, %v6568
        %v6570 = vpop.f32.mrb[0].mxu0
        %v6571 = vadd.f32 0.0, %v6570
        %6572 = vmatprep.mubr.f32.mxu0 0.0
        %6573 = vmatmul.mubr.f32.gmra.mrb[0].mxu0 %v6371
        %v6574 = vpop.f32.mrb[0].mxu0
        %v6575 = vadd.f32 0.0, %v6574
        %v6576 = vpop.f32.mrb[0].mxu0
        %v6577 = vadd.f32 0.0, %v6576
        %6578 = vmatprep.mubr.f32.mxu0 0.0
        %6579 = vmatmul.mubr.f32.gmra.mrb[0].mxu0 %v6372
        %v6580 = vpop.f32.mrb[0].mxu0
        %v6581 = vadd.f32 0.0, %v6580
        %v6582 = vpop.f32.mrb[0].mxu0
        %v6583 = vadd.f32 0.0, %v6582
        %6584 = vmatprep.mubr.f32.mxu0 0.0
        %6585 = vmatmul.mubr.f32.gmra.mrb[0].mxu0 %v6373
        %v6586 = vpop.f32.mrb[0].mxu0
        %v6587 = vadd.f32 0.0, %v6586
        %v6588 = vpop.f32.mrb[0].mxu0
        %v6589 = vadd.f32 0.0, %v6588
        %6590 = vmatprep.mubr.f32.mxu0 0.0
        %6591 = vmatmul.mubr.f32.gmra.mrb[0].mxu0 %v6374
        %v6592 = vpop.f32.mrb[0].mxu0
        %v6593 = vadd.f32 0.0, %v6592
        %v6594 = vpop.f32.mrb[0].mxu0
        %v6595 = vadd.f32 0.0, %v6594
        %6596 = vdwg.mxu0
        %6597 = vmatprep.subr.mxu0 0.0
        %6598 = vmatpush1.msra.mxu0 %v6378
        %6599 = vmatprep.subr.mxu0 0.0
        %6600 = vmatpush1.msra.mxu0 %v6381
        %6601 = vmatprep.subr.mxu0 0.0
        %6602 = vmatpush1.msra.mxu0 %v6384
        %6603 = vmatprep.subr.mxu0 0.0
        %6604 = vmatpush1.msra.mxu0 %v6387
        %6605 = vmatprep.subr.mxu0 0.0
        %6606 = vmatpush1.msra.mxu0 %v6390
        %6607 = vmatprep.subr.mxu0 0.0
        %6608 = vmatpush1.msra.mxu0 %v6393
        %6609 = vmatprep.subr.mxu0 0.0
        %6610 = vmatpush1.msra.mxu0 %v6396
        %6611 = vmatprep.subr.mxu0 0.0
        %6612 = vmatpush1.msra.mxu0 %v6399
        %6613 = vmatprep.subr.mxu0 0.0
        %6614 = vmatpush1.msra.mxu0 %v6402
        %6615 = vmatprep.subr.mxu0 0.0
        %6616 = vmatpush1.msra.mxu0 %v6405
        %6617 = vmatprep.subr.mxu0 0.0
        %6618 = vmatpush1.msra.mxu0 %v6408
        %6619 = vmatprep.subr.mxu0 0.0
        %6620 = vmatpush1.msra.mxu0 %v6411
        %6621 = vmatprep.subr.mxu0 0.0
        %6622 = vmatpush1.msra.mxu0 %v6414
        %6623 = vmatprep.subr.mxu0 0.0
        %6624 = vmatpush1.msra.mxu0 %v6417
        %6625 = vmatprep.subr.mxu0 0.0
        %6626 = vmatpush1.msra.mxu0 %v6420
        %6627 = vmatprep.subr.mxu0 0.0
        %6628 = vmatpush1.msra.mxu0 %v6423
        %6629 = vmatprep.subr.mxu0 0.0
        %6630 = vmatpush1.msra.mxu0 0.0
        %6631 = vmatprep.subr.mxu0 0.0
        %6632 = vmatpush1.msra.mxu0 0.0
        %6633 = vmatprep.subr.mxu0 0.0
        %6634 = vmatpush1.msra.mxu0 0.0
        %6635 = vmatprep.subr.mxu0 0.0
        %6636 = vmatpush1.msra.mxu0 0.0
        %6637 = vmatprep.subr.mxu0 0.0
        %6638 = vmatpush1.msra.mxu0 0.0
        %6639 = vmatprep.subr.mxu0 0.0
        %6640 = vmatpush1.msra.mxu0 0.0
        %6641 = vmatprep.subr.mxu0 0.0
        %6642 = vmatpush1.msra.mxu0 0.0
        %6643 = vmatprep.subr.mxu0 0.0
        %6644 = vmatpush1.msra.mxu0 0.0
        %6645 = vmatprep.subr.mxu0 0.0
        %6646 = vmatpush1.msra.mxu0 0.0
        %6647 = vmatprep.subr.mxu0 0.0
        %6648 = vmatpush1.msra.mxu0 0.0
        %6649 = vmatprep.subr.mxu0 0.0
        %6650 = vmatpush1.msra.mxu0 0.0
        %6651 = vmatprep.subr.mxu0 0.0
        %6652 = vmatpush1.msra.mxu0 0.0
        %6653 = vmatprep.subr.mxu0 0.0
        %6654 = vmatpush1.msra.mxu0 0.0
        %6655 = vmatprep.subr.mxu0 0.0
        %6656 = vmatpush1.msra.mxu0 0.0
        %6657 = vmatprep.subr.mxu0 0.0
        %6658 = vmatpush1.msra.mxu0 0.0
        %6659 = vmatprep.subr.mxu0 0.0
        %6660 = vmatpush1.msra.mxu0 0.0
        %6661 = vmatprep.mubr.f32.mxu0 0.0
        %6662 = vmatmul.mubr.f32.gmra.mrb[0].mxu0 %v6357
        %v6663 = vpop.f32.mrb[0].mxu0
        %v6664 = vadd.f32 0.0, %v6663
        %v6665 = vpop.f32.mrb[0].mxu0
        %6666 = vmatprep.mubr.f32.mxu0 0.0
        %6667 = vmatmul.mubr.f32.gmra.mrb[0].mxu0 %v6358
        %v6668 = vpop.f32.mrb[0].mxu0
        %v6669 = vadd.f32 0.0, %v6668
        %v6670 = vpop.f32.mrb[0].mxu0
        %6671 = vmatprep.mubr.f32.mxu0 0.0
        %6672 = vmatmul.mubr.f32.gmra.mrb[0].mxu0 %v6359
        %v6673 = vpop.f32.mrb[0].mxu0
        %v6674 = vadd.f32 0.0, %v6673
        %v6675 = vpop.f32.mrb[0].mxu0
        %6676 = vmatprep.mubr.f32.mxu0 0.0
        %6677 = vmatmul.mubr.f32.gmra.mrb[0].mxu0 %v6360
        %v6678 = vpop.f32.mrb[0].mxu0
        %v6679 = vadd.f32 0.0, %v6678
        %v6680 = vpop.f32.mrb[0].mxu0
        %6681 = vmatprep.mubr.f32.mxu0 0.0
        %6682 = vmatmul.mubr.f32.gmra.mrb[0].mxu0 %v6361
        %v6683 = vpop.f32.mrb[0].mxu0
        %v6684 = vadd.f32 0.0, %v6683
        %v6685 = vpop.f32.mrb[0].mxu0
        %6686 = vmatprep.mubr.f32.mxu0 0.0
        %6687 = vmatmul.mubr.f32.gmra.mrb[0].mxu0 %v6362
        %v6688 = vpop.f32.mrb[0].mxu0
        %v6689 = vadd.f32 0.0, %v6688
        %v6690 = vpop.f32.mrb[0].mxu0
        %6691 = vmatprep.mubr.f32.mxu0 0.0
        %6692 = vmatmul.mubr.f32.gmra.mrb[0].mxu0 %v6363
        %v6693 = vpop.f32.mrb[0].mxu0
        %v6694 = vadd.f32 0.0, %v6693
        %v6695 = vpop.f32.mrb[0].mxu0
        %6696 = vmatprep.mubr.f32.mxu0 0.0
        %6697 = vmatmul.mubr.f32.gmra.mrb[0].mxu0 %v6364
        %v6698 = vpop.f32.mrb[0].mxu0
        %v6699 = vadd.f32 0.0, %v6698
        %v6700 = vpop.f32.mrb[0].mxu0
        %6701 = vmatprep.mubr.f32.mxu0 0.0
        %6702 = vmatmul.mubr.f32.gmra.mrb[0].mxu0 %v6365
        %v6703 = vpop.f32.mrb[0].mxu0
        %v6704 = vadd.f32 0.0, %v6703
        %v6705 = vpop.f32.mrb[0].mxu0
        %6706 = vmatprep.mubr.f32.mxu0 0.0
        %6707 = vmatmul.mubr.f32.gmra.mrb[0].mxu0 %v6366
        %v6708 = vpop.f32.mrb[0].mxu0
        %v6709 = vadd.f32 0.0, %v6708
        %v6710 = vpop.f32.mrb[0].mxu0
        %6711 = vmatprep.mubr.f32.mxu0 0.0
        %6712 = vmatmul.mubr.f32.gmra.mrb[0].mxu0 %v6367
        %v6713 = vpop.f32.mrb[0].mxu0
        %v6714 = vadd.f32 0.0, %v6713
        %v6715 = vpop.f32.mrb[0].mxu0
        %6716 = vmatprep.mubr.f32.mxu0 0.0
        %6717 = vmatmul.mubr.f32.gmra.mrb[0].mxu0 %v6368
        %v6718 = vpop.f32.mrb[0].mxu0
        %v6719 = vadd.f32 0.0, %v6718
        %v6720 = vpop.f32.mrb[0].mxu0
        %6721 = vmatprep.mubr.f32.mxu0 0.0
        %6722 = vmatmul.mubr.f32.gmra.mrb[0].mxu0 %v6369
        %v6723 = vpop.f32.mrb[0].mxu0
        %v6724 = vadd.f32 0.0, %v6723
        %v6725 = vpop.f32.mrb[0].mxu0
        %6726 = vmatprep.mubr.f32.mxu0 0.0
        %6727 = vmatmul.mubr.f32.gmra.mrb[0].mxu0 %v6370
        %v6728 = vpop.f32.mrb[0].mxu0
        %v6729 = vadd.f32 0.0, %v6728
        %v6730 = vpop.f32.mrb[0].mxu0
        %6731 = vmatprep.mubr.f32.mxu0 0.0
        %6732 = vmatmul.mubr.f32.gmra.mrb[0].mxu0 %v6371
        %v6733 = vpop.f32.mrb[0].mxu0
        %v6734 = vadd.f32 0.0, %v6733
        %v6735 = vpop.f32.mrb[0].mxu0
        %6736 = vmatprep.mubr.f32.mxu0 0.0
        %6737 = vmatmul.mubr.f32.gmra.mrb[0].mxu0 %v6372
        %v6738 = vpop.f32.mrb[0].mxu0
        %v6739 = vadd.f32 0.0, %v6738
        %v6740 = vpop.f32.mrb[0].mxu0
        %6741 = vmatprep.mubr.f32.mxu0 0.0
        %6742 = vmatmul.mubr.f32.gmra.mrb[0].mxu0 %v6373
        %v6743 = vpop.f32.mrb[0].mxu0
        %v6744 = vadd.f32 0.0, %v6743
        %v6745 = vpop.f32.mrb[0].mxu0
        %6746 = vmatprep.mubr.f32.mxu0 0.0
        %6747 = vmatmul.mubr.f32.gmra.mrb[0].mxu0 %v6374
        %v6748 = vpop.f32.mrb[0].mxu0
        %v6749 = vadd.f32 0.0, %v6748
        %v6750 = vpop.f32.mrb[0].mxu0
        %6751 = vdwg.mxu0
        %v6752 = vadd.f32 %v6303, %v6491
        %v6753 = vadd.f32 %v6304, %v6493
        %v6754 = vadd.f32 %v6305, %v6664
        %v6755 = vadd.f32 %v6306, %v6497
        %v6756 = vadd.f32 %v6307, %v6499
        %v6757 = vadd.f32 %v6308, %v6669
        %v6758 = vadd.f32 %v6309, %v6503
        %v6759 = vadd.f32 %v6310, %v6505
        %v6760 = vadd.f32 %v6311, %v6674
        %v6761 = vadd.f32 %v6312, %v6509
        %v6762 = vadd.f32 %v6313, %v6511
        %v6763 = vadd.f32 %v6314, %v6679
        %v6764 = vadd.f32 %v6315, %v6515
        %v6765 = vadd.f32 %v6316, %v6517
        %v6766 = vadd.f32 %v6317, %v6684
        %v6767 = vadd.f32 %v6318, %v6521
        %v6768 = vadd.f32 %v6319, %v6523
        %v6769 = vadd.f32 %v6320, %v6689
        %v6770 = vadd.f32 %v6321, %v6527
        %v6771 = vadd.f32 %v6322, %v6529
        %v6772 = vadd.f32 %v6323, %v6694
        %v6773 = vadd.f32 %v6324, %v6533
        %v6774 = vadd.f32 %v6325, %v6535
        %v6775 = vadd.f32 %v6326, %v6699
        %v6776 = vadd.f32 %v6327, %v6539
        %v6777 = vadd.f32 %v6328, %v6541
        %v6778 = vadd.f32 %v6329, %v6704
        %v6779 = vadd.f32 %v6330, %v6545
        %v6780 = vadd.f32 %v6331, %v6547
        %v6781 = vadd.f32 %v6332, %v6709
        %v6782 = vadd.f32 %v6333, %v6551
        %v6783 = vadd.f32 %v6334, %v6553
        %v6784 = vadd.f32 %v6335, %v6714
        %v6785 = vadd.f32 %v6336, %v6557
        %v6786 = vadd.f32 %v6337, %v6559
        %v6787 = vadd.f32 %v6338, %v6719
        %v6788 = vadd.f32 %v6339, %v6563
        %v6789 = vadd.f32 %v6340, %v6565
        %v6790 = vadd.f32 %v6341, %v6724
        %v6791 = vadd.f32 %v6342, %v6569
        %v6792 = vadd.f32 %v6343, %v6571
        %v6793 = vadd.f32 %v6344, %v6729
        %v6794 = vadd.f32 %v6345, %v6575
        %v6795 = vadd.f32 %v6346, %v6577
        %v6796 = vadd.f32 %v6347, %v6734
        %v6797 = vadd.f32 %v6348, %v6581
        %v6798 = vadd.f32 %v6349, %v6583
        %v6799 = vadd.f32 %v6350, %v6739
        %v6800 = vadd.f32 %v6351, %v6587
        %v6801 = vadd.f32 %v6352, %v6589
        %v6802 = vadd.f32 %v6353, %v6744
        %v6803 = vadd.f32 %v6354, %v6593
        %v6804 = vadd.f32 %v6355, %v6595
        %v6805 = vadd.f32 %v6356, %v6749
        %v6806 = vld [vmem:[#allocation3 + $0x26] sm:$0xff]
        %v6807 = vld [vmem:[#allocation3 + $0x2e] sm:$0xff]
        %v6808 = vld [vmem:[#allocation3 + $0x36] sm:$0xff]
        %v6809 = vld [vmem:[#allocation3 + $0x3e] sm:$0xff]
        %v6810 = vld [vmem:[#allocation3 + $0x46] sm:$0xff]
        %v6811 = vld [vmem:[#allocation3 + $0x4e] sm:$0xff]
        %v6812 = vld [vmem:[#allocation3 + $0x56] sm:$0xff]
        %v6813 = vld [vmem:[#allocation3 + $0x5e] sm:$0xff]
        %v6814 = vld [vmem:[#allocation3 + $0x66] sm:$0xff]
        %v6815 = vld [vmem:[#allocation3 + $0x6e] sm:$0xff]
        %v6816 = vld [vmem:[#allocation3 + $0x76] sm:$0xff]
        %v6817 = vld [vmem:[#allocation3 + $0x7e] sm:$0xff]
        %v6818 = vld [vmem:[#allocation3 + $0x86] sm:$0xff]
        %v6819 = vld [vmem:[#allocation3 + $0x8e] sm:$0xff]
        %v6820 = vld [vmem:[#allocation3 + $0x96] sm:$0xff]
        %v6821 = vld [vmem:[#allocation3 + $0x9e] sm:$0xff]
        %v6822 = vld [vmem:[#allocation3 + $0xa6] sm:$0xff]
        %v6823 = vld [vmem:[#allocation3 + $0xae] sm:$0xff]
        %s6824 = scalar_lea.vmem [#allocation13], 3072
        %v6825 = vld [vmem:[%s6824] sm:$0xff]
        %v6826 = vld [vmem:[%s6824 + $0x8] sm:$0xff]
        %v6827 = vld [vmem:[%s6824 + $0x10] sm:$0xff]
        %v6828 = vld [vmem:[%s6824 + $0x18] sm:$0xff]
        %v6829 = vld [vmem:[%s6824 + $0x20] sm:$0xff]
        %v6830 = vld [vmem:[%s6824 + $0x28] sm:$0xff]
        %v6831 = vld [vmem:[%s6824 + $0x30] sm:$0xff]
        %v6832 = vld [vmem:[%s6824 + $0x38] sm:$0xff]
        %v6833 = vld [vmem:[%s6824 + $0x40] sm:$0xff]
        %v6834 = vld [vmem:[%s6824 + $0x48] sm:$0xff]
        %v6835 = vld [vmem:[%s6824 + $0x50] sm:$0xff]
        %v6836 = vld [vmem:[%s6824 + $0x58] sm:$0xff]
        %v6837 = vld [vmem:[%s6824 + $0x60] sm:$0xff]
        %v6838 = vld [vmem:[%s6824 + $0x68] sm:$0xff]
        %v6839 = vld [vmem:[%s6824 + $0x70] sm:$0xff]
        %v6840 = vld [vmem:[%s6824 + $0x78] sm:$0xff]
        %v6841 = vld [vmem:[%s6824 + $0x80] sm:$0xff]
        %v6842 = vld [vmem:[%s6824 + $0x88] sm:$0xff]
        %v6843 = vld [vmem:[%s6824 + $0x90] sm:$0xff]
        %v6844 = vld [vmem:[%s6824 + $0x98] sm:$0xff]
        %v6845 = vld [vmem:[%s6824 + $0xa0] sm:$0xff]
        %v6846 = vld [vmem:[%s6824 + $0xa8] sm:$0xff]
        %v6847 = vld [vmem:[%s6824 + $0xb0] sm:$0xff]
        %v6848 = vld [vmem:[%s6824 + $0xb8] sm:$0xff]
        %v6849 = vld [vmem:[%s6824 + $0xc0] sm:$0xff]
        %v6850 = vld [vmem:[%s6824 + $0xc8] sm:$0xff]
        %v6851 = vld [vmem:[%s6824 + $0xd0] sm:$0xff]
        %v6852 = vld [vmem:[%s6824 + $0xd8] sm:$0xff]
        %v6853 = vld [vmem:[%s6824 + $0xe0] sm:$0xff]
        %v6854 = vld [vmem:[%s6824 + $0xe8] sm:$0xff]
        %v6855 = vld [vmem:[%s6824 + $0xf0] sm:$0xff]
        %v6856 = vld [vmem:[%s6824 + $0xf8] sm:$0xff]
        %v6857 = vld [vmem:[%s6824 + $0x100] sm:$0xff]
        %v6858 = vld [vmem:[%s6824 + $0x108] sm:$0xff]
        %v6859 = vld [vmem:[%s6824 + $0x110] sm:$0xff]
        %v6860 = vld [vmem:[%s6824 + $0x118] sm:$0xff]
        %v6861 = vld [vmem:[%s6824 + $0x120] sm:$0xff]
        %v6862 = vld [vmem:[%s6824 + $0x128] sm:$0xff]
        %v6863 = vld [vmem:[%s6824 + $0x130] sm:$0xff]
        %v6864 = vld [vmem:[%s6824 + $0x138] sm:$0xff]
        %v6865 = vld [vmem:[%s6824 + $0x140] sm:$0xff]
        %v6866 = vld [vmem:[%s6824 + $0x148] sm:$0xff]
        %v6867 = vld [vmem:[%s6824 + $0x150] sm:$0xff]
        %v6868 = vld [vmem:[%s6824 + $0x158] sm:$0xff]
        %v6869 = vld [vmem:[%s6824 + $0x160] sm:$0xff]
        %v6870 = vld [vmem:[%s6824 + $0x168] sm:$0xff]
        %v6871 = vld [vmem:[%s6824 + $0x170] sm:$0xff]
        %v6872 = vld [vmem:[%s6824 + $0x178] sm:$0xff]
        %6873 = vmatprep.subr.mxu0 %v6826
        %6874 = vmatpush1.msra.mxu0 %v6825
        %6875 = vmatprep.subr.mxu0 %v6829
        %6876 = vmatpush1.msra.mxu0 %v6828
        %6877 = vmatprep.subr.mxu0 %v6832
        %6878 = vmatpush1.msra.mxu0 %v6831
        %6879 = vmatprep.subr.mxu0 %v6835
        %6880 = vmatpush1.msra.mxu0 %v6834
        %6881 = vmatprep.subr.mxu0 %v6838
        %6882 = vmatpush1.msra.mxu0 %v6837
        %6883 = vmatprep.subr.mxu0 %v6841
        %6884 = vmatpush1.msra.mxu0 %v6840
        %6885 = vmatprep.subr.mxu0 %v6844
        %6886 = vmatpush1.msra.mxu0 %v6843
        %6887 = vmatprep.subr.mxu0 %v6847
        %6888 = vmatpush1.msra.mxu0 %v6846
        %6889 = vmatprep.subr.mxu0 %v6850
        %6890 = vmatpush1.msra.mxu0 %v6849
        %6891 = vmatprep.subr.mxu0 %v6853
        %6892 = vmatpush1.msra.mxu0 %v6852
        %6893 = vmatprep.subr.mxu0 %v6856
        %6894 = vmatpush1.msra.mxu0 %v6855
        %6895 = vmatprep.subr.mxu0 %v6859
        %6896 = vmatpush1.msra.mxu0 %v6858
        %6897 = vmatprep.subr.mxu0 %v6862
        %6898 = vmatpush1.msra.mxu0 %v6861
        %6899 = vmatprep.subr.mxu0 %v6865
        %6900 = vmatpush1.msra.mxu0 %v6864
        %6901 = vmatprep.subr.mxu0 %v6868
        %6902 = vmatpush1.msra.mxu0 %v6867
        %6903 = vmatprep.subr.mxu0 %v6871
        %6904 = vmatpush1.msra.mxu0 %v6870
        %6905 = vmatprep.subr.mxu0 0.0
        %6906 = vmatpush1.msra.mxu0 0.0
        %6907 = vmatprep.subr.mxu0 0.0
        %6908 = vmatpush1.msra.mxu0 0.0
        %6909 = vmatprep.subr.mxu0 0.0
        %6910 = vmatpush1.msra.mxu0 0.0
        %6911 = vmatprep.subr.mxu0 0.0
        %6912 = vmatpush1.msra.mxu0 0.0
        %6913 = vmatprep.subr.mxu0 0.0
        %6914 = vmatpush1.msra.mxu0 0.0
        %6915 = vmatprep.subr.mxu0 0.0
        %6916 = vmatpush1.msra.mxu0 0.0
        %6917 = vmatprep.subr.mxu0 0.0
        %6918 = vmatpush1.msra.mxu0 0.0
        %6919 = vmatprep.subr.mxu0 0.0
        %6920 = vmatpush1.msra.mxu0 0.0
        %6921 = vmatprep.subr.mxu0 0.0
        %6922 = vmatpush1.msra.mxu0 0.0
        %6923 = vmatprep.subr.mxu0 0.0
        %6924 = vmatpush1.msra.mxu0 0.0
        %6925 = vmatprep.subr.mxu0 0.0
        %6926 = vmatpush1.msra.mxu0 0.0
        %6927 = vmatprep.subr.mxu0 0.0
        %6928 = vmatpush1.msra.mxu0 0.0
        %6929 = vmatprep.subr.mxu0 0.0
        %6930 = vmatpush1.msra.mxu0 0.0
        %6931 = vmatprep.subr.mxu0 0.0
        %6932 = vmatpush1.msra.mxu0 0.0
        %6933 = vmatprep.subr.mxu0 0.0
        %6934 = vmatpush1.msra.mxu0 0.0
        %6935 = vmatprep.subr.mxu0 0.0
        %6936 = vmatpush1.msra.mxu0 0.0
        %6937 = vmatprep.mubr.f32.mxu0 0.0
        %6938 = vmatmul.mubr.f32.gmra.mrb[0].mxu0 %v6806
        %v6939 = vpop.f32.mrb[0].mxu0
        %v6940 = vadd.f32 0.0, %v6939
        %v6941 = vpop.f32.mrb[0].mxu0
        %v6942 = vadd.f32 0.0, %v6941
        %6943 = vmatprep.mubr.f32.mxu0 0.0
        %6944 = vmatmul.mubr.f32.gmra.mrb[0].mxu0 %v6807
        %v6945 = vpop.f32.mrb[0].mxu0
        %v6946 = vadd.f32 0.0, %v6945
        %v6947 = vpop.f32.mrb[0].mxu0
        %v6948 = vadd.f32 0.0, %v6947
        %6949 = vmatprep.mubr.f32.mxu0 0.0
        %6950 = vmatmul.mubr.f32.gmra.mrb[0].mxu0 %v6808
        %v6951 = vpop.f32.mrb[0].mxu0
        %v6952 = vadd.f32 0.0, %v6951
        %v6953 = vpop.f32.mrb[0].mxu0
        %v6954 = vadd.f32 0.0, %v6953
        %6955 = vmatprep.mubr.f32.mxu0 0.0
        %6956 = vmatmul.mubr.f32.gmra.mrb[0].mxu0 %v6809
        %v6957 = vpop.f32.mrb[0].mxu0
        %v6958 = vadd.f32 0.0, %v6957
        %v6959 = vpop.f32.mrb[0].mxu0
        %v6960 = vadd.f32 0.0, %v6959
        %6961 = vmatprep.mubr.f32.mxu0 0.0
        %6962 = vmatmul.mubr.f32.gmra.mrb[0].mxu0 %v6810
        %v6963 = vpop.f32.mrb[0].mxu0
        %v6964 = vadd.f32 0.0, %v6963
        %v6965 = vpop.f32.mrb[0].mxu0
        %v6966 = vadd.f32 0.0, %v6965
        %6967 = vmatprep.mubr.f32.mxu0 0.0
        %6968 = vmatmul.mubr.f32.gmra.mrb[0].mxu0 %v6811
        %v6969 = vpop.f32.mrb[0].mxu0
        %v6970 = vadd.f32 0.0, %v6969
        %v6971 = vpop.f32.mrb[0].mxu0
        %v6972 = vadd.f32 0.0, %v6971
        %6973 = vmatprep.mubr.f32.mxu0 0.0
        %6974 = vmatmul.mubr.f32.gmra.mrb[0].mxu0 %v6812
        %v6975 = vpop.f32.mrb[0].mxu0
        %v6976 = vadd.f32 0.0, %v6975
        %v6977 = vpop.f32.mrb[0].mxu0
        %v6978 = vadd.f32 0.0, %v6977
        %6979 = vmatprep.mubr.f32.mxu0 0.0
        %6980 = vmatmul.mubr.f32.gmra.mrb[0].mxu0 %v6813
        %v6981 = vpop.f32.mrb[0].mxu0
        %v6982 = vadd.f32 0.0, %v6981
        %v6983 = vpop.f32.mrb[0].mxu0
        %v6984 = vadd.f32 0.0, %v6983
        %6985 = vmatprep.mubr.f32.mxu0 0.0
        %6986 = vmatmul.mubr.f32.gmra.mrb[0].mxu0 %v6814
        %v6987 = vpop.f32.mrb[0].mxu0
        %v6988 = vadd.f32 0.0, %v6987
        %v6989 = vpop.f32.mrb[0].mxu0
        %v6990 = vadd.f32 0.0, %v6989
        %6991 = vmatprep.mubr.f32.mxu0 0.0
        %6992 = vmatmul.mubr.f32.gmra.mrb[0].mxu0 %v6815
        %v6993 = vpop.f32.mrb[0].mxu0
        %v6994 = vadd.f32 0.0, %v6993
        %v6995 = vpop.f32.mrb[0].mxu0
        %v6996 = vadd.f32 0.0, %v6995
        %6997 = vmatprep.mubr.f32.mxu0 0.0
        %6998 = vmatmul.mubr.f32.gmra.mrb[0].mxu0 %v6816
        %v6999 = vpop.f32.mrb[0].mxu0
        %v7000 = vadd.f32 0.0, %v6999
        %v7001 = vpop.f32.mrb[0].mxu0
        %v7002 = vadd.f32 0.0, %v7001
        %7003 = vmatprep.mubr.f32.mxu0 0.0
        %7004 = vmatmul.mubr.f32.gmra.mrb[0].mxu0 %v6817
        %v7005 = vpop.f32.mrb[0].mxu0
        %v7006 = vadd.f32 0.0, %v7005
        %v7007 = vpop.f32.mrb[0].mxu0
        %v7008 = vadd.f32 0.0, %v7007
        %7009 = vmatprep.mubr.f32.mxu0 0.0
        %7010 = vmatmul.mubr.f32.gmra.mrb[0].mxu0 %v6818
        %v7011 = vpop.f32.mrb[0].mxu0
        %v7012 = vadd.f32 0.0, %v7011
        %v7013 = vpop.f32.mrb[0].mxu0
        %v7014 = vadd.f32 0.0, %v7013
        %7015 = vmatprep.mubr.f32.mxu0 0.0
        %7016 = vmatmul.mubr.f32.gmra.mrb[0].mxu0 %v6819
        %v7017 = vpop.f32.mrb[0].mxu0
        %v7018 = vadd.f32 0.0, %v7017
        %v7019 = vpop.f32.mrb[0].mxu0
        %v7020 = vadd.f32 0.0, %v7019
        %7021 = vmatprep.mubr.f32.mxu0 0.0
        %7022 = vmatmul.mubr.f32.gmra.mrb[0].mxu0 %v6820
        %v7023 = vpop.f32.mrb[0].mxu0
        %v7024 = vadd.f32 0.0, %v7023
        %v7025 = vpop.f32.mrb[0].mxu0
        %v7026 = vadd.f32 0.0, %v7025
        %7027 = vmatprep.mubr.f32.mxu0 0.0
        %7028 = vmatmul.mubr.f32.gmra.mrb[0].mxu0 %v6821
        %v7029 = vpop.f32.mrb[0].mxu0
        %v7030 = vadd.f32 0.0, %v7029
        %v7031 = vpop.f32.mrb[0].mxu0
        %v7032 = vadd.f32 0.0, %v7031
        %7033 = vmatprep.mubr.f32.mxu0 0.0
        %7034 = vmatmul.mubr.f32.gmra.mrb[0].mxu0 %v6822
        %v7035 = vpop.f32.mrb[0].mxu0
        %v7036 = vadd.f32 0.0, %v7035
        %v7037 = vpop.f32.mrb[0].mxu0
        %v7038 = vadd.f32 0.0, %v7037
        %7039 = vmatprep.mubr.f32.mxu0 0.0
        %7040 = vmatmul.mubr.f32.gmra.mrb[0].mxu0 %v6823
        %v7041 = vpop.f32.mrb[0].mxu0
        %v7042 = vadd.f32 0.0, %v7041
        %v7043 = vpop.f32.mrb[0].mxu0
        %v7044 = vadd.f32 0.0, %v7043
        %7045 = vdwg.mxu0
        %7046 = vmatprep.subr.mxu0 0.0
        %7047 = vmatpush1.msra.mxu0 %v6827
        %7048 = vmatprep.subr.mxu0 0.0
        %7049 = vmatpush1.msra.mxu0 %v6830
        %7050 = vmatprep.subr.mxu0 0.0
        %7051 = vmatpush1.msra.mxu0 %v6833
        %7052 = vmatprep.subr.mxu0 0.0
        %7053 = vmatpush1.msra.mxu0 %v6836
        %7054 = vmatprep.subr.mxu0 0.0
        %7055 = vmatpush1.msra.mxu0 %v6839
        %7056 = vmatprep.subr.mxu0 0.0
        %7057 = vmatpush1.msra.mxu0 %v6842
        %7058 = vmatprep.subr.mxu0 0.0
        %7059 = vmatpush1.msra.mxu0 %v6845
        %7060 = vmatprep.subr.mxu0 0.0
        %7061 = vmatpush1.msra.mxu0 %v6848
        %7062 = vmatprep.subr.mxu0 0.0
        %7063 = vmatpush1.msra.mxu0 %v6851
        %7064 = vmatprep.subr.mxu0 0.0
        %7065 = vmatpush1.msra.mxu0 %v6854
        %7066 = vmatprep.subr.mxu0 0.0
        %7067 = vmatpush1.msra.mxu0 %v6857
        %7068 = vmatprep.subr.mxu0 0.0
        %7069 = vmatpush1.msra.mxu0 %v6860
        %7070 = vmatprep.subr.mxu0 0.0
        %7071 = vmatpush1.msra.mxu0 %v6863
        %7072 = vmatprep.subr.mxu0 0.0
        %7073 = vmatpush1.msra.mxu0 %v6866
        %7074 = vmatprep.subr.mxu0 0.0
        %7075 = vmatpush1.msra.mxu0 %v6869
        %7076 = vmatprep.subr.mxu0 0.0
        %7077 = vmatpush1.msra.mxu0 %v6872
        %7078 = vmatprep.subr.mxu0 0.0
        %7079 = vmatpush1.msra.mxu0 0.0
        %7080 = vmatprep.subr.mxu0 0.0
        %7081 = vmatpush1.msra.mxu0 0.0
        %7082 = vmatprep.subr.mxu0 0.0
        %7083 = vmatpush1.msra.mxu0 0.0
        %7084 = vmatprep.subr.mxu0 0.0
        %7085 = vmatpush1.msra.mxu0 0.0
        %7086 = vmatprep.subr.mxu0 0.0
        %7087 = vmatpush1.msra.mxu0 0.0
        %7088 = vmatprep.subr.mxu0 0.0
        %7089 = vmatpush1.msra.mxu0 0.0
        %7090 = vmatprep.subr.mxu0 0.0
        %7091 = vmatpush1.msra.mxu0 0.0
        %7092 = vmatprep.subr.mxu0 0.0
        %7093 = vmatpush1.msra.mxu0 0.0
        %7094 = vmatprep.subr.mxu0 0.0
        %7095 = vmatpush1.msra.mxu0 0.0
        %7096 = vmatprep.subr.mxu0 0.0
        %7097 = vmatpush1.msra.mxu0 0.0
        %7098 = vmatprep.subr.mxu0 0.0
        %7099 = vmatpush1.msra.mxu0 0.0
        %7100 = vmatprep.subr.mxu0 0.0
        %7101 = vmatpush1.msra.mxu0 0.0
        %7102 = vmatprep.subr.mxu0 0.0
        %7103 = vmatpush1.msra.mxu0 0.0
        %7104 = vmatprep.subr.mxu0 0.0
        %7105 = vmatpush1.msra.mxu0 0.0
        %7106 = vmatprep.subr.mxu0 0.0
        %7107 = vmatpush1.msra.mxu0 0.0
        %7108 = vmatprep.subr.mxu0 0.0
        %7109 = vmatpush1.msra.mxu0 0.0
        %7110 = vmatprep.mubr.f32.mxu0 0.0
        %7111 = vmatmul.mubr.f32.gmra.mrb[0].mxu0 %v6806
        %v7112 = vpop.f32.mrb[0].mxu0
        %v7113 = vadd.f32 0.0, %v7112
        %v7114 = vpop.f32.mrb[0].mxu0
        %7115 = vmatprep.mubr.f32.mxu0 0.0
        %7116 = vmatmul.mubr.f32.gmra.mrb[0].mxu0 %v6807
        %v7117 = vpop.f32.mrb[0].mxu0
        %v7118 = vadd.f32 0.0, %v7117
        %v7119 = vpop.f32.mrb[0].mxu0
        %7120 = vmatprep.mubr.f32.mxu0 0.0
        %7121 = vmatmul.mubr.f32.gmra.mrb[0].mxu0 %v6808
        %v7122 = vpop.f32.mrb[0].mxu0
        %v7123 = vadd.f32 0.0, %v7122
        %v7124 = vpop.f32.mrb[0].mxu0
        %7125 = vmatprep.mubr.f32.mxu0 0.0
        %7126 = vmatmul.mubr.f32.gmra.mrb[0].mxu0 %v6809
        %v7127 = vpop.f32.mrb[0].mxu0
        %v7128 = vadd.f32 0.0, %v7127
        %v7129 = vpop.f32.mrb[0].mxu0
        %7130 = vmatprep.mubr.f32.mxu0 0.0
        %7131 = vmatmul.mubr.f32.gmra.mrb[0].mxu0 %v6810
        %v7132 = vpop.f32.mrb[0].mxu0
        %v7133 = vadd.f32 0.0, %v7132
        %v7134 = vpop.f32.mrb[0].mxu0
        %7135 = vmatprep.mubr.f32.mxu0 0.0
        %7136 = vmatmul.mubr.f32.gmra.mrb[0].mxu0 %v6811
        %v7137 = vpop.f32.mrb[0].mxu0
        %v7138 = vadd.f32 0.0, %v7137
        %v7139 = vpop.f32.mrb[0].mxu0
        %7140 = vmatprep.mubr.f32.mxu0 0.0
        %7141 = vmatmul.mubr.f32.gmra.mrb[0].mxu0 %v6812
        %v7142 = vpop.f32.mrb[0].mxu0
        %v7143 = vadd.f32 0.0, %v7142
        %v7144 = vpop.f32.mrb[0].mxu0
        %7145 = vmatprep.mubr.f32.mxu0 0.0
        %7146 = vmatmul.mubr.f32.gmra.mrb[0].mxu0 %v6813
        %v7147 = vpop.f32.mrb[0].mxu0
        %v7148 = vadd.f32 0.0, %v7147
        %v7149 = vpop.f32.mrb[0].mxu0
        %7150 = vmatprep.mubr.f32.mxu0 0.0
        %7151 = vmatmul.mubr.f32.gmra.mrb[0].mxu0 %v6814
        %v7152 = vpop.f32.mrb[0].mxu0
        %v7153 = vadd.f32 0.0, %v7152
        %v7154 = vpop.f32.mrb[0].mxu0
        %7155 = vmatprep.mubr.f32.mxu0 0.0
        %7156 = vmatmul.mubr.f32.gmra.mrb[0].mxu0 %v6815
        %v7157 = vpop.f32.mrb[0].mxu0
        %v7158 = vadd.f32 0.0, %v7157
        %v7159 = vpop.f32.mrb[0].mxu0
        %7160 = vmatprep.mubr.f32.mxu0 0.0
        %7161 = vmatmul.mubr.f32.gmra.mrb[0].mxu0 %v6816
        %v7162 = vpop.f32.mrb[0].mxu0
        %v7163 = vadd.f32 0.0, %v7162
        %v7164 = vpop.f32.mrb[0].mxu0
        %7165 = vmatprep.mubr.f32.mxu0 0.0
        %7166 = vmatmul.mubr.f32.gmra.mrb[0].mxu0 %v6817
        %v7167 = vpop.f32.mrb[0].mxu0
        %v7168 = vadd.f32 0.0, %v7167
        %v7169 = vpop.f32.mrb[0].mxu0
        %7170 = vmatprep.mubr.f32.mxu0 0.0
        %7171 = vmatmul.mubr.f32.gmra.mrb[0].mxu0 %v6818
        %v7172 = vpop.f32.mrb[0].mxu0
        %v7173 = vadd.f32 0.0, %v7172
        %v7174 = vpop.f32.mrb[0].mxu0
        %7175 = vmatprep.mubr.f32.mxu0 0.0
        %7176 = vmatmul.mubr.f32.gmra.mrb[0].mxu0 %v6819
        %v7177 = vpop.f32.mrb[0].mxu0
        %v7178 = vadd.f32 0.0, %v7177
        %v7179 = vpop.f32.mrb[0].mxu0
        %7180 = vmatprep.mubr.f32.mxu0 0.0
        %7181 = vmatmul.mubr.f32.gmra.mrb[0].mxu0 %v6820
        %v7182 = vpop.f32.mrb[0].mxu0
        %v7183 = vadd.f32 0.0, %v7182
        %v7184 = vpop.f32.mrb[0].mxu0
        %7185 = vmatprep.mubr.f32.mxu0 0.0
        %7186 = vmatmul.mubr.f32.gmra.mrb[0].mxu0 %v6821
        %v7187 = vpop.f32.mrb[0].mxu0
        %v7188 = vadd.f32 0.0, %v7187
        %v7189 = vpop.f32.mrb[0].mxu0
        %7190 = vmatprep.mubr.f32.mxu0 0.0
        %7191 = vmatmul.mubr.f32.gmra.mrb[0].mxu0 %v6822
        %v7192 = vpop.f32.mrb[0].mxu0
        %v7193 = vadd.f32 0.0, %v7192
        %v7194 = vpop.f32.mrb[0].mxu0
        %7195 = vmatprep.mubr.f32.mxu0 0.0
        %7196 = vmatmul.mubr.f32.gmra.mrb[0].mxu0 %v6823
        %v7197 = vpop.f32.mrb[0].mxu0
        %v7198 = vadd.f32 0.0, %v7197
        %v7199 = vpop.f32.mrb[0].mxu0
        %7200 = vdwg.mxu0
        %v7201 = vadd.f32 %v6752, %v6940
        %v7202 = vadd.f32 %v6753, %v6942
        %v7203 = vadd.f32 %v6754, %v7113
        %v7204 = vadd.f32 %v6755, %v6946
        %v7205 = vadd.f32 %v6756, %v6948
        %v7206 = vadd.f32 %v6757, %v7118
        %v7207 = vadd.f32 %v6758, %v6952
        %v7208 = vadd.f32 %v6759, %v6954
        %v7209 = vadd.f32 %v6760, %v7123
        %v7210 = vadd.f32 %v6761, %v6958
        %v7211 = vadd.f32 %v6762, %v6960
        %v7212 = vadd.f32 %v6763, %v7128
        %v7213 = vadd.f32 %v6764, %v6964
        %v7214 = vadd.f32 %v6765, %v6966
        %v7215 = vadd.f32 %v6766, %v7133
        %v7216 = vadd.f32 %v6767, %v6970
        %v7217 = vadd.f32 %v6768, %v6972
        %v7218 = vadd.f32 %v6769, %v7138
        %v7219 = vadd.f32 %v6770, %v6976
        %v7220 = vadd.f32 %v6771, %v6978
        %v7221 = vadd.f32 %v6772, %v7143
        %v7222 = vadd.f32 %v6773, %v6982
        %v7223 = vadd.f32 %v6774, %v6984
        %v7224 = vadd.f32 %v6775, %v7148
        %v7225 = vadd.f32 %v6776, %v6988
        %v7226 = vadd.f32 %v6777, %v6990
        %v7227 = vadd.f32 %v6778, %v7153
        %v7228 = vadd.f32 %v6779, %v6994
        %v7229 = vadd.f32 %v6780, %v6996
        %v7230 = vadd.f32 %v6781, %v7158
        %v7231 = vadd.f32 %v6782, %v7000
        %v7232 = vadd.f32 %v6783, %v7002
        %v7233 = vadd.f32 %v6784, %v7163
        %v7234 = vadd.f32 %v6785, %v7006
        %v7235 = vadd.f32 %v6786, %v7008
        %v7236 = vadd.f32 %v6787, %v7168
        %v7237 = vadd.f32 %v6788, %v7012
        %v7238 = vadd.f32 %v6789, %v7014
        %v7239 = vadd.f32 %v6790, %v7173
        %v7240 = vadd.f32 %v6791, %v7018
        %v7241 = vadd.f32 %v6792, %v7020
        %v7242 = vadd.f32 %v6793, %v7178
        %v7243 = vadd.f32 %v6794, %v7024
        %v7244 = vadd.f32 %v6795, %v7026
        %v7245 = vadd.f32 %v6796, %v7183
        %v7246 = vadd.f32 %v6797, %v7030
        %v7247 = vadd.f32 %v6798, %v7032
        %v7248 = vadd.f32 %v6799, %v7188
        %v7249 = vadd.f32 %v6800, %v7036
        %v7250 = vadd.f32 %v6801, %v7038
        %v7251 = vadd.f32 %v6802, %v7193
        %v7252 = vadd.f32 %v6803, %v7042
        %v7253 = vadd.f32 %v6804, %v7044
        %v7254 = vadd.f32 %v6805, %v7198
        %v7255 = vld [vmem:[#allocation15] sm:$0x7]
        %v7257 = vlaneseq
        %v7258 = vshrl.u32 %v7257, 7
        %v7259 = vsub.s32 0, %v7258
        %v7260 = vrot.slane %v7255, %v7259
        %v7261 = vlaneseq
        %v7262 = vshrl.u32 %v7261, 7
        %v7263 = vsub.s32 1, %v7262
        %v7264 = vrot.slane %v7255, %v7263
        %v7265 = vlaneseq
        %v7266 = vshrl.u32 %v7265, 7
        %v7267 = vsub.s32 2, %v7266
        %v7268 = vrot.slane %v7255, %v7267
        %v7272 = vadd.f32 %v7201, %v7260
        %v7273 = vadd.f32 %v7202, %v7264
        %v7274 = vadd.f32 %v7203, %v7268
        %v7275 = vadd.f32 %v7204, %v7260
        %v7276 = vadd.f32 %v7205, %v7264
        %v7277 = vadd.f32 %v7206, %v7268
        %v7278 = vadd.f32 %v7207, %v7260
        %v7279 = vadd.f32 %v7208, %v7264
        %v7280 = vadd.f32 %v7209, %v7268
        %v7281 = vadd.f32 %v7210, %v7260
        %v7282 = vadd.f32 %v7211, %v7264
        %v7283 = vadd.f32 %v7212, %v7268
        %v7284 = vadd.f32 %v7213, %v7260
        %v7285 = vadd.f32 %v7214, %v7264
        %v7286 = vadd.f32 %v7215, %v7268
        %v7287 = vadd.f32 %v7216, %v7260
        %v7288 = vadd.f32 %v7217, %v7264
        %v7289 = vadd.f32 %v7218, %v7268
        %v7290 = vadd.f32 %v7219, %v7260
        %v7291 = vadd.f32 %v7220, %v7264
        %v7292 = vadd.f32 %v7221, %v7268
        %v7293 = vadd.f32 %v7222, %v7260
        %v7294 = vadd.f32 %v7223, %v7264
        %v7295 = vadd.f32 %v7224, %v7268
        %v7296 = vadd.f32 %v7225, %v7260
        %v7297 = vadd.f32 %v7226, %v7264
        %v7298 = vadd.f32 %v7227, %v7268
        %v7299 = vadd.f32 %v7228, %v7260
        %v7300 = vadd.f32 %v7229, %v7264
        %v7301 = vadd.f32 %v7230, %v7268
        %v7302 = vadd.f32 %v7231, %v7260
        %v7303 = vadd.f32 %v7232, %v7264
        %v7304 = vadd.f32 %v7233, %v7268
        %v7305 = vadd.f32 %v7234, %v7260
        %v7306 = vadd.f32 %v7235, %v7264
        %v7307 = vadd.f32 %v7236, %v7268
        %v7308 = vadd.f32 %v7237, %v7260
        %v7309 = vadd.f32 %v7238, %v7264
        %v7310 = vadd.f32 %v7239, %v7268
        %v7311 = vadd.f32 %v7240, %v7260
        %v7312 = vadd.f32 %v7241, %v7264
        %v7313 = vadd.f32 %v7242, %v7268
        %v7314 = vadd.f32 %v7243, %v7260
        %v7315 = vadd.f32 %v7244, %v7264
        %v7316 = vadd.f32 %v7245, %v7268
        %v7317 = vadd.f32 %v7246, %v7260
        %v7318 = vadd.f32 %v7247, %v7264
        %v7319 = vadd.f32 %v7248, %v7268
        %v7320 = vadd.f32 %v7249, %v7260
        %v7321 = vadd.f32 %v7250, %v7264
        %v7322 = vadd.f32 %v7251, %v7268
        %v7323 = vadd.f32 %v7252, %v7260
        %v7324 = vadd.f32 %v7253, %v7264
        %v7325 = vadd.f32 %v7254, %v7268
        %v7326 = vxor.u32 %v7272, 2147483648
        %v7327 = vxor.u32 %v7273, 2147483648
        %v7328 = vxor.u32 %v7274, 2147483648
        %v7329 = vxor.u32 %v7275, 2147483648
        %v7330 = vxor.u32 %v7276, 2147483648
        %v7331 = vxor.u32 %v7277, 2147483648
        %v7332 = vxor.u32 %v7278, 2147483648
        %v7333 = vxor.u32 %v7279, 2147483648
        %v7334 = vxor.u32 %v7280, 2147483648
        %v7335 = vxor.u32 %v7281, 2147483648
        %v7336 = vxor.u32 %v7282, 2147483648
        %v7337 = vxor.u32 %v7283, 2147483648
        %v7338 = vxor.u32 %v7284, 2147483648
        %v7339 = vxor.u32 %v7285, 2147483648
        %v7340 = vxor.u32 %v7286, 2147483648
        %v7341 = vxor.u32 %v7287, 2147483648
        %v7342 = vxor.u32 %v7288, 2147483648
        %v7343 = vxor.u32 %v7289, 2147483648
        %v7344 = vxor.u32 %v7290, 2147483648
        %v7345 = vxor.u32 %v7291, 2147483648
        %v7346 = vxor.u32 %v7292, 2147483648
        %v7347 = vxor.u32 %v7293, 2147483648
        %v7348 = vxor.u32 %v7294, 2147483648
        %v7349 = vxor.u32 %v7295, 2147483648
        %v7350 = vxor.u32 %v7296, 2147483648
        %v7351 = vxor.u32 %v7297, 2147483648
        %v7352 = vxor.u32 %v7298, 2147483648
        %v7353 = vxor.u32 %v7299, 2147483648
        %v7354 = vxor.u32 %v7300, 2147483648
        %v7355 = vxor.u32 %v7301, 2147483648
        %v7356 = vxor.u32 %v7302, 2147483648
        %v7357 = vxor.u32 %v7303, 2147483648
        %v7358 = vxor.u32 %v7304, 2147483648
        %v7359 = vxor.u32 %v7305, 2147483648
        %v7360 = vxor.u32 %v7306, 2147483648
        %v7361 = vxor.u32 %v7307, 2147483648
        %v7362 = vxor.u32 %v7308, 2147483648
        %v7363 = vxor.u32 %v7309, 2147483648
        %v7364 = vxor.u32 %v7310, 2147483648
        %v7365 = vxor.u32 %v7311, 2147483648
        %v7366 = vxor.u32 %v7312, 2147483648
        %v7367 = vxor.u32 %v7313, 2147483648
        %v7368 = vxor.u32 %v7314, 2147483648
        %v7369 = vxor.u32 %v7315, 2147483648
        %v7370 = vxor.u32 %v7316, 2147483648
        %v7371 = vxor.u32 %v7317, 2147483648
        %v7372 = vxor.u32 %v7318, 2147483648
        %v7373 = vxor.u32 %v7319, 2147483648
        %v7374 = vxor.u32 %v7320, 2147483648
        %v7375 = vxor.u32 %v7321, 2147483648
        %v7376 = vxor.u32 %v7322, 2147483648
        %v7377 = vxor.u32 %v7323, 2147483648
        %v7378 = vxor.u32 %v7324, 2147483648
        %v7379 = vxor.u32 %v7325, 2147483648
        %v7380 = vmul.f32 %v7326, 1.442695
        %v7381 = vpow.pop %v7380
        %v7382 = vmul.f32 %v7327, 1.442695
        %v7383 = vpow.pop %v7382
        %v7384 = vmul.f32 %v7328, 1.442695
        %v7385 = vpow.pop %v7384
        %v7386 = vmul.f32 %v7329, 1.442695
        %v7387 = vpow.pop %v7386
        %v7388 = vmul.f32 %v7330, 1.442695
        %v7389 = vpow.pop %v7388
        %v7390 = vmul.f32 %v7331, 1.442695
        %v7391 = vpow.pop %v7390
        %v7392 = vmul.f32 %v7332, 1.442695
        %v7393 = vpow.pop %v7392
        %v7394 = vmul.f32 %v7333, 1.442695
        %v7395 = vpow.pop %v7394
        %v7396 = vmul.f32 %v7334, 1.442695
        %v7397 = vpow.pop %v7396
        %v7398 = vmul.f32 %v7335, 1.442695
        %v7399 = vpow.pop %v7398
        %v7400 = vmul.f32 %v7336, 1.442695
        %v7401 = vpow.pop %v7400
        %v7402 = vmul.f32 %v7337, 1.442695
        %v7403 = vpow.pop %v7402
        %v7404 = vmul.f32 %v7338, 1.442695
        %v7405 = vpow.pop %v7404
        %v7406 = vmul.f32 %v7339, 1.442695
        %v7407 = vpow.pop %v7406
        %v7408 = vmul.f32 %v7340, 1.442695
        %v7409 = vpow.pop %v7408
        %v7410 = vmul.f32 %v7341, 1.442695
        %v7411 = vpow.pop %v7410
        %v7412 = vmul.f32 %v7342, 1.442695
        %v7413 = vpow.pop %v7412
        %v7414 = vmul.f32 %v7343, 1.442695
        %v7415 = vpow.pop %v7414
        %v7416 = vmul.f32 %v7344, 1.442695
        %v7417 = vpow.pop %v7416
        %v7418 = vmul.f32 %v7345, 1.442695
        %v7419 = vpow.pop %v7418
        %v7420 = vmul.f32 %v7346, 1.442695
        %v7421 = vpow.pop %v7420
        %v7422 = vmul.f32 %v7347, 1.442695
        %v7423 = vpow.pop %v7422
        %v7424 = vmul.f32 %v7348, 1.442695
        %v7425 = vpow.pop %v7424
        %v7426 = vmul.f32 %v7349, 1.442695
        %v7427 = vpow.pop %v7426
        %v7428 = vmul.f32 %v7350, 1.442695
        %v7429 = vpow.pop %v7428
        %v7430 = vmul.f32 %v7351, 1.442695
        %v7431 = vpow.pop %v7430
        %v7432 = vmul.f32 %v7352, 1.442695
        %v7433 = vpow.pop %v7432
        %v7434 = vmul.f32 %v7353, 1.442695
        %v7435 = vpow.pop %v7434
        %v7436 = vmul.f32 %v7354, 1.442695
        %v7437 = vpow.pop %v7436
        %v7438 = vmul.f32 %v7355, 1.442695
        %v7439 = vpow.pop %v7438
        %v7440 = vmul.f32 %v7356, 1.442695
        %v7441 = vpow.pop %v7440
        %v7442 = vmul.f32 %v7357, 1.442695
        %v7443 = vpow.pop %v7442
        %v7444 = vmul.f32 %v7358, 1.442695
        %v7445 = vpow.pop %v7444
        %v7446 = vmul.f32 %v7359, 1.442695
        %v7447 = vpow.pop %v7446
        %v7448 = vmul.f32 %v7360, 1.442695
        %v7449 = vpow.pop %v7448
        %v7450 = vmul.f32 %v7361, 1.442695
        %v7451 = vpow.pop %v7450
        %v7452 = vmul.f32 %v7362, 1.442695
        %v7453 = vpow.pop %v7452
        %v7454 = vmul.f32 %v7363, 1.442695
        %v7455 = vpow.pop %v7454
        %v7456 = vmul.f32 %v7364, 1.442695
        %v7457 = vpow.pop %v7456
        %v7458 = vmul.f32 %v7365, 1.442695
        %v7459 = vpow.pop %v7458
        %v7460 = vmul.f32 %v7366, 1.442695
        %v7461 = vpow.pop %v7460
        %v7462 = vmul.f32 %v7367, 1.442695
        %v7463 = vpow.pop %v7462
        %v7464 = vmul.f32 %v7368, 1.442695
        %v7465 = vpow.pop %v7464
        %v7466 = vmul.f32 %v7369, 1.442695
        %v7467 = vpow.pop %v7466
        %v7468 = vmul.f32 %v7370, 1.442695
        %v7469 = vpow.pop %v7468
        %v7470 = vmul.f32 %v7371, 1.442695
        %v7471 = vpow.pop %v7470
        %v7472 = vmul.f32 %v7372, 1.442695
        %v7473 = vpow.pop %v7472
        %v7474 = vmul.f32 %v7373, 1.442695
        %v7475 = vpow.pop %v7474
        %v7476 = vmul.f32 %v7374, 1.442695
        %v7477 = vpow.pop %v7476
        %v7478 = vmul.f32 %v7375, 1.442695
        %v7479 = vpow.pop %v7478
        %v7480 = vmul.f32 %v7376, 1.442695
        %v7481 = vpow.pop %v7480
        %v7482 = vmul.f32 %v7377, 1.442695
        %v7483 = vpow.pop %v7482
        %v7484 = vmul.f32 %v7378, 1.442695
        %v7485 = vpow.pop %v7484
        %v7486 = vmul.f32 %v7379, 1.442695
        %v7487 = vpow.pop %v7486
        %v7488 = vadd.f32 %v7381, 1.0
        %v7489 = vadd.f32 %v7383, 1.0
        %v7490 = vadd.f32 %v7385, 1.0
        %v7491 = vadd.f32 %v7387, 1.0
        %v7492 = vadd.f32 %v7389, 1.0
        %v7493 = vadd.f32 %v7391, 1.0
        %v7494 = vadd.f32 %v7393, 1.0
        %v7495 = vadd.f32 %v7395, 1.0
        %v7496 = vadd.f32 %v7397, 1.0
        %v7497 = vadd.f32 %v7399, 1.0
        %v7498 = vadd.f32 %v7401, 1.0
        %v7499 = vadd.f32 %v7403, 1.0
        %v7500 = vadd.f32 %v7405, 1.0
        %v7501 = vadd.f32 %v7407, 1.0
        %v7502 = vadd.f32 %v7409, 1.0
        %v7503 = vadd.f32 %v7411, 1.0
        %v7504 = vadd.f32 %v7413, 1.0
        %v7505 = vadd.f32 %v7415, 1.0
        %v7506 = vadd.f32 %v7417, 1.0
        %v7507 = vadd.f32 %v7419, 1.0
        %v7508 = vadd.f32 %v7421, 1.0
        %v7509 = vadd.f32 %v7423, 1.0
        %v7510 = vadd.f32 %v7425, 1.0
        %v7511 = vadd.f32 %v7427, 1.0
        %v7512 = vadd.f32 %v7429, 1.0
        %v7513 = vadd.f32 %v7431, 1.0
        %v7514 = vadd.f32 %v7433, 1.0
        %v7515 = vadd.f32 %v7435, 1.0
        %v7516 = vadd.f32 %v7437, 1.0
        %v7517 = vadd.f32 %v7439, 1.0
        %v7518 = vadd.f32 %v7441, 1.0
        %v7519 = vadd.f32 %v7443, 1.0
        %v7520 = vadd.f32 %v7445, 1.0
        %v7521 = vadd.f32 %v7447, 1.0
        %v7522 = vadd.f32 %v7449, 1.0
        %v7523 = vadd.f32 %v7451, 1.0
        %v7524 = vadd.f32 %v7453, 1.0
        %v7525 = vadd.f32 %v7455, 1.0
        %v7526 = vadd.f32 %v7457, 1.0
        %v7527 = vadd.f32 %v7459, 1.0
        %v7528 = vadd.f32 %v7461, 1.0
        %v7529 = vadd.f32 %v7463, 1.0
        %v7530 = vadd.f32 %v7465, 1.0
        %v7531 = vadd.f32 %v7467, 1.0
        %v7532 = vadd.f32 %v7469, 1.0
        %v7533 = vadd.f32 %v7471, 1.0
        %v7534 = vadd.f32 %v7473, 1.0
        %v7535 = vadd.f32 %v7475, 1.0
        %v7536 = vadd.f32 %v7477, 1.0
        %v7537 = vadd.f32 %v7479, 1.0
        %v7538 = vadd.f32 %v7481, 1.0
        %v7539 = vadd.f32 %v7483, 1.0
        %v7540 = vadd.f32 %v7485, 1.0
        %v7541 = vadd.f32 %v7487, 1.0
        %v7542 = vrcp.pop %v7488
        %v7543 = vmul.f32 1.0, %v7542
        %v7544 = vrcp.pop %v7489
        %v7545 = vmul.f32 1.0, %v7544
        %v7546 = vrcp.pop %v7490
        %v7547 = vmul.f32 1.0, %v7546
        %v7548 = vrcp.pop %v7491
        %v7549 = vmul.f32 1.0, %v7548
        %v7550 = vrcp.pop %v7492
        %v7551 = vmul.f32 1.0, %v7550
        %v7552 = vrcp.pop %v7493
        %v7553 = vmul.f32 1.0, %v7552
        %v7554 = vrcp.pop %v7494
        %v7555 = vmul.f32 1.0, %v7554
        %v7556 = vrcp.pop %v7495
        %v7557 = vmul.f32 1.0, %v7556
        %v7558 = vrcp.pop %v7496
        %v7559 = vmul.f32 1.0, %v7558
        %v7560 = vrcp.pop %v7497
        %v7561 = vmul.f32 1.0, %v7560
        %v7562 = vrcp.pop %v7498
        %v7563 = vmul.f32 1.0, %v7562
        %v7564 = vrcp.pop %v7499
        %v7565 = vmul.f32 1.0, %v7564
        %v7566 = vrcp.pop %v7500
        %v7567 = vmul.f32 1.0, %v7566
        %v7568 = vrcp.pop %v7501
        %v7569 = vmul.f32 1.0, %v7568
        %v7570 = vrcp.pop %v7502
        %v7571 = vmul.f32 1.0, %v7570
        %v7572 = vrcp.pop %v7503
        %v7573 = vmul.f32 1.0, %v7572
        %v7574 = vrcp.pop %v7504
        %v7575 = vmul.f32 1.0, %v7574
        %v7576 = vrcp.pop %v7505
        %v7577 = vmul.f32 1.0, %v7576
        %v7578 = vrcp.pop %v7506
        %v7579 = vmul.f32 1.0, %v7578
        %v7580 = vrcp.pop %v7507
        %v7581 = vmul.f32 1.0, %v7580
        %v7582 = vrcp.pop %v7508
        %v7583 = vmul.f32 1.0, %v7582
        %v7584 = vrcp.pop %v7509
        %v7585 = vmul.f32 1.0, %v7584
        %v7586 = vrcp.pop %v7510
        %v7587 = vmul.f32 1.0, %v7586
        %v7588 = vrcp.pop %v7511
        %v7589 = vmul.f32 1.0, %v7588
        %v7590 = vrcp.pop %v7512
        %v7591 = vmul.f32 1.0, %v7590
        %v7592 = vrcp.pop %v7513
        %v7593 = vmul.f32 1.0, %v7592
        %v7594 = vrcp.pop %v7514
        %v7595 = vmul.f32 1.0, %v7594
        %v7596 = vrcp.pop %v7515
        %v7597 = vmul.f32 1.0, %v7596
        %v7598 = vrcp.pop %v7516
        %v7599 = vmul.f32 1.0, %v7598
        %v7600 = vrcp.pop %v7517
        %v7601 = vmul.f32 1.0, %v7600
        %v7602 = vrcp.pop %v7518
        %v7603 = vmul.f32 1.0, %v7602
        %v7604 = vrcp.pop %v7519
        %v7605 = vmul.f32 1.0, %v7604
        %v7606 = vrcp.pop %v7520
        %v7607 = vmul.f32 1.0, %v7606
        %v7608 = vrcp.pop %v7521
        %v7609 = vmul.f32 1.0, %v7608
        %v7610 = vrcp.pop %v7522
        %v7611 = vmul.f32 1.0, %v7610
        %v7612 = vrcp.pop %v7523
        %v7613 = vmul.f32 1.0, %v7612
        %v7614 = vrcp.pop %v7524
        %v7615 = vmul.f32 1.0, %v7614
        %v7616 = vrcp.pop %v7525
        %v7617 = vmul.f32 1.0, %v7616
        %v7618 = vrcp.pop %v7526
        %v7619 = vmul.f32 1.0, %v7618
        %v7620 = vrcp.pop %v7527
        %v7621 = vmul.f32 1.0, %v7620
        %v7622 = vrcp.pop %v7528
        %v7623 = vmul.f32 1.0, %v7622
        %v7624 = vrcp.pop %v7529
        %v7625 = vmul.f32 1.0, %v7624
        %v7626 = vrcp.pop %v7530
        %v7627 = vmul.f32 1.0, %v7626
        %v7628 = vrcp.pop %v7531
        %v7629 = vmul.f32 1.0, %v7628
        %v7630 = vrcp.pop %v7532
        %v7631 = vmul.f32 1.0, %v7630
        %v7632 = vrcp.pop %v7533
        %v7633 = vmul.f32 1.0, %v7632
        %v7634 = vrcp.pop %v7534
        %v7635 = vmul.f32 1.0, %v7634
        %v7636 = vrcp.pop %v7535
        %v7637 = vmul.f32 1.0, %v7636
        %v7638 = vrcp.pop %v7536
        %v7639 = vmul.f32 1.0, %v7638
        %v7640 = vrcp.pop %v7537
        %v7641 = vmul.f32 1.0, %v7640
        %v7642 = vrcp.pop %v7538
        %v7643 = vmul.f32 1.0, %v7642
        %v7644 = vrcp.pop %v7539
        %v7645 = vmul.f32 1.0, %v7644
        %v7646 = vrcp.pop %v7540
        %v7647 = vmul.f32 1.0, %v7646
        %v7648 = vrcp.pop %v7541
        %v7649 = vmul.f32 1.0, %v7648
        %7650 = vst [vmem:[%s480] sm:$0xff] %v7543
        %7651 = vst [vmem:[%s480 + $0x8] sm:$0xff] %v7545
        %7652 = vst [vmem:[%s480 + $0x10] sm:$0xff] %v7547
        %7653 = vst [vmem:[%s480 + $0x18] sm:$0xff] %v7549
        %7654 = vst [vmem:[%s480 + $0x20] sm:$0xff] %v7551
        %7655 = vst [vmem:[%s480 + $0x28] sm:$0xff] %v7553
        %vm7665 = vcmask 1045504
        %v7666 = vrot.slane %v7555, 2
        %v7667 = vrot.slane %v7561, 2
        %v7668 = vsel %vm7665, %v7666, %v7667
        %v7669 = vrot.slane %v7557, 2
        %v7670 = vrot.slane %v7563, 2
        %v7671 = vsel %vm7665, %v7669, %v7670
        %v7672 = vrot.slane %v7559, 2
        %v7673 = vrot.slane %v7565, 2
        %v7674 = vsel %vm7665, %v7672, %v7673
        %v7675 = vrot.slane %v7567, 2
        %v7676 = vsel %vm7665, %v7667, %v7675
        %v7677 = vrot.slane %v7569, 2
        %v7678 = vsel %vm7665, %v7670, %v7677
        %v7679 = vrot.slane %v7571, 2
        %v7680 = vsel %vm7665, %v7673, %v7679
        %s7687 = scalar_lea.vmem %s480, 48 [#allocation16]
        %7688 = vst [vmem:[%s7687] sm:$0xff] %v7668
        %7689 = vst [vmem:[%s7687 + $0x8] sm:$0xff] %v7671
        %7690 = vst [vmem:[%s7687 + $0x10] sm:$0xff] %v7674
        %7691 = vst [vmem:[%s7687 + $0x18] sm:$0xff] %v7676
        %7692 = vst [vmem:[%s7687 + $0x20] sm:$0xff] %v7678
        %7693 = vst [vmem:[%s7687 + $0x28] sm:$0xff] %v7680
        %vm7700 = vcmask 1043456
        %v7701 = vrot.slane %v7567, 4
        %v7702 = vrot.slane %v7573, 4
        %v7703 = vsel %vm7700, %v7701, %v7702
        %v7704 = vrot.slane %v7569, 4
        %v7705 = vrot.slane %v7575, 4
        %v7706 = vsel %vm7700, %v7704, %v7705
        %v7707 = vrot.slane %v7571, 4
        %v7708 = vrot.slane %v7577, 4
        %v7709 = vsel %vm7700, %v7707, %v7708
        %v7710 = vrot.slane %v7579, 4
        %v7711 = vsel %vm7700, %v7702, %v7710
        %v7712 = vrot.slane %v7581, 4
        %v7713 = vsel %vm7700, %v7705, %v7712
        %v7714 = vrot.slane %v7583, 4
        %v7715 = vsel %vm7700, %v7708, %v7714
        %s7722 = scalar_lea.vmem %s480, 96 [#allocation16]
        %7723 = vst [vmem:[%s7722] sm:$0xff] %v7703
        %7724 = vst [vmem:[%s7722 + $0x8] sm:$0xff] %v7706
        %7725 = vst [vmem:[%s7722 + $0x10] sm:$0xff] %v7709
        %7726 = vst [vmem:[%s7722 + $0x18] sm:$0xff] %v7711
        %7727 = vst [vmem:[%s7722 + $0x20] sm:$0xff] %v7713
        %7728 = vst [vmem:[%s7722 + $0x28] sm:$0xff] %v7715
        %vm7735 = vcmask 1041408
        %v7736 = vrot.slane %v7579, 6
        %v7737 = vrot.slane %v7585, 6
        %v7738 = vsel %vm7735, %v7736, %v7737
        %v7739 = vrot.slane %v7581, 6
        %v7740 = vrot.slane %v7587, 6
        %v7741 = vsel %vm7735, %v7739, %v7740
        %v7742 = vrot.slane %v7583, 6
        %v7743 = vrot.slane %v7589, 6
        %v7744 = vsel %vm7735, %v7742, %v7743
        %v7745 = vrot.slane %v7591, 6
        %v7746 = vsel %vm7735, %v7737, %v7745
        %v7747 = vrot.slane %v7593, 6
        %v7748 = vsel %vm7735, %v7740, %v7747
        %v7749 = vrot.slane %v7595, 6
        %v7750 = vsel %vm7735, %v7743, %v7749
        %s7757 = scalar_lea.vmem %s480, 144 [#allocation16]
        %7758 = vst [vmem:[%s7757] sm:$0xff] %v7738
        %7759 = vst [vmem:[%s7757 + $0x8] sm:$0xff] %v7741
        %7760 = vst [vmem:[%s7757 + $0x10] sm:$0xff] %v7744
        %7761 = vst [vmem:[%s7757 + $0x18] sm:$0xff] %v7746
        %7762 = vst [vmem:[%s7757 + $0x20] sm:$0xff] %v7748
        %7763 = vst [vmem:[%s7757 + $0x28] sm:$0xff] %v7750
        %s7764 = scalar_lea.vmem %s480, 192 [#allocation16]
        %7765 = vst [vmem:[%s7764] sm:$0xff] %v7597
        %7766 = vst [vmem:[%s7764 + $0x8] sm:$0xff] %v7599
        %7767 = vst [vmem:[%s7764 + $0x10] sm:$0xff] %v7601
        %7768 = vst [vmem:[%s7764 + $0x18] sm:$0xff] %v7603
        %7769 = vst [vmem:[%s7764 + $0x20] sm:$0xff] %v7605
        %7770 = vst [vmem:[%s7764 + $0x28] sm:$0xff] %v7607
        %v7780 = vrot.slane %v7609, 2
        %v7781 = vrot.slane %v7615, 2
        %v7782 = vsel %vm7665, %v7780, %v7781
        %v7783 = vrot.slane %v7611, 2
        %v7784 = vrot.slane %v7617, 2
        %v7785 = vsel %vm7665, %v7783, %v7784
        %v7786 = vrot.slane %v7613, 2
        %v7787 = vrot.slane %v7619, 2
        %v7788 = vsel %vm7665, %v7786, %v7787
        %v7789 = vrot.slane %v7621, 2
        %v7790 = vsel %vm7665, %v7781, %v7789
        %v7791 = vrot.slane %v7623, 2
        %v7792 = vsel %vm7665, %v7784, %v7791
        %v7793 = vrot.slane %v7625, 2
        %v7794 = vsel %vm7665, %v7787, %v7793
        %s7801 = scalar_lea.vmem %s480, 240 [#allocation16]
        %7802 = vst [vmem:[%s7801] sm:$0xff] %v7782
        %7803 = vst [vmem:[%s7801 + $0x8] sm:$0xff] %v7785
        %7804 = vst [vmem:[%s7801 + $0x10] sm:$0xff] %v7788
        %7805 = vst [vmem:[%s7801 + $0x18] sm:$0xff] %v7790
        %7806 = vst [vmem:[%s7801 + $0x20] sm:$0xff] %v7792
        %7807 = vst [vmem:[%s7801 + $0x28] sm:$0xff] %v7794
        %v7814 = vrot.slane %v7621, 4
        %v7815 = vrot.slane %v7627, 4
        %v7816 = vsel %vm7700, %v7814, %v7815
        %v7817 = vrot.slane %v7623, 4
        %v7818 = vrot.slane %v7629, 4
        %v7819 = vsel %vm7700, %v7817, %v7818
        %v7820 = vrot.slane %v7625, 4
        %v7821 = vrot.slane %v7631, 4
        %v7822 = vsel %vm7700, %v7820, %v7821
        %v7823 = vrot.slane %v7633, 4
        %v7824 = vsel %vm7700, %v7815, %v7823
        %v7825 = vrot.slane %v7635, 4
        %v7826 = vsel %vm7700, %v7818, %v7825
        %v7827 = vrot.slane %v7637, 4
        %v7828 = vsel %vm7700, %v7821, %v7827
        %s7835 = scalar_lea.vmem %s480, 288 [#allocation16]
        %7836 = vst [vmem:[%s7835] sm:$0xff] %v7816
        %7837 = vst [vmem:[%s7835 + $0x8] sm:$0xff] %v7819
        %7838 = vst [vmem:[%s7835 + $0x10] sm:$0xff] %v7822
        %7839 = vst [vmem:[%s7835 + $0x18] sm:$0xff] %v7824
        %7840 = vst [vmem:[%s7835 + $0x20] sm:$0xff] %v7826
        %7841 = vst [vmem:[%s7835 + $0x28] sm:$0xff] %v7828
        %v7848 = vrot.slane %v7633, 6
        %v7849 = vrot.slane %v7639, 6
        %v7850 = vsel %vm7735, %v7848, %v7849
        %v7851 = vrot.slane %v7635, 6
        %v7852 = vrot.slane %v7641, 6
        %v7853 = vsel %vm7735, %v7851, %v7852
        %v7854 = vrot.slane %v7637, 6
        %v7855 = vrot.slane %v7643, 6
        %v7856 = vsel %vm7735, %v7854, %v7855
        %v7857 = vrot.slane %v7645, 6
        %v7858 = vsel %vm7735, %v7849, %v7857
        %v7859 = vrot.slane %v7647, 6
        %v7860 = vsel %vm7735, %v7852, %v7859
        %v7861 = vrot.slane %v7649, 6
        %v7862 = vsel %vm7735, %v7855, %v7861
        %s7869 = scalar_lea.vmem %s480, 336 [#allocation16]
        %7870 = vst [vmem:[%s7869] sm:$0xff] %v7850
        %7871 = vst [vmem:[%s7869 + $0x8] sm:$0xff] %v7853
        %7872 = vst [vmem:[%s7869 + $0x10] sm:$0xff] %v7856
        %7873 = vst [vmem:[%s7869 + $0x18] sm:$0xff] %v7858
        %7874 = vst [vmem:[%s7869 + $0x20] sm:$0xff] %v7860
        %7875 = vst [vmem:[%s7869 + $0x28] sm:$0xff] %v7862
        %s7876 = sand.u32 %s235, 1
        %s7877 = scalar_lea.sflag [#allocation6], %s7876
        %s7878 = sand.u32 %s235, 1
        %s7879 = smul.addr %s7878, 384
        %s7880 = scalar_lea.vmem [#allocation16], %s7879
        // Predicated region
        $region93: #{tpu_custom_call.1} parent=47 // pred_check
          %p7881 = pneg %p245
        $region94: #{tpu_custom_call.1} parent=47 // pred_check_branch
          %7883 = sbr.rel (%p7881) target = $region96
        $region95: #{tpu_custom_call.1} parent=47 // pred_region
          %s7884 = smul.u32 8, %s34
          %s7886 = ssub.s32 6144, 6144
          %7887 = vsyncadd %s7877, %s7886
          %s7888 = smul.addr %s7884, 6
          %s7889 = smul.addr %s33, 96
          %s7890 = sadd.s32 %s7888, %s7889
          %s7891 = smul.addr %s7890, 128
          %s7892 = scalar_lea.hbm %s7, %s7891
          %s7893 = sshll.u32 %s7880, 4
          %s7894 = int_to_ptr.vmem [resolvable:$true] %s7893
          %7899 = dma.vmem_to_hbm [thread:$0]  %s7894, 6144, %s7892, %s7877, 384, 384, 24
        $region96: #{tpu_custom_call.1} parent=47 // pred_fallthru
          _
      $region48: #{tpu_custom_call.1} parent=5 // pred_fallthru
        _
      %p7900 = scmp.le.s32.totalorder 2, %s24
      // Predicated region
      $region97: #{tpu_custom_call.1} parent=5 // pred_check
        %p7901 = pneg %p7900
      $region98: #{tpu_custom_call.1} parent=5 // pred_check_branch
        %7903 = sbr.rel (%p7901) target = $region100
      $region99: #{tpu_custom_call.1} parent=5 // pred_region
        %s7904 = ssub.s32 %s24, 2
        // Predicated region
        $region101: #{tpu_custom_call.1} parent=99 // pred_check
          %p7905 = pneg %p251
        $region102: #{tpu_custom_call.1} parent=99 // pred_check_branch
          %7907 = sbr.rel (%p7905) target = $region104
        $region103: #{tpu_custom_call.1} parent=99 // pred_region
          %s7908 = sand.u32 %s236, 1
          %s7909 = scalar_lea.sflag [#allocation6], %s7908
          %s7910 = sand.u32 %s236, 1
          %s7911 = smul.addr %s7910, 384
          %s7912 = scalar_lea.vmem [#allocation16], %s7911
          %7913 = dma.done %s7909, 6144
        $region104: #{tpu_custom_call.1} parent=99 // pred_fallthru
          _
      $region100: #{tpu_custom_call.1} parent=5 // pred_fallthru
        _
    $region6: #{tpu_custom_call.1} parent=1 // loop_footer
      %s28 = sadd.s32 1, %s24
    $region7: #{tpu_custom_call.1} parent=1 // loop_footer_branch
      %23 = sbr.rel target = $region3
    $region8: #{tpu_custom_call.1} parent=1 // loop_exit
      _
    %7914 = vsyncpa [#allocation5], 1
    %s7915 = scalar_lea.sflag [#allocation5], 1
    %7916 = vsyncpa %s7915, 1
    %7917 = vsyncpa [#allocation8], 1
    %s7918 = scalar_lea.sflag [#allocation8], 1
    %7919 = vsyncpa %s7918, 1
    %7920 = vsyncpa [#allocation11], 1
    %7921 = vsyncpa [#allocation14], 1
    %7922 = vsyncpa [#allocation6], 1
    %s7923 = scalar_lea.sflag [#allocation6], 1
    %7924 = vsyncpa %s7923, 1

</llo_original>
